<compile_context>
chip_gen: v5e
topology: v5e:2x2
jax: 0.10.0
libtpu: 0.0.40
codegen_flags: <defaults>
</compile_context>

<pallas_src>
import functools

import jax
import jax.numpy as jnp
from jax.experimental import pallas as pl
from jax.experimental.pallas import tpu as pltpu


_N_VEC_ROWS = 16   # packed per-layer vector rows (13 used, padded to 16)


# ------------------------------ in-kernel math ------------------------------

def _layernorm(x, gamma, beta, eps=1e-5):
    mu = jnp.mean(x, axis=-1, keepdims=True)
    var = jnp.mean((x - mu) ** 2, axis=-1, keepdims=True)
    return (x - mu) * jax.lax.rsqrt(var + eps) * gamma + beta


def _mha(q, k, v, bias, wo, bo, batch, s_q, s_kv, n_heads):
    """Head-batched multi-head attention.

    q: (B*Sq, D) f32, k/v: (B*Skv, D) f32, bias: (Sq, Skv) additive mask,
    wo: (D, D) bf16, bo: (1, D) f32.  Returns (B*Sq, D) f32.
    """
    D = q.shape[-1]
    dk = D // n_heads
    scale = 1.0 / float(dk) ** 0.5

    def split_heads(x, s):
        # (B*s, D) -> (B*H, s, dk): a single relayout, no per-head slicing.
        x = x.reshape(batch, s, n_heads, dk)
        x = jnp.transpose(x, (0, 2, 1, 3))
        return x.reshape(batch * n_heads, s, dk).astype(jnp.bfloat16)

    qh = split_heads(q, s_q)
    kh = split_heads(k, s_kv)
    vh = split_heads(v, s_kv)

    s = jnp.einsum("nqd,nkd->nqk", qh, kh,
                   preferred_element_type=jnp.float32) * scale   # (B*H,Sq,Skv)
    s = s + bias[None, :, :]                     # same mask for all b and h

    m = jnp.max(s, axis=-1, keepdims=True)
    e = jnp.exp(s - m)                           # EUP
    p = e / jnp.sum(e, axis=-1, keepdims=True)   # exact softmax

    ctx = jnp.einsum("nqk,nkd->nqd", p.astype(jnp.bfloat16), vh,
                     preferred_element_type=jnp.float32)         # (B*H,Sq,dk)
    ctx = jnp.transpose(ctx.reshape(batch, n_heads, s_q, dk), (0, 2, 1, 3))
    ctx = ctx.reshape(batch * s_q, D)
    return jnp.dot(ctx.astype(jnp.bfloat16), wo,
                   preferred_element_type=jnp.float32) + bo


# --------------------------------- kernel ------------------------------------

def _decoder_stack_kernel(y_ref, enc_ref, la_ref, ed_ref,
                          wqkv1_ref, wo1_ref, wq2_ref, wkv2_ref, wo2_ref,
                          wf1_ref, wf2_ref, vec_ref, out_ref,
                          *, n_heads, activation):
    l = pl.program_id(0)
    B, S, D = out_ref.shape
    T = enc_ref.shape[1]
    F = wf1_ref.shape[-1]

    # out_ref's block index is constant along the layer axis, so it stays
    # resident in VMEM and acts as the layer-to-layer activation carry.
    @pl.when(l == 0)
    def _():
        out_ref[...] = y_ref[...]

    # unpack the per-layer vector bundle (biases + layernorm params)
    vec = vec_ref[0]                                 # (16, W) f32
    bqkv1 = vec[0:1, :3 * D]
    bkv2 = vec[1:2, :2 * D]
    bf1 = vec[2:3, :F]
    bo1 = vec[3:4, :D]
    bq2 = vec[4:5, :D]
    bo2 = vec[5:6, :D]
    bf2 = vec[6:7, :D]
    g1, be1 = vec[7:8, :D], vec[8:9, :D]
    g2, be2 = vec[9:10, :D], vec[10:11, :D]
    g3, be3 = vec[11:12, :D], vec[12:13, :D]

    # additive attention bias: 0 where attended, -1e9 where masked (mask == 0)
    la_bias = (la_ref[...].astype(jnp.float32) - 1.0) * 1e9      # (S, S)
    ed_bias = (ed_ref[...].astype(jnp.float32) - 1.0) * 1e9      # (S, T)

    y = out_ref[...].astype(jnp.float32).reshape(B * S, D)
    enc = enc_ref[...].astype(jnp.bfloat16).reshape(B * T, D)

    # ---- 1) masked self-attention (fused QKV), residual, layernorm ---------
    qkv = jnp.dot(y.astype(jnp.bfloat16), wqkv1_ref[0],
                  preferred_element_type=jnp.float32) + bqkv1    # (B*S, 3D)
    attn1 = _mha(qkv[:, :D], qkv[:, D:2 * D], qkv[:, 2 * D:],
                 la_bias, wo1_ref[0], bo1, B, S, S, n_heads)
    y = _layernorm(y + attn1, g1, be1)

    # ---- 2) encoder-decoder attention (fused KV), residual, layernorm ------
    q2 = jnp.dot(y.astype(jnp.bfloat16), wq2_ref[0],
                 preferred_element_type=jnp.float32) + bq2       # (B*S, D)
    kv2 = jnp.dot(enc, wkv2_ref[0],
                  preferred_element_type=jnp.float32) + bkv2     # (B*T, 2D)
    attn2 = _mha(q2, kv2[:, :D], kv2[:, D:],
                 ed_bias, wo2_ref[0], bo2, B, S, T, n_heads)
    y = _layernorm(y + attn2, g2, be2)

    # ---- 3) conv(k=1) feed-forward D -> d_ff -> D, residual, layernorm -----
    h = jnp.dot(y.astype(jnp.bfloat16), wf1_ref[0],
                preferred_element_type=jnp.float32) + bf1
    if activation == "relu":
        h = jax.nn.relu(h)
    else:
        h = jax.nn.gelu(h, approximate=False)        # match torch nn.GELU (erf)
    ff = jnp.dot(h.astype(jnp.bfloat16), wf2_ref[0],
                 preferred_element_type=jnp.float32) + bf2
    y = _layernorm(y + ff, g3, be3)

    out_ref[...] = y.reshape(B, S, D).astype(out_ref.dtype)


# ------------------------------ host wrapper ---------------------------------

_WEIGHT_ORDER = ("wqkv1", "wo1", "wq2", "wkv2", "wo2", "wf1", "wf2")


def _fuse_layer_weights(p):
    bf = jnp.bfloat16
    return {
        "wqkv1": jnp.concatenate([p["wq1"], p["wk1"], p["wv1"]], 1).astype(bf),
        "wo1": p["wo1"].astype(bf),
        "wq2": p["wq2"].astype(bf),
        "wkv2": jnp.concatenate([p["wk2"], p["wv2"]], 1).astype(bf),
        "wo2": p["wo2"].astype(bf),
        "wf1": p["wf1"].astype(bf),
        "wf2": p["wf2"].astype(bf),
    }


def _pack_layer_vectors(p, width):
    rows = [
        jnp.concatenate([p["bq1"], p["bk1"], p["bv1"]], 1),     # row 0: 3D
        jnp.concatenate([p["bk2"], p["bv2"]], 1),               # row 1: 2D
        p["bf1"],                                               # row 2: F
        p["bo1"], p["bq2"], p["bo2"], p["bf2"],                 # rows 3-6: D
        p["g1"], p["be1"], p["g2"], p["be2"], p["g3"], p["be3"],  # rows 7-12
    ]
    padded = [jnp.pad(r.reshape(-1).astype(jnp.float32),
                      (0, width - r.shape[-1])) for r in rows]
    mat = jnp.stack(padded, 0)                                  # (13, W)
    return jnp.pad(mat, ((0, _N_VEC_ROWS - mat.shape[0]), (0, 0)))


def _vmem_limit_bytes():
    try:
        cap = int(pltpu.get_tpu_info().vmem_capacity_bytes)
    except Exception:
        cap = 128 * 1024 * 1024
    # ~3/4 of physical per-core VMEM: ~48 MiB on v7x, ~96 MiB on v5e/v6e.
    return max(32 * 1024 * 1024, min(3 * cap // 4, 96 * 1024 * 1024))


def decoder_pallas(y, encoder_result, layer_params, look_ahead_mask=None,
                   encoder_decoder_mask=None, *, n_heads, activation):
    B, S, D = y.shape
    T = encoder_result.shape[1]
    L = len(layer_params)
    F = layer_params[0]["wf1"].shape[1]
    assert D % n_heads == 0

    if look_ahead_mask is None:
        look_ahead_mask = jnp.ones((S, S), jnp.float32)
    if encoder_decoder_mask is None:
        encoder_decoder_mask = jnp.ones((S, T), jnp.float32)
    la_mask = look_ahead_mask.astype(jnp.bfloat16)       # 0/1 masks; converted
    ed_mask = encoder_decoder_mask.astype(jnp.bfloat16)  # to bias in-kernel

    fused = [_fuse_layer_weights(p) for p in layer_params]
    weights = [jnp.stack([f[n] for f in fused], 0) for n in _WEIGHT_ORDER]

    vec_width = max(3 * D, F)
    vec = jnp.stack([_pack_layer_vectors(p, vec_width) for p in layer_params], 0)

    def weight_spec(w):
        return pl.BlockSpec((1,) + tuple(w.shape[1:]), lambda l: (l, 0, 0))

    in_specs = [
        pl.BlockSpec((B, S, D), lambda l: (0, 0, 0)),   # y (fetched once)
        pl.BlockSpec((B, T, D), lambda l: (0, 0, 0)),   # encoder result
        pl.BlockSpec((S, S), lambda l: (0, 0)),         # look-ahead mask
        pl.BlockSpec((S, T), lambda l: (0, 0)),         # enc-dec mask
    ] + [weight_spec(w) for w in weights] + [
        pl.BlockSpec((1, _N_VEC_ROWS, vec_width), lambda l: (l, 0, 0)),
    ]

    kernel = functools.partial(_decoder_stack_kernel,
                               n_heads=n_heads, activation=activation)

    return pl.pallas_call(
        kernel,
        out_shape=jax.ShapeDtypeStruct((B, S, D), jnp.float32),
        grid=(L,),
        in_specs=in_specs,
        out_specs=pl.BlockSpec((B, S, D), lambda l: (0, 0, 0)),
        input_output_aliases={0: 0},        # y buffer reused for the output
        compiler_params=pltpu.CompilerParams(
            dimension_semantics=("arbitrary",),
            vmem_limit_bytes=_vmem_limit_bytes(),
        ),
    )(y.astype(jnp.float32), encoder_result, la_mask, ed_mask, *weights, vec)


# --------------------------- parameter creation ------------------------------

def make_decoder_layer_params(key, d_model, d_ff):
    ks = jax.random.split(key, 10)
    s = 0.02

    def lin(k, din, dout):
        return s * jax.random.normal(k, (din, dout), jnp.float32)

    return {
        "wq1": lin(ks[0], d_model, d_model), "bq1": jnp.zeros((1, d_model)),
        "wk1": lin(ks[1], d_model, d_model), "bk1": jnp.zeros((1, d_model)),
        "wv1": lin(ks[2], d_model, d_model), "bv1": jnp.zeros((1, d_model)),
        "wo1": lin(ks[3], d_model, d_model), "bo1": jnp.zeros((1, d_model)),
        "wq2": lin(ks[4], d_model, d_model), "bq2": jnp.zeros((1, d_model)),
        "wk2": lin(ks[5], d_model, d_model), "bk2": jnp.zeros((1, d_model)),
        "wv2": lin(ks[6], d_model, d_model), "bv2": jnp.zeros((1, d_model)),
        "wo2": lin(ks[7], d_model, d_model), "bo2": jnp.zeros((1, d_model)),
        "wf1": lin(ks[8], d_model, d_ff),    "bf1": jnp.zeros((1, d_ff)),
        "wf2": lin(ks[9], d_ff, d_model),    "bf2": jnp.zeros((1, d_model)),
        "g1": jnp.ones((1, d_model)), "be1": jnp.zeros((1, d_model)),
        "g2": jnp.ones((1, d_model)), "be2": jnp.zeros((1, d_model)),
        "g3": jnp.ones((1, d_model)), "be3": jnp.zeros((1, d_model)),
    }


# ----------------------------------- main ------------------------------------

if __name__ == "__main__":
    # Small but lane-dense feature dim (d_model = 128 fills the 128 lanes).
    layer_num = 2
    d_model = 128
    d_ff = 256
    n_heads = 4
    activation = "relu"
    B, S_dec, S_enc = 2, 16, 16

    root = jax.random.PRNGKey(0)
    k_y, k_enc, k_params = jax.random.split(root, 3)

    y = jax.random.normal(k_y, (B, S_dec, d_model), jnp.float32)
    encoder_result = jax.random.normal(k_enc, (B, S_enc, d_model), jnp.float32)

    layer_params = [
        make_decoder_layer_params(k, d_model, d_ff)
        for k in jax.random.split(k_params, layer_num)
    ]

    # look-ahead (causal) mask: 1 = attend, 0 = masked
    look_ahead_mask = jnp.tril(jnp.ones((S_dec, S_dec), jnp.float32))
    encoder_decoder_mask = jnp.ones((S_dec, S_enc), jnp.float32)

    run = jax.jit(
        functools.partial(decoder_pallas, n_heads=n_heads,
                          activation=activation),
        donate_argnums=(0,),   # lets the y->output alias avoid an HBM copy
    )
    out = run(y, encoder_result, layer_params,
              look_ahead_mask, encoder_decoder_mask)
    jax.block_until_ready(out)
    assert out.shape == (B, S_dec, d_model)
    assert bool(jnp.all(jnp.isfinite(out)))
    print("KERNEL_OK")
</pallas_src>

<mosaic_0001>
module attributes {stable_mosaic.version = 11 : i64} {
  func.func @_decoder_stack_kernel(%arg0: i32, %arg1: memref<2x16x128xf32, #tpu.memory_space<vmem>>, %arg2: memref<2x16x128xf32, #tpu.memory_space<vmem>>, %arg3: memref<16x16xbf16, #tpu.memory_space<vmem>>, %arg4: memref<16x16xbf16, #tpu.memory_space<vmem>>, %arg5: memref<1x128x384xbf16, #tpu.memory_space<vmem>>, %arg6: memref<1x128x128xbf16, #tpu.memory_space<vmem>>, %arg7: memref<1x128x128xbf16, #tpu.memory_space<vmem>>, %arg8: memref<1x128x256xbf16, #tpu.memory_space<vmem>>, %arg9: memref<1x128x128xbf16, #tpu.memory_space<vmem>>, %arg10: memref<1x128x256xbf16, #tpu.memory_space<vmem>>, %arg11: memref<1x256x128xbf16, #tpu.memory_space<vmem>>, %arg12: memref<1x16x384xf32, #tpu.memory_space<vmem>>, %arg13: memref<2x16x128xf32, #tpu.memory_space<vmem>>) attributes {dimension_semantics = [#tpu.dimension_semantics<arbitrary>], iteration_bounds = array<i64: 2>, scalar_prefetch = 0 : i64, scratch_operands = 0 : i64, tpu.core_type = #tpu.core_type<tc>, window_params = [{pipeline_mode = #tpu.pipeline_mode<synchronous>, transform_indices = @transform_0, window_bounds = array<i64: 2, 16, 128>}, {pipeline_mode = #tpu.pipeline_mode<synchronous>, transform_indices = @transform_1, window_bounds = array<i64: 2, 16, 128>}, {pipeline_mode = #tpu.pipeline_mode<synchronous>, transform_indices = @transform_2, window_bounds = array<i64: 16, 16>}, {pipeline_mode = #tpu.pipeline_mode<synchronous>, transform_indices = @transform_3, window_bounds = array<i64: 16, 16>}, {transform_indices = @transform_4, window_bounds = array<i64: 1, 128, 384>}, {transform_indices = @transform_5, window_bounds = array<i64: 1, 128, 128>}, {transform_indices = @transform_6, window_bounds = array<i64: 1, 128, 128>}, {transform_indices = @transform_7, window_bounds = array<i64: 1, 128, 256>}, {transform_indices = @transform_8, window_bounds = array<i64: 1, 128, 128>}, {transform_indices = @transform_9, window_bounds = array<i64: 1, 128, 256>}, {transform_indices = @transform_10, window_bounds = array<i64: 1, 256, 128>}, {transform_indices = @transform_11, window_bounds = array<i64: 1, 16, 384>}, {pipeline_mode = #tpu.pipeline_mode<synchronous>, transform_indices = @transform_12, window_bounds = array<i64: 2, 16, 128>}]} {
    %c0_i32 = arith.constant 0 : i32
    %0 = arith.cmpi eq, %arg0, %c0_i32 : i32
    %1 = arith.extui %0 : i1 to i32
    %c0_i32_0 = arith.constant 0 : i32
    %2 = arith.cmpi ne, %1, %c0_i32_0 : i32
    scf.if %2 {
      %c0_73 = arith.constant 0 : index
      %c0_74 = arith.constant 0 : index
      %c0_75 = arith.constant 0 : index
      %218 = vector.load %arg1[%c0_73, %c0_74, %c0_75] : memref<2x16x128xf32, #tpu.memory_space<vmem>>, vector<2x16x128xf32>
      %c0_76 = arith.constant 0 : index
      %c0_77 = arith.constant 0 : index
      %c0_78 = arith.constant 0 : index
      %219 = vector.load %arg13[%c0_76, %c0_77, %c0_78] : memref<2x16x128xf32, #tpu.memory_space<vmem>>, vector<2x16x128xf32>
      tpu.vector_store %arg13[%c0_76, %c0_77, %c0_78], %218 {strides = array<i32>} : memref<2x16x128xf32, #tpu.memory_space<vmem>>, vector<2x16x128xf32>,
    } else {
    }
    %c0 = arith.constant 0 : index
    %c0_1 = arith.constant 0 : index
    %c0_2 = arith.constant 0 : index
    %3 = vector.load %arg12[%c0, %c0_1, %c0_2] : memref<1x16x384xf32, #tpu.memory_space<vmem>>, vector<1x16x384xf32>
    %4 = vector.shape_cast %3 : vector<1x16x384xf32> to vector<16x384xf32>
    %5 = vector.extract_strided_slice %4 {offsets = [0, 0], sizes = [1, 384], strides = [1, 1]} : vector<16x384xf32> to vector<1x384xf32>
    %6 = vector.extract_strided_slice %4 {offsets = [1, 0], sizes = [1, 256], strides = [1, 1]} : vector<16x384xf32> to vector<1x256xf32>
    %7 = vector.extract_strided_slice %4 {offsets = [2, 0], sizes = [1, 256], strides = [1, 1]} : vector<16x384xf32> to vector<1x256xf32>
    %8 = vector.extract_strided_slice %4 {offsets = [3, 0], sizes = [1, 128], strides = [1, 1]} : vector<16x384xf32> to vector<1x128xf32>
    %9 = vector.extract_strided_slice %4 {offsets = [4, 0], sizes = [1, 128], strides = [1, 1]} : vector<16x384xf32> to vector<1x128xf32>
    %10 = vector.extract_strided_slice %4 {offsets = [5, 0], sizes = [1, 128], strides = [1, 1]} : vector<16x384xf32> to vector<1x128xf32>
    %11 = vector.extract_strided_slice %4 {offsets = [6, 0], sizes = [1, 128], strides = [1, 1]} : vector<16x384xf32> to vector<1x128xf32>
    %12 = vector.extract_strided_slice %4 {offsets = [7, 0], sizes = [1, 128], strides = [1, 1]} : vector<16x384xf32> to vector<1x128xf32>
    %13 = vector.extract_strided_slice %4 {offsets = [8, 0], sizes = [1, 128], strides = [1, 1]} : vector<16x384xf32> to vector<1x128xf32>
    %14 = vector.extract_strided_slice %4 {offsets = [9, 0], sizes = [1, 128], strides = [1, 1]} : vector<16x384xf32> to vector<1x128xf32>
    %15 = vector.extract_strided_slice %4 {offsets = [10, 0], sizes = [1, 128], strides = [1, 1]} : vector<16x384xf32> to vector<1x128xf32>
    %16 = vector.extract_strided_slice %4 {offsets = [11, 0], sizes = [1, 128], strides = [1, 1]} : vector<16x384xf32> to vector<1x128xf32>
    %17 = vector.extract_strided_slice %4 {offsets = [12, 0], sizes = [1, 128], strides = [1, 1]} : vector<16x384xf32> to vector<1x128xf32>
    %c0_3 = arith.constant 0 : index
    %c0_4 = arith.constant 0 : index
    %18 = vector.load %arg3[%c0_3, %c0_4] : memref<16x16xbf16, #tpu.memory_space<vmem>>, vector<16x16xbf16>
    %19 = arith.extf %18 : vector<16x16xbf16> to vector<16x16xf32>
    %cst = arith.constant 1.000000e+00 : f32
    %20 = vector.broadcast %cst : f32 to vector<16x16xf32>
    %21 = arith.subf %19, %20 : vector<16x16xf32>
    %cst_5 = arith.constant 1.000000e+09 : f32
    %22 = vector.broadcast %cst_5 : f32 to vector<16x16xf32>
    %23 = arith.mulf %21, %22 : vector<16x16xf32>
    %c0_6 = arith.constant 0 : index
    %c0_7 = arith.constant 0 : index
    %24 = vector.load %arg4[%c0_6, %c0_7] : memref<16x16xbf16, #tpu.memory_space<vmem>>, vector<16x16xbf16>
    %25 = arith.extf %24 : vector<16x16xbf16> to vector<16x16xf32>
    %cst_8 = arith.constant 1.000000e+00 : f32
    %26 = vector.broadcast %cst_8 : f32 to vector<16x16xf32>
    %27 = arith.subf %25, %26 : vector<16x16xf32>
    %cst_9 = arith.constant 1.000000e+09 : f32
    %28 = vector.broadcast %cst_9 : f32 to vector<16x16xf32>
    %29 = arith.mulf %27, %28 : vector<16x16xf32>
    %c0_10 = arith.constant 0 : index
    %c0_11 = arith.constant 0 : index
    %c0_12 = arith.constant 0 : index
    %30 = vector.load %arg13[%c0_10, %c0_11, %c0_12] : memref<2x16x128xf32, #tpu.memory_space<vmem>>, vector<2x16x128xf32>
    %31 = vector.shape_cast %30 : vector<2x16x128xf32> to vector<32x128xf32>
    %c0_13 = arith.constant 0 : index
    %c0_14 = arith.constant 0 : index
    %c0_15 = arith.constant 0 : index
    %32 = vector.load %arg2[%c0_13, %c0_14, %c0_15] : memref<2x16x128xf32, #tpu.memory_space<vmem>>, vector<2x16x128xf32>
    %33 = arith.truncf %32 : vector<2x16x128xf32> to vector<2x16x128xbf16>
    %34 = vector.shape_cast %33 : vector<2x16x128xbf16> to vector<32x128xbf16>
    %35 = arith.truncf %31 : vector<32x128xf32> to vector<32x128xbf16>
    %c0_16 = arith.constant 0 : index
    %c0_17 = arith.constant 0 : index
    %c0_18 = arith.constant 0 : index
    %36 = vector.load %arg5[%c0_16, %c0_17, %c0_18] : memref<1x128x384xbf16, #tpu.memory_space<vmem>>, vector<1x128x384xbf16>
    %37 = vector.shape_cast %36 : vector<1x128x384xbf16> to vector<128x384xbf16>
    %cst_19 = arith.constant dense<0.000000e+00> : vector<32x384xf32>
    %38 = tpu.matmul %35, %37, %cst_19 {dimension_numbers = #tpu.dot_dimension_numbers<[1], [0], [0], [1], [0, 0, 1, 1], [], []>} : vector<32x128xbf16>, vector<128x384xbf16>, vector<32x384xf32> -> vector<32x384xf32>
    %39 = vector.broadcast %5 : vector<1x384xf32> to vector<32x384xf32>
    %40 = arith.addf %38, %39 : vector<32x384xf32>
    %41 = vector.extract_strided_slice %40 {offsets = [0, 0], sizes = [32, 128], strides = [1, 1]} : vector<32x384xf32> to vector<32x128xf32>
    %42 = vector.extract_strided_slice %40 {offsets = [0, 128], sizes = [32, 128], strides = [1, 1]} : vector<32x384xf32> to vector<32x128xf32>
    %43 = vector.extract_strided_slice %40 {offsets = [0, 256], sizes = [32, 128], strides = [1, 1]} : vector<32x384xf32> to vector<32x128xf32>
    %c0_20 = arith.constant 0 : index
    %c0_21 = arith.constant 0 : index
    %c0_22 = arith.constant 0 : index
    %44 = vector.load %arg6[%c0_20, %c0_21, %c0_22] : memref<1x128x128xbf16, #tpu.memory_space<vmem>>, vector<1x128x128xbf16>
    %45 = vector.shape_cast %44 : vector<1x128x128xbf16> to vector<128x128xbf16>
    %46 = vector.shape_cast %41 : vector<32x128xf32> to vector<2x16x4x32xf32>
    %47 = tpu.transpose %46, [0, 2, 1, 3] : vector<2x16x4x32xf32> -> vector<2x4x16x32xf32>
    %48 = vector.shape_cast %47 : vector<2x4x16x32xf32> to vector<8x16x32xf32>
    %49 = arith.truncf %48 : vector<8x16x32xf32> to vector<8x16x32xbf16>
    %50 = vector.shape_cast %42 : vector<32x128xf32> to vector<2x16x4x32xf32>
    %51 = tpu.transpose %50, [0, 2, 1, 3] : vector<2x16x4x32xf32> -> vector<2x4x16x32xf32>
    %52 = vector.shape_cast %51 : vector<2x4x16x32xf32> to vector<8x16x32xf32>
    %53 = arith.truncf %52 : vector<8x16x32xf32> to vector<8x16x32xbf16>
    %54 = vector.shape_cast %43 : vector<32x128xf32> to vector<2x16x4x32xf32>
    %55 = tpu.transpose %54, [0, 2, 1, 3] : vector<2x16x4x32xf32> -> vector<2x4x16x32xf32>
    %56 = vector.shape_cast %55 : vector<2x4x16x32xf32> to vector<8x16x32xf32>
    %57 = arith.truncf %56 : vector<8x16x32xf32> to vector<8x16x32xbf16>
    "tpu.trace_start"() <{level = 10 : i32, message = "nqd,nkd->nqk"}> : () -> ()
    %cst_23 = arith.constant dense<0.000000e+00> : vector<8x16x16xf32>
    %58 = tpu.matmul %49, %53, %cst_23 {dimension_numbers = #tpu.dot_dimension_numbers<[2], [2], [1], [1], [0, 0, 0, 1, 1, 1], [0], [0]>} : vector<8x16x32xbf16>, vector<8x16x32xbf16>, vector<8x16x16xf32> -> vector<8x16x16xf32>
    "tpu.trace_stop"() : () -> ()
    %cst_24 = arith.constant 0.176776692 : f32
    %59 = vector.broadcast %cst_24 : f32 to vector<8x16x16xf32>
    %60 = arith.mulf %58, %59 : vector<8x16x16xf32>
    %61 = vector.shape_cast %23 : vector<16x16xf32> to vector<1x16x16xf32>
    %62 = vector.broadcast %61 : vector<1x16x16xf32> to vector<8x16x16xf32>
    %63 = arith.addf %60, %62 : vector<8x16x16xf32>
    %cst_25 = arith.constant dense<0xFF800000> : vector<8x16xf32>
    %64 = vector.multi_reduction <maximumf>, %63, %cst_25 [2] : vector<8x16x16xf32> to vector<8x16xf32>
    %65 = vector.shape_cast %64 : vector<8x16xf32> to vector<8x16x1xf32>
    %66 = vector.broadcast %65 : vector<8x16x1xf32> to vector<8x16x16xf32>
    %67 = arith.subf %63, %66 : vector<8x16x16xf32>
    %68 = math.exp %67 : vector<8x16x16xf32>
    %cst_26 = arith.constant dense<0.000000e+00> : vector<8x16xf32>
    %69 = vector.multi_reduction <add>, %68, %cst_26 [2] : vector<8x16x16xf32> to vector<8x16xf32>
    %70 = vector.shape_cast %69 : vector<8x16xf32> to vector<8x16x1xf32>
    %71 = vector.broadcast %70 : vector<8x16x1xf32> to vector<8x16x16xf32>
    %72 = arith.divf %68, %71 : vector<8x16x16xf32>
    %73 = arith.truncf %72 : vector<8x16x16xf32> to vector<8x16x16xbf16>
    "tpu.trace_start"() <{level = 10 : i32, message = "nqk,nkd->nqd"}> : () -> ()
    %cst_27 = arith.constant dense<0.000000e+00> : vector<8x16x32xf32>
    %74 = tpu.matmul %73, %57, %cst_27 {dimension_numbers = #tpu.dot_dimension_numbers<[2], [1], [1], [2], [0, 0, 0, 1, 1, 2], [0], [0]>} : vector<8x16x16xbf16>, vector<8x16x32xbf16>, vector<8x16x32xf32> -> vector<8x16x32xf32>
    "tpu.trace_stop"() : () -> ()
    %75 = vector.shape_cast %74 : vector<8x16x32xf32> to vector<2x4x16x32xf32>
    %76 = tpu.transpose %75, [0, 2, 1, 3] : vector<2x4x16x32xf32> -> vector<2x16x4x32xf32>
    %77 = vector.shape_cast %76 : vector<2x16x4x32xf32> to vector<32x128xf32>
    %78 = arith.truncf %77 : vector<32x128xf32> to vector<32x128xbf16>
    %cst_28 = arith.constant dense<0.000000e+00> : vector<32x128xf32>
    %79 = tpu.matmul %78, %45, %cst_28 {dimension_numbers = #tpu.dot_dimension_numbers<[1], [0], [0], [1], [0, 0, 1, 1], [], []>} : vector<32x128xbf16>, vector<128x128xbf16>, vector<32x128xf32> -> vector<32x128xf32>
    %80 = vector.broadcast %8 : vector<1x128xf32> to vector<32x128xf32>
    %81 = arith.addf %79, %80 : vector<32x128xf32>
    %82 = arith.addf %31, %81 : vector<32x128xf32>
    %cst_29 = arith.constant dense<0.000000e+00> : vector<32xf32>
    %83 = vector.multi_reduction <add>, %82, %cst_29 [1] : vector<32x128xf32> to vector<32xf32>
    %84 = vector.shape_cast %83 : vector<32xf32> to vector<32x1xf32>
    %cst_30 = arith.constant 1.280000e+02 : f32
    %85 = vector.broadcast %cst_30 : f32 to vector<32x1xf32>
    %86 = arith.divf %84, %85 : vector<32x1xf32>
    %87 = vector.broadcast %86 : vector<32x1xf32> to vector<32x128xf32>
    %88 = arith.subf %82, %87 : vector<32x128xf32>
    %89 = arith.mulf %88, %88 : vector<32x128xf32>
    %cst_31 = arith.constant dense<0.000000e+00> : vector<32xf32>
    %90 = vector.multi_reduction <add>, %89, %cst_31 [1] : vector<32x128xf32> to vector<32xf32>
    %91 = vector.shape_cast %90 : vector<32xf32> to vector<32x1xf32>
    %cst_32 = arith.constant 1.280000e+02 : f32
    %92 = vector.broadcast %cst_32 : f32 to vector<32x1xf32>
    %93 = arith.divf %91, %92 : vector<32x1xf32>
    %94 = vector.broadcast %86 : vector<32x1xf32> to vector<32x128xf32>
    %95 = arith.subf %82, %94 : vector<32x128xf32>
    %cst_33 = arith.constant 9.99999974E-6 : f32
    %96 = vector.broadcast %cst_33 : f32 to vector<32x1xf32>
    %97 = arith.addf %93, %96 : vector<32x1xf32>
    %98 = math.rsqrt %97 : vector<32x1xf32>
    %99 = vector.broadcast %98 : vector<32x1xf32> to vector<32x128xf32>
    %100 = arith.mulf %95, %99 : vector<32x128xf32>
    %101 = vector.broadcast %12 : vector<1x128xf32> to vector<32x128xf32>
    %102 = arith.mulf %100, %101 : vector<32x128xf32>
    %103 = vector.broadcast %13 : vector<1x128xf32> to vector<32x128xf32>
    %104 = arith.addf %102, %103 : vector<32x128xf32>
    %105 = arith.truncf %104 : vector<32x128xf32> to vector<32x128xbf16>
    %c0_34 = arith.constant 0 : index
    %c0_35 = arith.constant 0 : index
    %c0_36 = arith.constant 0 : index
    %106 = vector.load %arg7[%c0_34, %c0_35, %c0_36] : memref<1x128x128xbf16, #tpu.memory_space<vmem>>, vector<1x128x128xbf16>
    %107 = vector.shape_cast %106 : vector<1x128x128xbf16> to vector<128x128xbf16>
    %cst_37 = arith.constant dense<0.000000e+00> : vector<32x128xf32>
    %108 = tpu.matmul %105, %107, %cst_37 {dimension_numbers = #tpu.dot_dimension_numbers<[1], [0], [0], [1], [0, 0, 1, 1], [], []>} : vector<32x128xbf16>, vector<128x128xbf16>, vector<32x128xf32> -> vector<32x128xf32>
    %109 = vector.broadcast %9 : vector<1x128xf32> to vector<32x128xf32>
    %110 = arith.addf %108, %109 : vector<32x128xf32>
    %c0_38 = arith.constant 0 : index
    %c0_39 = arith.constant 0 : index
    %c0_40 = arith.constant 0 : index
    %111 = vector.load %arg8[%c0_38, %c0_39, %c0_40] : memref<1x128x256xbf16, #tpu.memory_space<vmem>>, vector<1x128x256xbf16>
    %112 = vector.shape_cast %111 : vector<1x128x256xbf16> to vector<128x256xbf16>
    %cst_41 = arith.constant dense<0.000000e+00> : vector<32x256xf32>
    %113 = tpu.matmul %34, %112, %cst_41 {dimension_numbers = #tpu.dot_dimension_numbers<[1], [0], [0], [1], [0, 0, 1, 1], [], []>} : vector<32x128xbf16>, vector<128x256xbf16>, vector<32x256xf32> -> vector<32x256xf32>
    %114 = vector.broadcast %6 : vector<1x256xf32> to vector<32x256xf32>
    %115 = arith.addf %113, %114 : vector<32x256xf32>
    %116 = vector.extract_strided_slice %115 {offsets = [0, 0], sizes = [32, 128], strides = [1, 1]} : vector<32x256xf32> to vector<32x128xf32>
    %117 = vector.extract_strided_slice %115 {offsets = [0, 128], sizes = [32, 128], strides = [1, 1]} : vector<32x256xf32> to vector<32x128xf32>
    %c0_42 = arith.constant 0 : index
    %c0_43 = arith.constant 0 : index
    %c0_44 = arith.constant 0 : index
    %118 = vector.load %arg9[%c0_42, %c0_43, %c0_44] : memref<1x128x128xbf16, #tpu.memory_space<vmem>>, vector<1x128x128xbf16>
    %119 = vector.shape_cast %118 : vector<1x128x128xbf16> to vector<128x128xbf16>
    %120 = vector.shape_cast %110 : vector<32x128xf32> to vector<2x16x4x32xf32>
    %121 = tpu.transpose %120, [0, 2, 1, 3] : vector<2x16x4x32xf32> -> vector<2x4x16x32xf32>
    %122 = vector.shape_cast %121 : vector<2x4x16x32xf32> to vector<8x16x32xf32>
    %123 = arith.truncf %122 : vector<8x16x32xf32> to vector<8x16x32xbf16>
    %124 = vector.shape_cast %116 : vector<32x128xf32> to vector<2x16x4x32xf32>
    %125 = tpu.transpose %124, [0, 2, 1, 3] : vector<2x16x4x32xf32> -> vector<2x4x16x32xf32>
    %126 = vector.shape_cast %125 : vector<2x4x16x32xf32> to vector<8x16x32xf32>
    %127 = arith.truncf %126 : vector<8x16x32xf32> to vector<8x16x32xbf16>
    %128 = vector.shape_cast %117 : vector<32x128xf32> to vector<2x16x4x32xf32>
    %129 = tpu.transpose %128, [0, 2, 1, 3] : vector<2x16x4x32xf32> -> vector<2x4x16x32xf32>
    %130 = vector.shape_cast %129 : vector<2x4x16x32xf32> to vector<8x16x32xf32>
    %131 = arith.truncf %130 : vector<8x16x32xf32> to vector<8x16x32xbf16>
    "tpu.trace_start"() <{level = 10 : i32, message = "nqd,nkd->nqk"}> : () -> ()
    %cst_45 = arith.constant dense<0.000000e+00> : vector<8x16x16xf32>
    %132 = tpu.matmul %123, %127, %cst_45 {dimension_numbers = #tpu.dot_dimension_numbers<[2], [2], [1], [1], [0, 0, 0, 1, 1, 1], [0], [0]>} : vector<8x16x32xbf16>, vector<8x16x32xbf16>, vector<8x16x16xf32> -> vector<8x16x16xf32>
    "tpu.trace_stop"() : () -> ()
    %cst_46 = arith.constant 0.176776692 : f32
    %133 = vector.broadcast %cst_46 : f32 to vector<8x16x16xf32>
    %134 = arith.mulf %132, %133 : vector<8x16x16xf32>
    %135 = vector.shape_cast %29 : vector<16x16xf32> to vector<1x16x16xf32>
    %136 = vector.broadcast %135 : vector<1x16x16xf32> to vector<8x16x16xf32>
    %137 = arith.addf %134, %136 : vector<8x16x16xf32>
    %cst_47 = arith.constant dense<0xFF800000> : vector<8x16xf32>
    %138 = vector.multi_reduction <maximumf>, %137, %cst_47 [2] : vector<8x16x16xf32> to vector<8x16xf32>
    %139 = vector.shape_cast %138 : vector<8x16xf32> to vector<8x16x1xf32>
    %140 = vector.broadcast %139 : vector<8x16x1xf32> to vector<8x16x16xf32>
    %141 = arith.subf %137, %140 : vector<8x16x16xf32>
    %142 = math.exp %141 : vector<8x16x16xf32>
    %cst_48 = arith.constant dense<0.000000e+00> : vector<8x16xf32>
    %143 = vector.multi_reduction <add>, %142, %cst_48 [2] : vector<8x16x16xf32> to vector<8x16xf32>
    %144 = vector.shape_cast %143 : vector<8x16xf32> to vector<8x16x1xf32>
    %145 = vector.broadcast %144 : vector<8x16x1xf32> to vector<8x16x16xf32>
    %146 = arith.divf %142, %145 : vector<8x16x16xf32>
    %147 = arith.truncf %146 : vector<8x16x16xf32> to vector<8x16x16xbf16>
    "tpu.trace_start"() <{level = 10 : i32, message = "nqk,nkd->nqd"}> : () -> ()
    %cst_49 = arith.constant dense<0.000000e+00> : vector<8x16x32xf32>
    %148 = tpu.matmul %147, %131, %cst_49 {dimension_numbers = #tpu.dot_dimension_numbers<[2], [1], [1], [2], [0, 0, 0, 1, 1, 2], [0], [0]>} : vector<8x16x16xbf16>, vector<8x16x32xbf16>, vector<8x16x32xf32> -> vector<8x16x32xf32>
    "tpu.trace_stop"() : () -> ()
    %149 = vector.shape_cast %148 : vector<8x16x32xf32> to vector<2x4x16x32xf32>
    %150 = tpu.transpose %149, [0, 2, 1, 3] : vector<2x4x16x32xf32> -> vector<2x16x4x32xf32>
    %151 = vector.shape_cast %150 : vector<2x16x4x32xf32> to vector<32x128xf32>
    %152 = arith.truncf %151 : vector<32x128xf32> to vector<32x128xbf16>
    %cst_50 = arith.constant dense<0.000000e+00> : vector<32x128xf32>
    %153 = tpu.matmul %152, %119, %cst_50 {dimension_numbers = #tpu.dot_dimension_numbers<[1], [0], [0], [1], [0, 0, 1, 1], [], []>} : vector<32x128xbf16>, vector<128x128xbf16>, vector<32x128xf32> -> vector<32x128xf32>
    %154 = vector.broadcast %10 : vector<1x128xf32> to vector<32x128xf32>
    %155 = arith.addf %153, %154 : vector<32x128xf32>
    %156 = arith.addf %104, %155 : vector<32x128xf32>
    %cst_51 = arith.constant dense<0.000000e+00> : vector<32xf32>
    %157 = vector.multi_reduction <add>, %156, %cst_51 [1] : vector<32x128xf32> to vector<32xf32>
    %158 = vector.shape_cast %157 : vector<32xf32> to vector<32x1xf32>
    %cst_52 = arith.constant 1.280000e+02 : f32
    %159 = vector.broadcast %cst_52 : f32 to vector<32x1xf32>
    %160 = arith.divf %158, %159 : vector<32x1xf32>
    %161 = vector.broadcast %160 : vector<32x1xf32> to vector<32x128xf32>
    %162 = arith.subf %156, %161 : vector<32x128xf32>
    %163 = arith.mulf %162, %162 : vector<32x128xf32>
    %cst_53 = arith.constant dense<0.000000e+00> : vector<32xf32>
    %164 = vector.multi_reduction <add>, %163, %cst_53 [1] : vector<32x128xf32> to vector<32xf32>
    %165 = vector.shape_cast %164 : vector<32xf32> to vector<32x1xf32>
    %cst_54 = arith.constant 1.280000e+02 : f32
    %166 = vector.broadcast %cst_54 : f32 to vector<32x1xf32>
    %167 = arith.divf %165, %166 : vector<32x1xf32>
    %168 = vector.broadcast %160 : vector<32x1xf32> to vector<32x128xf32>
    %169 = arith.subf %156, %168 : vector<32x128xf32>
    %cst_55 = arith.constant 9.99999974E-6 : f32
    %170 = vector.broadcast %cst_55 : f32 to vector<32x1xf32>
    %171 = arith.addf %167, %170 : vector<32x1xf32>
    %172 = math.rsqrt %171 : vector<32x1xf32>
    %173 = vector.broadcast %172 : vector<32x1xf32> to vector<32x128xf32>
    %174 = arith.mulf %169, %173 : vector<32x128xf32>
    %175 = vector.broadcast %14 : vector<1x128xf32> to vector<32x128xf32>
    %176 = arith.mulf %174, %175 : vector<32x128xf32>
    %177 = vector.broadcast %15 : vector<1x128xf32> to vector<32x128xf32>
    %178 = arith.addf %176, %177 : vector<32x128xf32>
    %179 = arith.truncf %178 : vector<32x128xf32> to vector<32x128xbf16>
    %c0_56 = arith.constant 0 : index
    %c0_57 = arith.constant 0 : index
    %c0_58 = arith.constant 0 : index
    %180 = vector.load %arg10[%c0_56, %c0_57, %c0_58] : memref<1x128x256xbf16, #tpu.memory_space<vmem>>, vector<1x128x256xbf16>
    %181 = vector.shape_cast %180 : vector<1x128x256xbf16> to vector<128x256xbf16>
    %cst_59 = arith.constant dense<0.000000e+00> : vector<32x256xf32>
    %182 = tpu.matmul %179, %181, %cst_59 {dimension_numbers = #tpu.dot_dimension_numbers<[1], [0], [0], [1], [0, 0, 1, 1], [], []>} : vector<32x128xbf16>, vector<128x256xbf16>, vector<32x256xf32> -> vector<32x256xf32>
    %183 = vector.broadcast %7 : vector<1x256xf32> to vector<32x256xf32>
    %184 = arith.addf %182, %183 : vector<32x256xf32>
    %cst_60 = arith.constant 0.000000e+00 : f32
    %185 = vector.broadcast %cst_60 : f32 to vector<32x256xf32>
    %186 = arith.maximumf %184, %185 : vector<32x256xf32>
    %187 = arith.truncf %186 : vector<32x256xf32> to vector<32x256xbf16>
    %c0_61 = arith.constant 0 : index
    %c0_62 = arith.constant 0 : index
    %c0_63 = arith.constant 0 : index
    %188 = vector.load %arg11[%c0_61, %c0_62, %c0_63] : memref<1x256x128xbf16, #tpu.memory_space<vmem>>, vector<1x256x128xbf16>
    %189 = vector.shape_cast %188 : vector<1x256x128xbf16> to vector<256x128xbf16>
    %cst_64 = arith.constant dense<0.000000e+00> : vector<32x128xf32>
    %190 = tpu.matmul %187, %189, %cst_64 {dimension_numbers = #tpu.dot_dimension_numbers<[1], [0], [0], [1], [0, 0, 1, 1], [], []>} : vector<32x256xbf16>, vector<256x128xbf16>, vector<32x128xf32> -> vector<32x128xf32>
    %191 = vector.broadcast %11 : vector<1x128xf32> to vector<32x128xf32>
    %192 = arith.addf %190, %191 : vector<32x128xf32>
    %193 = arith.addf %178, %192 : vector<32x128xf32>
    %cst_65 = arith.constant dense<0.000000e+00> : vector<32xf32>
    %194 = vector.multi_reduction <add>, %193, %cst_65 [1] : vector<32x128xf32> to vector<32xf32>
    %195 = vector.shape_cast %194 : vector<32xf32> to vector<32x1xf32>
    %cst_66 = arith.constant 1.280000e+02 : f32
    %196 = vector.broadcast %cst_66 : f32 to vector<32x1xf32>
    %197 = arith.divf %195, %196 : vector<32x1xf32>
    %198 = vector.broadcast %197 : vector<32x1xf32> to vector<32x128xf32>
    %199 = arith.subf %193, %198 : vector<32x128xf32>
    %200 = arith.mulf %199, %199 : vector<32x128xf32>
    %cst_67 = arith.constant dense<0.000000e+00> : vector<32xf32>
    %201 = vector.multi_reduction <add>, %200, %cst_67 [1] : vector<32x128xf32> to vector<32xf32>
    %202 = vector.shape_cast %201 : vector<32xf32> to vector<32x1xf32>
    %cst_68 = arith.constant 1.280000e+02 : f32
    %203 = vector.broadcast %cst_68 : f32 to vector<32x1xf32>
    %204 = arith.divf %202, %203 : vector<32x1xf32>
    %205 = vector.broadcast %197 : vector<32x1xf32> to vector<32x128xf32>
    %206 = arith.subf %193, %205 : vector<32x128xf32>
    %cst_69 = arith.constant 9.99999974E-6 : f32
    %207 = vector.broadcast %cst_69 : f32 to vector<32x1xf32>
    %208 = arith.addf %204, %207 : vector<32x1xf32>
    %209 = math.rsqrt %208 : vector<32x1xf32>
    %210 = vector.broadcast %209 : vector<32x1xf32> to vector<32x128xf32>
    %211 = arith.mulf %206, %210 : vector<32x128xf32>
    %212 = vector.broadcast %16 : vector<1x128xf32> to vector<32x128xf32>
    %213 = arith.mulf %211, %212 : vector<32x128xf32>
    %214 = vector.broadcast %17 : vector<1x128xf32> to vector<32x128xf32>
    %215 = arith.addf %213, %214 : vector<32x128xf32>
    %216 = vector.shape_cast %215 : vector<32x128xf32> to vector<2x16x128xf32>
    %c0_70 = arith.constant 0 : index
    %c0_71 = arith.constant 0 : index
    %c0_72 = arith.constant 0 : index
    %217 = vector.load %arg13[%c0_70, %c0_71, %c0_72] : memref<2x16x128xf32, #tpu.memory_space<vmem>>, vector<2x16x128xf32>
    tpu.vector_store %arg13[%c0_70, %c0_71, %c0_72], %216 {strides = array<i32>} : memref<2x16x128xf32, #tpu.memory_space<vmem>>, vector<2x16x128xf32>,
    return
  }
  func.func @transform_0(%arg0: i32) -> (i32, i32, i32) {
    %c0_i32 = arith.constant 0 : i32
    %c0_i32_0 = arith.constant 0 : i32
    %c0_i32_1 = arith.constant 0 : i32
    %c0_i32_2 = arith.constant 0 : i32
    return %c0_i32, %c0_i32_0, %c0_i32_1 : i32, i32, i32
  }
  func.func @transform_1(%arg0: i32) -> (i32, i32, i32) {
    %c0_i32 = arith.constant 0 : i32
    %c0_i32_0 = arith.constant 0 : i32
    %c0_i32_1 = arith.constant 0 : i32
    %c0_i32_2 = arith.constant 0 : i32
    return %c0_i32, %c0_i32_0, %c0_i32_1 : i32, i32, i32
  }
  func.func @transform_2(%arg0: i32) -> (i32, i32) {
    %c0_i32 = arith.constant 0 : i32
    %c0_i32_0 = arith.constant 0 : i32
    %c0_i32_1 = arith.constant 0 : i32
    return %c0_i32, %c0_i32_0 : i32, i32
  }
  func.func @transform_3(%arg0: i32) -> (i32, i32) {
    %c0_i32 = arith.constant 0 : i32
    %c0_i32_0 = arith.constant 0 : i32
    %c0_i32_1 = arith.constant 0 : i32
    return %c0_i32, %c0_i32_0 : i32, i32
  }
  func.func @transform_4(%arg0: i32) -> (i32, i32, i32) {
    %c0_i32 = arith.constant 0 : i32
    %c0_i32_0 = arith.constant 0 : i32
    %c0_i32_1 = arith.constant 0 : i32
    return %arg0, %c0_i32, %c0_i32_0 : i32, i32, i32
  }
  func.func @transform_5(%arg0: i32) -> (i32, i32, i32) {
    %c0_i32 = arith.constant 0 : i32
    %c0_i32_0 = arith.constant 0 : i32
    %c0_i32_1 = arith.constant 0 : i32
    return %arg0, %c0_i32, %c0_i32_0 : i32, i32, i32
  }
  func.func @transform_6(%arg0: i32) -> (i32, i32, i32) {
    %c0_i32 = arith.constant 0 : i32
    %c0_i32_0 = arith.constant 0 : i32
    %c0_i32_1 = arith.constant 0 : i32
    return %arg0, %c0_i32, %c0_i32_0 : i32, i32, i32
  }
  func.func @transform_7(%arg0: i32) -> (i32, i32, i32) {
    %c0_i32 = arith.constant 0 : i32
    %c0_i32_0 = arith.constant 0 : i32
    %c0_i32_1 = arith.constant 0 : i32
    return %arg0, %c0_i32, %c0_i32_0 : i32, i32, i32
  }
  func.func @transform_8(%arg0: i32) -> (i32, i32, i32) {
    %c0_i32 = arith.constant 0 : i32
    %c0_i32_0 = arith.constant 0 : i32
    %c0_i32_1 = arith.constant 0 : i32
    return %arg0, %c0_i32, %c0_i32_0 : i32, i32, i32
  }
  func.func @transform_9(%arg0: i32) -> (i32, i32, i32) {
    %c0_i32 = arith.constant 0 : i32
    %c0_i32_0 = arith.constant 0 : i32
    %c0_i32_1 = arith.constant 0 : i32
    return %arg0, %c0_i32, %c0_i32_0 : i32, i32, i32
  }
  func.func @transform_10(%arg0: i32) -> (i32, i32, i32) {
    %c0_i32 = arith.constant 0 : i32
    %c0_i32_0 = arith.constant 0 : i32
    %c0_i32_1 = arith.constant 0 : i32
    return %arg0, %c0_i32, %c0_i32_0 : i32, i32, i32
  }
  func.func @transform_11(%arg0: i32) -> (i32, i32, i32) {
    %c0_i32 = arith.constant 0 : i32
    %c0_i32_0 = arith.constant 0 : i32
    %c0_i32_1 = arith.constant 0 : i32
    return %arg0, %c0_i32, %c0_i32_0 : i32, i32, i32
  }
  func.func @transform_12(%arg0: i32) -> (i32, i32, i32) {
    %c0_i32 = arith.constant 0 : i32
    %c0_i32_0 = arith.constant 0 : i32
    %c0_i32_1 = arith.constant 0 : i32
    %c0_i32_2 = arith.constant 0 : i32
    return %c0_i32, %c0_i32_0, %c0_i32_1 : i32, i32, i32
  }
}

</mosaic_0001>

<llo_original>
// kernel: decoder_pallas.1
$region0: #{decoder_pallas.1}
  #allocation0 [shape = 'u32[]', space=smem, size = 0x4, offset = 0x4, fixed_abs, tag = 'smem constant byte address 0x4 - core index']
  #allocation1 [shape = 'u32[72,128]{1,0:T(1,128)}', space=vmem, size = 0x9000, scoped, tag = 'internal scratch']
  %s0 = inlined_call_operand.hbm [shape: f32[2,16,128], index: 0, kind: input, shape index: {}, may-alias: {0,12}]
  %s1 = inlined_call_operand.vmem [shape: f32[2,16,128], index: 1, kind: input, shape index: {}]
  %s2 = inlined_call_operand.vmem [shape: bf16[16,16], index: 2, kind: input, shape index: {}]
  %s3 = inlined_call_operand.vmem [shape: bf16[16,16], index: 3, kind: input, shape index: {}]
  %s4 = inlined_call_operand.vmem [shape: bf16[2,128,384], index: 4, kind: input, shape index: {}]
  %s5 = inlined_call_operand.vmem [shape: bf16[2,128,128], index: 5, kind: input, shape index: {}]
  %s6 = inlined_call_operand.vmem [shape: bf16[2,128,128], index: 6, kind: input, shape index: {}]
  %s7 = inlined_call_operand.vmem [shape: bf16[2,128,256], index: 7, kind: input, shape index: {}]
  %s8 = inlined_call_operand.vmem [shape: bf16[2,128,128], index: 8, kind: input, shape index: {}]
  %s9 = inlined_call_operand.vmem [shape: bf16[2,128,256], index: 9, kind: input, shape index: {}]
  %s10 = inlined_call_operand.vmem [shape: bf16[2,256,128], index: 10, kind: input, shape index: {}]
  %s11 = inlined_call_operand.vmem [shape: f32[2,16,384], index: 11, kind: input, shape index: {}]
  %s12 = inlined_call_operand.hbm [shape: f32[2,16,128], index: 12, kind: output, shape index: {}, may-alias: {0,12}]
  %s13 = sld [smem:[#allocation0]]
  $region89: #{decoder_pallas.1} parent=0
    _
  %s15 = ssub.s32 1, %s13
  %s16 = scalar_select 0, %s15, %s13
  $region1: #{decoder_pallas.1} parent=0
    #allocation2 [shape = 'u8[16384]{0}', space=vmem, size = 0x4000, scoped, tag = 'input window, operand 0, single buffered']
    #allocation3 [shape = 's32[2]{0}', space=sflag, size = 0x8, scoped, tag = 'scoped memory for decoder_pallas.1']
    #allocation4 [shape = 's32[2]{0}', space=sflag, size = 0x8, scoped, tag = 'scoped memory for decoder_pallas.1']
    #allocation5 [shape = 'u8[16384]{0}', space=vmem, size = 0x4000, scoped, tag = 'output window, operand 0, single buffered']
    %17 = vsyncpa [#allocation3], 0
    %18 = vsyncpa [#allocation4], 0
    loop: start=0, step=1, limit=4
    $region2: #{decoder_pallas.1} parent=1 // loop_pre_header
      _
    $region3: #{decoder_pallas.1} parent=1 // loop_header
      %s20 = sphi 0, %s24
      %p21 = scmp.ge.s32.totalorder %s20, 4
      %s28 = sphi 0, %s28
      %s30 = sphi 0, %s28
      %s31 = sphi 0, %s30
      %s45 = sphi 0, %s31
      %s49 = sphi 0, %s49
      %s51 = sphi 0, %s49
      %s52 = sphi 0, %s51
      %s66 = sphi 0, %s52
      %s70 = sphi 0, %s70
      %s72 = sphi 0, %s70
      %s73 = sphi 0, %s72
      %s87 = sphi 0, %s73
      %s91 = sphi 0, %s91
      %s93 = sphi 0, %s91
      %s94 = sphi 0, %s93
      %s108 = sphi 0, %s94
      %s114 = sphi 0, %s116
      %s117 = sphi 0, %s114
      %s118 = sphi 0, %s117
      %s134 = sphi 0, %s118
      %s140 = sphi 0, %s142
      %s143 = sphi 0, %s140
      %s144 = sphi 0, %s143
      %s160 = sphi 0, %s144
      %s166 = sphi 0, %s168
      %s169 = sphi 0, %s166
      %s170 = sphi 0, %s169
      %s186 = sphi 0, %s170
      %s192 = sphi 0, %s194
      %s195 = sphi 0, %s192
      %s196 = sphi 0, %s195
      %s212 = sphi 0, %s196
      %s218 = sphi 0, %s220
      %s221 = sphi 0, %s218
      %s222 = sphi 0, %s221
      %s238 = sphi 0, %s222
      %s244 = sphi 0, %s246
      %s247 = sphi 0, %s244
      %s248 = sphi 0, %s247
      %s264 = sphi 0, %s248
      %s270 = sphi 0, %s272
      %s273 = sphi 0, %s270
      %s274 = sphi 0, %s273
      %s290 = sphi 0, %s274
      %s296 = sphi 0, %s298
      %s299 = sphi 0, %s296
      %s300 = sphi 0, %s299
      %s316 = sphi 0, %s300
      %s320 = sphi 0, %s320
      %s322 = sphi 0, %s320
      %s323 = sphi 0, %s322
      %s337 = sphi 0, %s323
    $region4: #{decoder_pallas.1} parent=1 // loop_header_branch
      %23 = sbr.rel (%p21) target = $region8
    $region5: #{decoder_pallas.1} parent=1 // loop_body
      %s25 = ssub.s32 %s20, 1
      %s26 = ssub.s32 %s20, 2
      %s27 = sadd.s32 %s20, 1
      %s29 = sadd.s32 %s28, 1
      %p32 = scmp.eq.s32.totalorder %s20, 1
      %p33 = scmp.ne.s32.totalorder %s28, %s30
      %p34 = scmp.eq.s32.totalorder %s20, 0
      %p35 = por %p33, %p34
      %p36 = scmp.ne.s32.totalorder %s28, %s30
      %p37 = scmp.eq.s32.totalorder %s25, 1
      %p38 = por %p36, %p37
      %p39 = scmp.ne.s32.totalorder %s30, %s31
      %p40 = scmp.eq.s32.totalorder %s25, 0
      %p41 = por %p39, %p40
      %p42 = scmp.ne.s32.totalorder %s30, %s31
      %p43 = scmp.eq.s32.totalorder %s26, 1
      %p44 = por %p42, %p43
      %p46 = scmp.ne.s32.totalorder %s31, %s45
      %p47 = scmp.eq.s32.totalorder %s26, 0
      %p48 = por %p46, %p47
      %s50 = sadd.s32 %s49, 1
      %p53 = scmp.eq.s32.totalorder %s20, 1
      %p54 = scmp.ne.s32.totalorder %s49, %s51
      %p55 = scmp.eq.s32.totalorder %s20, 0
      %p56 = por %p54, %p55
      %p57 = scmp.ne.s32.totalorder %s49, %s51
      %p58 = scmp.eq.s32.totalorder %s25, 1
      %p59 = por %p57, %p58
      %p60 = scmp.ne.s32.totalorder %s51, %s52
      %p61 = scmp.eq.s32.totalorder %s25, 0
      %p62 = por %p60, %p61
      %p63 = scmp.ne.s32.totalorder %s51, %s52
      %p64 = scmp.eq.s32.totalorder %s26, 1
      %p65 = por %p63, %p64
      %p67 = scmp.ne.s32.totalorder %s52, %s66
      %p68 = scmp.eq.s32.totalorder %s26, 0
      %p69 = por %p67, %p68
      %s71 = sadd.s32 %s70, 1
      %p74 = scmp.eq.s32.totalorder %s20, 1
      %p75 = scmp.ne.s32.totalorder %s70, %s72
      %p76 = scmp.eq.s32.totalorder %s20, 0
      %p77 = por %p75, %p76
      %p78 = scmp.ne.s32.totalorder %s70, %s72
      %p79 = scmp.eq.s32.totalorder %s25, 1
      %p80 = por %p78, %p79
      %p81 = scmp.ne.s32.totalorder %s72, %s73
      %p82 = scmp.eq.s32.totalorder %s25, 0
      %p83 = por %p81, %p82
      %p84 = scmp.ne.s32.totalorder %s72, %s73
      %p85 = scmp.eq.s32.totalorder %s26, 1
      %p86 = por %p84, %p85
      %p88 = scmp.ne.s32.totalorder %s73, %s87
      %p89 = scmp.eq.s32.totalorder %s26, 0
      %p90 = por %p88, %p89
      %s92 = sadd.s32 %s91, 1
      %p95 = scmp.eq.s32.totalorder %s20, 1
      %p96 = scmp.ne.s32.totalorder %s91, %s93
      %p97 = scmp.eq.s32.totalorder %s20, 0
      %p98 = por %p96, %p97
      %p99 = scmp.ne.s32.totalorder %s91, %s93
      %p100 = scmp.eq.s32.totalorder %s25, 1
      %p101 = por %p99, %p100
      %p102 = scmp.ne.s32.totalorder %s93, %s94
      %p103 = scmp.eq.s32.totalorder %s25, 0
      %p104 = por %p102, %p103
      %p105 = scmp.ne.s32.totalorder %s93, %s94
      %p106 = scmp.eq.s32.totalorder %s26, 1
      %p107 = por %p105, %p106
      %p109 = scmp.ne.s32.totalorder %s94, %s108
      %p110 = scmp.eq.s32.totalorder %s26, 0
      %p111 = por %p109, %p110
      %s112 = ssub.s32 %s20, %s27
      %p113 = scmp.eq.s32.totalorder %s112, 0
      %s115 = sadd.s32 %s114, 1
      %s116 = scalar_select %p113, %s114, %s115
      %p119 = pneg %p113
      %p120 = scmp.eq.s32.totalorder %s20, 1
      %p121 = por %p119, %p120
      %p122 = scmp.ne.s32.totalorder %s114, %s117
      %p123 = scmp.eq.s32.totalorder %s20, 0
      %p124 = por %p122, %p123
      %p125 = scmp.ne.s32.totalorder %s114, %s117
      %p126 = scmp.eq.s32.totalorder %s25, 1
      %p127 = por %p125, %p126
      %p128 = scmp.ne.s32.totalorder %s117, %s118
      %p129 = scmp.eq.s32.totalorder %s25, 0
      %p130 = por %p128, %p129
      %p131 = scmp.ne.s32.totalorder %s117, %s118
      %p132 = scmp.eq.s32.totalorder %s26, 1
      %p133 = por %p131, %p132
      %p135 = scmp.ne.s32.totalorder %s118, %s134
      %p136 = scmp.eq.s32.totalorder %s26, 0
      %p137 = por %p135, %p136
      %s138 = ssub.s32 %s20, %s27
      %p139 = scmp.eq.s32.totalorder %s138, 0
      %s141 = sadd.s32 %s140, 1
      %s142 = scalar_select %p139, %s140, %s141
      %p145 = pneg %p139
      %p146 = scmp.eq.s32.totalorder %s20, 1
      %p147 = por %p145, %p146
      %p148 = scmp.ne.s32.totalorder %s140, %s143
      %p149 = scmp.eq.s32.totalorder %s20, 0
      %p150 = por %p148, %p149
      %p151 = scmp.ne.s32.totalorder %s140, %s143
      %p152 = scmp.eq.s32.totalorder %s25, 1
      %p153 = por %p151, %p152
      %p154 = scmp.ne.s32.totalorder %s143, %s144
      %p155 = scmp.eq.s32.totalorder %s25, 0
      %p156 = por %p154, %p155
      %p157 = scmp.ne.s32.totalorder %s143, %s144
      %p158 = scmp.eq.s32.totalorder %s26, 1
      %p159 = por %p157, %p158
      %p161 = scmp.ne.s32.totalorder %s144, %s160
      %p162 = scmp.eq.s32.totalorder %s26, 0
      %p163 = por %p161, %p162
      %s164 = ssub.s32 %s20, %s27
      %p165 = scmp.eq.s32.totalorder %s164, 0
      %s167 = sadd.s32 %s166, 1
      %s168 = scalar_select %p165, %s166, %s167
      %p171 = pneg %p165
      %p172 = scmp.eq.s32.totalorder %s20, 1
      %p173 = por %p171, %p172
      %p174 = scmp.ne.s32.totalorder %s166, %s169
      %p175 = scmp.eq.s32.totalorder %s20, 0
      %p176 = por %p174, %p175
      %p177 = scmp.ne.s32.totalorder %s166, %s169
      %p178 = scmp.eq.s32.totalorder %s25, 1
      %p179 = por %p177, %p178
      %p180 = scmp.ne.s32.totalorder %s169, %s170
      %p181 = scmp.eq.s32.totalorder %s25, 0
      %p182 = por %p180, %p181
      %p183 = scmp.ne.s32.totalorder %s169, %s170
      %p184 = scmp.eq.s32.totalorder %s26, 1
      %p185 = por %p183, %p184
      %p187 = scmp.ne.s32.totalorder %s170, %s186
      %p188 = scmp.eq.s32.totalorder %s26, 0
      %p189 = por %p187, %p188
      %s190 = ssub.s32 %s20, %s27
      %p191 = scmp.eq.s32.totalorder %s190, 0
      %s193 = sadd.s32 %s192, 1
      %s194 = scalar_select %p191, %s192, %s193
      %p197 = pneg %p191
      %p198 = scmp.eq.s32.totalorder %s20, 1
      %p199 = por %p197, %p198
      %p200 = scmp.ne.s32.totalorder %s192, %s195
      %p201 = scmp.eq.s32.totalorder %s20, 0
      %p202 = por %p200, %p201
      %p203 = scmp.ne.s32.totalorder %s192, %s195
      %p204 = scmp.eq.s32.totalorder %s25, 1
      %p205 = por %p203, %p204
      %p206 = scmp.ne.s32.totalorder %s195, %s196
      %p207 = scmp.eq.s32.totalorder %s25, 0
      %p208 = por %p206, %p207
      %p209 = scmp.ne.s32.totalorder %s195, %s196
      %p210 = scmp.eq.s32.totalorder %s26, 1
      %p211 = por %p209, %p210
      %p213 = scmp.ne.s32.totalorder %s196, %s212
      %p214 = scmp.eq.s32.totalorder %s26, 0
      %p215 = por %p213, %p214
      %s216 = ssub.s32 %s20, %s27
      %p217 = scmp.eq.s32.totalorder %s216, 0
      %s219 = sadd.s32 %s218, 1
      %s220 = scalar_select %p217, %s218, %s219
      %p223 = pneg %p217
      %p224 = scmp.eq.s32.totalorder %s20, 1
      %p225 = por %p223, %p224
      %p226 = scmp.ne.s32.totalorder %s218, %s221
      %p227 = scmp.eq.s32.totalorder %s20, 0
      %p228 = por %p226, %p227
      %p229 = scmp.ne.s32.totalorder %s218, %s221
      %p230 = scmp.eq.s32.totalorder %s25, 1
      %p231 = por %p229, %p230
      %p232 = scmp.ne.s32.totalorder %s221, %s222
      %p233 = scmp.eq.s32.totalorder %s25, 0
      %p234 = por %p232, %p233
      %p235 = scmp.ne.s32.totalorder %s221, %s222
      %p236 = scmp.eq.s32.totalorder %s26, 1
      %p237 = por %p235, %p236
      %p239 = scmp.ne.s32.totalorder %s222, %s238
      %p240 = scmp.eq.s32.totalorder %s26, 0
      %p241 = por %p239, %p240
      %s242 = ssub.s32 %s20, %s27
      %p243 = scmp.eq.s32.totalorder %s242, 0
      %s245 = sadd.s32 %s244, 1
      %s246 = scalar_select %p243, %s244, %s245
      %p249 = pneg %p243
      %p250 = scmp.eq.s32.totalorder %s20, 1
      %p251 = por %p249, %p250
      %p252 = scmp.ne.s32.totalorder %s244, %s247
      %p253 = scmp.eq.s32.totalorder %s20, 0
      %p254 = por %p252, %p253
      %p255 = scmp.ne.s32.totalorder %s244, %s247
      %p256 = scmp.eq.s32.totalorder %s25, 1
      %p257 = por %p255, %p256
      %p258 = scmp.ne.s32.totalorder %s247, %s248
      %p259 = scmp.eq.s32.totalorder %s25, 0
      %p260 = por %p258, %p259
      %p261 = scmp.ne.s32.totalorder %s247, %s248
      %p262 = scmp.eq.s32.totalorder %s26, 1
      %p263 = por %p261, %p262
      %p265 = scmp.ne.s32.totalorder %s248, %s264
      %p266 = scmp.eq.s32.totalorder %s26, 0
      %p267 = por %p265, %p266
      %s268 = ssub.s32 %s20, %s27
      %p269 = scmp.eq.s32.totalorder %s268, 0
      %s271 = sadd.s32 %s270, 1
      %s272 = scalar_select %p269, %s270, %s271
      %p275 = pneg %p269
      %p276 = scmp.eq.s32.totalorder %s20, 1
      %p277 = por %p275, %p276
      %p278 = scmp.ne.s32.totalorder %s270, %s273
      %p279 = scmp.eq.s32.totalorder %s20, 0
      %p280 = por %p278, %p279
      %p281 = scmp.ne.s32.totalorder %s270, %s273
      %p282 = scmp.eq.s32.totalorder %s25, 1
      %p283 = por %p281, %p282
      %p284 = scmp.ne.s32.totalorder %s273, %s274
      %p285 = scmp.eq.s32.totalorder %s25, 0
      %p286 = por %p284, %p285
      %p287 = scmp.ne.s32.totalorder %s273, %s274
      %p288 = scmp.eq.s32.totalorder %s26, 1
      %p289 = por %p287, %p288
      %p291 = scmp.ne.s32.totalorder %s274, %s290
      %p292 = scmp.eq.s32.totalorder %s26, 0
      %p293 = por %p291, %p292
      %s294 = ssub.s32 %s20, %s27
      %p295 = scmp.eq.s32.totalorder %s294, 0
      %s297 = sadd.s32 %s296, 1
      %s298 = scalar_select %p295, %s296, %s297
      %p301 = pneg %p295
      %p302 = scmp.eq.s32.totalorder %s20, 1
      %p303 = por %p301, %p302
      %p304 = scmp.ne.s32.totalorder %s296, %s299
      %p305 = scmp.eq.s32.totalorder %s20, 0
      %p306 = por %p304, %p305
      %p307 = scmp.ne.s32.totalorder %s296, %s299
      %p308 = scmp.eq.s32.totalorder %s25, 1
      %p309 = por %p307, %p308
      %p310 = scmp.ne.s32.totalorder %s299, %s300
      %p311 = scmp.eq.s32.totalorder %s25, 0
      %p312 = por %p310, %p311
      %p313 = scmp.ne.s32.totalorder %s299, %s300
      %p314 = scmp.eq.s32.totalorder %s26, 1
      %p315 = por %p313, %p314
      %p317 = scmp.ne.s32.totalorder %s300, %s316
      %p318 = scmp.eq.s32.totalorder %s26, 0
      %p319 = por %p317, %p318
      %s321 = sadd.s32 %s320, 1
      %p324 = scmp.eq.s32.totalorder %s20, 1
      %p325 = scmp.ne.s32.totalorder %s320, %s322
      %p326 = scmp.eq.s32.totalorder %s20, 0
      %p327 = por %p325, %p326
      %p328 = scmp.ne.s32.totalorder %s320, %s322
      %p329 = scmp.eq.s32.totalorder %s25, 1
      %p330 = por %p328, %p329
      %p331 = scmp.ne.s32.totalorder %s322, %s323
      %p332 = scmp.eq.s32.totalorder %s25, 0
      %p333 = por %p331, %p332
      %p334 = scmp.ne.s32.totalorder %s322, %s323
      %p335 = scmp.eq.s32.totalorder %s26, 1
      %p336 = por %p334, %p335
      %p338 = scmp.ne.s32.totalorder %s323, %s337
      %p339 = scmp.eq.s32.totalorder %s26, 0
      %p340 = por %p338, %p339
      %p341 = scmp.le.s32.totalorder 1, %s20
      %p342 = scmp.lt.s32.totalorder %s20, 3
      %p343 = pnand %p341, %p342
      %p344 = pneg %p343
      // Predicated region
      $region9: #{decoder_pallas.1} parent=5 // pred_check
        _
      $region10: #{decoder_pallas.1} parent=5 // pred_check_branch
        %346 = sbr.rel (%p343) target = $region12
      $region11: #{decoder_pallas.1} parent=5 // pred_region
        %s347 = ssub.s32 %s20, 1
        // Predicated region
        $region13: #{decoder_pallas.1} parent=11 // pred_check
          %p348 = pneg %p41
        $region14: #{decoder_pallas.1} parent=11 // pred_check_branch
          %350 = sbr.rel (%p348) target = $region16
        $region15: #{decoder_pallas.1} parent=11 // pred_region
          %352 = vsyncadd [#allocation3], 0
          %s353 = sshll.u32 %s0, 4
          %s354 = int_to_ptr.hbm [resolvable:$true] %s353
          %s355 = sshll.u32 [#allocation2], 4
          %s356 = int_to_ptr.vmem [resolvable:$true] %s355
          %361 = dma.hbm_to_vmem [thread:$0]  %s354, 512, %s356, [#allocation3], 128, 128, 8
        $region16: #{decoder_pallas.1} parent=11 // pred_fallthru
          _
        // Predicated region
        $region17: #{decoder_pallas.1} parent=11 // pred_check
          %p362 = pneg %p62
        $region18: #{decoder_pallas.1} parent=11 // pred_check_branch
          %364 = sbr.rel (%p362) target = $region20
        $region19: #{decoder_pallas.1} parent=11 // pred_region
          _
        $region20: #{decoder_pallas.1} parent=11 // pred_fallthru
          _
        // Predicated region
        $region21: #{decoder_pallas.1} parent=11 // pred_check
          %p365 = pneg %p83
        $region22: #{decoder_pallas.1} parent=11 // pred_check_branch
          %367 = sbr.rel (%p365) target = $region24
        $region23: #{decoder_pallas.1} parent=11 // pred_region
          _
        $region24: #{decoder_pallas.1} parent=11 // pred_fallthru
          _
        // Predicated region
        $region25: #{decoder_pallas.1} parent=11 // pred_check
          %p368 = pneg %p104
        $region26: #{decoder_pallas.1} parent=11 // pred_check_branch
          %370 = sbr.rel (%p368) target = $region28
        $region27: #{decoder_pallas.1} parent=11 // pred_region
          _
        $region28: #{decoder_pallas.1} parent=11 // pred_fallthru
          _
      $region12: #{decoder_pallas.1} parent=5 // pred_fallthru
        _
      %p371 = scmp.lt.s32.totalorder %s20, 2
      // Predicated region
      $region29: #{decoder_pallas.1} parent=5 // pred_check
        %p372 = pneg %p371
      $region30: #{decoder_pallas.1} parent=5 // pred_check_branch
        %374 = sbr.rel (%p372) target = $region32
      $region31: #{decoder_pallas.1} parent=5 // pred_region
        // Predicated region
        $region33: #{decoder_pallas.1} parent=31 // pred_check
          %p375 = pneg %p124
        $region34: #{decoder_pallas.1} parent=31 // pred_check_branch
          %377 = sbr.rel (%p375) target = $region36
        $region35: #{decoder_pallas.1} parent=31 // pred_region
          %p378 = scmp.lt.s32.totalorder %s20, 1
          %s379 = scalar_select %p378, %s20, 1
          %s380 = smul.addr %s379, 48
          %s381 = smul.addr %s380, 4
          %s382 = scalar_lea.vmem %s4, %s381
        $region36: #{decoder_pallas.1} parent=31 // pred_fallthru
          _
        // Predicated region
        $region37: #{decoder_pallas.1} parent=31 // pred_check
          %p383 = pneg %p150
        $region38: #{decoder_pallas.1} parent=31 // pred_check_branch
          %385 = sbr.rel (%p383) target = $region40
        $region39: #{decoder_pallas.1} parent=31 // pred_region
          %p386 = scmp.lt.s32.totalorder %s20, 1
          %s387 = scalar_select %p386, %s20, 1
          %s388 = smul.addr %s387, 16
          %s389 = smul.addr %s388, 4
          %s390 = scalar_lea.vmem %s5, %s389
        $region40: #{decoder_pallas.1} parent=31 // pred_fallthru
          _
        // Predicated region
        $region41: #{decoder_pallas.1} parent=31 // pred_check
          %p391 = pneg %p176
        $region42: #{decoder_pallas.1} parent=31 // pred_check_branch
          %393 = sbr.rel (%p391) target = $region44
        $region43: #{decoder_pallas.1} parent=31 // pred_region
          %p394 = scmp.lt.s32.totalorder %s20, 1
          %s395 = scalar_select %p394, %s20, 1
          %s396 = smul.addr %s395, 16
          %s397 = smul.addr %s396, 4
          %s398 = scalar_lea.vmem %s6, %s397
        $region44: #{decoder_pallas.1} parent=31 // pred_fallthru
          _
        // Predicated region
        $region45: #{decoder_pallas.1} parent=31 // pred_check
          %p399 = pneg %p202
        $region46: #{decoder_pallas.1} parent=31 // pred_check_branch
          %401 = sbr.rel (%p399) target = $region48
        $region47: #{decoder_pallas.1} parent=31 // pred_region
          %p402 = scmp.lt.s32.totalorder %s20, 1
          %s403 = scalar_select %p402, %s20, 1
          %s404 = smul.addr %s403, 32
          %s405 = smul.addr %s404, 4
          %s406 = scalar_lea.vmem %s7, %s405
        $region48: #{decoder_pallas.1} parent=31 // pred_fallthru
          _
        // Predicated region
        $region49: #{decoder_pallas.1} parent=31 // pred_check
          %p407 = pneg %p228
        $region50: #{decoder_pallas.1} parent=31 // pred_check_branch
          %409 = sbr.rel (%p407) target = $region52
        $region51: #{decoder_pallas.1} parent=31 // pred_region
          %p410 = scmp.lt.s32.totalorder %s20, 1
          %s411 = scalar_select %p410, %s20, 1
          %s412 = smul.addr %s411, 16
          %s413 = smul.addr %s412, 4
          %s414 = scalar_lea.vmem %s8, %s413
        $region52: #{decoder_pallas.1} parent=31 // pred_fallthru
          _
        // Predicated region
        $region53: #{decoder_pallas.1} parent=31 // pred_check
          %p415 = pneg %p254
        $region54: #{decoder_pallas.1} parent=31 // pred_check_branch
          %417 = sbr.rel (%p415) target = $region56
        $region55: #{decoder_pallas.1} parent=31 // pred_region
          %p418 = scmp.lt.s32.totalorder %s20, 1
          %s419 = scalar_select %p418, %s20, 1
          %s420 = smul.addr %s419, 32
          %s421 = smul.addr %s420, 4
          %s422 = scalar_lea.vmem %s9, %s421
        $region56: #{decoder_pallas.1} parent=31 // pred_fallthru
          _
        // Predicated region
        $region57: #{decoder_pallas.1} parent=31 // pred_check
          %p423 = pneg %p280
        $region58: #{decoder_pallas.1} parent=31 // pred_check_branch
          %425 = sbr.rel (%p423) target = $region60
        $region59: #{decoder_pallas.1} parent=31 // pred_region
          %p426 = scmp.lt.s32.totalorder %s20, 1
          %s427 = scalar_select %p426, %s20, 1
          %s428 = smul.addr %s427, 32
          %s429 = smul.addr %s428, 4
          %s430 = scalar_lea.vmem %s10, %s429
        $region60: #{decoder_pallas.1} parent=31 // pred_fallthru
          _
        // Predicated region
        $region61: #{decoder_pallas.1} parent=31 // pred_check
          %p431 = pneg %p306
        $region62: #{decoder_pallas.1} parent=31 // pred_check_branch
          %433 = sbr.rel (%p431) target = $region64
        $region63: #{decoder_pallas.1} parent=31 // pred_region
          %p434 = scmp.lt.s32.totalorder %s20, 1
          %s435 = scalar_select %p434, %s20, 1
          %s436 = smul.addr %s435, 6
          %s437 = smul.addr %s436, 8
          %s438 = scalar_lea.vmem %s11, %s437
        $region64: #{decoder_pallas.1} parent=31 // pred_fallthru
          _
      $region32: #{decoder_pallas.1} parent=5 // pred_fallthru
        _
      %p439 = scmp.le.s32.totalorder 1, %s20
      %p440 = scmp.lt.s32.totalorder %s20, 3
      %p441 = pnand %p439, %p440
      %p442 = pneg %p441
      // Predicated region
      $region65: #{decoder_pallas.1} parent=5 // pred_check
        _
      $region66: #{decoder_pallas.1} parent=5 // pred_check_branch
        %444 = sbr.rel (%p441) target = $region68
      $region67: #{decoder_pallas.1} parent=5 // pred_region
        %s445 = ssub.s32 %s20, 1
        // Predicated region
        $region69: #{decoder_pallas.1} parent=67 // pred_check
          %p446 = pneg %p41
        $region70: #{decoder_pallas.1} parent=67 // pred_check_branch
          %448 = sbr.rel (%p446) target = $region72
        $region71: #{decoder_pallas.1} parent=67 // pred_region
          %450 = dma.done [#allocation3], 512
        $region72: #{decoder_pallas.1} parent=67 // pred_fallthru
          _
        %p451 = pneg %p41
        %p452 = pneg %p38
        %p453 = pneg %p62
        %p454 = pneg %p59
        %p455 = pneg %p83
        %p456 = pneg %p80
        %p457 = pneg %p104
        %p458 = pneg %p101
        %p459 = scmp.lt.s32.totalorder %s25, 1
        %s460 = scalar_select %p459, %s25, 1
        %s461 = smul.addr %s460, 48
        %s462 = smul.addr %s461, 4
        %s463 = scalar_lea.vmem %s4, %s462
        %p464 = pneg %p130
        %p465 = pneg %p127
        %p466 = scmp.lt.s32.totalorder %s25, 1
        %s467 = scalar_select %p466, %s25, 1
        %s468 = smul.addr %s467, 16
        %s469 = smul.addr %s468, 4
        %s470 = scalar_lea.vmem %s5, %s469
        %p471 = pneg %p156
        %p472 = pneg %p153
        %p473 = scmp.lt.s32.totalorder %s25, 1
        %s474 = scalar_select %p473, %s25, 1
        %s475 = smul.addr %s474, 16
        %s476 = smul.addr %s475, 4
        %s477 = scalar_lea.vmem %s6, %s476
        %p478 = pneg %p182
        %p479 = pneg %p179
        %p480 = scmp.lt.s32.totalorder %s25, 1
        %s481 = scalar_select %p480, %s25, 1
        %s482 = smul.addr %s481, 32
        %s483 = smul.addr %s482, 4
        %s484 = scalar_lea.vmem %s7, %s483
        %p485 = pneg %p208
        %p486 = pneg %p205
        %p487 = scmp.lt.s32.totalorder %s25, 1
        %s488 = scalar_select %p487, %s25, 1
        %s489 = smul.addr %s488, 16
        %s490 = smul.addr %s489, 4
        %s491 = scalar_lea.vmem %s8, %s490
        %p492 = pneg %p234
        %p493 = pneg %p231
        %p494 = scmp.lt.s32.totalorder %s25, 1
        %s495 = scalar_select %p494, %s25, 1
        %s496 = smul.addr %s495, 32
        %s497 = smul.addr %s496, 4
        %s498 = scalar_lea.vmem %s9, %s497
        %p499 = pneg %p260
        %p500 = pneg %p257
        %p501 = scmp.lt.s32.totalorder %s25, 1
        %s502 = scalar_select %p501, %s25, 1
        %s503 = smul.addr %s502, 32
        %s504 = smul.addr %s503, 4
        %s505 = scalar_lea.vmem %s10, %s504
        %p506 = pneg %p286
        %p507 = pneg %p283
        %p508 = scmp.lt.s32.totalorder %s25, 1
        %s509 = scalar_select %p508, %s25, 1
        %s510 = smul.addr %s509, 6
        %s511 = smul.addr %s510, 8
        %s512 = scalar_lea.vmem %s11, %s511
        %p513 = pneg %p312
        %p514 = pneg %p309
        %p515 = pneg %p333
        %p516 = pneg %p330
        %p517 = scmp.lt.s32.totalorder %s25, 1
        %s518 = scalar_select %p517, %s25, 1
        %s519 = smul.addr %s518, 48
        %s520 = smul.addr %s519, 4
        %s521 = scalar_lea.vmem %s4, %s520
        %p522 = scmp.lt.s32.totalorder %s25, 1
        %s523 = scalar_select %p522, %s25, 1
        %s524 = smul.addr %s523, 16
        %s525 = smul.addr %s524, 4
        %s526 = scalar_lea.vmem %s5, %s525
        %p527 = scmp.lt.s32.totalorder %s25, 1
        %s528 = scalar_select %p527, %s25, 1
        %s529 = smul.addr %s528, 16
        %s530 = smul.addr %s529, 4
        %s531 = scalar_lea.vmem %s6, %s530
        %p532 = scmp.lt.s32.totalorder %s25, 1
        %s533 = scalar_select %p532, %s25, 1
        %s534 = smul.addr %s533, 32
        %s535 = smul.addr %s534, 4
        %s536 = scalar_lea.vmem %s7, %s535
        %p537 = scmp.lt.s32.totalorder %s25, 1
        %s538 = scalar_select %p537, %s25, 1
        %s539 = smul.addr %s538, 16
        %s540 = smul.addr %s539, 4
        %s541 = scalar_lea.vmem %s8, %s540
        %p542 = scmp.lt.s32.totalorder %s25, 1
        %s543 = scalar_select %p542, %s25, 1
        %s544 = smul.addr %s543, 32
        %s545 = smul.addr %s544, 4
        %s546 = scalar_lea.vmem %s9, %s545
        %p547 = scmp.lt.s32.totalorder %s25, 1
        %s548 = scalar_select %p547, %s25, 1
        %s549 = smul.addr %s548, 32
        %s550 = smul.addr %s549, 4
        %s551 = scalar_lea.vmem %s10, %s550
        %p552 = scmp.lt.s32.totalorder %s25, 1
        %s553 = scalar_select %p552, %s25, 1
        %s554 = smul.addr %s553, 6
        %s555 = smul.addr %s554, 8
        %s556 = scalar_lea.vmem %s11, %s555
        %p558 = scmp.eq.s32.totalorder %s25, 0
        // Predicated region
        $region73: #{decoder_pallas.1} parent=67 // pred_check
          %p559 = pneg %p558
        $region74: #{decoder_pallas.1} parent=67 // pred_check_branch
          %561 = sbr.rel (%p559) target = $region76
        $region75: #{decoder_pallas.1} parent=67 // pred_region
          %v562 = vld [vmem:[#allocation2] sm:$0xff]
          %v563 = vld [vmem:[#allocation2 + $0x8] sm:$0xff]
          %v564 = vld [vmem:[#allocation2 + $0x10] sm:$0xff]
          %v565 = vld [vmem:[#allocation2 + $0x18] sm:$0xff]
          %566 = vst [vmem:[#allocation5] sm:$0xff] %v562
          %567 = vst [vmem:[#allocation5 + $0x8] sm:$0xff] %v563
          %568 = vst [vmem:[#allocation5 + $0x10] sm:$0xff] %v564
          %569 = vst [vmem:[#allocation5 + $0x18] sm:$0xff] %v565
        $region76: #{decoder_pallas.1} parent=67 // pred_fallthru
          _
        %v570 = vld [vmem:[%s556] sm:$0xff]
        %v571 = vld [vmem:[%s556 + $0x8] sm:$0xff]
        %v572 = vld [vmem:[%s556 + $0x10] sm:$0xff]
        %v573 = vld [vmem:[%s556 + $0x18] sm:$0xff]
        %v574 = vld [vmem:[%s2] sm:$0xf]
        %v575 = vld [vmem:[%s2 + $0x4] sm:$0xf]
        %v576 = vunpack.c.l.bf16 %v574
        %v577 = vunpack.c.l.bf16 %v575
        %v578 = vsub.f32 %v576, 1.0
        %v579 = vsub.f32 %v577, 1.0
        %v580 = vmul.f32 %v578, 1e+09
        %v581 = vmul.f32 %v579, 1e+09
        %v582 = vld [vmem:[%s3] sm:$0xf]
        %v583 = vld [vmem:[%s3 + $0x4] sm:$0xf]
        %v584 = vunpack.c.l.bf16 %v582
        %v585 = vunpack.c.l.bf16 %v583
        %v586 = vsub.f32 %v584, 1.0
        %v587 = vsub.f32 %v585, 1.0
        %v588 = vmul.f32 %v586, 1e+09
        %v589 = vmul.f32 %v587, 1e+09
        %v590 = vld [vmem:[#allocation5] sm:$0xff]
        %v591 = vld [vmem:[#allocation5 + $0x8] sm:$0xff]
        %v592 = vld [vmem:[#allocation5 + $0x10] sm:$0xff]
        %v593 = vld [vmem:[#allocation5 + $0x18] sm:$0xff]
        %v594 = vld [vmem:[%s1] sm:$0xff]
        %v595 = vld [vmem:[%s1 + $0x8] sm:$0xff]
        %v596 = vld [vmem:[%s1 + $0x10] sm:$0xff]
        %v597 = vld [vmem:[%s1 + $0x18] sm:$0xff]
        %v598 = vpack.c.bf16 %v594, %v594
        %v599 = vpack.c.bf16 %v595, %v595
        %v600 = vpack.c.bf16 %v596, %v596
        %v601 = vpack.c.bf16 %v597, %v597
        %v602 = vpack.c.bf16 %v591, %v590
        %v603 = vpack.c.bf16 %v593, %v592
        %v604 = vld [vmem:[%s521] sm:$0xff]
        %v605 = vld [vmem:[%s521 + $0x8] sm:$0xf]
        %v606 = vld [vmem:[%s521 + $0xc] sm:$0xff]
        %v607 = vld [vmem:[%s521 + $0x14] sm:$0xf]
        %v608 = vld [vmem:[%s521 + $0x18] sm:$0xff]
        %v609 = vld [vmem:[%s521 + $0x20] sm:$0xf]
        %v610 = vld [vmem:[%s521 + $0x24] sm:$0xff]
        %v611 = vld [vmem:[%s521 + $0x2c] sm:$0xf]
        %v612 = vld [vmem:[%s521 + $0x30] sm:$0xff]
        %v613 = vld [vmem:[%s521 + $0x38] sm:$0xf]
        %v614 = vld [vmem:[%s521 + $0x3c] sm:$0xff]
        %v615 = vld [vmem:[%s521 + $0x44] sm:$0xf]
        %v616 = vld [vmem:[%s521 + $0x48] sm:$0xff]
        %v617 = vld [vmem:[%s521 + $0x50] sm:$0xf]
        %v618 = vld [vmem:[%s521 + $0x54] sm:$0xff]
        %v619 = vld [vmem:[%s521 + $0x5c] sm:$0xf]
        %v620 = vld [vmem:[%s521 + $0x60] sm:$0xff]
        %v621 = vld [vmem:[%s521 + $0x68] sm:$0xf]
        %v622 = vld [vmem:[%s521 + $0x6c] sm:$0xff]
        %v623 = vld [vmem:[%s521 + $0x74] sm:$0xf]
        %v624 = vld [vmem:[%s521 + $0x78] sm:$0xff]
        %v625 = vld [vmem:[%s521 + $0x80] sm:$0xf]
        %v626 = vld [vmem:[%s521 + $0x84] sm:$0xff]
        %v627 = vld [vmem:[%s521 + $0x8c] sm:$0xf]
        %v628 = vld [vmem:[%s521 + $0x90] sm:$0xff]
        %v629 = vld [vmem:[%s521 + $0x98] sm:$0xf]
        %v630 = vld [vmem:[%s521 + $0x9c] sm:$0xff]
        %v631 = vld [vmem:[%s521 + $0xa4] sm:$0xf]
        %v632 = vld [vmem:[%s521 + $0xa8] sm:$0xff]
        %v633 = vld [vmem:[%s521 + $0xb0] sm:$0xf]
        %v634 = vld [vmem:[%s521 + $0xb4] sm:$0xff]
        %v635 = vld [vmem:[%s521 + $0xbc] sm:$0xf]
        %v636 = vperm.slane %v570, 0
        %v637 = vperm.slane %v571, 0
        %v638 = vperm.slane %v572, 0
        %v671 = vunpack.c.l.b16 %v604
        %v672 = vunpack.c.h.b16 %v604
        %v673 = vunpack.c.l.b16 %v605
        %v674 = vunpack.c.l.b16 %v606
        %v675 = vunpack.c.h.b16 %v606
        %v676 = vunpack.c.l.b16 %v607
        %v677 = vunpack.c.l.b16 %v608
        %v678 = vunpack.c.h.b16 %v608
        %v679 = vunpack.c.l.b16 %v609
        %v680 = vunpack.c.l.b16 %v610
        %v681 = vunpack.c.h.b16 %v610
        %v682 = vunpack.c.l.b16 %v611
        %v683 = vunpack.c.l.b16 %v612
        %v684 = vunpack.c.h.b16 %v612
        %v685 = vunpack.c.l.b16 %v613
        %v686 = vunpack.c.l.b16 %v614
        %v687 = vunpack.c.h.b16 %v614
        %v688 = vunpack.c.l.b16 %v615
        %v689 = vunpack.c.l.b16 %v616
        %v690 = vunpack.c.h.b16 %v616
        %v691 = vunpack.c.l.b16 %v617
        %v692 = vunpack.c.l.b16 %v618
        %v693 = vunpack.c.h.b16 %v618
        %v694 = vunpack.c.l.b16 %v619
        %v695 = vunpack.c.l.b16 %v620
        %v696 = vunpack.c.h.b16 %v620
        %v697 = vunpack.c.l.b16 %v621
        %v698 = vunpack.c.l.b16 %v622
        %v699 = vunpack.c.h.b16 %v622
        %v700 = vunpack.c.l.b16 %v623
        %v701 = vunpack.c.l.b16 %v624
        %v702 = vunpack.c.h.b16 %v624
        %v703 = vunpack.c.l.b16 %v625
        %v704 = vunpack.c.l.b16 %v626
        %v705 = vunpack.c.h.b16 %v626
        %v706 = vunpack.c.l.b16 %v627
        %v707 = vunpack.c.l.b16 %v628
        %v708 = vunpack.c.h.b16 %v628
        %v709 = vunpack.c.l.b16 %v629
        %v710 = vunpack.c.l.b16 %v630
        %v711 = vunpack.c.h.b16 %v630
        %v712 = vunpack.c.l.b16 %v631
        %v713 = vunpack.c.l.b16 %v632
        %v714 = vunpack.c.h.b16 %v632
        %v715 = vunpack.c.l.b16 %v633
        %v716 = vunpack.c.l.b16 %v634
        %v717 = vunpack.c.h.b16 %v634
        %v718 = vunpack.c.l.b16 %v635
        %v719 = vpack.c.b16 %v674, %v671
        %v720 = vpack.c.b16 %v675, %v672
        %v721 = vpack.c.b16 %v676, %v673
        %v722 = vpack.c.b16 %v680, %v677
        %v723 = vpack.c.b16 %v681, %v678
        %v724 = vpack.c.b16 %v682, %v679
        %v725 = vpack.c.b16 %v686, %v683
        %v726 = vpack.c.b16 %v687, %v684
        %v727 = vpack.c.b16 %v688, %v685
        %v728 = vpack.c.b16 %v692, %v689
        %v729 = vpack.c.b16 %v693, %v690
        %v730 = vpack.c.b16 %v694, %v691
        %v731 = vpack.c.b16 %v698, %v695
        %v732 = vpack.c.b16 %v699, %v696
        %v733 = vpack.c.b16 %v700, %v697
        %v734 = vpack.c.b16 %v704, %v701
        %v735 = vpack.c.b16 %v705, %v702
        %v736 = vpack.c.b16 %v706, %v703
        %v737 = vpack.c.b16 %v710, %v707
        %v738 = vpack.c.b16 %v711, %v708
        %v739 = vpack.c.b16 %v712, %v709
        %v740 = vpack.c.b16 %v716, %v713
        %v741 = vpack.c.b16 %v717, %v714
        %v742 = vpack.c.b16 %v718, %v715
        %767 = vmatpush.bf16.msra.mxu0 %v740
        %768 = vmatpush.bf16.msra.mxu0 %v737
        %769 = vmatpush.bf16.msra.mxu0 %v734
        %770 = vmatpush.bf16.msra.mxu0 %v731
        %771 = vmatpush.bf16.msra.mxu0 %v728
        %772 = vmatpush.bf16.msra.mxu0 %v725
        %773 = vmatpush.bf16.msra.mxu0 %v722
        %774 = vmatpush.bf16.msra.mxu0 %v719
        %775 = vmatmul.bf16.gmra.mxu0 %v602
        %v776 = vpop.f32.mrf.mxu0
        %v777 = vadd.f32 %v636, %v776
        %v778 = vpop.f32.mrf.mxu0
        %v779 = vadd.f32 %v636, %v778
        %780 = vmatmul.bf16.gmra.mxu0 %v603
        %v781 = vpop.f32.mrf.mxu0
        %v782 = vadd.f32 %v636, %v781
        %v783 = vpop.f32.mrf.mxu0
        %v784 = vadd.f32 %v636, %v783
        %785 = vdwg.mxu0
        %786 = vmatpush.bf16.msra.mxu0 %v741
        %787 = vmatpush.bf16.msra.mxu0 %v738
        %788 = vmatpush.bf16.msra.mxu0 %v735
        %789 = vmatpush.bf16.msra.mxu0 %v732
        %790 = vmatpush.bf16.msra.mxu0 %v729
        %791 = vmatpush.bf16.msra.mxu0 %v726
        %792 = vmatpush.bf16.msra.mxu0 %v723
        %793 = vmatpush.bf16.msra.mxu0 %v720
        %794 = vmatmul.bf16.gmra.mxu0 %v602
        %v795 = vpop.f32.mrf.mxu0
        %v796 = vadd.f32 %v637, %v795
        %v797 = vpop.f32.mrf.mxu0
        %v798 = vadd.f32 %v637, %v797
        %799 = vmatmul.bf16.gmra.mxu0 %v603
        %v800 = vpop.f32.mrf.mxu0
        %v801 = vadd.f32 %v637, %v800
        %v802 = vpop.f32.mrf.mxu0
        %v803 = vadd.f32 %v637, %v802
        %804 = vdwg.mxu0
        %805 = vmatpush.bf16.msra.mxu0 %v742
        %806 = vmatpush.bf16.msra.mxu0 %v739
        %807 = vmatpush.bf16.msra.mxu0 %v736
        %808 = vmatpush.bf16.msra.mxu0 %v733
        %809 = vmatpush.bf16.msra.mxu0 %v730
        %810 = vmatpush.bf16.msra.mxu0 %v727
        %811 = vmatpush.bf16.msra.mxu0 %v724
        %812 = vmatpush.bf16.msra.mxu0 %v721
        %813 = vmatmul.bf16.gmra.mxu0 %v602
        %v814 = vpop.f32.mrf.mxu0
        %v815 = vadd.f32 %v638, %v814
        %v816 = vpop.f32.mrf.mxu0
        %v817 = vadd.f32 %v638, %v816
        %818 = vmatmul.bf16.gmra.mxu0 %v603
        %v819 = vpop.f32.mrf.mxu0
        %v820 = vadd.f32 %v638, %v819
        %v821 = vpop.f32.mrf.mxu0
        %v822 = vadd.f32 %v638, %v821
        %823 = vdwg.mxu0
        %v824 = vld [vmem:[%s526] sm:$0xf]
        %v825 = vld [vmem:[%s526 + $0x4] sm:$0xf]
        %v826 = vld [vmem:[%s526 + $0x8] sm:$0xf]
        %v827 = vld [vmem:[%s526 + $0xc] sm:$0xf]
        %v828 = vld [vmem:[%s526 + $0x10] sm:$0xf]
        %v829 = vld [vmem:[%s526 + $0x14] sm:$0xf]
        %v830 = vld [vmem:[%s526 + $0x18] sm:$0xf]
        %v831 = vld [vmem:[%s526 + $0x1c] sm:$0xf]
        %v832 = vld [vmem:[%s526 + $0x20] sm:$0xf]
        %v833 = vld [vmem:[%s526 + $0x24] sm:$0xf]
        %v834 = vld [vmem:[%s526 + $0x28] sm:$0xf]
        %v835 = vld [vmem:[%s526 + $0x2c] sm:$0xf]
        %v836 = vld [vmem:[%s526 + $0x30] sm:$0xf]
        %v837 = vld [vmem:[%s526 + $0x34] sm:$0xf]
        %v838 = vld [vmem:[%s526 + $0x38] sm:$0xf]
        %v839 = vld [vmem:[%s526 + $0x3c] sm:$0xf]
        %844 = vrot.lane.b32.xlu0 %v777, 96
        %v845 = vpop.permute.xlu0 %844
        %846 = vrot.lane.b32.xlu0 %v779, 96
        %v847 = vpop.permute.xlu0 %846
        %848 = vrot.lane.b32.xlu0 %v782, 96
        %v849 = vpop.permute.xlu0 %848
        %850 = vrot.lane.b32.xlu0 %v784, 96
        %v851 = vpop.permute.xlu0 %850
        %856 = vrot.lane.b32.xlu0 %v777, 64
        %v857 = vpop.permute.xlu0 %856
        %858 = vrot.lane.b32.xlu0 %v779, 64
        %v859 = vpop.permute.xlu0 %858
        %860 = vrot.lane.b32.xlu0 %v782, 64
        %v861 = vpop.permute.xlu0 %860
        %862 = vrot.lane.b32.xlu0 %v784, 64
        %v863 = vpop.permute.xlu0 %862
        %868 = vrot.lane.b32.xlu0 %v777, 32
        %v869 = vpop.permute.xlu0 %868
        %870 = vrot.lane.b32.xlu0 %v779, 32
        %v871 = vpop.permute.xlu0 %870
        %872 = vrot.lane.b32.xlu0 %v782, 32
        %v873 = vpop.permute.xlu0 %872
        %874 = vrot.lane.b32.xlu0 %v784, 32
        %v875 = vpop.permute.xlu0 %874
        %v880 = vrot.slane %v857, 4
        %vm881 = vcmask 1047556
        %v882 = vsel %vm881, %v880, %v777
        %v883 = vrot.slane %v777, 4
        %v884 = vsel %vm881, %v857, %v883
        %v886 = vunpack.c.l.s4 1983009808
        %v887 = vunpack.c.0.s8 %v886
        %v888 = vperm.slane %v882, %v887
        %v890 = vunpack.c.l.s4 1983009808
        %v891 = vunpack.c.0.s8 %v890
        %v892 = vperm.slane %v884, %v891
        %v893 = vrot.slane %v869, 4
        %v894 = vsel %vm881, %v893, %v845
        %v895 = vrot.slane %v845, 4
        %v896 = vsel %vm881, %v869, %v895
        %v898 = vunpack.c.l.s4 1983009808
        %v899 = vunpack.c.0.s8 %v898
        %v900 = vperm.slane %v894, %v899
        %v902 = vunpack.c.l.s4 1983009808
        %v903 = vunpack.c.0.s8 %v902
        %v904 = vperm.slane %v896, %v903
        %v905 = vrot.slane %v900, 4
        %v906 = vsel %vm881, %v905, %v888
        %v907 = vrot.slane %v888, 4
        %v908 = vsel %vm881, %v900, %v907
        %v910 = vunpack.c.l.s4 1934713408
        %v911 = vunpack.c.0.s8 %v910
        %v912 = vperm.slane %v906, %v911
        %v914 = vunpack.c.l.s4 1934713408
        %v915 = vunpack.c.0.s8 %v914
        %v916 = vperm.slane %v908, %v915
        %v917 = vrot.slane %v904, 4
        %v918 = vsel %vm881, %v917, %v892
        %v919 = vrot.slane %v892, 4
        %v920 = vsel %vm881, %v904, %v919
        %v922 = vunpack.c.l.s4 1934713408
        %v923 = vunpack.c.0.s8 %v922
        %v924 = vperm.slane %v918, %v923
        %v926 = vunpack.c.l.s4 1934713408
        %v927 = vunpack.c.0.s8 %v926
        %v928 = vperm.slane %v920, %v927
        %v929 = vrot.slane %v912, 4
        %v930 = vsel %vm881, 0.0, %v929
        %v931 = vrot.slane %v916, 4
        %v932 = vsel %vm881, 0.0, %v931
        %v933 = vrot.slane %v924, 4
        %v934 = vsel %vm881, 0.0, %v933
        %v935 = vrot.slane %v928, 4
        %v936 = vsel %vm881, 0.0, %v935
        %v937 = vrot.slane %v859, 4
        %v938 = vsel %vm881, %v937, %v779
        %v939 = vrot.slane %v779, 4
        %v940 = vsel %vm881, %v859, %v939
        %v942 = vunpack.c.l.s4 1983009808
        %v943 = vunpack.c.0.s8 %v942
        %v944 = vperm.slane %v938, %v943
        %v946 = vunpack.c.l.s4 1983009808
        %v947 = vunpack.c.0.s8 %v946
        %v948 = vperm.slane %v940, %v947
        %v949 = vrot.slane %v871, 4
        %v950 = vsel %vm881, %v949, %v847
        %v951 = vrot.slane %v847, 4
        %v952 = vsel %vm881, %v871, %v951
        %v954 = vunpack.c.l.s4 1983009808
        %v955 = vunpack.c.0.s8 %v954
        %v956 = vperm.slane %v950, %v955
        %v958 = vunpack.c.l.s4 1983009808
        %v959 = vunpack.c.0.s8 %v958
        %v960 = vperm.slane %v952, %v959
        %v961 = vrot.slane %v956, 4
        %v962 = vsel %vm881, %v961, %v944
        %v963 = vrot.slane %v944, 4
        %v964 = vsel %vm881, %v956, %v963
        %v966 = vunpack.c.l.s4 1934713408
        %v967 = vunpack.c.0.s8 %v966
        %v968 = vperm.slane %v962, %v967
        %v970 = vunpack.c.l.s4 1934713408
        %v971 = vunpack.c.0.s8 %v970
        %v972 = vperm.slane %v964, %v971
        %v973 = vrot.slane %v960, 4
        %v974 = vsel %vm881, %v973, %v948
        %v975 = vrot.slane %v948, 4
        %v976 = vsel %vm881, %v960, %v975
        %v978 = vunpack.c.l.s4 1934713408
        %v979 = vunpack.c.0.s8 %v978
        %v980 = vperm.slane %v974, %v979
        %v982 = vunpack.c.l.s4 1934713408
        %v983 = vunpack.c.0.s8 %v982
        %v984 = vperm.slane %v976, %v983
        %v985 = vrot.slane %v968, 4
        %v986 = vsel %vm881, 0.0, %v985
        %v987 = vrot.slane %v972, 4
        %v988 = vsel %vm881, 0.0, %v987
        %v989 = vrot.slane %v980, 4
        %v990 = vsel %vm881, 0.0, %v989
        %v991 = vrot.slane %v984, 4
        %v992 = vsel %vm881, 0.0, %v991
        %v993 = vrot.slane %v861, 4
        %v994 = vsel %vm881, %v993, %v782
        %v995 = vrot.slane %v782, 4
        %v996 = vsel %vm881, %v861, %v995
        %v998 = vunpack.c.l.s4 1983009808
        %v999 = vunpack.c.0.s8 %v998
        %v1000 = vperm.slane %v994, %v999
        %v1002 = vunpack.c.l.s4 1983009808
        %v1003 = vunpack.c.0.s8 %v1002
        %v1004 = vperm.slane %v996, %v1003
        %v1005 = vrot.slane %v873, 4
        %v1006 = vsel %vm881, %v1005, %v849
        %v1007 = vrot.slane %v849, 4
        %v1008 = vsel %vm881, %v873, %v1007
        %v1010 = vunpack.c.l.s4 1983009808
        %v1011 = vunpack.c.0.s8 %v1010
        %v1012 = vperm.slane %v1006, %v1011
        %v1014 = vunpack.c.l.s4 1983009808
        %v1015 = vunpack.c.0.s8 %v1014
        %v1016 = vperm.slane %v1008, %v1015
        %v1017 = vrot.slane %v1012, 4
        %v1018 = vsel %vm881, %v1017, %v1000
        %v1019 = vrot.slane %v1000, 4
        %v1020 = vsel %vm881, %v1012, %v1019
        %v1022 = vunpack.c.l.s4 1934713408
        %v1023 = vunpack.c.0.s8 %v1022
        %v1024 = vperm.slane %v1018, %v1023
        %v1026 = vunpack.c.l.s4 1934713408
        %v1027 = vunpack.c.0.s8 %v1026
        %v1028 = vperm.slane %v1020, %v1027
        %v1029 = vrot.slane %v1016, 4
        %v1030 = vsel %vm881, %v1029, %v1004
        %v1031 = vrot.slane %v1004, 4
        %v1032 = vsel %vm881, %v1016, %v1031
        %v1034 = vunpack.c.l.s4 1934713408
        %v1035 = vunpack.c.0.s8 %v1034
        %v1036 = vperm.slane %v1030, %v1035
        %v1038 = vunpack.c.l.s4 1934713408
        %v1039 = vunpack.c.0.s8 %v1038
        %v1040 = vperm.slane %v1032, %v1039
        %v1041 = vrot.slane %v1024, 4
        %v1042 = vsel %vm881, 0.0, %v1041
        %v1043 = vrot.slane %v1028, 4
        %v1044 = vsel %vm881, 0.0, %v1043
        %v1045 = vrot.slane %v1036, 4
        %v1046 = vsel %vm881, 0.0, %v1045
        %v1047 = vrot.slane %v1040, 4
        %v1048 = vsel %vm881, 0.0, %v1047
        %v1049 = vrot.slane %v863, 4
        %v1050 = vsel %vm881, %v1049, %v784
        %v1051 = vrot.slane %v784, 4
        %v1052 = vsel %vm881, %v863, %v1051
        %v1054 = vunpack.c.l.s4 1983009808
        %v1055 = vunpack.c.0.s8 %v1054
        %v1056 = vperm.slane %v1050, %v1055
        %v1058 = vunpack.c.l.s4 1983009808
        %v1059 = vunpack.c.0.s8 %v1058
        %v1060 = vperm.slane %v1052, %v1059
        %v1061 = vrot.slane %v875, 4
        %v1062 = vsel %vm881, %v1061, %v851
        %v1063 = vrot.slane %v851, 4
        %v1064 = vsel %vm881, %v875, %v1063
        %v1066 = vunpack.c.l.s4 1983009808
        %v1067 = vunpack.c.0.s8 %v1066
        %v1068 = vperm.slane %v1062, %v1067
        %v1070 = vunpack.c.l.s4 1983009808
        %v1071 = vunpack.c.0.s8 %v1070
        %v1072 = vperm.slane %v1064, %v1071
        %v1073 = vrot.slane %v1068, 4
        %v1074 = vsel %vm881, %v1073, %v1056
        %v1075 = vrot.slane %v1056, 4
        %v1076 = vsel %vm881, %v1068, %v1075
        %v1078 = vunpack.c.l.s4 1934713408
        %v1079 = vunpack.c.0.s8 %v1078
        %v1080 = vperm.slane %v1074, %v1079
        %v1082 = vunpack.c.l.s4 1934713408
        %v1083 = vunpack.c.0.s8 %v1082
        %v1084 = vperm.slane %v1076, %v1083
        %v1085 = vrot.slane %v1072, 4
        %v1086 = vsel %vm881, %v1085, %v1060
        %v1087 = vrot.slane %v1060, 4
        %v1088 = vsel %vm881, %v1072, %v1087
        %v1090 = vunpack.c.l.s4 1934713408
        %v1091 = vunpack.c.0.s8 %v1090
        %v1092 = vperm.slane %v1086, %v1091
        %v1094 = vunpack.c.l.s4 1934713408
        %v1095 = vunpack.c.0.s8 %v1094
        %v1096 = vperm.slane %v1088, %v1095
        %v1097 = vrot.slane %v1080, 4
        %v1098 = vsel %vm881, 0.0, %v1097
        %v1099 = vrot.slane %v1084, 4
        %v1100 = vsel %vm881, 0.0, %v1099
        %v1101 = vrot.slane %v1092, 4
        %v1102 = vsel %vm881, 0.0, %v1101
        %v1103 = vrot.slane %v1096, 4
        %v1104 = vsel %vm881, 0.0, %v1103
        %v1105 = vsel %vm881, %v931, %v912
        %v1107 = vunpack.c.l.s4 1983009808
        %v1108 = vunpack.c.0.s8 %v1107
        %v1109 = vperm.slane %v1105, %v1108
        %v1110 = vrot.slane %v932, 4
        %v1111 = vsel %vm881, %v1110, %v930
        %v1113 = vunpack.c.l.s4 1983009808
        %v1114 = vunpack.c.0.s8 %v1113
        %v1115 = vperm.slane %v1111, %v1114
        %v1116 = vsel %vm881, %v935, %v924
        %v1118 = vunpack.c.l.s4 1983009808
        %v1119 = vunpack.c.0.s8 %v1118
        %v1120 = vperm.slane %v1116, %v1119
        %v1121 = vrot.slane %v936, 4
        %v1122 = vsel %vm881, %v1121, %v934
        %v1124 = vunpack.c.l.s4 1983009808
        %v1125 = vunpack.c.0.s8 %v1124
        %v1126 = vperm.slane %v1122, %v1125
        %v1127 = vrot.slane %v1115, 4
        %v1128 = vsel %vm881, %v1127, %v1109
        %v1129 = vrot.slane %v1109, 4
        %v1130 = vsel %vm881, %v1115, %v1129
        %v1132 = vunpack.c.l.s4 1934713408
        %v1133 = vunpack.c.0.s8 %v1132
        %v1134 = vperm.slane %v1128, %v1133
        %v1136 = vunpack.c.l.s4 1934713408
        %v1137 = vunpack.c.0.s8 %v1136
        %v1138 = vperm.slane %v1130, %v1137
        %v1139 = vrot.slane %v1126, 4
        %v1140 = vsel %vm881, %v1139, %v1120
        %v1141 = vrot.slane %v1120, 4
        %v1142 = vsel %vm881, %v1126, %v1141
        %v1144 = vunpack.c.l.s4 1934713408
        %v1145 = vunpack.c.0.s8 %v1144
        %v1146 = vperm.slane %v1140, %v1145
        %v1148 = vunpack.c.l.s4 1934713408
        %v1149 = vunpack.c.0.s8 %v1148
        %v1150 = vperm.slane %v1142, %v1149
        %v1151 = vrot.slane %v1146, 4
        %v1152 = vsel %vm881, %v1151, %v1134
        %v1153 = vrot.slane %v1134, 4
        %v1154 = vsel %vm881, %v1146, %v1153
        %v1155 = vrot.slane %v1150, 4
        %v1156 = vsel %vm881, %v1155, %v1138
        %v1157 = vrot.slane %v1138, 4
        %v1158 = vsel %vm881, %v1150, %v1157
        %v1159 = vsel %vm881, %v987, %v968
        %v1161 = vunpack.c.l.s4 1983009808
        %v1162 = vunpack.c.0.s8 %v1161
        %v1163 = vperm.slane %v1159, %v1162
        %v1164 = vrot.slane %v988, 4
        %v1165 = vsel %vm881, %v1164, %v986
        %v1167 = vunpack.c.l.s4 1983009808
        %v1168 = vunpack.c.0.s8 %v1167
        %v1169 = vperm.slane %v1165, %v1168
        %v1170 = vsel %vm881, %v991, %v980
        %v1172 = vunpack.c.l.s4 1983009808
        %v1173 = vunpack.c.0.s8 %v1172
        %v1174 = vperm.slane %v1170, %v1173
        %v1175 = vrot.slane %v992, 4
        %v1176 = vsel %vm881, %v1175, %v990
        %v1178 = vunpack.c.l.s4 1983009808
        %v1179 = vunpack.c.0.s8 %v1178
        %v1180 = vperm.slane %v1176, %v1179
        %v1181 = vrot.slane %v1169, 4
        %v1182 = vsel %vm881, %v1181, %v1163
        %v1183 = vrot.slane %v1163, 4
        %v1184 = vsel %vm881, %v1169, %v1183
        %v1186 = vunpack.c.l.s4 1934713408
        %v1187 = vunpack.c.0.s8 %v1186
        %v1188 = vperm.slane %v1182, %v1187
        %v1190 = vunpack.c.l.s4 1934713408
        %v1191 = vunpack.c.0.s8 %v1190
        %v1192 = vperm.slane %v1184, %v1191
        %v1193 = vrot.slane %v1180, 4
        %v1194 = vsel %vm881, %v1193, %v1174
        %v1195 = vrot.slane %v1174, 4
        %v1196 = vsel %vm881, %v1180, %v1195
        %v1198 = vunpack.c.l.s4 1934713408
        %v1199 = vunpack.c.0.s8 %v1198
        %v1200 = vperm.slane %v1194, %v1199
        %v1202 = vunpack.c.l.s4 1934713408
        %v1203 = vunpack.c.0.s8 %v1202
        %v1204 = vperm.slane %v1196, %v1203
        %v1205 = vrot.slane %v1200, 4
        %v1206 = vsel %vm881, %v1205, %v1188
        %v1207 = vrot.slane %v1188, 4
        %v1208 = vsel %vm881, %v1200, %v1207
        %v1209 = vrot.slane %v1204, 4
        %v1210 = vsel %vm881, %v1209, %v1192
        %v1211 = vrot.slane %v1192, 4
        %v1212 = vsel %vm881, %v1204, %v1211
        %v1213 = vsel %vm881, %v1043, %v1024
        %v1215 = vunpack.c.l.s4 1983009808
        %v1216 = vunpack.c.0.s8 %v1215
        %v1217 = vperm.slane %v1213, %v1216
        %v1218 = vrot.slane %v1044, 4
        %v1219 = vsel %vm881, %v1218, %v1042
        %v1221 = vunpack.c.l.s4 1983009808
        %v1222 = vunpack.c.0.s8 %v1221
        %v1223 = vperm.slane %v1219, %v1222
        %v1224 = vsel %vm881, %v1047, %v1036
        %v1226 = vunpack.c.l.s4 1983009808
        %v1227 = vunpack.c.0.s8 %v1226
        %v1228 = vperm.slane %v1224, %v1227
        %v1229 = vrot.slane %v1048, 4
        %v1230 = vsel %vm881, %v1229, %v1046
        %v1232 = vunpack.c.l.s4 1983009808
        %v1233 = vunpack.c.0.s8 %v1232
        %v1234 = vperm.slane %v1230, %v1233
        %v1235 = vrot.slane %v1223, 4
        %v1236 = vsel %vm881, %v1235, %v1217
        %v1237 = vrot.slane %v1217, 4
        %v1238 = vsel %vm881, %v1223, %v1237
        %v1240 = vunpack.c.l.s4 1934713408
        %v1241 = vunpack.c.0.s8 %v1240
        %v1242 = vperm.slane %v1236, %v1241
        %v1244 = vunpack.c.l.s4 1934713408
        %v1245 = vunpack.c.0.s8 %v1244
        %v1246 = vperm.slane %v1238, %v1245
        %v1247 = vrot.slane %v1234, 4
        %v1248 = vsel %vm881, %v1247, %v1228
        %v1249 = vrot.slane %v1228, 4
        %v1250 = vsel %vm881, %v1234, %v1249
        %v1252 = vunpack.c.l.s4 1934713408
        %v1253 = vunpack.c.0.s8 %v1252
        %v1254 = vperm.slane %v1248, %v1253
        %v1256 = vunpack.c.l.s4 1934713408
        %v1257 = vunpack.c.0.s8 %v1256
        %v1258 = vperm.slane %v1250, %v1257
        %v1259 = vrot.slane %v1254, 4
        %v1260 = vsel %vm881, %v1259, %v1242
        %v1261 = vrot.slane %v1242, 4
        %v1262 = vsel %vm881, %v1254, %v1261
        %v1263 = vrot.slane %v1258, 4
        %v1264 = vsel %vm881, %v1263, %v1246
        %v1265 = vrot.slane %v1246, 4
        %v1266 = vsel %vm881, %v1258, %v1265
        %v1267 = vsel %vm881, %v1099, %v1080
        %v1269 = vunpack.c.l.s4 1983009808
        %v1270 = vunpack.c.0.s8 %v1269
        %v1271 = vperm.slane %v1267, %v1270
        %v1272 = vrot.slane %v1100, 4
        %v1273 = vsel %vm881, %v1272, %v1098
        %v1275 = vunpack.c.l.s4 1983009808
        %v1276 = vunpack.c.0.s8 %v1275
        %v1277 = vperm.slane %v1273, %v1276
        %v1278 = vsel %vm881, %v1103, %v1092
        %v1280 = vunpack.c.l.s4 1983009808
        %v1281 = vunpack.c.0.s8 %v1280
        %v1282 = vperm.slane %v1278, %v1281
        %v1283 = vrot.slane %v1104, 4
        %v1284 = vsel %vm881, %v1283, %v1102
        %v1286 = vunpack.c.l.s4 1983009808
        %v1287 = vunpack.c.0.s8 %v1286
        %v1288 = vperm.slane %v1284, %v1287
        %v1289 = vrot.slane %v1277, 4
        %v1290 = vsel %vm881, %v1289, %v1271
        %v1291 = vrot.slane %v1271, 4
        %v1292 = vsel %vm881, %v1277, %v1291
        %v1294 = vunpack.c.l.s4 1934713408
        %v1295 = vunpack.c.0.s8 %v1294
        %v1296 = vperm.slane %v1290, %v1295
        %v1298 = vunpack.c.l.s4 1934713408
        %v1299 = vunpack.c.0.s8 %v1298
        %v1300 = vperm.slane %v1292, %v1299
        %v1301 = vrot.slane %v1288, 4
        %v1302 = vsel %vm881, %v1301, %v1282
        %v1303 = vrot.slane %v1282, 4
        %v1304 = vsel %vm881, %v1288, %v1303
        %v1306 = vunpack.c.l.s4 1934713408
        %v1307 = vunpack.c.0.s8 %v1306
        %v1308 = vperm.slane %v1302, %v1307
        %v1310 = vunpack.c.l.s4 1934713408
        %v1311 = vunpack.c.0.s8 %v1310
        %v1312 = vperm.slane %v1304, %v1311
        %v1313 = vrot.slane %v1308, 4
        %v1314 = vsel %vm881, %v1313, %v1296
        %v1315 = vrot.slane %v1296, 4
        %v1316 = vsel %vm881, %v1308, %v1315
        %v1317 = vrot.slane %v1312, 4
        %v1318 = vsel %vm881, %v1317, %v1300
        %v1319 = vrot.slane %v1300, 4
        %v1320 = vsel %vm881, %v1312, %v1319
        %v1321 = vpack.c.bf16 %v1152, %v1152
        %v1322 = vpack.c.bf16 %v1206, %v1206
        %v1323 = vpack.c.bf16 %v1154, %v1154
        %v1324 = vpack.c.bf16 %v1208, %v1208
        %v1325 = vpack.c.bf16 %v1156, %v1156
        %v1326 = vpack.c.bf16 %v1210, %v1210
        %v1327 = vpack.c.bf16 %v1158, %v1158
        %v1328 = vpack.c.bf16 %v1212, %v1212
        %v1329 = vpack.c.bf16 %v1260, %v1260
        %v1330 = vpack.c.bf16 %v1314, %v1314
        %v1331 = vpack.c.bf16 %v1262, %v1262
        %v1332 = vpack.c.bf16 %v1316, %v1316
        %v1333 = vpack.c.bf16 %v1264, %v1264
        %v1334 = vpack.c.bf16 %v1318, %v1318
        %v1335 = vpack.c.bf16 %v1266, %v1266
        %v1336 = vpack.c.bf16 %v1320, %v1320
        %1341 = vrot.lane.b32.xlu0 %v796, 96
        %v1342 = vpop.permute.xlu0 %1341
        %1343 = vrot.lane.b32.xlu0 %v798, 96
        %v1344 = vpop.permute.xlu0 %1343
        %1345 = vrot.lane.b32.xlu0 %v801, 96
        %v1346 = vpop.permute.xlu0 %1345
        %1347 = vrot.lane.b32.xlu0 %v803, 96
        %v1348 = vpop.permute.xlu0 %1347
        %1353 = vrot.lane.b32.xlu0 %v796, 64
        %v1354 = vpop.permute.xlu0 %1353
        %1355 = vrot.lane.b32.xlu0 %v798, 64
        %v1356 = vpop.permute.xlu0 %1355
        %1357 = vrot.lane.b32.xlu0 %v801, 64
        %v1358 = vpop.permute.xlu0 %1357
        %1359 = vrot.lane.b32.xlu0 %v803, 64
        %v1360 = vpop.permute.xlu0 %1359
        %1365 = vrot.lane.b32.xlu0 %v796, 32
        %v1366 = vpop.permute.xlu0 %1365
        %1367 = vrot.lane.b32.xlu0 %v798, 32
        %v1368 = vpop.permute.xlu0 %1367
        %1369 = vrot.lane.b32.xlu0 %v801, 32
        %v1370 = vpop.permute.xlu0 %1369
        %1371 = vrot.lane.b32.xlu0 %v803, 32
        %v1372 = vpop.permute.xlu0 %1371
        %v1377 = vrot.slane %v1354, 4
        %v1378 = vsel %vm881, %v1377, %v796
        %v1379 = vrot.slane %v796, 4
        %v1380 = vsel %vm881, %v1354, %v1379
        %v1382 = vunpack.c.l.s4 1983009808
        %v1383 = vunpack.c.0.s8 %v1382
        %v1384 = vperm.slane %v1378, %v1383
        %v1386 = vunpack.c.l.s4 1983009808
        %v1387 = vunpack.c.0.s8 %v1386
        %v1388 = vperm.slane %v1380, %v1387
        %v1389 = vrot.slane %v1366, 4
        %v1390 = vsel %vm881, %v1389, %v1342
        %v1391 = vrot.slane %v1342, 4
        %v1392 = vsel %vm881, %v1366, %v1391
        %v1394 = vunpack.c.l.s4 1983009808
        %v1395 = vunpack.c.0.s8 %v1394
        %v1396 = vperm.slane %v1390, %v1395
        %v1398 = vunpack.c.l.s4 1983009808
        %v1399 = vunpack.c.0.s8 %v1398
        %v1400 = vperm.slane %v1392, %v1399
        %v1401 = vrot.slane %v1396, 4
        %v1402 = vsel %vm881, %v1401, %v1384
        %v1403 = vrot.slane %v1384, 4
        %v1404 = vsel %vm881, %v1396, %v1403
        %v1406 = vunpack.c.l.s4 1934713408
        %v1407 = vunpack.c.0.s8 %v1406
        %v1408 = vperm.slane %v1402, %v1407
        %v1410 = vunpack.c.l.s4 1934713408
        %v1411 = vunpack.c.0.s8 %v1410
        %v1412 = vperm.slane %v1404, %v1411
        %v1413 = vrot.slane %v1400, 4
        %v1414 = vsel %vm881, %v1413, %v1388
        %v1415 = vrot.slane %v1388, 4
        %v1416 = vsel %vm881, %v1400, %v1415
        %v1418 = vunpack.c.l.s4 1934713408
        %v1419 = vunpack.c.0.s8 %v1418
        %v1420 = vperm.slane %v1414, %v1419
        %v1422 = vunpack.c.l.s4 1934713408
        %v1423 = vunpack.c.0.s8 %v1422
        %v1424 = vperm.slane %v1416, %v1423
        %v1425 = vrot.slane %v1408, 4
        %v1426 = vsel %vm881, 0.0, %v1425
        %v1427 = vrot.slane %v1412, 4
        %v1428 = vsel %vm881, 0.0, %v1427
        %v1429 = vrot.slane %v1420, 4
        %v1430 = vsel %vm881, 0.0, %v1429
        %v1431 = vrot.slane %v1424, 4
        %v1432 = vsel %vm881, 0.0, %v1431
        %v1433 = vrot.slane %v1356, 4
        %v1434 = vsel %vm881, %v1433, %v798
        %v1435 = vrot.slane %v798, 4
        %v1436 = vsel %vm881, %v1356, %v1435
        %v1438 = vunpack.c.l.s4 1983009808
        %v1439 = vunpack.c.0.s8 %v1438
        %v1440 = vperm.slane %v1434, %v1439
        %v1442 = vunpack.c.l.s4 1983009808
        %v1443 = vunpack.c.0.s8 %v1442
        %v1444 = vperm.slane %v1436, %v1443
        %v1445 = vrot.slane %v1368, 4
        %v1446 = vsel %vm881, %v1445, %v1344
        %v1447 = vrot.slane %v1344, 4
        %v1448 = vsel %vm881, %v1368, %v1447
        %v1450 = vunpack.c.l.s4 1983009808
        %v1451 = vunpack.c.0.s8 %v1450
        %v1452 = vperm.slane %v1446, %v1451
        %v1454 = vunpack.c.l.s4 1983009808
        %v1455 = vunpack.c.0.s8 %v1454
        %v1456 = vperm.slane %v1448, %v1455
        %v1457 = vrot.slane %v1452, 4
        %v1458 = vsel %vm881, %v1457, %v1440
        %v1459 = vrot.slane %v1440, 4
        %v1460 = vsel %vm881, %v1452, %v1459
        %v1462 = vunpack.c.l.s4 1934713408
        %v1463 = vunpack.c.0.s8 %v1462
        %v1464 = vperm.slane %v1458, %v1463
        %v1466 = vunpack.c.l.s4 1934713408
        %v1467 = vunpack.c.0.s8 %v1466
        %v1468 = vperm.slane %v1460, %v1467
        %v1469 = vrot.slane %v1456, 4
        %v1470 = vsel %vm881, %v1469, %v1444
        %v1471 = vrot.slane %v1444, 4
        %v1472 = vsel %vm881, %v1456, %v1471
        %v1474 = vunpack.c.l.s4 1934713408
        %v1475 = vunpack.c.0.s8 %v1474
        %v1476 = vperm.slane %v1470, %v1475
        %v1478 = vunpack.c.l.s4 1934713408
        %v1479 = vunpack.c.0.s8 %v1478
        %v1480 = vperm.slane %v1472, %v1479
        %v1481 = vrot.slane %v1464, 4
        %v1482 = vsel %vm881, 0.0, %v1481
        %v1483 = vrot.slane %v1468, 4
        %v1484 = vsel %vm881, 0.0, %v1483
        %v1485 = vrot.slane %v1476, 4
        %v1486 = vsel %vm881, 0.0, %v1485
        %v1487 = vrot.slane %v1480, 4
        %v1488 = vsel %vm881, 0.0, %v1487
        %v1489 = vrot.slane %v1358, 4
        %v1490 = vsel %vm881, %v1489, %v801
        %v1491 = vrot.slane %v801, 4
        %v1492 = vsel %vm881, %v1358, %v1491
        %v1494 = vunpack.c.l.s4 1983009808
        %v1495 = vunpack.c.0.s8 %v1494
        %v1496 = vperm.slane %v1490, %v1495
        %v1498 = vunpack.c.l.s4 1983009808
        %v1499 = vunpack.c.0.s8 %v1498
        %v1500 = vperm.slane %v1492, %v1499
        %v1501 = vrot.slane %v1370, 4
        %v1502 = vsel %vm881, %v1501, %v1346
        %v1503 = vrot.slane %v1346, 4
        %v1504 = vsel %vm881, %v1370, %v1503
        %v1506 = vunpack.c.l.s4 1983009808
        %v1507 = vunpack.c.0.s8 %v1506
        %v1508 = vperm.slane %v1502, %v1507
        %v1510 = vunpack.c.l.s4 1983009808
        %v1511 = vunpack.c.0.s8 %v1510
        %v1512 = vperm.slane %v1504, %v1511
        %v1513 = vrot.slane %v1508, 4
        %v1514 = vsel %vm881, %v1513, %v1496
        %v1515 = vrot.slane %v1496, 4
        %v1516 = vsel %vm881, %v1508, %v1515
        %v1518 = vunpack.c.l.s4 1934713408
        %v1519 = vunpack.c.0.s8 %v1518
        %v1520 = vperm.slane %v1514, %v1519
        %v1522 = vunpack.c.l.s4 1934713408
        %v1523 = vunpack.c.0.s8 %v1522
        %v1524 = vperm.slane %v1516, %v1523
        %v1525 = vrot.slane %v1512, 4
        %v1526 = vsel %vm881, %v1525, %v1500
        %v1527 = vrot.slane %v1500, 4
        %v1528 = vsel %vm881, %v1512, %v1527
        %v1530 = vunpack.c.l.s4 1934713408
        %v1531 = vunpack.c.0.s8 %v1530
        %v1532 = vperm.slane %v1526, %v1531
        %v1534 = vunpack.c.l.s4 1934713408
        %v1535 = vunpack.c.0.s8 %v1534
        %v1536 = vperm.slane %v1528, %v1535
        %v1537 = vrot.slane %v1520, 4
        %v1538 = vsel %vm881, 0.0, %v1537
        %v1539 = vrot.slane %v1524, 4
        %v1540 = vsel %vm881, 0.0, %v1539
        %v1541 = vrot.slane %v1532, 4
        %v1542 = vsel %vm881, 0.0, %v1541
        %v1543 = vrot.slane %v1536, 4
        %v1544 = vsel %vm881, 0.0, %v1543
        %v1545 = vrot.slane %v1360, 4
        %v1546 = vsel %vm881, %v1545, %v803
        %v1547 = vrot.slane %v803, 4
        %v1548 = vsel %vm881, %v1360, %v1547
        %v1550 = vunpack.c.l.s4 1983009808
        %v1551 = vunpack.c.0.s8 %v1550
        %v1552 = vperm.slane %v1546, %v1551
        %v1554 = vunpack.c.l.s4 1983009808
        %v1555 = vunpack.c.0.s8 %v1554
        %v1556 = vperm.slane %v1548, %v1555
        %v1557 = vrot.slane %v1372, 4
        %v1558 = vsel %vm881, %v1557, %v1348
        %v1559 = vrot.slane %v1348, 4
        %v1560 = vsel %vm881, %v1372, %v1559
        %v1562 = vunpack.c.l.s4 1983009808
        %v1563 = vunpack.c.0.s8 %v1562
        %v1564 = vperm.slane %v1558, %v1563
        %v1566 = vunpack.c.l.s4 1983009808
        %v1567 = vunpack.c.0.s8 %v1566
        %v1568 = vperm.slane %v1560, %v1567
        %v1569 = vrot.slane %v1564, 4
        %v1570 = vsel %vm881, %v1569, %v1552
        %v1571 = vrot.slane %v1552, 4
        %v1572 = vsel %vm881, %v1564, %v1571
        %v1574 = vunpack.c.l.s4 1934713408
        %v1575 = vunpack.c.0.s8 %v1574
        %v1576 = vperm.slane %v1570, %v1575
        %v1578 = vunpack.c.l.s4 1934713408
        %v1579 = vunpack.c.0.s8 %v1578
        %v1580 = vperm.slane %v1572, %v1579
        %v1581 = vrot.slane %v1568, 4
        %v1582 = vsel %vm881, %v1581, %v1556
        %v1583 = vrot.slane %v1556, 4
        %v1584 = vsel %vm881, %v1568, %v1583
        %v1586 = vunpack.c.l.s4 1934713408
        %v1587 = vunpack.c.0.s8 %v1586
        %v1588 = vperm.slane %v1582, %v1587
        %v1590 = vunpack.c.l.s4 1934713408
        %v1591 = vunpack.c.0.s8 %v1590
        %v1592 = vperm.slane %v1584, %v1591
        %v1593 = vrot.slane %v1576, 4
        %v1594 = vsel %vm881, 0.0, %v1593
        %v1595 = vrot.slane %v1580, 4
        %v1596 = vsel %vm881, 0.0, %v1595
        %v1597 = vrot.slane %v1588, 4
        %v1598 = vsel %vm881, 0.0, %v1597
        %v1599 = vrot.slane %v1592, 4
        %v1600 = vsel %vm881, 0.0, %v1599
        %v1601 = vsel %vm881, %v1427, %v1408
        %v1603 = vunpack.c.l.s4 1983009808
        %v1604 = vunpack.c.0.s8 %v1603
        %v1605 = vperm.slane %v1601, %v1604
        %v1606 = vrot.slane %v1428, 4
        %v1607 = vsel %vm881, %v1606, %v1426
        %v1609 = vunpack.c.l.s4 1983009808
        %v1610 = vunpack.c.0.s8 %v1609
        %v1611 = vperm.slane %v1607, %v1610
        %v1612 = vsel %vm881, %v1431, %v1420
        %v1614 = vunpack.c.l.s4 1983009808
        %v1615 = vunpack.c.0.s8 %v1614
        %v1616 = vperm.slane %v1612, %v1615
        %v1617 = vrot.slane %v1432, 4
        %v1618 = vsel %vm881, %v1617, %v1430
        %v1620 = vunpack.c.l.s4 1983009808
        %v1621 = vunpack.c.0.s8 %v1620
        %v1622 = vperm.slane %v1618, %v1621
        %v1623 = vrot.slane %v1611, 4
        %v1624 = vsel %vm881, %v1623, %v1605
        %v1625 = vrot.slane %v1605, 4
        %v1626 = vsel %vm881, %v1611, %v1625
        %v1628 = vunpack.c.l.s4 1934713408
        %v1629 = vunpack.c.0.s8 %v1628
        %v1630 = vperm.slane %v1624, %v1629
        %v1632 = vunpack.c.l.s4 1934713408
        %v1633 = vunpack.c.0.s8 %v1632
        %v1634 = vperm.slane %v1626, %v1633
        %v1635 = vrot.slane %v1622, 4
        %v1636 = vsel %vm881, %v1635, %v1616
        %v1637 = vrot.slane %v1616, 4
        %v1638 = vsel %vm881, %v1622, %v1637
        %v1640 = vunpack.c.l.s4 1934713408
        %v1641 = vunpack.c.0.s8 %v1640
        %v1642 = vperm.slane %v1636, %v1641
        %v1644 = vunpack.c.l.s4 1934713408
        %v1645 = vunpack.c.0.s8 %v1644
        %v1646 = vperm.slane %v1638, %v1645
        %v1647 = vrot.slane %v1642, 4
        %v1648 = vsel %vm881, %v1647, %v1630
        %v1649 = vrot.slane %v1630, 4
        %v1650 = vsel %vm881, %v1642, %v1649
        %v1651 = vrot.slane %v1646, 4
        %v1652 = vsel %vm881, %v1651, %v1634
        %v1653 = vrot.slane %v1634, 4
        %v1654 = vsel %vm881, %v1646, %v1653
        %v1655 = vsel %vm881, %v1483, %v1464
        %v1657 = vunpack.c.l.s4 1983009808
        %v1658 = vunpack.c.0.s8 %v1657
        %v1659 = vperm.slane %v1655, %v1658
        %v1660 = vrot.slane %v1484, 4
        %v1661 = vsel %vm881, %v1660, %v1482
        %v1663 = vunpack.c.l.s4 1983009808
        %v1664 = vunpack.c.0.s8 %v1663
        %v1665 = vperm.slane %v1661, %v1664
        %v1666 = vsel %vm881, %v1487, %v1476
        %v1668 = vunpack.c.l.s4 1983009808
        %v1669 = vunpack.c.0.s8 %v1668
        %v1670 = vperm.slane %v1666, %v1669
        %v1671 = vrot.slane %v1488, 4
        %v1672 = vsel %vm881, %v1671, %v1486
        %v1674 = vunpack.c.l.s4 1983009808
        %v1675 = vunpack.c.0.s8 %v1674
        %v1676 = vperm.slane %v1672, %v1675
        %v1677 = vrot.slane %v1665, 4
        %v1678 = vsel %vm881, %v1677, %v1659
        %v1679 = vrot.slane %v1659, 4
        %v1680 = vsel %vm881, %v1665, %v1679
        %v1682 = vunpack.c.l.s4 1934713408
        %v1683 = vunpack.c.0.s8 %v1682
        %v1684 = vperm.slane %v1678, %v1683
        %v1686 = vunpack.c.l.s4 1934713408
        %v1687 = vunpack.c.0.s8 %v1686
        %v1688 = vperm.slane %v1680, %v1687
        %v1689 = vrot.slane %v1676, 4
        %v1690 = vsel %vm881, %v1689, %v1670
        %v1691 = vrot.slane %v1670, 4
        %v1692 = vsel %vm881, %v1676, %v1691
        %v1694 = vunpack.c.l.s4 1934713408
        %v1695 = vunpack.c.0.s8 %v1694
        %v1696 = vperm.slane %v1690, %v1695
        %v1698 = vunpack.c.l.s4 1934713408
        %v1699 = vunpack.c.0.s8 %v1698
        %v1700 = vperm.slane %v1692, %v1699
        %v1701 = vrot.slane %v1696, 4
        %v1702 = vsel %vm881, %v1701, %v1684
        %v1703 = vrot.slane %v1684, 4
        %v1704 = vsel %vm881, %v1696, %v1703
        %v1705 = vrot.slane %v1700, 4
        %v1706 = vsel %vm881, %v1705, %v1688
        %v1707 = vrot.slane %v1688, 4
        %v1708 = vsel %vm881, %v1700, %v1707
        %v1709 = vsel %vm881, %v1539, %v1520
        %v1711 = vunpack.c.l.s4 1983009808
        %v1712 = vunpack.c.0.s8 %v1711
        %v1713 = vperm.slane %v1709, %v1712
        %v1714 = vrot.slane %v1540, 4
        %v1715 = vsel %vm881, %v1714, %v1538
        %v1717 = vunpack.c.l.s4 1983009808
        %v1718 = vunpack.c.0.s8 %v1717
        %v1719 = vperm.slane %v1715, %v1718
        %v1720 = vsel %vm881, %v1543, %v1532
        %v1722 = vunpack.c.l.s4 1983009808
        %v1723 = vunpack.c.0.s8 %v1722
        %v1724 = vperm.slane %v1720, %v1723
        %v1725 = vrot.slane %v1544, 4
        %v1726 = vsel %vm881, %v1725, %v1542
        %v1728 = vunpack.c.l.s4 1983009808
        %v1729 = vunpack.c.0.s8 %v1728
        %v1730 = vperm.slane %v1726, %v1729
        %v1731 = vrot.slane %v1719, 4
        %v1732 = vsel %vm881, %v1731, %v1713
        %v1733 = vrot.slane %v1713, 4
        %v1734 = vsel %vm881, %v1719, %v1733
        %v1736 = vunpack.c.l.s4 1934713408
        %v1737 = vunpack.c.0.s8 %v1736
        %v1738 = vperm.slane %v1732, %v1737
        %v1740 = vunpack.c.l.s4 1934713408
        %v1741 = vunpack.c.0.s8 %v1740
        %v1742 = vperm.slane %v1734, %v1741
        %v1743 = vrot.slane %v1730, 4
        %v1744 = vsel %vm881, %v1743, %v1724
        %v1745 = vrot.slane %v1724, 4
        %v1746 = vsel %vm881, %v1730, %v1745
        %v1748 = vunpack.c.l.s4 1934713408
        %v1749 = vunpack.c.0.s8 %v1748
        %v1750 = vperm.slane %v1744, %v1749
        %v1752 = vunpack.c.l.s4 1934713408
        %v1753 = vunpack.c.0.s8 %v1752
        %v1754 = vperm.slane %v1746, %v1753
        %v1755 = vrot.slane %v1750, 4
        %v1756 = vsel %vm881, %v1755, %v1738
        %v1757 = vrot.slane %v1738, 4
        %v1758 = vsel %vm881, %v1750, %v1757
        %v1759 = vrot.slane %v1754, 4
        %v1760 = vsel %vm881, %v1759, %v1742
        %v1761 = vrot.slane %v1742, 4
        %v1762 = vsel %vm881, %v1754, %v1761
        %v1763 = vsel %vm881, %v1595, %v1576
        %v1765 = vunpack.c.l.s4 1983009808
        %v1766 = vunpack.c.0.s8 %v1765
        %v1767 = vperm.slane %v1763, %v1766
        %v1768 = vrot.slane %v1596, 4
        %v1769 = vsel %vm881, %v1768, %v1594
        %v1771 = vunpack.c.l.s4 1983009808
        %v1772 = vunpack.c.0.s8 %v1771
        %v1773 = vperm.slane %v1769, %v1772
        %v1774 = vsel %vm881, %v1599, %v1588
        %v1776 = vunpack.c.l.s4 1983009808
        %v1777 = vunpack.c.0.s8 %v1776
        %v1778 = vperm.slane %v1774, %v1777
        %v1779 = vrot.slane %v1600, 4
        %v1780 = vsel %vm881, %v1779, %v1598
        %v1782 = vunpack.c.l.s4 1983009808
        %v1783 = vunpack.c.0.s8 %v1782
        %v1784 = vperm.slane %v1780, %v1783
        %v1785 = vrot.slane %v1773, 4
        %v1786 = vsel %vm881, %v1785, %v1767
        %v1787 = vrot.slane %v1767, 4
        %v1788 = vsel %vm881, %v1773, %v1787
        %v1790 = vunpack.c.l.s4 1934713408
        %v1791 = vunpack.c.0.s8 %v1790
        %v1792 = vperm.slane %v1786, %v1791
        %v1794 = vunpack.c.l.s4 1934713408
        %v1795 = vunpack.c.0.s8 %v1794
        %v1796 = vperm.slane %v1788, %v1795
        %v1797 = vrot.slane %v1784, 4
        %v1798 = vsel %vm881, %v1797, %v1778
        %v1799 = vrot.slane %v1778, 4
        %v1800 = vsel %vm881, %v1784, %v1799
        %v1802 = vunpack.c.l.s4 1934713408
        %v1803 = vunpack.c.0.s8 %v1802
        %v1804 = vperm.slane %v1798, %v1803
        %v1806 = vunpack.c.l.s4 1934713408
        %v1807 = vunpack.c.0.s8 %v1806
        %v1808 = vperm.slane %v1800, %v1807
        %v1809 = vrot.slane %v1804, 4
        %v1810 = vsel %vm881, %v1809, %v1792
        %v1811 = vrot.slane %v1792, 4
        %v1812 = vsel %vm881, %v1804, %v1811
        %v1813 = vrot.slane %v1808, 4
        %v1814 = vsel %vm881, %v1813, %v1796
        %v1815 = vrot.slane %v1796, 4
        %v1816 = vsel %vm881, %v1808, %v1815
        %v1817 = vpack.c.bf16 %v1648, %v1648
        %v1818 = vpack.c.bf16 %v1702, %v1702
        %v1819 = vpack.c.bf16 %v1650, %v1650
        %v1820 = vpack.c.bf16 %v1704, %v1704
        %v1821 = vpack.c.bf16 %v1652, %v1652
        %v1822 = vpack.c.bf16 %v1706, %v1706
        %v1823 = vpack.c.bf16 %v1654, %v1654
        %v1824 = vpack.c.bf16 %v1708, %v1708
        %v1825 = vpack.c.bf16 %v1756, %v1756
        %v1826 = vpack.c.bf16 %v1810, %v1810
        %v1827 = vpack.c.bf16 %v1758, %v1758
        %v1828 = vpack.c.bf16 %v1812, %v1812
        %v1829 = vpack.c.bf16 %v1760, %v1760
        %v1830 = vpack.c.bf16 %v1814, %v1814
        %v1831 = vpack.c.bf16 %v1762, %v1762
        %v1832 = vpack.c.bf16 %v1816, %v1816
        %1837 = vrot.lane.b32.xlu0 %v815, 96
        %v1838 = vpop.permute.xlu0 %1837
        %1839 = vrot.lane.b32.xlu0 %v817, 96
        %v1840 = vpop.permute.xlu0 %1839
        %1841 = vrot.lane.b32.xlu0 %v820, 96
        %v1842 = vpop.permute.xlu0 %1841
        %1843 = vrot.lane.b32.xlu0 %v822, 96
        %v1844 = vpop.permute.xlu0 %1843
        %1849 = vrot.lane.b32.xlu0 %v815, 64
        %v1850 = vpop.permute.xlu0 %1849
        %1851 = vrot.lane.b32.xlu0 %v817, 64
        %v1852 = vpop.permute.xlu0 %1851
        %1853 = vrot.lane.b32.xlu0 %v820, 64
        %v1854 = vpop.permute.xlu0 %1853
        %1855 = vrot.lane.b32.xlu0 %v822, 64
        %v1856 = vpop.permute.xlu0 %1855
        %1861 = vrot.lane.b32.xlu0 %v815, 32
        %v1862 = vpop.permute.xlu0 %1861
        %1863 = vrot.lane.b32.xlu0 %v817, 32
        %v1864 = vpop.permute.xlu0 %1863
        %1865 = vrot.lane.b32.xlu0 %v820, 32
        %v1866 = vpop.permute.xlu0 %1865
        %1867 = vrot.lane.b32.xlu0 %v822, 32
        %v1868 = vpop.permute.xlu0 %1867
        %v1873 = vrot.slane %v1850, 4
        %v1874 = vsel %vm881, %v1873, %v815
        %v1875 = vrot.slane %v815, 4
        %v1876 = vsel %vm881, %v1850, %v1875
        %v1878 = vunpack.c.l.s4 1983009808
        %v1879 = vunpack.c.0.s8 %v1878
        %v1880 = vperm.slane %v1874, %v1879
        %v1882 = vunpack.c.l.s4 1983009808
        %v1883 = vunpack.c.0.s8 %v1882
        %v1884 = vperm.slane %v1876, %v1883
        %v1885 = vrot.slane %v1862, 4
        %v1886 = vsel %vm881, %v1885, %v1838
        %v1887 = vrot.slane %v1838, 4
        %v1888 = vsel %vm881, %v1862, %v1887
        %v1890 = vunpack.c.l.s4 1983009808
        %v1891 = vunpack.c.0.s8 %v1890
        %v1892 = vperm.slane %v1886, %v1891
        %v1894 = vunpack.c.l.s4 1983009808
        %v1895 = vunpack.c.0.s8 %v1894
        %v1896 = vperm.slane %v1888, %v1895
        %v1897 = vrot.slane %v1892, 4
        %v1898 = vsel %vm881, %v1897, %v1880
        %v1899 = vrot.slane %v1880, 4
        %v1900 = vsel %vm881, %v1892, %v1899
        %v1902 = vunpack.c.l.s4 1934713408
        %v1903 = vunpack.c.0.s8 %v1902
        %v1904 = vperm.slane %v1898, %v1903
        %v1906 = vunpack.c.l.s4 1934713408
        %v1907 = vunpack.c.0.s8 %v1906
        %v1908 = vperm.slane %v1900, %v1907
        %v1909 = vrot.slane %v1896, 4
        %v1910 = vsel %vm881, %v1909, %v1884
        %v1911 = vrot.slane %v1884, 4
        %v1912 = vsel %vm881, %v1896, %v1911
        %v1914 = vunpack.c.l.s4 1934713408
        %v1915 = vunpack.c.0.s8 %v1914
        %v1916 = vperm.slane %v1910, %v1915
        %v1918 = vunpack.c.l.s4 1934713408
        %v1919 = vunpack.c.0.s8 %v1918
        %v1920 = vperm.slane %v1912, %v1919
        %v1921 = vrot.slane %v1904, 4
        %v1922 = vsel %vm881, 0.0, %v1921
        %v1923 = vrot.slane %v1908, 4
        %v1924 = vsel %vm881, 0.0, %v1923
        %v1925 = vrot.slane %v1916, 4
        %v1926 = vsel %vm881, 0.0, %v1925
        %v1927 = vrot.slane %v1920, 4
        %v1928 = vsel %vm881, 0.0, %v1927
        %v1929 = vrot.slane %v1852, 4
        %v1930 = vsel %vm881, %v1929, %v817
        %v1931 = vrot.slane %v817, 4
        %v1932 = vsel %vm881, %v1852, %v1931
        %v1934 = vunpack.c.l.s4 1983009808
        %v1935 = vunpack.c.0.s8 %v1934
        %v1936 = vperm.slane %v1930, %v1935
        %v1938 = vunpack.c.l.s4 1983009808
        %v1939 = vunpack.c.0.s8 %v1938
        %v1940 = vperm.slane %v1932, %v1939
        %v1941 = vrot.slane %v1864, 4
        %v1942 = vsel %vm881, %v1941, %v1840
        %v1943 = vrot.slane %v1840, 4
        %v1944 = vsel %vm881, %v1864, %v1943
        %v1946 = vunpack.c.l.s4 1983009808
        %v1947 = vunpack.c.0.s8 %v1946
        %v1948 = vperm.slane %v1942, %v1947
        %v1950 = vunpack.c.l.s4 1983009808
        %v1951 = vunpack.c.0.s8 %v1950
        %v1952 = vperm.slane %v1944, %v1951
        %v1953 = vrot.slane %v1948, 4
        %v1954 = vsel %vm881, %v1953, %v1936
        %v1955 = vrot.slane %v1936, 4
        %v1956 = vsel %vm881, %v1948, %v1955
        %v1958 = vunpack.c.l.s4 1934713408
        %v1959 = vunpack.c.0.s8 %v1958
        %v1960 = vperm.slane %v1954, %v1959
        %v1962 = vunpack.c.l.s4 1934713408
        %v1963 = vunpack.c.0.s8 %v1962
        %v1964 = vperm.slane %v1956, %v1963
        %v1965 = vrot.slane %v1952, 4
        %v1966 = vsel %vm881, %v1965, %v1940
        %v1967 = vrot.slane %v1940, 4
        %v1968 = vsel %vm881, %v1952, %v1967
        %v1970 = vunpack.c.l.s4 1934713408
        %v1971 = vunpack.c.0.s8 %v1970
        %v1972 = vperm.slane %v1966, %v1971
        %v1974 = vunpack.c.l.s4 1934713408
        %v1975 = vunpack.c.0.s8 %v1974
        %v1976 = vperm.slane %v1968, %v1975
        %v1977 = vrot.slane %v1960, 4
        %v1978 = vsel %vm881, 0.0, %v1977
        %v1979 = vrot.slane %v1964, 4
        %v1980 = vsel %vm881, 0.0, %v1979
        %v1981 = vrot.slane %v1972, 4
        %v1982 = vsel %vm881, 0.0, %v1981
        %v1983 = vrot.slane %v1976, 4
        %v1984 = vsel %vm881, 0.0, %v1983
        %v1985 = vrot.slane %v1854, 4
        %v1986 = vsel %vm881, %v1985, %v820
        %v1987 = vrot.slane %v820, 4
        %v1988 = vsel %vm881, %v1854, %v1987
        %v1990 = vunpack.c.l.s4 1983009808
        %v1991 = vunpack.c.0.s8 %v1990
        %v1992 = vperm.slane %v1986, %v1991
        %v1994 = vunpack.c.l.s4 1983009808
        %v1995 = vunpack.c.0.s8 %v1994
        %v1996 = vperm.slane %v1988, %v1995
        %v1997 = vrot.slane %v1866, 4
        %v1998 = vsel %vm881, %v1997, %v1842
        %v1999 = vrot.slane %v1842, 4
        %v2000 = vsel %vm881, %v1866, %v1999
        %v2002 = vunpack.c.l.s4 1983009808
        %v2003 = vunpack.c.0.s8 %v2002
        %v2004 = vperm.slane %v1998, %v2003
        %v2006 = vunpack.c.l.s4 1983009808
        %v2007 = vunpack.c.0.s8 %v2006
        %v2008 = vperm.slane %v2000, %v2007
        %v2009 = vrot.slane %v2004, 4
        %v2010 = vsel %vm881, %v2009, %v1992
        %v2011 = vrot.slane %v1992, 4
        %v2012 = vsel %vm881, %v2004, %v2011
        %v2014 = vunpack.c.l.s4 1934713408
        %v2015 = vunpack.c.0.s8 %v2014
        %v2016 = vperm.slane %v2010, %v2015
        %v2018 = vunpack.c.l.s4 1934713408
        %v2019 = vunpack.c.0.s8 %v2018
        %v2020 = vperm.slane %v2012, %v2019
        %v2021 = vrot.slane %v2008, 4
        %v2022 = vsel %vm881, %v2021, %v1996
        %v2023 = vrot.slane %v1996, 4
        %v2024 = vsel %vm881, %v2008, %v2023
        %v2026 = vunpack.c.l.s4 1934713408
        %v2027 = vunpack.c.0.s8 %v2026
        %v2028 = vperm.slane %v2022, %v2027
        %v2030 = vunpack.c.l.s4 1934713408
        %v2031 = vunpack.c.0.s8 %v2030
        %v2032 = vperm.slane %v2024, %v2031
        %v2033 = vrot.slane %v2016, 4
        %v2034 = vsel %vm881, 0.0, %v2033
        %v2035 = vrot.slane %v2020, 4
        %v2036 = vsel %vm881, 0.0, %v2035
        %v2037 = vrot.slane %v2028, 4
        %v2038 = vsel %vm881, 0.0, %v2037
        %v2039 = vrot.slane %v2032, 4
        %v2040 = vsel %vm881, 0.0, %v2039
        %v2041 = vrot.slane %v1856, 4
        %v2042 = vsel %vm881, %v2041, %v822
        %v2043 = vrot.slane %v822, 4
        %v2044 = vsel %vm881, %v1856, %v2043
        %v2046 = vunpack.c.l.s4 1983009808
        %v2047 = vunpack.c.0.s8 %v2046
        %v2048 = vperm.slane %v2042, %v2047
        %v2050 = vunpack.c.l.s4 1983009808
        %v2051 = vunpack.c.0.s8 %v2050
        %v2052 = vperm.slane %v2044, %v2051
        %v2053 = vrot.slane %v1868, 4
        %v2054 = vsel %vm881, %v2053, %v1844
        %v2055 = vrot.slane %v1844, 4
        %v2056 = vsel %vm881, %v1868, %v2055
        %v2058 = vunpack.c.l.s4 1983009808
        %v2059 = vunpack.c.0.s8 %v2058
        %v2060 = vperm.slane %v2054, %v2059
        %v2062 = vunpack.c.l.s4 1983009808
        %v2063 = vunpack.c.0.s8 %v2062
        %v2064 = vperm.slane %v2056, %v2063
        %v2065 = vrot.slane %v2060, 4
        %v2066 = vsel %vm881, %v2065, %v2048
        %v2067 = vrot.slane %v2048, 4
        %v2068 = vsel %vm881, %v2060, %v2067
        %v2070 = vunpack.c.l.s4 1934713408
        %v2071 = vunpack.c.0.s8 %v2070
        %v2072 = vperm.slane %v2066, %v2071
        %v2074 = vunpack.c.l.s4 1934713408
        %v2075 = vunpack.c.0.s8 %v2074
        %v2076 = vperm.slane %v2068, %v2075
        %v2077 = vrot.slane %v2064, 4
        %v2078 = vsel %vm881, %v2077, %v2052
        %v2079 = vrot.slane %v2052, 4
        %v2080 = vsel %vm881, %v2064, %v2079
        %v2082 = vunpack.c.l.s4 1934713408
        %v2083 = vunpack.c.0.s8 %v2082
        %v2084 = vperm.slane %v2078, %v2083
        %v2086 = vunpack.c.l.s4 1934713408
        %v2087 = vunpack.c.0.s8 %v2086
        %v2088 = vperm.slane %v2080, %v2087
        %v2089 = vrot.slane %v2072, 4
        %v2090 = vsel %vm881, 0.0, %v2089
        %v2091 = vrot.slane %v2076, 4
        %v2092 = vsel %vm881, 0.0, %v2091
        %v2093 = vrot.slane %v2084, 4
        %v2094 = vsel %vm881, 0.0, %v2093
        %v2095 = vrot.slane %v2088, 4
        %v2096 = vsel %vm881, 0.0, %v2095
        %v2097 = vsel %vm881, %v1923, %v1904
        %v2099 = vunpack.c.l.s4 1983009808
        %v2100 = vunpack.c.0.s8 %v2099
        %v2101 = vperm.slane %v2097, %v2100
        %v2102 = vrot.slane %v1924, 4
        %v2103 = vsel %vm881, %v2102, %v1922
        %v2105 = vunpack.c.l.s4 1983009808
        %v2106 = vunpack.c.0.s8 %v2105
        %v2107 = vperm.slane %v2103, %v2106
        %v2108 = vsel %vm881, %v1927, %v1916
        %v2110 = vunpack.c.l.s4 1983009808
        %v2111 = vunpack.c.0.s8 %v2110
        %v2112 = vperm.slane %v2108, %v2111
        %v2113 = vrot.slane %v1928, 4
        %v2114 = vsel %vm881, %v2113, %v1926
        %v2116 = vunpack.c.l.s4 1983009808
        %v2117 = vunpack.c.0.s8 %v2116
        %v2118 = vperm.slane %v2114, %v2117
        %v2119 = vrot.slane %v2107, 4
        %v2120 = vsel %vm881, %v2119, %v2101
        %v2121 = vrot.slane %v2101, 4
        %v2122 = vsel %vm881, %v2107, %v2121
        %v2124 = vunpack.c.l.s4 1934713408
        %v2125 = vunpack.c.0.s8 %v2124
        %v2126 = vperm.slane %v2120, %v2125
        %v2128 = vunpack.c.l.s4 1934713408
        %v2129 = vunpack.c.0.s8 %v2128
        %v2130 = vperm.slane %v2122, %v2129
        %v2131 = vrot.slane %v2118, 4
        %v2132 = vsel %vm881, %v2131, %v2112
        %v2133 = vrot.slane %v2112, 4
        %v2134 = vsel %vm881, %v2118, %v2133
        %v2136 = vunpack.c.l.s4 1934713408
        %v2137 = vunpack.c.0.s8 %v2136
        %v2138 = vperm.slane %v2132, %v2137
        %v2140 = vunpack.c.l.s4 1934713408
        %v2141 = vunpack.c.0.s8 %v2140
        %v2142 = vperm.slane %v2134, %v2141
        %v2143 = vrot.slane %v2138, 4
        %v2144 = vsel %vm881, %v2143, %v2126
        %v2145 = vrot.slane %v2126, 4
        %v2146 = vsel %vm881, %v2138, %v2145
        %v2147 = vrot.slane %v2142, 4
        %v2148 = vsel %vm881, %v2147, %v2130
        %v2149 = vrot.slane %v2130, 4
        %v2150 = vsel %vm881, %v2142, %v2149
        %v2151 = vsel %vm881, %v1979, %v1960
        %v2153 = vunpack.c.l.s4 1983009808
        %v2154 = vunpack.c.0.s8 %v2153
        %v2155 = vperm.slane %v2151, %v2154
        %v2156 = vrot.slane %v1980, 4
        %v2157 = vsel %vm881, %v2156, %v1978
        %v2159 = vunpack.c.l.s4 1983009808
        %v2160 = vunpack.c.0.s8 %v2159
        %v2161 = vperm.slane %v2157, %v2160
        %v2162 = vsel %vm881, %v1983, %v1972
        %v2164 = vunpack.c.l.s4 1983009808
        %v2165 = vunpack.c.0.s8 %v2164
        %v2166 = vperm.slane %v2162, %v2165
        %v2167 = vrot.slane %v1984, 4
        %v2168 = vsel %vm881, %v2167, %v1982
        %v2170 = vunpack.c.l.s4 1983009808
        %v2171 = vunpack.c.0.s8 %v2170
        %v2172 = vperm.slane %v2168, %v2171
        %v2173 = vrot.slane %v2161, 4
        %v2174 = vsel %vm881, %v2173, %v2155
        %v2175 = vrot.slane %v2155, 4
        %v2176 = vsel %vm881, %v2161, %v2175
        %v2178 = vunpack.c.l.s4 1934713408
        %v2179 = vunpack.c.0.s8 %v2178
        %v2180 = vperm.slane %v2174, %v2179
        %v2182 = vunpack.c.l.s4 1934713408
        %v2183 = vunpack.c.0.s8 %v2182
        %v2184 = vperm.slane %v2176, %v2183
        %v2185 = vrot.slane %v2172, 4
        %v2186 = vsel %vm881, %v2185, %v2166
        %v2187 = vrot.slane %v2166, 4
        %v2188 = vsel %vm881, %v2172, %v2187
        %v2190 = vunpack.c.l.s4 1934713408
        %v2191 = vunpack.c.0.s8 %v2190
        %v2192 = vperm.slane %v2186, %v2191
        %v2194 = vunpack.c.l.s4 1934713408
        %v2195 = vunpack.c.0.s8 %v2194
        %v2196 = vperm.slane %v2188, %v2195
        %v2197 = vrot.slane %v2192, 4
        %v2198 = vsel %vm881, %v2197, %v2180
        %v2199 = vrot.slane %v2180, 4
        %v2200 = vsel %vm881, %v2192, %v2199
        %v2201 = vrot.slane %v2196, 4
        %v2202 = vsel %vm881, %v2201, %v2184
        %v2203 = vrot.slane %v2184, 4
        %v2204 = vsel %vm881, %v2196, %v2203
        %v2205 = vsel %vm881, %v2035, %v2016
        %v2207 = vunpack.c.l.s4 1983009808
        %v2208 = vunpack.c.0.s8 %v2207
        %v2209 = vperm.slane %v2205, %v2208
        %v2210 = vrot.slane %v2036, 4
        %v2211 = vsel %vm881, %v2210, %v2034
        %v2213 = vunpack.c.l.s4 1983009808
        %v2214 = vunpack.c.0.s8 %v2213
        %v2215 = vperm.slane %v2211, %v2214
        %v2216 = vsel %vm881, %v2039, %v2028
        %v2218 = vunpack.c.l.s4 1983009808
        %v2219 = vunpack.c.0.s8 %v2218
        %v2220 = vperm.slane %v2216, %v2219
        %v2221 = vrot.slane %v2040, 4
        %v2222 = vsel %vm881, %v2221, %v2038
        %v2224 = vunpack.c.l.s4 1983009808
        %v2225 = vunpack.c.0.s8 %v2224
        %v2226 = vperm.slane %v2222, %v2225
        %v2227 = vrot.slane %v2215, 4
        %v2228 = vsel %vm881, %v2227, %v2209
        %v2229 = vrot.slane %v2209, 4
        %v2230 = vsel %vm881, %v2215, %v2229
        %v2232 = vunpack.c.l.s4 1934713408
        %v2233 = vunpack.c.0.s8 %v2232
        %v2234 = vperm.slane %v2228, %v2233
        %v2236 = vunpack.c.l.s4 1934713408
        %v2237 = vunpack.c.0.s8 %v2236
        %v2238 = vperm.slane %v2230, %v2237
        %v2239 = vrot.slane %v2226, 4
        %v2240 = vsel %vm881, %v2239, %v2220
        %v2241 = vrot.slane %v2220, 4
        %v2242 = vsel %vm881, %v2226, %v2241
        %v2244 = vunpack.c.l.s4 1934713408
        %v2245 = vunpack.c.0.s8 %v2244
        %v2246 = vperm.slane %v2240, %v2245
        %v2248 = vunpack.c.l.s4 1934713408
        %v2249 = vunpack.c.0.s8 %v2248
        %v2250 = vperm.slane %v2242, %v2249
        %v2251 = vrot.slane %v2246, 4
        %v2252 = vsel %vm881, %v2251, %v2234
        %v2253 = vrot.slane %v2234, 4
        %v2254 = vsel %vm881, %v2246, %v2253
        %v2255 = vrot.slane %v2250, 4
        %v2256 = vsel %vm881, %v2255, %v2238
        %v2257 = vrot.slane %v2238, 4
        %v2258 = vsel %vm881, %v2250, %v2257
        %v2259 = vsel %vm881, %v2091, %v2072
        %v2261 = vunpack.c.l.s4 1983009808
        %v2262 = vunpack.c.0.s8 %v2261
        %v2263 = vperm.slane %v2259, %v2262
        %v2264 = vrot.slane %v2092, 4
        %v2265 = vsel %vm881, %v2264, %v2090
        %v2267 = vunpack.c.l.s4 1983009808
        %v2268 = vunpack.c.0.s8 %v2267
        %v2269 = vperm.slane %v2265, %v2268
        %v2270 = vsel %vm881, %v2095, %v2084
        %v2272 = vunpack.c.l.s4 1983009808
        %v2273 = vunpack.c.0.s8 %v2272
        %v2274 = vperm.slane %v2270, %v2273
        %v2275 = vrot.slane %v2096, 4
        %v2276 = vsel %vm881, %v2275, %v2094
        %v2278 = vunpack.c.l.s4 1983009808
        %v2279 = vunpack.c.0.s8 %v2278
        %v2280 = vperm.slane %v2276, %v2279
        %v2281 = vrot.slane %v2269, 4
        %v2282 = vsel %vm881, %v2281, %v2263
        %v2283 = vrot.slane %v2263, 4
        %v2284 = vsel %vm881, %v2269, %v2283
        %v2286 = vunpack.c.l.s4 1934713408
        %v2287 = vunpack.c.0.s8 %v2286
        %v2288 = vperm.slane %v2282, %v2287
        %v2290 = vunpack.c.l.s4 1934713408
        %v2291 = vunpack.c.0.s8 %v2290
        %v2292 = vperm.slane %v2284, %v2291
        %v2293 = vrot.slane %v2280, 4
        %v2294 = vsel %vm881, %v2293, %v2274
        %v2295 = vrot.slane %v2274, 4
        %v2296 = vsel %vm881, %v2280, %v2295
        %v2298 = vunpack.c.l.s4 1934713408
        %v2299 = vunpack.c.0.s8 %v2298
        %v2300 = vperm.slane %v2294, %v2299
        %v2302 = vunpack.c.l.s4 1934713408
        %v2303 = vunpack.c.0.s8 %v2302
        %v2304 = vperm.slane %v2296, %v2303
        %v2305 = vrot.slane %v2300, 4
        %v2306 = vsel %vm881, %v2305, %v2288
        %v2307 = vrot.slane %v2288, 4
        %v2308 = vsel %vm881, %v2300, %v2307
        %v2309 = vrot.slane %v2304, 4
        %v2310 = vsel %vm881, %v2309, %v2292
        %v2311 = vrot.slane %v2292, 4
        %v2312 = vsel %vm881, %v2304, %v2311
        %v2313 = vpack.c.bf16 %v2144, %v2144
        %v2314 = vpack.c.bf16 %v2198, %v2198
        %v2315 = vpack.c.bf16 %v2146, %v2146
        %v2316 = vpack.c.bf16 %v2200, %v2200
        %v2317 = vpack.c.bf16 %v2148, %v2148
        %v2318 = vpack.c.bf16 %v2202, %v2202
        %v2319 = vpack.c.bf16 %v2150, %v2150
        %v2320 = vpack.c.bf16 %v2204, %v2204
        %v2321 = vpack.c.bf16 %v2252, %v2252
        %v2322 = vpack.c.bf16 %v2306, %v2306
        %v2323 = vpack.c.bf16 %v2254, %v2254
        %v2324 = vpack.c.bf16 %v2308, %v2308
        %v2325 = vpack.c.bf16 %v2256, %v2256
        %v2326 = vpack.c.bf16 %v2310, %v2310
        %v2327 = vpack.c.bf16 %v2258, %v2258
        %v2328 = vpack.c.bf16 %v2312, %v2312
        %v2331 = vunpack.c.l.b16 %v1321
        %v2332 = vunpack.c.l.b16 %v1322
        %v2333 = vpack.c.b16 %v2332, %v2331
        %v2336 = vunpack.c.l.b16 %v1817
        %v2337 = vunpack.c.l.b16 %v1818
        %v2338 = vpack.c.b16 %v2337, %v2336
        %vm2339 = vcmask 261120
        %v2341 = vsel %vm2339, %v2333, 0
        %v2344 = vsel %vm2339, %v2338, 0
        %2346 = vmatpush.bf16.xpose.msra.mxu0 0
        %2347 = vmatpush.bf16.xpose.msra.mxu0 0
        %2348 = vmatpush.bf16.xpose.msra.mxu0 0
        %2349 = vmatpush.bf16.xpose.msra.mxu0 0
        %2350 = vmatpush.bf16.xpose.msra.mxu0 0
        %2351 = vmatpush.bf16.xpose.msra.mxu0 0
        %2352 = vmatpush.bf16.xpose.msra.mxu0 0
        %2353 = vmatpush.bf16.xpose.msra.mxu0 %v2344
        %2354 = vmatmul.bf16.gmra.mxu0 %v2341
        %v2355 = vpop.f32.mrf.mxu0
        %v2356 = vadd.f32 0.0, %v2355
        %v2357 = vpop.f32.mrf.mxu0
        %v2358 = vadd.f32 0.0, %v2357
        %2359 = vdwg.mxu0
        %v2362 = vunpack.c.l.b16 %v1323
        %v2363 = vunpack.c.l.b16 %v1324
        %v2364 = vpack.c.b16 %v2363, %v2362
        %v2367 = vunpack.c.l.b16 %v1819
        %v2368 = vunpack.c.l.b16 %v1820
        %v2369 = vpack.c.b16 %v2368, %v2367
        %v2371 = vsel %vm2339, %v2364, 0
        %v2374 = vsel %vm2339, %v2369, 0
        %2376 = vmatpush.bf16.xpose.msra.mxu0 0
        %2377 = vmatpush.bf16.xpose.msra.mxu0 0
        %2378 = vmatpush.bf16.xpose.msra.mxu0 0
        %2379 = vmatpush.bf16.xpose.msra.mxu0 0
        %2380 = vmatpush.bf16.xpose.msra.mxu0 0
        %2381 = vmatpush.bf16.xpose.msra.mxu0 0
        %2382 = vmatpush.bf16.xpose.msra.mxu0 0
        %2383 = vmatpush.bf16.xpose.msra.mxu0 %v2374
        %2384 = vmatmul.bf16.gmra.mxu0 %v2371
        %v2385 = vpop.f32.mrf.mxu0
        %v2386 = vadd.f32 0.0, %v2385
        %v2387 = vpop.f32.mrf.mxu0
        %v2388 = vadd.f32 0.0, %v2387
        %2389 = vdwg.mxu0
        %v2392 = vunpack.c.l.b16 %v1325
        %v2393 = vunpack.c.l.b16 %v1326
        %v2394 = vpack.c.b16 %v2393, %v2392
        %v2397 = vunpack.c.l.b16 %v1821
        %v2398 = vunpack.c.l.b16 %v1822
        %v2399 = vpack.c.b16 %v2398, %v2397
        %v2401 = vsel %vm2339, %v2394, 0
        %v2404 = vsel %vm2339, %v2399, 0
        %2406 = vmatpush.bf16.xpose.msra.mxu0 0
        %2407 = vmatpush.bf16.xpose.msra.mxu0 0
        %2408 = vmatpush.bf16.xpose.msra.mxu0 0
        %2409 = vmatpush.bf16.xpose.msra.mxu0 0
        %2410 = vmatpush.bf16.xpose.msra.mxu0 0
        %2411 = vmatpush.bf16.xpose.msra.mxu0 0
        %2412 = vmatpush.bf16.xpose.msra.mxu0 0
        %2413 = vmatpush.bf16.xpose.msra.mxu0 %v2404
        %2414 = vmatmul.bf16.gmra.mxu0 %v2401
        %v2415 = vpop.f32.mrf.mxu0
        %v2416 = vadd.f32 0.0, %v2415
        %v2417 = vpop.f32.mrf.mxu0
        %v2418 = vadd.f32 0.0, %v2417
        %2419 = vdwg.mxu0
        %v2422 = vunpack.c.l.b16 %v1327
        %v2423 = vunpack.c.l.b16 %v1328
        %v2424 = vpack.c.b16 %v2423, %v2422
        %v2427 = vunpack.c.l.b16 %v1823
        %v2428 = vunpack.c.l.b16 %v1824
        %v2429 = vpack.c.b16 %v2428, %v2427
        %v2431 = vsel %vm2339, %v2424, 0
        %v2434 = vsel %vm2339, %v2429, 0
        %2436 = vmatpush.bf16.xpose.msra.mxu0 0
        %2437 = vmatpush.bf16.xpose.msra.mxu0 0
        %2438 = vmatpush.bf16.xpose.msra.mxu0 0
        %2439 = vmatpush.bf16.xpose.msra.mxu0 0
        %2440 = vmatpush.bf16.xpose.msra.mxu0 0
        %2441 = vmatpush.bf16.xpose.msra.mxu0 0
        %2442 = vmatpush.bf16.xpose.msra.mxu0 0
        %2443 = vmatpush.bf16.xpose.msra.mxu0 %v2434
        %2444 = vmatmul.bf16.gmra.mxu0 %v2431
        %v2445 = vpop.f32.mrf.mxu0
        %v2446 = vadd.f32 0.0, %v2445
        %v2447 = vpop.f32.mrf.mxu0
        %v2448 = vadd.f32 0.0, %v2447
        %2449 = vdwg.mxu0
        %v2452 = vunpack.c.l.b16 %v1329
        %v2453 = vunpack.c.l.b16 %v1330
        %v2454 = vpack.c.b16 %v2453, %v2452
        %v2457 = vunpack.c.l.b16 %v1825
        %v2458 = vunpack.c.l.b16 %v1826
        %v2459 = vpack.c.b16 %v2458, %v2457
        %v2461 = vsel %vm2339, %v2454, 0
        %v2464 = vsel %vm2339, %v2459, 0
        %2466 = vmatpush.bf16.xpose.msra.mxu0 0
        %2467 = vmatpush.bf16.xpose.msra.mxu0 0
        %2468 = vmatpush.bf16.xpose.msra.mxu0 0
        %2469 = vmatpush.bf16.xpose.msra.mxu0 0
        %2470 = vmatpush.bf16.xpose.msra.mxu0 0
        %2471 = vmatpush.bf16.xpose.msra.mxu0 0
        %2472 = vmatpush.bf16.xpose.msra.mxu0 0
        %2473 = vmatpush.bf16.xpose.msra.mxu0 %v2464
        %2474 = vmatmul.bf16.gmra.mxu0 %v2461
        %v2475 = vpop.f32.mrf.mxu0
        %v2476 = vadd.f32 0.0, %v2475
        %v2477 = vpop.f32.mrf.mxu0
        %v2478 = vadd.f32 0.0, %v2477
        %2479 = vdwg.mxu0
        %v2482 = vunpack.c.l.b16 %v1331
        %v2483 = vunpack.c.l.b16 %v1332
        %v2484 = vpack.c.b16 %v2483, %v2482
        %v2487 = vunpack.c.l.b16 %v1827
        %v2488 = vunpack.c.l.b16 %v1828
        %v2489 = vpack.c.b16 %v2488, %v2487
        %v2491 = vsel %vm2339, %v2484, 0
        %v2494 = vsel %vm2339, %v2489, 0
        %2496 = vmatpush.bf16.xpose.msra.mxu0 0
        %2497 = vmatpush.bf16.xpose.msra.mxu0 0
        %2498 = vmatpush.bf16.xpose.msra.mxu0 0
        %2499 = vmatpush.bf16.xpose.msra.mxu0 0
        %2500 = vmatpush.bf16.xpose.msra.mxu0 0
        %2501 = vmatpush.bf16.xpose.msra.mxu0 0
        %2502 = vmatpush.bf16.xpose.msra.mxu0 0
        %2503 = vmatpush.bf16.xpose.msra.mxu0 %v2494
        %2504 = vmatmul.bf16.gmra.mxu0 %v2491
        %v2505 = vpop.f32.mrf.mxu0
        %v2506 = vadd.f32 0.0, %v2505
        %v2507 = vpop.f32.mrf.mxu0
        %v2508 = vadd.f32 0.0, %v2507
        %2509 = vdwg.mxu0
        %v2512 = vunpack.c.l.b16 %v1333
        %v2513 = vunpack.c.l.b16 %v1334
        %v2514 = vpack.c.b16 %v2513, %v2512
        %v2517 = vunpack.c.l.b16 %v1829
        %v2518 = vunpack.c.l.b16 %v1830
        %v2519 = vpack.c.b16 %v2518, %v2517
        %v2521 = vsel %vm2339, %v2514, 0
        %v2524 = vsel %vm2339, %v2519, 0
        %2526 = vmatpush.bf16.xpose.msra.mxu0 0
        %2527 = vmatpush.bf16.xpose.msra.mxu0 0
        %2528 = vmatpush.bf16.xpose.msra.mxu0 0
        %2529 = vmatpush.bf16.xpose.msra.mxu0 0
        %2530 = vmatpush.bf16.xpose.msra.mxu0 0
        %2531 = vmatpush.bf16.xpose.msra.mxu0 0
        %2532 = vmatpush.bf16.xpose.msra.mxu0 0
        %2533 = vmatpush.bf16.xpose.msra.mxu0 %v2524
        %2534 = vmatmul.bf16.gmra.mxu0 %v2521
        %v2535 = vpop.f32.mrf.mxu0
        %v2536 = vadd.f32 0.0, %v2535
        %v2537 = vpop.f32.mrf.mxu0
        %v2538 = vadd.f32 0.0, %v2537
        %2539 = vdwg.mxu0
        %v2542 = vunpack.c.l.b16 %v1335
        %v2543 = vunpack.c.l.b16 %v1336
        %v2544 = vpack.c.b16 %v2543, %v2542
        %v2547 = vunpack.c.l.b16 %v1831
        %v2548 = vunpack.c.l.b16 %v1832
        %v2549 = vpack.c.b16 %v2548, %v2547
        %v2551 = vsel %vm2339, %v2544, 0
        %v2554 = vsel %vm2339, %v2549, 0
        %2556 = vmatpush.bf16.xpose.msra.mxu0 0
        %2557 = vmatpush.bf16.xpose.msra.mxu0 0
        %2558 = vmatpush.bf16.xpose.msra.mxu0 0
        %2559 = vmatpush.bf16.xpose.msra.mxu0 0
        %2560 = vmatpush.bf16.xpose.msra.mxu0 0
        %2561 = vmatpush.bf16.xpose.msra.mxu0 0
        %2562 = vmatpush.bf16.xpose.msra.mxu0 0
        %2563 = vmatpush.bf16.xpose.msra.mxu0 %v2554
        %2564 = vmatmul.bf16.gmra.mxu0 %v2551
        %v2565 = vpop.f32.mrf.mxu0
        %v2566 = vadd.f32 0.0, %v2565
        %v2567 = vpop.f32.mrf.mxu0
        %v2568 = vadd.f32 0.0, %v2567
        %2569 = vdwg.mxu0
        %v2570 = vmul.f32 %v2356, 0.17677669
        %v2571 = vmul.f32 %v2358, 0.17677669
        %v2572 = vmul.f32 %v2386, 0.17677669
        %v2573 = vmul.f32 %v2388, 0.17677669
        %v2574 = vmul.f32 %v2416, 0.17677669
        %v2575 = vmul.f32 %v2418, 0.17677669
        %v2576 = vmul.f32 %v2446, 0.17677669
        %v2577 = vmul.f32 %v2448, 0.17677669
        %v2578 = vmul.f32 %v2476, 0.17677669
        %v2579 = vmul.f32 %v2478, 0.17677669
        %v2580 = vmul.f32 %v2506, 0.17677669
        %v2581 = vmul.f32 %v2508, 0.17677669
        %v2582 = vmul.f32 %v2536, 0.17677669
        %v2583 = vmul.f32 %v2538, 0.17677669
        %v2584 = vmul.f32 %v2566, 0.17677669
        %v2585 = vmul.f32 %v2568, 0.17677669
        %v2586 = vadd.f32 %v2570, %v580
        %v2587 = vadd.f32 %v2571, %v581
        %v2588 = vadd.f32 %v2572, %v580
        %v2589 = vadd.f32 %v2573, %v581
        %v2590 = vadd.f32 %v2574, %v580
        %v2591 = vadd.f32 %v2575, %v581
        %v2592 = vadd.f32 %v2576, %v580
        %v2593 = vadd.f32 %v2577, %v581
        %v2594 = vadd.f32 %v2578, %v580
        %v2595 = vadd.f32 %v2579, %v581
        %v2596 = vadd.f32 %v2580, %v580
        %v2597 = vadd.f32 %v2581, %v581
        %v2598 = vadd.f32 %v2582, %v580
        %v2599 = vadd.f32 %v2583, %v581
        %v2600 = vadd.f32 %v2584, %v580
        %v2601 = vadd.f32 %v2585, %v581
        %vm2602 = vcmask 130048
        %v2603 = vsel %vm2602, %v2586, -inf
        %2604 = vmax.xlane.f32.xlu0 %v2603
        %v2605 = vpop.xlane.xlu0 %2604
        %v2606 = vsel %vm2602, %v2587, -inf
        %2607 = vmax.xlane.f32.xlu0 %v2606
        %v2608 = vpop.xlane.xlu0 %2607
        %v2609 = vsel %vm2602, %v2588, -inf
        %2610 = vmax.xlane.f32.xlu0 %v2609
        %v2611 = vpop.xlane.xlu0 %2610
        %v2612 = vsel %vm2602, %v2589, -inf
        %2613 = vmax.xlane.f32.xlu0 %v2612
        %v2614 = vpop.xlane.xlu0 %2613
        %v2615 = vsel %vm2602, %v2590, -inf
        %2616 = vmax.xlane.f32.xlu0 %v2615
        %v2617 = vpop.xlane.xlu0 %2616
        %v2618 = vsel %vm2602, %v2591, -inf
        %2619 = vmax.xlane.f32.xlu0 %v2618
        %v2620 = vpop.xlane.xlu0 %2619
        %v2621 = vsel %vm2602, %v2592, -inf
        %2622 = vmax.xlane.f32.xlu0 %v2621
        %v2623 = vpop.xlane.xlu0 %2622
        %v2624 = vsel %vm2602, %v2593, -inf
        %2625 = vmax.xlane.f32.xlu0 %v2624
        %v2626 = vpop.xlane.xlu0 %2625
        %v2627 = vsel %vm2602, %v2594, -inf
        %2628 = vmax.xlane.f32.xlu0 %v2627
        %v2629 = vpop.xlane.xlu0 %2628
        %v2630 = vsel %vm2602, %v2595, -inf
        %2631 = vmax.xlane.f32.xlu0 %v2630
        %v2632 = vpop.xlane.xlu0 %2631
        %v2633 = vsel %vm2602, %v2596, -inf
        %2634 = vmax.xlane.f32.xlu0 %v2633
        %v2635 = vpop.xlane.xlu0 %2634
        %v2636 = vsel %vm2602, %v2597, -inf
        %2637 = vmax.xlane.f32.xlu0 %v2636
        %v2638 = vpop.xlane.xlu0 %2637
        %v2639 = vsel %vm2602, %v2598, -inf
        %2640 = vmax.xlane.f32.xlu0 %v2639
        %v2641 = vpop.xlane.xlu0 %2640
        %v2642 = vsel %vm2602, %v2599, -inf
        %2643 = vmax.xlane.f32.xlu0 %v2642
        %v2644 = vpop.xlane.xlu0 %2643
        %v2645 = vsel %vm2602, %v2600, -inf
        %2646 = vmax.xlane.f32.xlu0 %v2645
        %v2647 = vpop.xlane.xlu0 %2646
        %v2648 = vsel %vm2602, %v2601, -inf
        %2649 = vmax.xlane.f32.xlu0 %v2648
        %v2650 = vpop.xlane.xlu0 %2649
        %v2651 = vsub.f32 %v2586, %v2605
        %v2652 = vsub.f32 %v2587, %v2608
        %v2653 = vsub.f32 %v2588, %v2611
        %v2654 = vsub.f32 %v2589, %v2614
        %v2655 = vsub.f32 %v2590, %v2617
        %v2656 = vsub.f32 %v2591, %v2620
        %v2657 = vsub.f32 %v2592, %v2623
        %v2658 = vsub.f32 %v2593, %v2626
        %v2659 = vsub.f32 %v2594, %v2629
        %v2660 = vsub.f32 %v2595, %v2632
        %v2661 = vsub.f32 %v2596, %v2635
        %v2662 = vsub.f32 %v2597, %v2638
        %v2663 = vsub.f32 %v2598, %v2641
        %v2664 = vsub.f32 %v2599, %v2644
        %v2665 = vsub.f32 %v2600, %v2647
        %v2666 = vsub.f32 %v2601, %v2650
        %v2667 = vmul.f32 %v2651, 1.442695
        %v2668 = vpow.pop %v2667
        %v2669 = vmul.f32 %v2652, 1.442695
        %v2670 = vpow.pop %v2669
        %v2671 = vmul.f32 %v2653, 1.442695
        %v2672 = vpow.pop %v2671
        %v2673 = vmul.f32 %v2654, 1.442695
        %v2674 = vpow.pop %v2673
        %v2675 = vmul.f32 %v2655, 1.442695
        %v2676 = vpow.pop %v2675
        %v2677 = vmul.f32 %v2656, 1.442695
        %v2678 = vpow.pop %v2677
        %v2679 = vmul.f32 %v2657, 1.442695
        %v2680 = vpow.pop %v2679
        %v2681 = vmul.f32 %v2658, 1.442695
        %v2682 = vpow.pop %v2681
        %v2683 = vmul.f32 %v2659, 1.442695
        %v2684 = vpow.pop %v2683
        %v2685 = vmul.f32 %v2660, 1.442695
        %v2686 = vpow.pop %v2685
        %v2687 = vmul.f32 %v2661, 1.442695
        %v2688 = vpow.pop %v2687
        %v2689 = vmul.f32 %v2662, 1.442695
        %v2690 = vpow.pop %v2689
        %v2691 = vmul.f32 %v2663, 1.442695
        %v2692 = vpow.pop %v2691
        %v2693 = vmul.f32 %v2664, 1.442695
        %v2694 = vpow.pop %v2693
        %v2695 = vmul.f32 %v2665, 1.442695
        %v2696 = vpow.pop %v2695
        %v2697 = vmul.f32 %v2666, 1.442695
        %v2698 = vpow.pop %v2697
        %v2699 = vsel %vm2602, %v2668, 0.0
        %2700 = vadd.xlane.f32.xlu0 %v2699
        %v2701 = vpop.xlane.xlu0 %2700
        %v2702 = vsel %vm2602, %v2670, 0.0
        %2703 = vadd.xlane.f32.xlu0 %v2702
        %v2704 = vpop.xlane.xlu0 %2703
        %v2705 = vsel %vm2602, %v2672, 0.0
        %2706 = vadd.xlane.f32.xlu0 %v2705
        %v2707 = vpop.xlane.xlu0 %2706
        %v2708 = vsel %vm2602, %v2674, 0.0
        %2709 = vadd.xlane.f32.xlu0 %v2708
        %v2710 = vpop.xlane.xlu0 %2709
        %v2711 = vsel %vm2602, %v2676, 0.0
        %2712 = vadd.xlane.f32.xlu0 %v2711
        %v2713 = vpop.xlane.xlu0 %2712
        %v2714 = vsel %vm2602, %v2678, 0.0
        %2715 = vadd.xlane.f32.xlu0 %v2714
        %v2716 = vpop.xlane.xlu0 %2715
        %v2717 = vsel %vm2602, %v2680, 0.0
        %2718 = vadd.xlane.f32.xlu0 %v2717
        %v2719 = vpop.xlane.xlu0 %2718
        %v2720 = vsel %vm2602, %v2682, 0.0
        %2721 = vadd.xlane.f32.xlu0 %v2720
        %v2722 = vpop.xlane.xlu0 %2721
        %v2723 = vsel %vm2602, %v2684, 0.0
        %2724 = vadd.xlane.f32.xlu0 %v2723
        %v2725 = vpop.xlane.xlu0 %2724
        %v2726 = vsel %vm2602, %v2686, 0.0
        %2727 = vadd.xlane.f32.xlu0 %v2726
        %v2728 = vpop.xlane.xlu0 %2727
        %v2729 = vsel %vm2602, %v2688, 0.0
        %2730 = vadd.xlane.f32.xlu0 %v2729
        %v2731 = vpop.xlane.xlu0 %2730
        %v2732 = vsel %vm2602, %v2690, 0.0
        %2733 = vadd.xlane.f32.xlu0 %v2732
        %v2734 = vpop.xlane.xlu0 %2733
        %v2735 = vsel %vm2602, %v2692, 0.0
        %2736 = vadd.xlane.f32.xlu0 %v2735
        %v2737 = vpop.xlane.xlu0 %2736
        %v2738 = vsel %vm2602, %v2694, 0.0
        %2739 = vadd.xlane.f32.xlu0 %v2738
        %v2740 = vpop.xlane.xlu0 %2739
        %v2741 = vsel %vm2602, %v2696, 0.0
        %2742 = vadd.xlane.f32.xlu0 %v2741
        %v2743 = vpop.xlane.xlu0 %2742
        %v2744 = vsel %vm2602, %v2698, 0.0
        %2745 = vadd.xlane.f32.xlu0 %v2744
        %v2746 = vpop.xlane.xlu0 %2745
        %v2747 = vrcp.pop %v2701
        %v2748 = vmul.f32 %v2701, %v2747
        %v2749 = vsub.f32 1.0, %v2748
        %v2750 = vmul.f32 %v2747, %v2749
        %v2751 = vadd.f32 %v2747, %v2750
        %vm2752 = vweird.f32 %v2701
        %vm2753 = vweird.f32 %v2747
        %vm2754 = vmor %vm2752, %vm2753
        %v2755 = vsel %vm2754, %v2747, %v2751
        %v2756 = vand.u32 2147483647, %v2701
        %vm2757 = vcmp.eq.f32.partialorder %v2756, 8.507059e+37
        %v2758 = vand.u32 %v2701, 2147483648
        %v2759 = vor.u32 1.1754944e-38, %v2758
        %v2760 = vsel %vm2757, %v2759, %v2755
        %v2761 = vmul.f32 %v2668, %v2760
        %v2762 = vrcp.pop %v2704
        %v2763 = vmul.f32 %v2704, %v2762
        %v2764 = vsub.f32 1.0, %v2763
        %v2765 = vmul.f32 %v2762, %v2764
        %v2766 = vadd.f32 %v2762, %v2765
        %vm2767 = vweird.f32 %v2704
        %vm2768 = vweird.f32 %v2762
        %vm2769 = vmor %vm2767, %vm2768
        %v2770 = vsel %vm2769, %v2762, %v2766
        %v2771 = vand.u32 2147483647, %v2704
        %vm2772 = vcmp.eq.f32.partialorder %v2771, 8.507059e+37
        %v2773 = vand.u32 %v2704, 2147483648
        %v2774 = vor.u32 1.1754944e-38, %v2773
        %v2775 = vsel %vm2772, %v2774, %v2770
        %v2776 = vmul.f32 %v2670, %v2775
        %v2777 = vrcp.pop %v2707
        %v2778 = vmul.f32 %v2707, %v2777
        %v2779 = vsub.f32 1.0, %v2778
        %v2780 = vmul.f32 %v2777, %v2779
        %v2781 = vadd.f32 %v2777, %v2780
        %vm2782 = vweird.f32 %v2707
        %vm2783 = vweird.f32 %v2777
        %vm2784 = vmor %vm2782, %vm2783
        %v2785 = vsel %vm2784, %v2777, %v2781
        %v2786 = vand.u32 2147483647, %v2707
        %vm2787 = vcmp.eq.f32.partialorder %v2786, 8.507059e+37
        %v2788 = vand.u32 %v2707, 2147483648
        %v2789 = vor.u32 1.1754944e-38, %v2788
        %v2790 = vsel %vm2787, %v2789, %v2785
        %v2791 = vmul.f32 %v2672, %v2790
        %v2792 = vrcp.pop %v2710
        %v2793 = vmul.f32 %v2710, %v2792
        %v2794 = vsub.f32 1.0, %v2793
        %v2795 = vmul.f32 %v2792, %v2794
        %v2796 = vadd.f32 %v2792, %v2795
        %vm2797 = vweird.f32 %v2710
        %vm2798 = vweird.f32 %v2792
        %vm2799 = vmor %vm2797, %vm2798
        %v2800 = vsel %vm2799, %v2792, %v2796
        %v2801 = vand.u32 2147483647, %v2710
        %vm2802 = vcmp.eq.f32.partialorder %v2801, 8.507059e+37
        %v2803 = vand.u32 %v2710, 2147483648
        %v2804 = vor.u32 1.1754944e-38, %v2803
        %v2805 = vsel %vm2802, %v2804, %v2800
        %v2806 = vmul.f32 %v2674, %v2805
        %v2807 = vrcp.pop %v2713
        %v2808 = vmul.f32 %v2713, %v2807
        %v2809 = vsub.f32 1.0, %v2808
        %v2810 = vmul.f32 %v2807, %v2809
        %v2811 = vadd.f32 %v2807, %v2810
        %vm2812 = vweird.f32 %v2713
        %vm2813 = vweird.f32 %v2807
        %vm2814 = vmor %vm2812, %vm2813
        %v2815 = vsel %vm2814, %v2807, %v2811
        %v2816 = vand.u32 2147483647, %v2713
        %vm2817 = vcmp.eq.f32.partialorder %v2816, 8.507059e+37
        %v2818 = vand.u32 %v2713, 2147483648
        %v2819 = vor.u32 1.1754944e-38, %v2818
        %v2820 = vsel %vm2817, %v2819, %v2815
        %v2821 = vmul.f32 %v2676, %v2820
        %v2822 = vrcp.pop %v2716
        %v2823 = vmul.f32 %v2716, %v2822
        %v2824 = vsub.f32 1.0, %v2823
        %v2825 = vmul.f32 %v2822, %v2824
        %v2826 = vadd.f32 %v2822, %v2825
        %vm2827 = vweird.f32 %v2716
        %vm2828 = vweird.f32 %v2822
        %vm2829 = vmor %vm2827, %vm2828
        %v2830 = vsel %vm2829, %v2822, %v2826
        %v2831 = vand.u32 2147483647, %v2716
        %vm2832 = vcmp.eq.f32.partialorder %v2831, 8.507059e+37
        %v2833 = vand.u32 %v2716, 2147483648
        %v2834 = vor.u32 1.1754944e-38, %v2833
        %v2835 = vsel %vm2832, %v2834, %v2830
        %v2836 = vmul.f32 %v2678, %v2835
        %v2837 = vrcp.pop %v2719
        %v2838 = vmul.f32 %v2719, %v2837
        %v2839 = vsub.f32 1.0, %v2838
        %v2840 = vmul.f32 %v2837, %v2839
        %v2841 = vadd.f32 %v2837, %v2840
        %vm2842 = vweird.f32 %v2719
        %vm2843 = vweird.f32 %v2837
        %vm2844 = vmor %vm2842, %vm2843
        %v2845 = vsel %vm2844, %v2837, %v2841
        %v2846 = vand.u32 2147483647, %v2719
        %vm2847 = vcmp.eq.f32.partialorder %v2846, 8.507059e+37
        %v2848 = vand.u32 %v2719, 2147483648
        %v2849 = vor.u32 1.1754944e-38, %v2848
        %v2850 = vsel %vm2847, %v2849, %v2845
        %v2851 = vmul.f32 %v2680, %v2850
        %v2852 = vrcp.pop %v2722
        %v2853 = vmul.f32 %v2722, %v2852
        %v2854 = vsub.f32 1.0, %v2853
        %v2855 = vmul.f32 %v2852, %v2854
        %v2856 = vadd.f32 %v2852, %v2855
        %vm2857 = vweird.f32 %v2722
        %vm2858 = vweird.f32 %v2852
        %vm2859 = vmor %vm2857, %vm2858
        %v2860 = vsel %vm2859, %v2852, %v2856
        %v2861 = vand.u32 2147483647, %v2722
        %vm2862 = vcmp.eq.f32.partialorder %v2861, 8.507059e+37
        %v2863 = vand.u32 %v2722, 2147483648
        %v2864 = vor.u32 1.1754944e-38, %v2863
        %v2865 = vsel %vm2862, %v2864, %v2860
        %v2866 = vmul.f32 %v2682, %v2865
        %v2867 = vrcp.pop %v2725
        %v2868 = vmul.f32 %v2725, %v2867
        %v2869 = vsub.f32 1.0, %v2868
        %v2870 = vmul.f32 %v2867, %v2869
        %v2871 = vadd.f32 %v2867, %v2870
        %vm2872 = vweird.f32 %v2725
        %vm2873 = vweird.f32 %v2867
        %vm2874 = vmor %vm2872, %vm2873
        %v2875 = vsel %vm2874, %v2867, %v2871
        %v2876 = vand.u32 2147483647, %v2725
        %vm2877 = vcmp.eq.f32.partialorder %v2876, 8.507059e+37
        %v2878 = vand.u32 %v2725, 2147483648
        %v2879 = vor.u32 1.1754944e-38, %v2878
        %v2880 = vsel %vm2877, %v2879, %v2875
        %v2881 = vmul.f32 %v2684, %v2880
        %v2882 = vrcp.pop %v2728
        %v2883 = vmul.f32 %v2728, %v2882
        %v2884 = vsub.f32 1.0, %v2883
        %v2885 = vmul.f32 %v2882, %v2884
        %v2886 = vadd.f32 %v2882, %v2885
        %vm2887 = vweird.f32 %v2728
        %vm2888 = vweird.f32 %v2882
        %vm2889 = vmor %vm2887, %vm2888
        %v2890 = vsel %vm2889, %v2882, %v2886
        %v2891 = vand.u32 2147483647, %v2728
        %vm2892 = vcmp.eq.f32.partialorder %v2891, 8.507059e+37
        %v2893 = vand.u32 %v2728, 2147483648
        %v2894 = vor.u32 1.1754944e-38, %v2893
        %v2895 = vsel %vm2892, %v2894, %v2890
        %v2896 = vmul.f32 %v2686, %v2895
        %v2897 = vrcp.pop %v2731
        %v2898 = vmul.f32 %v2731, %v2897
        %v2899 = vsub.f32 1.0, %v2898
        %v2900 = vmul.f32 %v2897, %v2899
        %v2901 = vadd.f32 %v2897, %v2900
        %vm2902 = vweird.f32 %v2731
        %vm2903 = vweird.f32 %v2897
        %vm2904 = vmor %vm2902, %vm2903
        %v2905 = vsel %vm2904, %v2897, %v2901
        %v2906 = vand.u32 2147483647, %v2731
        %vm2907 = vcmp.eq.f32.partialorder %v2906, 8.507059e+37
        %v2908 = vand.u32 %v2731, 2147483648
        %v2909 = vor.u32 1.1754944e-38, %v2908
        %v2910 = vsel %vm2907, %v2909, %v2905
        %v2911 = vmul.f32 %v2688, %v2910
        %v2912 = vrcp.pop %v2734
        %v2913 = vmul.f32 %v2734, %v2912
        %v2914 = vsub.f32 1.0, %v2913
        %v2915 = vmul.f32 %v2912, %v2914
        %v2916 = vadd.f32 %v2912, %v2915
        %vm2917 = vweird.f32 %v2734
        %vm2918 = vweird.f32 %v2912
        %vm2919 = vmor %vm2917, %vm2918
        %v2920 = vsel %vm2919, %v2912, %v2916
        %v2921 = vand.u32 2147483647, %v2734
        %vm2922 = vcmp.eq.f32.partialorder %v2921, 8.507059e+37
        %v2923 = vand.u32 %v2734, 2147483648
        %v2924 = vor.u32 1.1754944e-38, %v2923
        %v2925 = vsel %vm2922, %v2924, %v2920
        %v2926 = vmul.f32 %v2690, %v2925
        %v2927 = vrcp.pop %v2737
        %v2928 = vmul.f32 %v2737, %v2927
        %v2929 = vsub.f32 1.0, %v2928
        %v2930 = vmul.f32 %v2927, %v2929
        %v2931 = vadd.f32 %v2927, %v2930
        %vm2932 = vweird.f32 %v2737
        %vm2933 = vweird.f32 %v2927
        %vm2934 = vmor %vm2932, %vm2933
        %v2935 = vsel %vm2934, %v2927, %v2931
        %v2936 = vand.u32 2147483647, %v2737
        %vm2937 = vcmp.eq.f32.partialorder %v2936, 8.507059e+37
        %v2938 = vand.u32 %v2737, 2147483648
        %v2939 = vor.u32 1.1754944e-38, %v2938
        %v2940 = vsel %vm2937, %v2939, %v2935
        %v2941 = vmul.f32 %v2692, %v2940
        %v2942 = vrcp.pop %v2740
        %v2943 = vmul.f32 %v2740, %v2942
        %v2944 = vsub.f32 1.0, %v2943
        %v2945 = vmul.f32 %v2942, %v2944
        %v2946 = vadd.f32 %v2942, %v2945
        %vm2947 = vweird.f32 %v2740
        %vm2948 = vweird.f32 %v2942
        %vm2949 = vmor %vm2947, %vm2948
        %v2950 = vsel %vm2949, %v2942, %v2946
        %v2951 = vand.u32 2147483647, %v2740
        %vm2952 = vcmp.eq.f32.partialorder %v2951, 8.507059e+37
        %v2953 = vand.u32 %v2740, 2147483648
        %v2954 = vor.u32 1.1754944e-38, %v2953
        %v2955 = vsel %vm2952, %v2954, %v2950
        %v2956 = vmul.f32 %v2694, %v2955
        %v2957 = vrcp.pop %v2743
        %v2958 = vmul.f32 %v2743, %v2957
        %v2959 = vsub.f32 1.0, %v2958
        %v2960 = vmul.f32 %v2957, %v2959
        %v2961 = vadd.f32 %v2957, %v2960
        %vm2962 = vweird.f32 %v2743
        %vm2963 = vweird.f32 %v2957
        %vm2964 = vmor %vm2962, %vm2963
        %v2965 = vsel %vm2964, %v2957, %v2961
        %v2966 = vand.u32 2147483647, %v2743
        %vm2967 = vcmp.eq.f32.partialorder %v2966, 8.507059e+37
        %v2968 = vand.u32 %v2743, 2147483648
        %v2969 = vor.u32 1.1754944e-38, %v2968
        %v2970 = vsel %vm2967, %v2969, %v2965
        %v2971 = vmul.f32 %v2696, %v2970
        %v2972 = vrcp.pop %v2746
        %v2973 = vmul.f32 %v2746, %v2972
        %v2974 = vsub.f32 1.0, %v2973
        %v2975 = vmul.f32 %v2972, %v2974
        %v2976 = vadd.f32 %v2972, %v2975
        %vm2977 = vweird.f32 %v2746
        %vm2978 = vweird.f32 %v2972
        %vm2979 = vmor %vm2977, %vm2978
        %v2980 = vsel %vm2979, %v2972, %v2976
        %v2981 = vand.u32 2147483647, %v2746
        %vm2982 = vcmp.eq.f32.partialorder %v2981, 8.507059e+37
        %v2983 = vand.u32 %v2746, 2147483648
        %v2984 = vor.u32 1.1754944e-38, %v2983
        %v2985 = vsel %vm2982, %v2984, %v2980
        %v2986 = vmul.f32 %v2698, %v2985
        %v2987 = vpack.c.bf16 %v2761, %v2761
        %v2988 = vpack.c.bf16 %v2776, %v2776
        %v2989 = vpack.c.bf16 %v2791, %v2791
        %v2990 = vpack.c.bf16 %v2806, %v2806
        %v2991 = vpack.c.bf16 %v2821, %v2821
        %v2992 = vpack.c.bf16 %v2836, %v2836
        %v2993 = vpack.c.bf16 %v2851, %v2851
        %v2994 = vpack.c.bf16 %v2866, %v2866
        %v2995 = vpack.c.bf16 %v2881, %v2881
        %v2996 = vpack.c.bf16 %v2896, %v2896
        %v2997 = vpack.c.bf16 %v2911, %v2911
        %v2998 = vpack.c.bf16 %v2926, %v2926
        %v2999 = vpack.c.bf16 %v2941, %v2941
        %v3000 = vpack.c.bf16 %v2956, %v2956
        %v3001 = vpack.c.bf16 %v2971, %v2971
        %v3002 = vpack.c.bf16 %v2986, %v2986
        %v3005 = vunpack.c.l.b16 %v2987
        %v3006 = vunpack.c.l.b16 %v2988
        %v3007 = vpack.c.b16 %v3006, %v3005
        %v3010 = vunpack.c.l.b16 %v2313
        %v3011 = vunpack.c.l.b16 %v2314
        %v3012 = vpack.c.b16 %v3011, %v3010
        %v3015 = vsel %vm2602, %v3007, 0
        %3017 = vmatpush.bf16.msra.mxu0 0
        %3018 = vmatpush.bf16.msra.mxu0 0
        %3019 = vmatpush.bf16.msra.mxu0 0
        %3020 = vmatpush.bf16.msra.mxu0 0
        %3021 = vmatpush.bf16.msra.mxu0 0
        %3022 = vmatpush.bf16.msra.mxu0 0
        %3023 = vmatpush.bf16.msra.mxu0 0
        %3024 = vmatpush.bf16.msra.mxu0 %v3012
        %3025 = vmatmul.bf16.gmra.mxu0 %v3015
        %v3026 = vpop.f32.mrf.mxu0
        %v3027 = vadd.f32 0.0, %v3026
        %v3028 = vpop.f32.mrf.mxu0
        %v3029 = vadd.f32 0.0, %v3028
        %3030 = vdwg.mxu0
        %v3033 = vunpack.c.l.b16 %v2989
        %v3034 = vunpack.c.l.b16 %v2990
        %v3035 = vpack.c.b16 %v3034, %v3033
        %v3038 = vunpack.c.l.b16 %v2315
        %v3039 = vunpack.c.l.b16 %v2316
        %v3040 = vpack.c.b16 %v3039, %v3038
        %v3043 = vsel %vm2602, %v3035, 0
        %3045 = vmatpush.bf16.msra.mxu0 0
        %3046 = vmatpush.bf16.msra.mxu0 0
        %3047 = vmatpush.bf16.msra.mxu0 0
        %3048 = vmatpush.bf16.msra.mxu0 0
        %3049 = vmatpush.bf16.msra.mxu0 0
        %3050 = vmatpush.bf16.msra.mxu0 0
        %3051 = vmatpush.bf16.msra.mxu0 0
        %3052 = vmatpush.bf16.msra.mxu0 %v3040
        %3053 = vmatmul.bf16.gmra.mxu0 %v3043
        %v3054 = vpop.f32.mrf.mxu0
        %v3055 = vadd.f32 0.0, %v3054
        %v3056 = vpop.f32.mrf.mxu0
        %v3057 = vadd.f32 0.0, %v3056
        %3058 = vdwg.mxu0
        %v3061 = vunpack.c.l.b16 %v2991
        %v3062 = vunpack.c.l.b16 %v2992
        %v3063 = vpack.c.b16 %v3062, %v3061
        %v3066 = vunpack.c.l.b16 %v2317
        %v3067 = vunpack.c.l.b16 %v2318
        %v3068 = vpack.c.b16 %v3067, %v3066
        %v3071 = vsel %vm2602, %v3063, 0
        %3073 = vmatpush.bf16.msra.mxu0 0
        %3074 = vmatpush.bf16.msra.mxu0 0
        %3075 = vmatpush.bf16.msra.mxu0 0
        %3076 = vmatpush.bf16.msra.mxu0 0
        %3077 = vmatpush.bf16.msra.mxu0 0
        %3078 = vmatpush.bf16.msra.mxu0 0
        %3079 = vmatpush.bf16.msra.mxu0 0
        %3080 = vmatpush.bf16.msra.mxu0 %v3068
        %3081 = vmatmul.bf16.gmra.mxu0 %v3071
        %v3082 = vpop.f32.mrf.mxu0
        %v3083 = vadd.f32 0.0, %v3082
        %v3084 = vpop.f32.mrf.mxu0
        %v3085 = vadd.f32 0.0, %v3084
        %3086 = vdwg.mxu0
        %v3089 = vunpack.c.l.b16 %v2993
        %v3090 = vunpack.c.l.b16 %v2994
        %v3091 = vpack.c.b16 %v3090, %v3089
        %v3094 = vunpack.c.l.b16 %v2319
        %v3095 = vunpack.c.l.b16 %v2320
        %v3096 = vpack.c.b16 %v3095, %v3094
        %v3099 = vsel %vm2602, %v3091, 0
        %3101 = vmatpush.bf16.msra.mxu0 0
        %3102 = vmatpush.bf16.msra.mxu0 0
        %3103 = vmatpush.bf16.msra.mxu0 0
        %3104 = vmatpush.bf16.msra.mxu0 0
        %3105 = vmatpush.bf16.msra.mxu0 0
        %3106 = vmatpush.bf16.msra.mxu0 0
        %3107 = vmatpush.bf16.msra.mxu0 0
        %3108 = vmatpush.bf16.msra.mxu0 %v3096
        %3109 = vmatmul.bf16.gmra.mxu0 %v3099
        %v3110 = vpop.f32.mrf.mxu0
        %v3111 = vadd.f32 0.0, %v3110
        %v3112 = vpop.f32.mrf.mxu0
        %v3113 = vadd.f32 0.0, %v3112
        %3114 = vdwg.mxu0
        %v3117 = vunpack.c.l.b16 %v2995
        %v3118 = vunpack.c.l.b16 %v2996
        %v3119 = vpack.c.b16 %v3118, %v3117
        %v3122 = vunpack.c.l.b16 %v2321
        %v3123 = vunpack.c.l.b16 %v2322
        %v3124 = vpack.c.b16 %v3123, %v3122
        %v3127 = vsel %vm2602, %v3119, 0
        %3129 = vmatpush.bf16.msra.mxu0 0
        %3130 = vmatpush.bf16.msra.mxu0 0
        %3131 = vmatpush.bf16.msra.mxu0 0
        %3132 = vmatpush.bf16.msra.mxu0 0
        %3133 = vmatpush.bf16.msra.mxu0 0
        %3134 = vmatpush.bf16.msra.mxu0 0
        %3135 = vmatpush.bf16.msra.mxu0 0
        %3136 = vmatpush.bf16.msra.mxu0 %v3124
        %3137 = vmatmul.bf16.gmra.mxu0 %v3127
        %v3138 = vpop.f32.mrf.mxu0
        %v3139 = vadd.f32 0.0, %v3138
        %v3140 = vpop.f32.mrf.mxu0
        %v3141 = vadd.f32 0.0, %v3140
        %3142 = vdwg.mxu0
        %v3145 = vunpack.c.l.b16 %v2997
        %v3146 = vunpack.c.l.b16 %v2998
        %v3147 = vpack.c.b16 %v3146, %v3145
        %v3150 = vunpack.c.l.b16 %v2323
        %v3151 = vunpack.c.l.b16 %v2324
        %v3152 = vpack.c.b16 %v3151, %v3150
        %v3155 = vsel %vm2602, %v3147, 0
        %3157 = vmatpush.bf16.msra.mxu0 0
        %3158 = vmatpush.bf16.msra.mxu0 0
        %3159 = vmatpush.bf16.msra.mxu0 0
        %3160 = vmatpush.bf16.msra.mxu0 0
        %3161 = vmatpush.bf16.msra.mxu0 0
        %3162 = vmatpush.bf16.msra.mxu0 0
        %3163 = vmatpush.bf16.msra.mxu0 0
        %3164 = vmatpush.bf16.msra.mxu0 %v3152
        %3165 = vmatmul.bf16.gmra.mxu0 %v3155
        %v3166 = vpop.f32.mrf.mxu0
        %v3167 = vadd.f32 0.0, %v3166
        %v3168 = vpop.f32.mrf.mxu0
        %v3169 = vadd.f32 0.0, %v3168
        %3170 = vdwg.mxu0
        %v3173 = vunpack.c.l.b16 %v2999
        %v3174 = vunpack.c.l.b16 %v3000
        %v3175 = vpack.c.b16 %v3174, %v3173
        %v3178 = vunpack.c.l.b16 %v2325
        %v3179 = vunpack.c.l.b16 %v2326
        %v3180 = vpack.c.b16 %v3179, %v3178
        %v3183 = vsel %vm2602, %v3175, 0
        %3185 = vmatpush.bf16.msra.mxu0 0
        %3186 = vmatpush.bf16.msra.mxu0 0
        %3187 = vmatpush.bf16.msra.mxu0 0
        %3188 = vmatpush.bf16.msra.mxu0 0
        %3189 = vmatpush.bf16.msra.mxu0 0
        %3190 = vmatpush.bf16.msra.mxu0 0
        %3191 = vmatpush.bf16.msra.mxu0 0
        %3192 = vmatpush.bf16.msra.mxu0 %v3180
        %3193 = vmatmul.bf16.gmra.mxu0 %v3183
        %v3194 = vpop.f32.mrf.mxu0
        %v3195 = vadd.f32 0.0, %v3194
        %v3196 = vpop.f32.mrf.mxu0
        %v3197 = vadd.f32 0.0, %v3196
        %3198 = vdwg.mxu0
        %v3201 = vunpack.c.l.b16 %v3001
        %v3202 = vunpack.c.l.b16 %v3002
        %v3203 = vpack.c.b16 %v3202, %v3201
        %v3206 = vunpack.c.l.b16 %v2327
        %v3207 = vunpack.c.l.b16 %v2328
        %v3208 = vpack.c.b16 %v3207, %v3206
        %v3211 = vsel %vm2602, %v3203, 0
        %3213 = vmatpush.bf16.msra.mxu0 0
        %3214 = vmatpush.bf16.msra.mxu0 0
        %3215 = vmatpush.bf16.msra.mxu0 0
        %3216 = vmatpush.bf16.msra.mxu0 0
        %3217 = vmatpush.bf16.msra.mxu0 0
        %3218 = vmatpush.bf16.msra.mxu0 0
        %3219 = vmatpush.bf16.msra.mxu0 0
        %3220 = vmatpush.bf16.msra.mxu0 %v3208
        %3221 = vmatmul.bf16.gmra.mxu0 %v3211
        %v3222 = vpop.f32.mrf.mxu0
        %v3223 = vadd.f32 0.0, %v3222
        %v3224 = vpop.f32.mrf.mxu0
        %v3225 = vadd.f32 0.0, %v3224
        %3226 = vdwg.mxu0
        %v3227 = vrot.slane %v3083, 4
        %v3228 = vsel %vm881, %v3227, %v3027
        %v3229 = vrot.slane %v3027, 4
        %v3230 = vsel %vm881, %v3083, %v3229
        %v3232 = vunpack.c.l.s4 1983009808
        %v3233 = vunpack.c.0.s8 %v3232
        %v3234 = vperm.slane %v3228, %v3233
        %v3236 = vunpack.c.l.s4 1983009808
        %v3237 = vunpack.c.0.s8 %v3236
        %v3238 = vperm.slane %v3230, %v3237
        %v3239 = vrot.slane %v3111, 4
        %v3240 = vsel %vm881, %v3239, %v3055
        %v3241 = vrot.slane %v3055, 4
        %v3242 = vsel %vm881, %v3111, %v3241
        %v3244 = vunpack.c.l.s4 1983009808
        %v3245 = vunpack.c.0.s8 %v3244
        %v3246 = vperm.slane %v3240, %v3245
        %v3248 = vunpack.c.l.s4 1983009808
        %v3249 = vunpack.c.0.s8 %v3248
        %v3250 = vperm.slane %v3242, %v3249
        %v3251 = vrot.slane %v3246, 4
        %v3252 = vsel %vm881, %v3251, %v3234
        %v3253 = vrot.slane %v3234, 4
        %v3254 = vsel %vm881, %v3246, %v3253
        %v3256 = vunpack.c.l.s4 1934713408
        %v3257 = vunpack.c.0.s8 %v3256
        %v3258 = vperm.slane %v3252, %v3257
        %v3260 = vunpack.c.l.s4 1934713408
        %v3261 = vunpack.c.0.s8 %v3260
        %v3262 = vperm.slane %v3254, %v3261
        %v3263 = vrot.slane %v3250, 4
        %v3264 = vsel %vm881, %v3263, %v3238
        %v3265 = vrot.slane %v3238, 4
        %v3266 = vsel %vm881, %v3250, %v3265
        %v3268 = vunpack.c.l.s4 1934713408
        %v3269 = vunpack.c.0.s8 %v3268
        %v3270 = vperm.slane %v3264, %v3269
        %v3272 = vunpack.c.l.s4 1934713408
        %v3273 = vunpack.c.0.s8 %v3272
        %v3274 = vperm.slane %v3266, %v3273
        %v3275 = vrot.slane %v3258, 4
        %v3276 = vsel %vm881, 0.0, %v3275
        %v3277 = vrot.slane %v3262, 4
        %v3278 = vsel %vm881, 0.0, %v3277
        %v3279 = vrot.slane %v3270, 4
        %v3280 = vsel %vm881, 0.0, %v3279
        %v3281 = vrot.slane %v3274, 4
        %v3282 = vsel %vm881, 0.0, %v3281
        %v3283 = vrot.slane %v3085, 4
        %v3284 = vsel %vm881, %v3283, %v3029
        %v3285 = vrot.slane %v3029, 4
        %v3286 = vsel %vm881, %v3085, %v3285
        %v3288 = vunpack.c.l.s4 1983009808
        %v3289 = vunpack.c.0.s8 %v3288
        %v3290 = vperm.slane %v3284, %v3289
        %v3292 = vunpack.c.l.s4 1983009808
        %v3293 = vunpack.c.0.s8 %v3292
        %v3294 = vperm.slane %v3286, %v3293
        %v3295 = vrot.slane %v3113, 4
        %v3296 = vsel %vm881, %v3295, %v3057
        %v3297 = vrot.slane %v3057, 4
        %v3298 = vsel %vm881, %v3113, %v3297
        %v3300 = vunpack.c.l.s4 1983009808
        %v3301 = vunpack.c.0.s8 %v3300
        %v3302 = vperm.slane %v3296, %v3301
        %v3304 = vunpack.c.l.s4 1983009808
        %v3305 = vunpack.c.0.s8 %v3304
        %v3306 = vperm.slane %v3298, %v3305
        %v3307 = vrot.slane %v3302, 4
        %v3308 = vsel %vm881, %v3307, %v3290
        %v3309 = vrot.slane %v3290, 4
        %v3310 = vsel %vm881, %v3302, %v3309
        %v3312 = vunpack.c.l.s4 1934713408
        %v3313 = vunpack.c.0.s8 %v3312
        %v3314 = vperm.slane %v3308, %v3313
        %v3316 = vunpack.c.l.s4 1934713408
        %v3317 = vunpack.c.0.s8 %v3316
        %v3318 = vperm.slane %v3310, %v3317
        %v3319 = vrot.slane %v3306, 4
        %v3320 = vsel %vm881, %v3319, %v3294
        %v3321 = vrot.slane %v3294, 4
        %v3322 = vsel %vm881, %v3306, %v3321
        %v3324 = vunpack.c.l.s4 1934713408
        %v3325 = vunpack.c.0.s8 %v3324
        %v3326 = vperm.slane %v3320, %v3325
        %v3328 = vunpack.c.l.s4 1934713408
        %v3329 = vunpack.c.0.s8 %v3328
        %v3330 = vperm.slane %v3322, %v3329
        %v3331 = vrot.slane %v3314, 4
        %v3332 = vsel %vm881, 0.0, %v3331
        %v3333 = vrot.slane %v3318, 4
        %v3334 = vsel %vm881, 0.0, %v3333
        %v3335 = vrot.slane %v3326, 4
        %v3336 = vsel %vm881, 0.0, %v3335
        %v3337 = vrot.slane %v3330, 4
        %v3338 = vsel %vm881, 0.0, %v3337
        %v3339 = vrot.slane %v3195, 4
        %v3340 = vsel %vm881, %v3339, %v3139
        %v3341 = vrot.slane %v3139, 4
        %v3342 = vsel %vm881, %v3195, %v3341
        %v3344 = vunpack.c.l.s4 1983009808
        %v3345 = vunpack.c.0.s8 %v3344
        %v3346 = vperm.slane %v3340, %v3345
        %v3348 = vunpack.c.l.s4 1983009808
        %v3349 = vunpack.c.0.s8 %v3348
        %v3350 = vperm.slane %v3342, %v3349
        %v3351 = vrot.slane %v3223, 4
        %v3352 = vsel %vm881, %v3351, %v3167
        %v3353 = vrot.slane %v3167, 4
        %v3354 = vsel %vm881, %v3223, %v3353
        %v3356 = vunpack.c.l.s4 1983009808
        %v3357 = vunpack.c.0.s8 %v3356
        %v3358 = vperm.slane %v3352, %v3357
        %v3360 = vunpack.c.l.s4 1983009808
        %v3361 = vunpack.c.0.s8 %v3360
        %v3362 = vperm.slane %v3354, %v3361
        %v3363 = vrot.slane %v3358, 4
        %v3364 = vsel %vm881, %v3363, %v3346
        %v3365 = vrot.slane %v3346, 4
        %v3366 = vsel %vm881, %v3358, %v3365
        %v3368 = vunpack.c.l.s4 1934713408
        %v3369 = vunpack.c.0.s8 %v3368
        %v3370 = vperm.slane %v3364, %v3369
        %v3372 = vunpack.c.l.s4 1934713408
        %v3373 = vunpack.c.0.s8 %v3372
        %v3374 = vperm.slane %v3366, %v3373
        %v3375 = vrot.slane %v3362, 4
        %v3376 = vsel %vm881, %v3375, %v3350
        %v3377 = vrot.slane %v3350, 4
        %v3378 = vsel %vm881, %v3362, %v3377
        %v3380 = vunpack.c.l.s4 1934713408
        %v3381 = vunpack.c.0.s8 %v3380
        %v3382 = vperm.slane %v3376, %v3381
        %v3384 = vunpack.c.l.s4 1934713408
        %v3385 = vunpack.c.0.s8 %v3384
        %v3386 = vperm.slane %v3378, %v3385
        %v3387 = vrot.slane %v3370, 4
        %v3388 = vsel %vm881, 0.0, %v3387
        %v3389 = vrot.slane %v3374, 4
        %v3390 = vsel %vm881, 0.0, %v3389
        %v3391 = vrot.slane %v3382, 4
        %v3392 = vsel %vm881, 0.0, %v3391
        %v3393 = vrot.slane %v3386, 4
        %v3394 = vsel %vm881, 0.0, %v3393
        %v3395 = vrot.slane %v3197, 4
        %v3396 = vsel %vm881, %v3395, %v3141
        %v3397 = vrot.slane %v3141, 4
        %v3398 = vsel %vm881, %v3197, %v3397
        %v3400 = vunpack.c.l.s4 1983009808
        %v3401 = vunpack.c.0.s8 %v3400
        %v3402 = vperm.slane %v3396, %v3401
        %v3404 = vunpack.c.l.s4 1983009808
        %v3405 = vunpack.c.0.s8 %v3404
        %v3406 = vperm.slane %v3398, %v3405
        %v3407 = vrot.slane %v3225, 4
        %v3408 = vsel %vm881, %v3407, %v3169
        %v3409 = vrot.slane %v3169, 4
        %v3410 = vsel %vm881, %v3225, %v3409
        %v3412 = vunpack.c.l.s4 1983009808
        %v3413 = vunpack.c.0.s8 %v3412
        %v3414 = vperm.slane %v3408, %v3413
        %v3416 = vunpack.c.l.s4 1983009808
        %v3417 = vunpack.c.0.s8 %v3416
        %v3418 = vperm.slane %v3410, %v3417
        %v3419 = vrot.slane %v3414, 4
        %v3420 = vsel %vm881, %v3419, %v3402
        %v3421 = vrot.slane %v3402, 4
        %v3422 = vsel %vm881, %v3414, %v3421
        %v3424 = vunpack.c.l.s4 1934713408
        %v3425 = vunpack.c.0.s8 %v3424
        %v3426 = vperm.slane %v3420, %v3425
        %v3428 = vunpack.c.l.s4 1934713408
        %v3429 = vunpack.c.0.s8 %v3428
        %v3430 = vperm.slane %v3422, %v3429
        %v3431 = vrot.slane %v3418, 4
        %v3432 = vsel %vm881, %v3431, %v3406
        %v3433 = vrot.slane %v3406, 4
        %v3434 = vsel %vm881, %v3418, %v3433
        %v3436 = vunpack.c.l.s4 1934713408
        %v3437 = vunpack.c.0.s8 %v3436
        %v3438 = vperm.slane %v3432, %v3437
        %v3440 = vunpack.c.l.s4 1934713408
        %v3441 = vunpack.c.0.s8 %v3440
        %v3442 = vperm.slane %v3434, %v3441
        %v3443 = vrot.slane %v3426, 4
        %v3444 = vsel %vm881, 0.0, %v3443
        %v3445 = vrot.slane %v3430, 4
        %v3446 = vsel %vm881, 0.0, %v3445
        %v3447 = vrot.slane %v3438, 4
        %v3448 = vsel %vm881, 0.0, %v3447
        %v3449 = vrot.slane %v3442, 4
        %v3450 = vsel %vm881, 0.0, %v3449
        %v3451 = vsel %vm881, %v3277, %v3258
        %v3453 = vunpack.c.l.s4 1983009808
        %v3454 = vunpack.c.0.s8 %v3453
        %v3455 = vperm.slane %v3451, %v3454
        %v3456 = vrot.slane %v3278, 4
        %v3457 = vsel %vm881, %v3456, %v3276
        %v3459 = vunpack.c.l.s4 1983009808
        %v3460 = vunpack.c.0.s8 %v3459
        %v3461 = vperm.slane %v3457, %v3460
        %v3462 = vsel %vm881, %v3281, %v3270
        %v3464 = vunpack.c.l.s4 1983009808
        %v3465 = vunpack.c.0.s8 %v3464
        %v3466 = vperm.slane %v3462, %v3465
        %v3467 = vrot.slane %v3282, 4
        %v3468 = vsel %vm881, %v3467, %v3280
        %v3470 = vunpack.c.l.s4 1983009808
        %v3471 = vunpack.c.0.s8 %v3470
        %v3472 = vperm.slane %v3468, %v3471
        %v3473 = vrot.slane %v3461, 4
        %v3474 = vsel %vm881, %v3473, %v3455
        %v3475 = vrot.slane %v3455, 4
        %v3476 = vsel %vm881, %v3461, %v3475
        %v3478 = vunpack.c.l.s4 1934713408
        %v3479 = vunpack.c.0.s8 %v3478
        %v3480 = vperm.slane %v3474, %v3479
        %v3482 = vunpack.c.l.s4 1934713408
        %v3483 = vunpack.c.0.s8 %v3482
        %v3484 = vperm.slane %v3476, %v3483
        %v3485 = vrot.slane %v3472, 4
        %v3486 = vsel %vm881, %v3485, %v3466
        %v3487 = vrot.slane %v3466, 4
        %v3488 = vsel %vm881, %v3472, %v3487
        %v3490 = vunpack.c.l.s4 1934713408
        %v3491 = vunpack.c.0.s8 %v3490
        %v3492 = vperm.slane %v3486, %v3491
        %v3494 = vunpack.c.l.s4 1934713408
        %v3495 = vunpack.c.0.s8 %v3494
        %v3496 = vperm.slane %v3488, %v3495
        %v3497 = vrot.slane %v3492, 4
        %v3498 = vsel %vm881, %v3497, %v3480
        %v3499 = vrot.slane %v3480, 4
        %v3500 = vsel %vm881, %v3492, %v3499
        %v3501 = vrot.slane %v3496, 4
        %v3502 = vsel %vm881, %v3501, %v3484
        %v3503 = vrot.slane %v3484, 4
        %v3504 = vsel %vm881, %v3496, %v3503
        %v3505 = vsel %vm881, %v3333, %v3314
        %v3507 = vunpack.c.l.s4 1983009808
        %v3508 = vunpack.c.0.s8 %v3507
        %v3509 = vperm.slane %v3505, %v3508
        %v3510 = vrot.slane %v3334, 4
        %v3511 = vsel %vm881, %v3510, %v3332
        %v3513 = vunpack.c.l.s4 1983009808
        %v3514 = vunpack.c.0.s8 %v3513
        %v3515 = vperm.slane %v3511, %v3514
        %v3516 = vsel %vm881, %v3337, %v3326
        %v3518 = vunpack.c.l.s4 1983009808
        %v3519 = vunpack.c.0.s8 %v3518
        %v3520 = vperm.slane %v3516, %v3519
        %v3521 = vrot.slane %v3338, 4
        %v3522 = vsel %vm881, %v3521, %v3336
        %v3524 = vunpack.c.l.s4 1983009808
        %v3525 = vunpack.c.0.s8 %v3524
        %v3526 = vperm.slane %v3522, %v3525
        %v3527 = vrot.slane %v3515, 4
        %v3528 = vsel %vm881, %v3527, %v3509
        %v3529 = vrot.slane %v3509, 4
        %v3530 = vsel %vm881, %v3515, %v3529
        %v3532 = vunpack.c.l.s4 1934713408
        %v3533 = vunpack.c.0.s8 %v3532
        %v3534 = vperm.slane %v3528, %v3533
        %v3536 = vunpack.c.l.s4 1934713408
        %v3537 = vunpack.c.0.s8 %v3536
        %v3538 = vperm.slane %v3530, %v3537
        %v3539 = vrot.slane %v3526, 4
        %v3540 = vsel %vm881, %v3539, %v3520
        %v3541 = vrot.slane %v3520, 4
        %v3542 = vsel %vm881, %v3526, %v3541
        %v3544 = vunpack.c.l.s4 1934713408
        %v3545 = vunpack.c.0.s8 %v3544
        %v3546 = vperm.slane %v3540, %v3545
        %v3548 = vunpack.c.l.s4 1934713408
        %v3549 = vunpack.c.0.s8 %v3548
        %v3550 = vperm.slane %v3542, %v3549
        %v3551 = vrot.slane %v3546, 4
        %v3552 = vsel %vm881, %v3551, %v3534
        %v3553 = vrot.slane %v3534, 4
        %v3554 = vsel %vm881, %v3546, %v3553
        %v3555 = vrot.slane %v3550, 4
        %v3556 = vsel %vm881, %v3555, %v3538
        %v3557 = vrot.slane %v3538, 4
        %v3558 = vsel %vm881, %v3550, %v3557
        %v3559 = vsel %vm881, %v3389, %v3370
        %v3561 = vunpack.c.l.s4 1983009808
        %v3562 = vunpack.c.0.s8 %v3561
        %v3563 = vperm.slane %v3559, %v3562
        %v3564 = vrot.slane %v3390, 4
        %v3565 = vsel %vm881, %v3564, %v3388
        %v3567 = vunpack.c.l.s4 1983009808
        %v3568 = vunpack.c.0.s8 %v3567
        %v3569 = vperm.slane %v3565, %v3568
        %v3570 = vsel %vm881, %v3393, %v3382
        %v3572 = vunpack.c.l.s4 1983009808
        %v3573 = vunpack.c.0.s8 %v3572
        %v3574 = vperm.slane %v3570, %v3573
        %v3575 = vrot.slane %v3394, 4
        %v3576 = vsel %vm881, %v3575, %v3392
        %v3578 = vunpack.c.l.s4 1983009808
        %v3579 = vunpack.c.0.s8 %v3578
        %v3580 = vperm.slane %v3576, %v3579
        %v3581 = vrot.slane %v3569, 4
        %v3582 = vsel %vm881, %v3581, %v3563
        %v3583 = vrot.slane %v3563, 4
        %v3584 = vsel %vm881, %v3569, %v3583
        %v3586 = vunpack.c.l.s4 1934713408
        %v3587 = vunpack.c.0.s8 %v3586
        %v3588 = vperm.slane %v3582, %v3587
        %v3590 = vunpack.c.l.s4 1934713408
        %v3591 = vunpack.c.0.s8 %v3590
        %v3592 = vperm.slane %v3584, %v3591
        %v3593 = vrot.slane %v3580, 4
        %v3594 = vsel %vm881, %v3593, %v3574
        %v3595 = vrot.slane %v3574, 4
        %v3596 = vsel %vm881, %v3580, %v3595
        %v3598 = vunpack.c.l.s4 1934713408
        %v3599 = vunpack.c.0.s8 %v3598
        %v3600 = vperm.slane %v3594, %v3599
        %v3602 = vunpack.c.l.s4 1934713408
        %v3603 = vunpack.c.0.s8 %v3602
        %v3604 = vperm.slane %v3596, %v3603
        %v3605 = vrot.slane %v3600, 4
        %v3606 = vsel %vm881, %v3605, %v3588
        %v3607 = vrot.slane %v3588, 4
        %v3608 = vsel %vm881, %v3600, %v3607
        %v3609 = vrot.slane %v3604, 4
        %v3610 = vsel %vm881, %v3609, %v3592
        %v3611 = vrot.slane %v3592, 4
        %v3612 = vsel %vm881, %v3604, %v3611
        %v3613 = vsel %vm881, %v3445, %v3426
        %v3615 = vunpack.c.l.s4 1983009808
        %v3616 = vunpack.c.0.s8 %v3615
        %v3617 = vperm.slane %v3613, %v3616
        %v3618 = vrot.slane %v3446, 4
        %v3619 = vsel %vm881, %v3618, %v3444
        %v3621 = vunpack.c.l.s4 1983009808
        %v3622 = vunpack.c.0.s8 %v3621
        %v3623 = vperm.slane %v3619, %v3622
        %v3624 = vsel %vm881, %v3449, %v3438
        %v3626 = vunpack.c.l.s4 1983009808
        %v3627 = vunpack.c.0.s8 %v3626
        %v3628 = vperm.slane %v3624, %v3627
        %v3629 = vrot.slane %v3450, 4
        %v3630 = vsel %vm881, %v3629, %v3448
        %v3632 = vunpack.c.l.s4 1983009808
        %v3633 = vunpack.c.0.s8 %v3632
        %v3634 = vperm.slane %v3630, %v3633
        %v3635 = vrot.slane %v3623, 4
        %v3636 = vsel %vm881, %v3635, %v3617
        %v3637 = vrot.slane %v3617, 4
        %v3638 = vsel %vm881, %v3623, %v3637
        %v3640 = vunpack.c.l.s4 1934713408
        %v3641 = vunpack.c.0.s8 %v3640
        %v3642 = vperm.slane %v3636, %v3641
        %v3644 = vunpack.c.l.s4 1934713408
        %v3645 = vunpack.c.0.s8 %v3644
        %v3646 = vperm.slane %v3638, %v3645
        %v3647 = vrot.slane %v3634, 4
        %v3648 = vsel %vm881, %v3647, %v3628
        %v3649 = vrot.slane %v3628, 4
        %v3650 = vsel %vm881, %v3634, %v3649
        %v3652 = vunpack.c.l.s4 1934713408
        %v3653 = vunpack.c.0.s8 %v3652
        %v3654 = vperm.slane %v3648, %v3653
        %v3656 = vunpack.c.l.s4 1934713408
        %v3657 = vunpack.c.0.s8 %v3656
        %v3658 = vperm.slane %v3650, %v3657
        %v3659 = vrot.slane %v3654, 4
        %v3660 = vsel %vm881, %v3659, %v3642
        %v3661 = vrot.slane %v3642, 4
        %v3662 = vsel %vm881, %v3654, %v3661
        %v3663 = vrot.slane %v3658, 4
        %v3664 = vsel %vm881, %v3663, %v3646
        %v3665 = vrot.slane %v3646, 4
        %v3666 = vsel %vm881, %v3658, %v3665
        %3671 = vrot.lane.b32.xlu0 %v3500, 32
        %v3672 = vpop.permute.xlu0 %3671
        %3673 = vrot.lane.b32.xlu0 %v3554, 32
        %v3674 = vpop.permute.xlu0 %3673
        %3675 = vrot.lane.b32.xlu0 %v3608, 32
        %v3676 = vpop.permute.xlu0 %3675
        %3677 = vrot.lane.b32.xlu0 %v3662, 32
        %v3678 = vpop.permute.xlu0 %3677
        %3687 = vrot.lane.b32.xlu0 %v3502, 64
        %v3688 = vpop.permute.xlu0 %3687
        %3689 = vrot.lane.b32.xlu0 %v3556, 64
        %v3690 = vpop.permute.xlu0 %3689
        %3691 = vrot.lane.b32.xlu0 %v3610, 64
        %v3692 = vpop.permute.xlu0 %3691
        %3693 = vrot.lane.b32.xlu0 %v3664, 64
        %v3694 = vpop.permute.xlu0 %3693
        %3703 = vrot.lane.b32.xlu0 %v3504, 96
        %v3704 = vpop.permute.xlu0 %3703
        %3705 = vrot.lane.b32.xlu0 %v3558, 96
        %v3706 = vpop.permute.xlu0 %3705
        %3707 = vrot.lane.b32.xlu0 %v3612, 96
        %v3708 = vpop.permute.xlu0 %3707
        %3709 = vrot.lane.b32.xlu0 %v3666, 96
        %v3710 = vpop.permute.xlu0 %3709
        %v3715 = vsel %vm2339, %v3498, %v3672
        %v3716 = vsel %vm2339, %v3552, %v3674
        %v3717 = vsel %vm2339, %v3606, %v3676
        %v3718 = vsel %vm2339, %v3660, %v3678
        %vm3719 = vcmask 523264
        %v3720 = vsel %vm3719, %v3715, %v3688
        %v3721 = vsel %vm3719, %v3716, %v3690
        %v3722 = vsel %vm3719, %v3717, %v3692
        %v3723 = vsel %vm3719, %v3718, %v3694
        %vm3724 = vcmask 785408
        %v3725 = vsel %vm3724, %v3720, %v3704
        %v3726 = vsel %vm3724, %v3721, %v3706
        %v3727 = vsel %vm3724, %v3722, %v3708
        %v3728 = vsel %vm3724, %v3723, %v3710
        %v3729 = vpack.c.bf16 %v3726, %v3725
        %v3730 = vpack.c.bf16 %v3728, %v3727
        %v3731 = vperm.slane %v570, 3
        %v3748 = vunpack.c.l.b16 %v824
        %v3749 = vunpack.c.l.b16 %v825
        %v3750 = vunpack.c.l.b16 %v826
        %v3751 = vunpack.c.l.b16 %v827
        %v3752 = vunpack.c.l.b16 %v828
        %v3753 = vunpack.c.l.b16 %v829
        %v3754 = vunpack.c.l.b16 %v830
        %v3755 = vunpack.c.l.b16 %v831
        %v3756 = vunpack.c.l.b16 %v832
        %v3757 = vunpack.c.l.b16 %v833
        %v3758 = vunpack.c.l.b16 %v834
        %v3759 = vunpack.c.l.b16 %v835
        %v3760 = vunpack.c.l.b16 %v836
        %v3761 = vunpack.c.l.b16 %v837
        %v3762 = vunpack.c.l.b16 %v838
        %v3763 = vunpack.c.l.b16 %v839
        %v3764 = vpack.c.b16 %v3749, %v3748
        %v3765 = vpack.c.b16 %v3751, %v3750
        %v3766 = vpack.c.b16 %v3753, %v3752
        %v3767 = vpack.c.b16 %v3755, %v3754
        %v3768 = vpack.c.b16 %v3757, %v3756
        %v3769 = vpack.c.b16 %v3759, %v3758
        %v3770 = vpack.c.b16 %v3761, %v3760
        %v3771 = vpack.c.b16 %v3763, %v3762
        %3780 = vmatpush.bf16.msra.mxu0 %v3771
        %3781 = vmatpush.bf16.msra.mxu0 %v3770
        %3782 = vmatpush.bf16.msra.mxu0 %v3769
        %3783 = vmatpush.bf16.msra.mxu0 %v3768
        %3784 = vmatpush.bf16.msra.mxu0 %v3767
        %3785 = vmatpush.bf16.msra.mxu0 %v3766
        %3786 = vmatpush.bf16.msra.mxu0 %v3765
        %3787 = vmatpush.bf16.msra.mxu0 %v3764
        %3788 = vmatmul.bf16.gmra.mxu0 %v3729
        %v3789 = vpop.f32.mrf.mxu0
        %v3790 = vadd.f32 %v3731, %v3789
        %v3791 = vpop.f32.mrf.mxu0
        %v3792 = vadd.f32 %v3731, %v3791
        %3793 = vmatmul.bf16.gmra.mxu0 %v3730
        %v3794 = vpop.f32.mrf.mxu0
        %v3795 = vadd.f32 %v3731, %v3794
        %v3796 = vpop.f32.mrf.mxu0
        %v3797 = vadd.f32 %v3731, %v3796
        %3798 = vdwg.mxu0
        %v3799 = vadd.f32 %v590, %v3790
        %v3800 = vadd.f32 %v591, %v3792
        %v3801 = vadd.f32 %v592, %v3795
        %v3802 = vadd.f32 %v593, %v3797
        %3803 = vadd.xlane.f32.xlu0 %v3799
        %v3804 = vpop.xlane.xlu0 %3803
        %3805 = vadd.xlane.f32.xlu0 %v3800
        %v3806 = vpop.xlane.xlu0 %3805
        %3807 = vadd.xlane.f32.xlu0 %v3801
        %v3808 = vpop.xlane.xlu0 %3807
        %3809 = vadd.xlane.f32.xlu0 %v3802
        %v3810 = vpop.xlane.xlu0 %3809
        %v3811 = vrcp.pop 128.0
        %v3812 = vmul.f32 128.0, %v3811
        %v3813 = vsub.f32 1.0, %v3812
        %v3814 = vmul.f32 %v3811, %v3813
        %v3815 = vadd.f32 %v3811, %v3814
        %vm3816 = vweird.f32 %v3811
        %v3817 = vsel %vm3816, %v3811, %v3815
        %v3818 = vmul.f32 %v3804, %v3817
        %v3819 = vmul.f32 %v3806, %v3817
        %v3820 = vmul.f32 %v3808, %v3817
        %v3821 = vmul.f32 %v3810, %v3817
        %v3822 = vsub.f32 %v3799, %v3818
        %v3823 = vsub.f32 %v3800, %v3819
        %v3824 = vsub.f32 %v3801, %v3820
        %v3825 = vsub.f32 %v3802, %v3821
        %v3826 = vmul.f32 %v3822, %v3822
        %v3827 = vmul.f32 %v3823, %v3823
        %v3828 = vmul.f32 %v3824, %v3824
        %v3829 = vmul.f32 %v3825, %v3825
        %3830 = vadd.xlane.f32.xlu0 %v3826
        %v3831 = vpop.xlane.xlu0 %3830
        %3832 = vadd.xlane.f32.xlu0 %v3827
        %v3833 = vpop.xlane.xlu0 %3832
        %3834 = vadd.xlane.f32.xlu0 %v3828
        %v3835 = vpop.xlane.xlu0 %3834
        %3836 = vadd.xlane.f32.xlu0 %v3829
        %v3837 = vpop.xlane.xlu0 %3836
        %v3838 = vmul.f32 %v3831, %v3817
        %v3839 = vmul.f32 %v3833, %v3817
        %v3840 = vmul.f32 %v3835, %v3817
        %v3841 = vmul.f32 %v3837, %v3817
        %v3842 = vadd.f32 %v3838, 1e-05
        %v3843 = vadd.f32 %v3839, 1e-05
        %v3844 = vadd.f32 %v3840, 1e-05
        %v3845 = vadd.f32 %v3841, 1e-05
        %v3846 = vrsqrt.pop %v3842
        %v3847 = vmul.f32 %v3846, %v3842
        %v3848 = vmul.f32 %v3847, %v3846
        %v3849 = vmul.f32 0.5, %v3848
        %v3850 = vsub.f32 1.5, %v3849
        %v3851 = vmul.f32 %v3846, %v3850
        %vm3852 = vweird.f32 %v3842
        %vm3853 = vweird.f32 %v3846
        %vm3854 = vmor %vm3852, %vm3853
        %v3855 = vsel %vm3854, %v3846, %v3851
        %v3856 = vrsqrt.pop %v3843
        %v3857 = vmul.f32 %v3856, %v3843
        %v3858 = vmul.f32 %v3857, %v3856
        %v3859 = vmul.f32 0.5, %v3858
        %v3860 = vsub.f32 1.5, %v3859
        %v3861 = vmul.f32 %v3856, %v3860
        %vm3862 = vweird.f32 %v3843
        %vm3863 = vweird.f32 %v3856
        %vm3864 = vmor %vm3862, %vm3863
        %v3865 = vsel %vm3864, %v3856, %v3861
        %v3866 = vrsqrt.pop %v3844
        %v3867 = vmul.f32 %v3866, %v3844
        %v3868 = vmul.f32 %v3867, %v3866
        %v3869 = vmul.f32 0.5, %v3868
        %v3870 = vsub.f32 1.5, %v3869
        %v3871 = vmul.f32 %v3866, %v3870
        %vm3872 = vweird.f32 %v3844
        %vm3873 = vweird.f32 %v3866
        %vm3874 = vmor %vm3872, %vm3873
        %v3875 = vsel %vm3874, %v3866, %v3871
        %v3876 = vrsqrt.pop %v3845
        %v3877 = vmul.f32 %v3876, %v3845
        %v3878 = vmul.f32 %v3877, %v3876
        %v3879 = vmul.f32 0.5, %v3878
        %v3880 = vsub.f32 1.5, %v3879
        %v3881 = vmul.f32 %v3876, %v3880
        %vm3882 = vweird.f32 %v3845
        %vm3883 = vweird.f32 %v3876
        %vm3884 = vmor %vm3882, %vm3883
        %v3885 = vsel %vm3884, %v3876, %v3881
        %v3886 = vmul.f32 %v3822, %v3855
        %v3887 = vmul.f32 %v3823, %v3865
        %v3888 = vmul.f32 %v3824, %v3875
        %v3889 = vmul.f32 %v3825, %v3885
        %v3890 = vperm.slane %v570, 7
        %v3891 = vmul.f32 %v3886, %v3890
        %v3892 = vmul.f32 %v3887, %v3890
        %v3893 = vmul.f32 %v3888, %v3890
        %v3894 = vmul.f32 %v3889, %v3890
        %v3895 = vperm.slane %v573, 0
        %v3896 = vadd.f32 %v3891, %v3895
        %v3897 = vadd.f32 %v3892, %v3895
        %v3898 = vadd.f32 %v3893, %v3895
        %v3899 = vadd.f32 %v3894, %v3895
        %v3900 = vpack.c.bf16 %v3897, %v3896
        %v3901 = vpack.c.bf16 %v3899, %v3898
        %v3902 = vld [vmem:[%s531] sm:$0xf]
        %v3903 = vld [vmem:[%s531 + $0x4] sm:$0xf]
        %v3904 = vld [vmem:[%s531 + $0x8] sm:$0xf]
        %v3905 = vld [vmem:[%s531 + $0xc] sm:$0xf]
        %v3906 = vld [vmem:[%s531 + $0x10] sm:$0xf]
        %v3907 = vld [vmem:[%s531 + $0x14] sm:$0xf]
        %v3908 = vld [vmem:[%s531 + $0x18] sm:$0xf]
        %v3909 = vld [vmem:[%s531 + $0x1c] sm:$0xf]
        %v3910 = vld [vmem:[%s531 + $0x20] sm:$0xf]
        %v3911 = vld [vmem:[%s531 + $0x24] sm:$0xf]
        %v3912 = vld [vmem:[%s531 + $0x28] sm:$0xf]
        %v3913 = vld [vmem:[%s531 + $0x2c] sm:$0xf]
        %v3914 = vld [vmem:[%s531 + $0x30] sm:$0xf]
        %v3915 = vld [vmem:[%s531 + $0x34] sm:$0xf]
        %v3916 = vld [vmem:[%s531 + $0x38] sm:$0xf]
        %v3917 = vld [vmem:[%s531 + $0x3c] sm:$0xf]
        %v3918 = vperm.slane %v570, 4
        %v3935 = vunpack.c.l.b16 %v3902
        %v3936 = vunpack.c.l.b16 %v3903
        %v3937 = vunpack.c.l.b16 %v3904
        %v3938 = vunpack.c.l.b16 %v3905
        %v3939 = vunpack.c.l.b16 %v3906
        %v3940 = vunpack.c.l.b16 %v3907
        %v3941 = vunpack.c.l.b16 %v3908
        %v3942 = vunpack.c.l.b16 %v3909
        %v3943 = vunpack.c.l.b16 %v3910
        %v3944 = vunpack.c.l.b16 %v3911
        %v3945 = vunpack.c.l.b16 %v3912
        %v3946 = vunpack.c.l.b16 %v3913
        %v3947 = vunpack.c.l.b16 %v3914
        %v3948 = vunpack.c.l.b16 %v3915
        %v3949 = vunpack.c.l.b16 %v3916
        %v3950 = vunpack.c.l.b16 %v3917
        %v3951 = vpack.c.b16 %v3936, %v3935
        %v3952 = vpack.c.b16 %v3938, %v3937
        %v3953 = vpack.c.b16 %v3940, %v3939
        %v3954 = vpack.c.b16 %v3942, %v3941
        %v3955 = vpack.c.b16 %v3944, %v3943
        %v3956 = vpack.c.b16 %v3946, %v3945
        %v3957 = vpack.c.b16 %v3948, %v3947
        %v3958 = vpack.c.b16 %v3950, %v3949
        %3967 = vmatpush.bf16.msra.mxu0 %v3958
        %3968 = vmatpush.bf16.msra.mxu0 %v3957
        %3969 = vmatpush.bf16.msra.mxu0 %v3956
        %3970 = vmatpush.bf16.msra.mxu0 %v3955
        %3971 = vmatpush.bf16.msra.mxu0 %v3954
        %3972 = vmatpush.bf16.msra.mxu0 %v3953
        %3973 = vmatpush.bf16.msra.mxu0 %v3952
        %3974 = vmatpush.bf16.msra.mxu0 %v3951
        %3975 = vmatmul.bf16.gmra.mxu0 %v3900
        %v3976 = vpop.f32.mrf.mxu0
        %v3977 = vadd.f32 %v3918, %v3976
        %v3978 = vpop.f32.mrf.mxu0
        %v3979 = vadd.f32 %v3918, %v3978
        %3980 = vmatmul.bf16.gmra.mxu0 %v3901
        %v3981 = vpop.f32.mrf.mxu0
        %v3982 = vadd.f32 %v3918, %v3981
        %v3983 = vpop.f32.mrf.mxu0
        %v3984 = vadd.f32 %v3918, %v3983
        %3985 = vdwg.mxu0
        %v3986 = vld [vmem:[%s536] sm:$0xff]
        %v3987 = vld [vmem:[%s536 + $0x8] sm:$0xff]
        %v3988 = vld [vmem:[%s536 + $0x10] sm:$0xff]
        %v3989 = vld [vmem:[%s536 + $0x18] sm:$0xff]
        %v3990 = vld [vmem:[%s536 + $0x20] sm:$0xff]
        %v3991 = vld [vmem:[%s536 + $0x28] sm:$0xff]
        %v3992 = vld [vmem:[%s536 + $0x30] sm:$0xff]
        %v3993 = vld [vmem:[%s536 + $0x38] sm:$0xff]
        %v3994 = vld [vmem:[%s536 + $0x40] sm:$0xff]
        %v3995 = vld [vmem:[%s536 + $0x48] sm:$0xff]
        %v3996 = vld [vmem:[%s536 + $0x50] sm:$0xff]
        %v3997 = vld [vmem:[%s536 + $0x58] sm:$0xff]
        %v3998 = vld [vmem:[%s536 + $0x60] sm:$0xff]
        %v3999 = vld [vmem:[%s536 + $0x68] sm:$0xff]
        %v4000 = vld [vmem:[%s536 + $0x70] sm:$0xff]
        %v4001 = vld [vmem:[%s536 + $0x78] sm:$0xff]
        %v4002 = vperm.slane %v570, 1
        %v4003 = vperm.slane %v571, 1
        %v4008 = vunpack.c.l.b16 %v598
        %v4009 = vunpack.c.l.b16 %v599
        %v4010 = vunpack.c.l.b16 %v600
        %v4011 = vunpack.c.l.b16 %v601
        %v4012 = vpack.c.b16 %v4009, %v4008
        %v4013 = vpack.c.b16 %v4011, %v4010
        %v4032 = vunpack.c.l.b16 %v3986
        %v4033 = vunpack.c.h.b16 %v3986
        %v4034 = vunpack.c.l.b16 %v3987
        %v4035 = vunpack.c.h.b16 %v3987
        %v4036 = vunpack.c.l.b16 %v3988
        %v4037 = vunpack.c.h.b16 %v3988
        %v4038 = vunpack.c.l.b16 %v3989
        %v4039 = vunpack.c.h.b16 %v3989
        %v4040 = vunpack.c.l.b16 %v3990
        %v4041 = vunpack.c.h.b16 %v3990
        %v4042 = vunpack.c.l.b16 %v3991
        %v4043 = vunpack.c.h.b16 %v3991
        %v4044 = vunpack.c.l.b16 %v3992
        %v4045 = vunpack.c.h.b16 %v3992
        %v4046 = vunpack.c.l.b16 %v3993
        %v4047 = vunpack.c.h.b16 %v3993
        %v4048 = vunpack.c.l.b16 %v3994
        %v4049 = vunpack.c.h.b16 %v3994
        %v4050 = vunpack.c.l.b16 %v3995
        %v4051 = vunpack.c.h.b16 %v3995
        %v4052 = vunpack.c.l.b16 %v3996
        %v4053 = vunpack.c.h.b16 %v3996
        %v4054 = vunpack.c.l.b16 %v3997
        %v4055 = vunpack.c.h.b16 %v3997
        %v4056 = vunpack.c.l.b16 %v3998
        %v4057 = vunpack.c.h.b16 %v3998
        %v4058 = vunpack.c.l.b16 %v3999
        %v4059 = vunpack.c.h.b16 %v3999
        %v4060 = vunpack.c.l.b16 %v4000
        %v4061 = vunpack.c.h.b16 %v4000
        %v4062 = vunpack.c.l.b16 %v4001
        %v4063 = vunpack.c.h.b16 %v4001
        %v4064 = vpack.c.b16 %v4034, %v4032
        %v4065 = vpack.c.b16 %v4035, %v4033
        %v4066 = vpack.c.b16 %v4038, %v4036
        %v4067 = vpack.c.b16 %v4039, %v4037
        %v4068 = vpack.c.b16 %v4042, %v4040
        %v4069 = vpack.c.b16 %v4043, %v4041
        %v4070 = vpack.c.b16 %v4046, %v4044
        %v4071 = vpack.c.b16 %v4047, %v4045
        %v4072 = vpack.c.b16 %v4050, %v4048
        %v4073 = vpack.c.b16 %v4051, %v4049
        %v4074 = vpack.c.b16 %v4054, %v4052
        %v4075 = vpack.c.b16 %v4055, %v4053
        %v4076 = vpack.c.b16 %v4058, %v4056
        %v4077 = vpack.c.b16 %v4059, %v4057
        %v4078 = vpack.c.b16 %v4062, %v4060
        %v4079 = vpack.c.b16 %v4063, %v4061
        %4096 = vmatpush.bf16.msra.mxu0 %v4078
        %4097 = vmatpush.bf16.msra.mxu0 %v4076
        %4098 = vmatpush.bf16.msra.mxu0 %v4074
        %4099 = vmatpush.bf16.msra.mxu0 %v4072
        %4100 = vmatpush.bf16.msra.mxu0 %v4070
        %4101 = vmatpush.bf16.msra.mxu0 %v4068
        %4102 = vmatpush.bf16.msra.mxu0 %v4066
        %4103 = vmatpush.bf16.msra.mxu0 %v4064
        %4104 = vmatmul.bf16.gmra.mxu0 %v4012
        %v4105 = vpop.f32.mrf.mxu0
        %v4106 = vadd.f32 %v4002, %v4105
        %v4107 = vpop.f32.mrf.mxu0
        %v4108 = vadd.f32 %v4002, %v4107
        %4109 = vmatmul.bf16.gmra.mxu0 %v4013
        %v4110 = vpop.f32.mrf.mxu0
        %v4111 = vadd.f32 %v4002, %v4110
        %v4112 = vpop.f32.mrf.mxu0
        %v4113 = vadd.f32 %v4002, %v4112
        %4114 = vdwg.mxu0
        %4115 = vmatpush.bf16.msra.mxu0 %v4079
        %4116 = vmatpush.bf16.msra.mxu0 %v4077
        %4117 = vmatpush.bf16.msra.mxu0 %v4075
        %4118 = vmatpush.bf16.msra.mxu0 %v4073
        %4119 = vmatpush.bf16.msra.mxu0 %v4071
        %4120 = vmatpush.bf16.msra.mxu0 %v4069
        %4121 = vmatpush.bf16.msra.mxu0 %v4067
        %4122 = vmatpush.bf16.msra.mxu0 %v4065
        %4123 = vmatmul.bf16.gmra.mxu0 %v4012
        %v4124 = vpop.f32.mrf.mxu0
        %v4125 = vadd.f32 %v4003, %v4124
        %v4126 = vpop.f32.mrf.mxu0
        %v4127 = vadd.f32 %v4003, %v4126
        %4128 = vmatmul.bf16.gmra.mxu0 %v4013
        %v4129 = vpop.f32.mrf.mxu0
        %v4130 = vadd.f32 %v4003, %v4129
        %v4131 = vpop.f32.mrf.mxu0
        %v4132 = vadd.f32 %v4003, %v4131
        %4133 = vdwg.mxu0
        %v4134 = vld [vmem:[%s541] sm:$0xf]
        %v4135 = vld [vmem:[%s541 + $0x4] sm:$0xf]
        %v4136 = vld [vmem:[%s541 + $0x8] sm:$0xf]
        %v4137 = vld [vmem:[%s541 + $0xc] sm:$0xf]
        %v4138 = vld [vmem:[%s541 + $0x10] sm:$0xf]
        %v4139 = vld [vmem:[%s541 + $0x14] sm:$0xf]
        %v4140 = vld [vmem:[%s541 + $0x18] sm:$0xf]
        %v4141 = vld [vmem:[%s541 + $0x1c] sm:$0xf]
        %v4142 = vld [vmem:[%s541 + $0x20] sm:$0xf]
        %v4143 = vld [vmem:[%s541 + $0x24] sm:$0xf]
        %v4144 = vld [vmem:[%s541 + $0x28] sm:$0xf]
        %v4145 = vld [vmem:[%s541 + $0x2c] sm:$0xf]
        %v4146 = vld [vmem:[%s541 + $0x30] sm:$0xf]
        %v4147 = vld [vmem:[%s541 + $0x34] sm:$0xf]
        %v4148 = vld [vmem:[%s541 + $0x38] sm:$0xf]
        %v4149 = vld [vmem:[%s541 + $0x3c] sm:$0xf]
        %4154 = vrot.lane.b32.xlu0 %v3977, 96
        %v4155 = vpop.permute.xlu0 %4154
        %4156 = vrot.lane.b32.xlu0 %v3979, 96
        %v4157 = vpop.permute.xlu0 %4156
        %4158 = vrot.lane.b32.xlu0 %v3982, 96
        %v4159 = vpop.permute.xlu0 %4158
        %4160 = vrot.lane.b32.xlu0 %v3984, 96
        %v4161 = vpop.permute.xlu0 %4160
        %4166 = vrot.lane.b32.xlu0 %v3977, 64
        %v4167 = vpop.permute.xlu0 %4166
        %4168 = vrot.lane.b32.xlu0 %v3979, 64
        %v4169 = vpop.permute.xlu0 %4168
        %4170 = vrot.lane.b32.xlu0 %v3982, 64
        %v4171 = vpop.permute.xlu0 %4170
        %4172 = vrot.lane.b32.xlu0 %v3984, 64
        %v4173 = vpop.permute.xlu0 %4172
        %4178 = vrot.lane.b32.xlu0 %v3977, 32
        %v4179 = vpop.permute.xlu0 %4178
        %4180 = vrot.lane.b32.xlu0 %v3979, 32
        %v4181 = vpop.permute.xlu0 %4180
        %4182 = vrot.lane.b32.xlu0 %v3982, 32
        %v4183 = vpop.permute.xlu0 %4182
        %4184 = vrot.lane.b32.xlu0 %v3984, 32
        %v4185 = vpop.permute.xlu0 %4184
        %v4190 = vrot.slane %v4167, 4
        %v4191 = vsel %vm881, %v4190, %v3977
        %v4192 = vrot.slane %v3977, 4
        %v4193 = vsel %vm881, %v4167, %v4192
        %v4195 = vunpack.c.l.s4 1983009808
        %v4196 = vunpack.c.0.s8 %v4195
        %v4197 = vperm.slane %v4191, %v4196
        %v4199 = vunpack.c.l.s4 1983009808
        %v4200 = vunpack.c.0.s8 %v4199
        %v4201 = vperm.slane %v4193, %v4200
        %v4202 = vrot.slane %v4179, 4
        %v4203 = vsel %vm881, %v4202, %v4155
        %v4204 = vrot.slane %v4155, 4
        %v4205 = vsel %vm881, %v4179, %v4204
        %v4207 = vunpack.c.l.s4 1983009808
        %v4208 = vunpack.c.0.s8 %v4207
        %v4209 = vperm.slane %v4203, %v4208
        %v4211 = vunpack.c.l.s4 1983009808
        %v4212 = vunpack.c.0.s8 %v4211
        %v4213 = vperm.slane %v4205, %v4212
        %v4214 = vrot.slane %v4209, 4
        %v4215 = vsel %vm881, %v4214, %v4197
        %v4216 = vrot.slane %v4197, 4
        %v4217 = vsel %vm881, %v4209, %v4216
        %v4219 = vunpack.c.l.s4 1934713408
        %v4220 = vunpack.c.0.s8 %v4219
        %v4221 = vperm.slane %v4215, %v4220
        %v4223 = vunpack.c.l.s4 1934713408
        %v4224 = vunpack.c.0.s8 %v4223
        %v4225 = vperm.slane %v4217, %v4224
        %v4226 = vrot.slane %v4213, 4
        %v4227 = vsel %vm881, %v4226, %v4201
        %v4228 = vrot.slane %v4201, 4
        %v4229 = vsel %vm881, %v4213, %v4228
        %v4231 = vunpack.c.l.s4 1934713408
        %v4232 = vunpack.c.0.s8 %v4231
        %v4233 = vperm.slane %v4227, %v4232
        %v4235 = vunpack.c.l.s4 1934713408
        %v4236 = vunpack.c.0.s8 %v4235
        %v4237 = vperm.slane %v4229, %v4236
        %v4238 = vrot.slane %v4221, 4
        %v4239 = vsel %vm881, 0.0, %v4238
        %v4240 = vrot.slane %v4225, 4
        %v4241 = vsel %vm881, 0.0, %v4240
        %v4242 = vrot.slane %v4233, 4
        %v4243 = vsel %vm881, 0.0, %v4242
        %v4244 = vrot.slane %v4237, 4
        %v4245 = vsel %vm881, 0.0, %v4244
        %v4246 = vrot.slane %v4169, 4
        %v4247 = vsel %vm881, %v4246, %v3979
        %v4248 = vrot.slane %v3979, 4
        %v4249 = vsel %vm881, %v4169, %v4248
        %v4251 = vunpack.c.l.s4 1983009808
        %v4252 = vunpack.c.0.s8 %v4251
        %v4253 = vperm.slane %v4247, %v4252
        %v4255 = vunpack.c.l.s4 1983009808
        %v4256 = vunpack.c.0.s8 %v4255
        %v4257 = vperm.slane %v4249, %v4256
        %v4258 = vrot.slane %v4181, 4
        %v4259 = vsel %vm881, %v4258, %v4157
        %v4260 = vrot.slane %v4157, 4
        %v4261 = vsel %vm881, %v4181, %v4260
        %v4263 = vunpack.c.l.s4 1983009808
        %v4264 = vunpack.c.0.s8 %v4263
        %v4265 = vperm.slane %v4259, %v4264
        %v4267 = vunpack.c.l.s4 1983009808
        %v4268 = vunpack.c.0.s8 %v4267
        %v4269 = vperm.slane %v4261, %v4268
        %v4270 = vrot.slane %v4265, 4
        %v4271 = vsel %vm881, %v4270, %v4253
        %v4272 = vrot.slane %v4253, 4
        %v4273 = vsel %vm881, %v4265, %v4272
        %v4275 = vunpack.c.l.s4 1934713408
        %v4276 = vunpack.c.0.s8 %v4275
        %v4277 = vperm.slane %v4271, %v4276
        %v4279 = vunpack.c.l.s4 1934713408
        %v4280 = vunpack.c.0.s8 %v4279
        %v4281 = vperm.slane %v4273, %v4280
        %v4282 = vrot.slane %v4269, 4
        %v4283 = vsel %vm881, %v4282, %v4257
        %v4284 = vrot.slane %v4257, 4
        %v4285 = vsel %vm881, %v4269, %v4284
        %v4287 = vunpack.c.l.s4 1934713408
        %v4288 = vunpack.c.0.s8 %v4287
        %v4289 = vperm.slane %v4283, %v4288
        %v4291 = vunpack.c.l.s4 1934713408
        %v4292 = vunpack.c.0.s8 %v4291
        %v4293 = vperm.slane %v4285, %v4292
        %v4294 = vrot.slane %v4277, 4
        %v4295 = vsel %vm881, 0.0, %v4294
        %v4296 = vrot.slane %v4281, 4
        %v4297 = vsel %vm881, 0.0, %v4296
        %v4298 = vrot.slane %v4289, 4
        %v4299 = vsel %vm881, 0.0, %v4298
        %v4300 = vrot.slane %v4293, 4
        %v4301 = vsel %vm881, 0.0, %v4300
        %v4302 = vrot.slane %v4171, 4
        %v4303 = vsel %vm881, %v4302, %v3982
        %v4304 = vrot.slane %v3982, 4
        %v4305 = vsel %vm881, %v4171, %v4304
        %v4307 = vunpack.c.l.s4 1983009808
        %v4308 = vunpack.c.0.s8 %v4307
        %v4309 = vperm.slane %v4303, %v4308
        %v4311 = vunpack.c.l.s4 1983009808
        %v4312 = vunpack.c.0.s8 %v4311
        %v4313 = vperm.slane %v4305, %v4312
        %v4314 = vrot.slane %v4183, 4
        %v4315 = vsel %vm881, %v4314, %v4159
        %v4316 = vrot.slane %v4159, 4
        %v4317 = vsel %vm881, %v4183, %v4316
        %v4319 = vunpack.c.l.s4 1983009808
        %v4320 = vunpack.c.0.s8 %v4319
        %v4321 = vperm.slane %v4315, %v4320
        %v4323 = vunpack.c.l.s4 1983009808
        %v4324 = vunpack.c.0.s8 %v4323
        %v4325 = vperm.slane %v4317, %v4324
        %v4326 = vrot.slane %v4321, 4
        %v4327 = vsel %vm881, %v4326, %v4309
        %v4328 = vrot.slane %v4309, 4
        %v4329 = vsel %vm881, %v4321, %v4328
        %v4331 = vunpack.c.l.s4 1934713408
        %v4332 = vunpack.c.0.s8 %v4331
        %v4333 = vperm.slane %v4327, %v4332
        %v4335 = vunpack.c.l.s4 1934713408
        %v4336 = vunpack.c.0.s8 %v4335
        %v4337 = vperm.slane %v4329, %v4336
        %v4338 = vrot.slane %v4325, 4
        %v4339 = vsel %vm881, %v4338, %v4313
        %v4340 = vrot.slane %v4313, 4
        %v4341 = vsel %vm881, %v4325, %v4340
        %v4343 = vunpack.c.l.s4 1934713408
        %v4344 = vunpack.c.0.s8 %v4343
        %v4345 = vperm.slane %v4339, %v4344
        %v4347 = vunpack.c.l.s4 1934713408
        %v4348 = vunpack.c.0.s8 %v4347
        %v4349 = vperm.slane %v4341, %v4348
        %v4350 = vrot.slane %v4333, 4
        %v4351 = vsel %vm881, 0.0, %v4350
        %v4352 = vrot.slane %v4337, 4
        %v4353 = vsel %vm881, 0.0, %v4352
        %v4354 = vrot.slane %v4345, 4
        %v4355 = vsel %vm881, 0.0, %v4354
        %v4356 = vrot.slane %v4349, 4
        %v4357 = vsel %vm881, 0.0, %v4356
        %v4358 = vrot.slane %v4173, 4
        %v4359 = vsel %vm881, %v4358, %v3984
        %v4360 = vrot.slane %v3984, 4
        %v4361 = vsel %vm881, %v4173, %v4360
        %v4363 = vunpack.c.l.s4 1983009808
        %v4364 = vunpack.c.0.s8 %v4363
        %v4365 = vperm.slane %v4359, %v4364
        %v4367 = vunpack.c.l.s4 1983009808
        %v4368 = vunpack.c.0.s8 %v4367
        %v4369 = vperm.slane %v4361, %v4368
        %v4370 = vrot.slane %v4185, 4
        %v4371 = vsel %vm881, %v4370, %v4161
        %v4372 = vrot.slane %v4161, 4
        %v4373 = vsel %vm881, %v4185, %v4372
        %v4375 = vunpack.c.l.s4 1983009808
        %v4376 = vunpack.c.0.s8 %v4375
        %v4377 = vperm.slane %v4371, %v4376
        %v4379 = vunpack.c.l.s4 1983009808
        %v4380 = vunpack.c.0.s8 %v4379
        %v4381 = vperm.slane %v4373, %v4380
        %v4382 = vrot.slane %v4377, 4
        %v4383 = vsel %vm881, %v4382, %v4365
        %v4384 = vrot.slane %v4365, 4
        %v4385 = vsel %vm881, %v4377, %v4384
        %v4387 = vunpack.c.l.s4 1934713408
        %v4388 = vunpack.c.0.s8 %v4387
        %v4389 = vperm.slane %v4383, %v4388
        %v4391 = vunpack.c.l.s4 1934713408
        %v4392 = vunpack.c.0.s8 %v4391
        %v4393 = vperm.slane %v4385, %v4392
        %v4394 = vrot.slane %v4381, 4
        %v4395 = vsel %vm881, %v4394, %v4369
        %v4396 = vrot.slane %v4369, 4
        %v4397 = vsel %vm881, %v4381, %v4396
        %v4399 = vunpack.c.l.s4 1934713408
        %v4400 = vunpack.c.0.s8 %v4399
        %v4401 = vperm.slane %v4395, %v4400
        %v4403 = vunpack.c.l.s4 1934713408
        %v4404 = vunpack.c.0.s8 %v4403
        %v4405 = vperm.slane %v4397, %v4404
        %v4406 = vrot.slane %v4389, 4
        %v4407 = vsel %vm881, 0.0, %v4406
        %v4408 = vrot.slane %v4393, 4
        %v4409 = vsel %vm881, 0.0, %v4408
        %v4410 = vrot.slane %v4401, 4
        %v4411 = vsel %vm881, 0.0, %v4410
        %v4412 = vrot.slane %v4405, 4
        %v4413 = vsel %vm881, 0.0, %v4412
        %v4414 = vsel %vm881, %v4240, %v4221
        %v4416 = vunpack.c.l.s4 1983009808
        %v4417 = vunpack.c.0.s8 %v4416
        %v4418 = vperm.slane %v4414, %v4417
        %v4419 = vrot.slane %v4241, 4
        %v4420 = vsel %vm881, %v4419, %v4239
        %v4422 = vunpack.c.l.s4 1983009808
        %v4423 = vunpack.c.0.s8 %v4422
        %v4424 = vperm.slane %v4420, %v4423
        %v4425 = vsel %vm881, %v4244, %v4233
        %v4427 = vunpack.c.l.s4 1983009808
        %v4428 = vunpack.c.0.s8 %v4427
        %v4429 = vperm.slane %v4425, %v4428
        %v4430 = vrot.slane %v4245, 4
        %v4431 = vsel %vm881, %v4430, %v4243
        %v4433 = vunpack.c.l.s4 1983009808
        %v4434 = vunpack.c.0.s8 %v4433
        %v4435 = vperm.slane %v4431, %v4434
        %v4436 = vrot.slane %v4424, 4
        %v4437 = vsel %vm881, %v4436, %v4418
        %v4438 = vrot.slane %v4418, 4
        %v4439 = vsel %vm881, %v4424, %v4438
        %v4441 = vunpack.c.l.s4 1934713408
        %v4442 = vunpack.c.0.s8 %v4441
        %v4443 = vperm.slane %v4437, %v4442
        %v4445 = vunpack.c.l.s4 1934713408
        %v4446 = vunpack.c.0.s8 %v4445
        %v4447 = vperm.slane %v4439, %v4446
        %v4448 = vrot.slane %v4435, 4
        %v4449 = vsel %vm881, %v4448, %v4429
        %v4450 = vrot.slane %v4429, 4
        %v4451 = vsel %vm881, %v4435, %v4450
        %v4453 = vunpack.c.l.s4 1934713408
        %v4454 = vunpack.c.0.s8 %v4453
        %v4455 = vperm.slane %v4449, %v4454
        %v4457 = vunpack.c.l.s4 1934713408
        %v4458 = vunpack.c.0.s8 %v4457
        %v4459 = vperm.slane %v4451, %v4458
        %v4460 = vrot.slane %v4455, 4
        %v4461 = vsel %vm881, %v4460, %v4443
        %v4462 = vrot.slane %v4443, 4
        %v4463 = vsel %vm881, %v4455, %v4462
        %v4464 = vrot.slane %v4459, 4
        %v4465 = vsel %vm881, %v4464, %v4447
        %v4466 = vrot.slane %v4447, 4
        %v4467 = vsel %vm881, %v4459, %v4466
        %v4468 = vsel %vm881, %v4296, %v4277
        %v4470 = vunpack.c.l.s4 1983009808
        %v4471 = vunpack.c.0.s8 %v4470
        %v4472 = vperm.slane %v4468, %v4471
        %v4473 = vrot.slane %v4297, 4
        %v4474 = vsel %vm881, %v4473, %v4295
        %v4476 = vunpack.c.l.s4 1983009808
        %v4477 = vunpack.c.0.s8 %v4476
        %v4478 = vperm.slane %v4474, %v4477
        %v4479 = vsel %vm881, %v4300, %v4289
        %v4481 = vunpack.c.l.s4 1983009808
        %v4482 = vunpack.c.0.s8 %v4481
        %v4483 = vperm.slane %v4479, %v4482
        %v4484 = vrot.slane %v4301, 4
        %v4485 = vsel %vm881, %v4484, %v4299
        %v4487 = vunpack.c.l.s4 1983009808
        %v4488 = vunpack.c.0.s8 %v4487
        %v4489 = vperm.slane %v4485, %v4488
        %v4490 = vrot.slane %v4478, 4
        %v4491 = vsel %vm881, %v4490, %v4472
        %v4492 = vrot.slane %v4472, 4
        %v4493 = vsel %vm881, %v4478, %v4492
        %v4495 = vunpack.c.l.s4 1934713408
        %v4496 = vunpack.c.0.s8 %v4495
        %v4497 = vperm.slane %v4491, %v4496
        %v4499 = vunpack.c.l.s4 1934713408
        %v4500 = vunpack.c.0.s8 %v4499
        %v4501 = vperm.slane %v4493, %v4500
        %v4502 = vrot.slane %v4489, 4
        %v4503 = vsel %vm881, %v4502, %v4483
        %v4504 = vrot.slane %v4483, 4
        %v4505 = vsel %vm881, %v4489, %v4504
        %v4507 = vunpack.c.l.s4 1934713408
        %v4508 = vunpack.c.0.s8 %v4507
        %v4509 = vperm.slane %v4503, %v4508
        %v4511 = vunpack.c.l.s4 1934713408
        %v4512 = vunpack.c.0.s8 %v4511
        %v4513 = vperm.slane %v4505, %v4512
        %v4514 = vrot.slane %v4509, 4
        %v4515 = vsel %vm881, %v4514, %v4497
        %v4516 = vrot.slane %v4497, 4
        %v4517 = vsel %vm881, %v4509, %v4516
        %v4518 = vrot.slane %v4513, 4
        %v4519 = vsel %vm881, %v4518, %v4501
        %v4520 = vrot.slane %v4501, 4
        %v4521 = vsel %vm881, %v4513, %v4520
        %v4522 = vsel %vm881, %v4352, %v4333
        %v4524 = vunpack.c.l.s4 1983009808
        %v4525 = vunpack.c.0.s8 %v4524
        %v4526 = vperm.slane %v4522, %v4525
        %v4527 = vrot.slane %v4353, 4
        %v4528 = vsel %vm881, %v4527, %v4351
        %v4530 = vunpack.c.l.s4 1983009808
        %v4531 = vunpack.c.0.s8 %v4530
        %v4532 = vperm.slane %v4528, %v4531
        %v4533 = vsel %vm881, %v4356, %v4345
        %v4535 = vunpack.c.l.s4 1983009808
        %v4536 = vunpack.c.0.s8 %v4535
        %v4537 = vperm.slane %v4533, %v4536
        %v4538 = vrot.slane %v4357, 4
        %v4539 = vsel %vm881, %v4538, %v4355
        %v4541 = vunpack.c.l.s4 1983009808
        %v4542 = vunpack.c.0.s8 %v4541
        %v4543 = vperm.slane %v4539, %v4542
        %v4544 = vrot.slane %v4532, 4
        %v4545 = vsel %vm881, %v4544, %v4526
        %v4546 = vrot.slane %v4526, 4
        %v4547 = vsel %vm881, %v4532, %v4546
        %v4549 = vunpack.c.l.s4 1934713408
        %v4550 = vunpack.c.0.s8 %v4549
        %v4551 = vperm.slane %v4545, %v4550
        %v4553 = vunpack.c.l.s4 1934713408
        %v4554 = vunpack.c.0.s8 %v4553
        %v4555 = vperm.slane %v4547, %v4554
        %v4556 = vrot.slane %v4543, 4
        %v4557 = vsel %vm881, %v4556, %v4537
        %v4558 = vrot.slane %v4537, 4
        %v4559 = vsel %vm881, %v4543, %v4558
        %v4561 = vunpack.c.l.s4 1934713408
        %v4562 = vunpack.c.0.s8 %v4561
        %v4563 = vperm.slane %v4557, %v4562
        %v4565 = vunpack.c.l.s4 1934713408
        %v4566 = vunpack.c.0.s8 %v4565
        %v4567 = vperm.slane %v4559, %v4566
        %v4568 = vrot.slane %v4563, 4
        %v4569 = vsel %vm881, %v4568, %v4551
        %v4570 = vrot.slane %v4551, 4
        %v4571 = vsel %vm881, %v4563, %v4570
        %v4572 = vrot.slane %v4567, 4
        %v4573 = vsel %vm881, %v4572, %v4555
        %v4574 = vrot.slane %v4555, 4
        %v4575 = vsel %vm881, %v4567, %v4574
        %v4576 = vsel %vm881, %v4408, %v4389
        %v4578 = vunpack.c.l.s4 1983009808
        %v4579 = vunpack.c.0.s8 %v4578
        %v4580 = vperm.slane %v4576, %v4579
        %v4581 = vrot.slane %v4409, 4
        %v4582 = vsel %vm881, %v4581, %v4407
        %v4584 = vunpack.c.l.s4 1983009808
        %v4585 = vunpack.c.0.s8 %v4584
        %v4586 = vperm.slane %v4582, %v4585
        %v4587 = vsel %vm881, %v4412, %v4401
        %v4589 = vunpack.c.l.s4 1983009808
        %v4590 = vunpack.c.0.s8 %v4589
        %v4591 = vperm.slane %v4587, %v4590
        %v4592 = vrot.slane %v4413, 4
        %v4593 = vsel %vm881, %v4592, %v4411
        %v4595 = vunpack.c.l.s4 1983009808
        %v4596 = vunpack.c.0.s8 %v4595
        %v4597 = vperm.slane %v4593, %v4596
        %v4598 = vrot.slane %v4586, 4
        %v4599 = vsel %vm881, %v4598, %v4580
        %v4600 = vrot.slane %v4580, 4
        %v4601 = vsel %vm881, %v4586, %v4600
        %v4603 = vunpack.c.l.s4 1934713408
        %v4604 = vunpack.c.0.s8 %v4603
        %v4605 = vperm.slane %v4599, %v4604
        %v4607 = vunpack.c.l.s4 1934713408
        %v4608 = vunpack.c.0.s8 %v4607
        %v4609 = vperm.slane %v4601, %v4608
        %v4610 = vrot.slane %v4597, 4
        %v4611 = vsel %vm881, %v4610, %v4591
        %v4612 = vrot.slane %v4591, 4
        %v4613 = vsel %vm881, %v4597, %v4612
        %v4615 = vunpack.c.l.s4 1934713408
        %v4616 = vunpack.c.0.s8 %v4615
        %v4617 = vperm.slane %v4611, %v4616
        %v4619 = vunpack.c.l.s4 1934713408
        %v4620 = vunpack.c.0.s8 %v4619
        %v4621 = vperm.slane %v4613, %v4620
        %v4622 = vrot.slane %v4617, 4
        %v4623 = vsel %vm881, %v4622, %v4605
        %v4624 = vrot.slane %v4605, 4
        %v4625 = vsel %vm881, %v4617, %v4624
        %v4626 = vrot.slane %v4621, 4
        %v4627 = vsel %vm881, %v4626, %v4609
        %v4628 = vrot.slane %v4609, 4
        %v4629 = vsel %vm881, %v4621, %v4628
        %v4630 = vpack.c.bf16 %v4461, %v4461
        %v4631 = vpack.c.bf16 %v4515, %v4515
        %v4632 = vpack.c.bf16 %v4463, %v4463
        %v4633 = vpack.c.bf16 %v4517, %v4517
        %v4634 = vpack.c.bf16 %v4465, %v4465
        %v4635 = vpack.c.bf16 %v4519, %v4519
        %v4636 = vpack.c.bf16 %v4467, %v4467
        %v4637 = vpack.c.bf16 %v4521, %v4521
        %v4638 = vpack.c.bf16 %v4569, %v4569
        %v4639 = vpack.c.bf16 %v4623, %v4623
        %v4640 = vpack.c.bf16 %v4571, %v4571
        %v4641 = vpack.c.bf16 %v4625, %v4625
        %v4642 = vpack.c.bf16 %v4573, %v4573
        %v4643 = vpack.c.bf16 %v4627, %v4627
        %v4644 = vpack.c.bf16 %v4575, %v4575
        %v4645 = vpack.c.bf16 %v4629, %v4629
        %4650 = vrot.lane.b32.xlu0 %v4106, 96
        %v4651 = vpop.permute.xlu0 %4650
        %4652 = vrot.lane.b32.xlu0 %v4108, 96
        %v4653 = vpop.permute.xlu0 %4652
        %4654 = vrot.lane.b32.xlu0 %v4111, 96
        %v4655 = vpop.permute.xlu0 %4654
        %4656 = vrot.lane.b32.xlu0 %v4113, 96
        %v4657 = vpop.permute.xlu0 %4656
        %4662 = vrot.lane.b32.xlu0 %v4106, 64
        %v4663 = vpop.permute.xlu0 %4662
        %4664 = vrot.lane.b32.xlu0 %v4108, 64
        %v4665 = vpop.permute.xlu0 %4664
        %4666 = vrot.lane.b32.xlu0 %v4111, 64
        %v4667 = vpop.permute.xlu0 %4666
        %4668 = vrot.lane.b32.xlu0 %v4113, 64
        %v4669 = vpop.permute.xlu0 %4668
        %4674 = vrot.lane.b32.xlu0 %v4106, 32
        %v4675 = vpop.permute.xlu0 %4674
        %4676 = vrot.lane.b32.xlu0 %v4108, 32
        %v4677 = vpop.permute.xlu0 %4676
        %4678 = vrot.lane.b32.xlu0 %v4111, 32
        %v4679 = vpop.permute.xlu0 %4678
        %4680 = vrot.lane.b32.xlu0 %v4113, 32
        %v4681 = vpop.permute.xlu0 %4680
        %v4686 = vrot.slane %v4663, 4
        %v4687 = vsel %vm881, %v4686, %v4106
        %v4688 = vrot.slane %v4106, 4
        %v4689 = vsel %vm881, %v4663, %v4688
        %v4691 = vunpack.c.l.s4 1983009808
        %v4692 = vunpack.c.0.s8 %v4691
        %v4693 = vperm.slane %v4687, %v4692
        %v4695 = vunpack.c.l.s4 1983009808
        %v4696 = vunpack.c.0.s8 %v4695
        %v4697 = vperm.slane %v4689, %v4696
        %v4698 = vrot.slane %v4675, 4
        %v4699 = vsel %vm881, %v4698, %v4651
        %v4700 = vrot.slane %v4651, 4
        %v4701 = vsel %vm881, %v4675, %v4700
        %v4703 = vunpack.c.l.s4 1983009808
        %v4704 = vunpack.c.0.s8 %v4703
        %v4705 = vperm.slane %v4699, %v4704
        %v4707 = vunpack.c.l.s4 1983009808
        %v4708 = vunpack.c.0.s8 %v4707
        %v4709 = vperm.slane %v4701, %v4708
        %v4710 = vrot.slane %v4705, 4
        %v4711 = vsel %vm881, %v4710, %v4693
        %v4712 = vrot.slane %v4693, 4
        %v4713 = vsel %vm881, %v4705, %v4712
        %v4715 = vunpack.c.l.s4 1934713408
        %v4716 = vunpack.c.0.s8 %v4715
        %v4717 = vperm.slane %v4711, %v4716
        %v4719 = vunpack.c.l.s4 1934713408
        %v4720 = vunpack.c.0.s8 %v4719
        %v4721 = vperm.slane %v4713, %v4720
        %v4722 = vrot.slane %v4709, 4
        %v4723 = vsel %vm881, %v4722, %v4697
        %v4724 = vrot.slane %v4697, 4
        %v4725 = vsel %vm881, %v4709, %v4724
        %v4727 = vunpack.c.l.s4 1934713408
        %v4728 = vunpack.c.0.s8 %v4727
        %v4729 = vperm.slane %v4723, %v4728
        %v4731 = vunpack.c.l.s4 1934713408
        %v4732 = vunpack.c.0.s8 %v4731
        %v4733 = vperm.slane %v4725, %v4732
        %v4734 = vrot.slane %v4717, 4
        %v4735 = vsel %vm881, 0.0, %v4734
        %v4736 = vrot.slane %v4721, 4
        %v4737 = vsel %vm881, 0.0, %v4736
        %v4738 = vrot.slane %v4729, 4
        %v4739 = vsel %vm881, 0.0, %v4738
        %v4740 = vrot.slane %v4733, 4
        %v4741 = vsel %vm881, 0.0, %v4740
        %v4742 = vrot.slane %v4665, 4
        %v4743 = vsel %vm881, %v4742, %v4108
        %v4744 = vrot.slane %v4108, 4
        %v4745 = vsel %vm881, %v4665, %v4744
        %v4747 = vunpack.c.l.s4 1983009808
        %v4748 = vunpack.c.0.s8 %v4747
        %v4749 = vperm.slane %v4743, %v4748
        %v4751 = vunpack.c.l.s4 1983009808
        %v4752 = vunpack.c.0.s8 %v4751
        %v4753 = vperm.slane %v4745, %v4752
        %v4754 = vrot.slane %v4677, 4
        %v4755 = vsel %vm881, %v4754, %v4653
        %v4756 = vrot.slane %v4653, 4
        %v4757 = vsel %vm881, %v4677, %v4756
        %v4759 = vunpack.c.l.s4 1983009808
        %v4760 = vunpack.c.0.s8 %v4759
        %v4761 = vperm.slane %v4755, %v4760
        %v4763 = vunpack.c.l.s4 1983009808
        %v4764 = vunpack.c.0.s8 %v4763
        %v4765 = vperm.slane %v4757, %v4764
        %v4766 = vrot.slane %v4761, 4
        %v4767 = vsel %vm881, %v4766, %v4749
        %v4768 = vrot.slane %v4749, 4
        %v4769 = vsel %vm881, %v4761, %v4768
        %v4771 = vunpack.c.l.s4 1934713408
        %v4772 = vunpack.c.0.s8 %v4771
        %v4773 = vperm.slane %v4767, %v4772
        %v4775 = vunpack.c.l.s4 1934713408
        %v4776 = vunpack.c.0.s8 %v4775
        %v4777 = vperm.slane %v4769, %v4776
        %v4778 = vrot.slane %v4765, 4
        %v4779 = vsel %vm881, %v4778, %v4753
        %v4780 = vrot.slane %v4753, 4
        %v4781 = vsel %vm881, %v4765, %v4780
        %v4783 = vunpack.c.l.s4 1934713408
        %v4784 = vunpack.c.0.s8 %v4783
        %v4785 = vperm.slane %v4779, %v4784
        %v4787 = vunpack.c.l.s4 1934713408
        %v4788 = vunpack.c.0.s8 %v4787
        %v4789 = vperm.slane %v4781, %v4788
        %v4790 = vrot.slane %v4773, 4
        %v4791 = vsel %vm881, 0.0, %v4790
        %v4792 = vrot.slane %v4777, 4
        %v4793 = vsel %vm881, 0.0, %v4792
        %v4794 = vrot.slane %v4785, 4
        %v4795 = vsel %vm881, 0.0, %v4794
        %v4796 = vrot.slane %v4789, 4
        %v4797 = vsel %vm881, 0.0, %v4796
        %v4798 = vrot.slane %v4667, 4
        %v4799 = vsel %vm881, %v4798, %v4111
        %v4800 = vrot.slane %v4111, 4
        %v4801 = vsel %vm881, %v4667, %v4800
        %v4803 = vunpack.c.l.s4 1983009808
        %v4804 = vunpack.c.0.s8 %v4803
        %v4805 = vperm.slane %v4799, %v4804
        %v4807 = vunpack.c.l.s4 1983009808
        %v4808 = vunpack.c.0.s8 %v4807
        %v4809 = vperm.slane %v4801, %v4808
        %v4810 = vrot.slane %v4679, 4
        %v4811 = vsel %vm881, %v4810, %v4655
        %v4812 = vrot.slane %v4655, 4
        %v4813 = vsel %vm881, %v4679, %v4812
        %v4815 = vunpack.c.l.s4 1983009808
        %v4816 = vunpack.c.0.s8 %v4815
        %v4817 = vperm.slane %v4811, %v4816
        %v4819 = vunpack.c.l.s4 1983009808
        %v4820 = vunpack.c.0.s8 %v4819
        %v4821 = vperm.slane %v4813, %v4820
        %v4822 = vrot.slane %v4817, 4
        %v4823 = vsel %vm881, %v4822, %v4805
        %v4824 = vrot.slane %v4805, 4
        %v4825 = vsel %vm881, %v4817, %v4824
        %v4827 = vunpack.c.l.s4 1934713408
        %v4828 = vunpack.c.0.s8 %v4827
        %v4829 = vperm.slane %v4823, %v4828
        %v4831 = vunpack.c.l.s4 1934713408
        %v4832 = vunpack.c.0.s8 %v4831
        %v4833 = vperm.slane %v4825, %v4832
        %v4834 = vrot.slane %v4821, 4
        %v4835 = vsel %vm881, %v4834, %v4809
        %v4836 = vrot.slane %v4809, 4
        %v4837 = vsel %vm881, %v4821, %v4836
        %v4839 = vunpack.c.l.s4 1934713408
        %v4840 = vunpack.c.0.s8 %v4839
        %v4841 = vperm.slane %v4835, %v4840
        %v4843 = vunpack.c.l.s4 1934713408
        %v4844 = vunpack.c.0.s8 %v4843
        %v4845 = vperm.slane %v4837, %v4844
        %v4846 = vrot.slane %v4829, 4
        %v4847 = vsel %vm881, 0.0, %v4846
        %v4848 = vrot.slane %v4833, 4
        %v4849 = vsel %vm881, 0.0, %v4848
        %v4850 = vrot.slane %v4841, 4
        %v4851 = vsel %vm881, 0.0, %v4850
        %v4852 = vrot.slane %v4845, 4
        %v4853 = vsel %vm881, 0.0, %v4852
        %v4854 = vrot.slane %v4669, 4
        %v4855 = vsel %vm881, %v4854, %v4113
        %v4856 = vrot.slane %v4113, 4
        %v4857 = vsel %vm881, %v4669, %v4856
        %v4859 = vunpack.c.l.s4 1983009808
        %v4860 = vunpack.c.0.s8 %v4859
        %v4861 = vperm.slane %v4855, %v4860
        %v4863 = vunpack.c.l.s4 1983009808
        %v4864 = vunpack.c.0.s8 %v4863
        %v4865 = vperm.slane %v4857, %v4864
        %v4866 = vrot.slane %v4681, 4
        %v4867 = vsel %vm881, %v4866, %v4657
        %v4868 = vrot.slane %v4657, 4
        %v4869 = vsel %vm881, %v4681, %v4868
        %v4871 = vunpack.c.l.s4 1983009808
        %v4872 = vunpack.c.0.s8 %v4871
        %v4873 = vperm.slane %v4867, %v4872
        %v4875 = vunpack.c.l.s4 1983009808
        %v4876 = vunpack.c.0.s8 %v4875
        %v4877 = vperm.slane %v4869, %v4876
        %v4878 = vrot.slane %v4873, 4
        %v4879 = vsel %vm881, %v4878, %v4861
        %v4880 = vrot.slane %v4861, 4
        %v4881 = vsel %vm881, %v4873, %v4880
        %v4883 = vunpack.c.l.s4 1934713408
        %v4884 = vunpack.c.0.s8 %v4883
        %v4885 = vperm.slane %v4879, %v4884
        %v4887 = vunpack.c.l.s4 1934713408
        %v4888 = vunpack.c.0.s8 %v4887
        %v4889 = vperm.slane %v4881, %v4888
        %v4890 = vrot.slane %v4877, 4
        %v4891 = vsel %vm881, %v4890, %v4865
        %v4892 = vrot.slane %v4865, 4
        %v4893 = vsel %vm881, %v4877, %v4892
        %v4895 = vunpack.c.l.s4 1934713408
        %v4896 = vunpack.c.0.s8 %v4895
        %v4897 = vperm.slane %v4891, %v4896
        %v4899 = vunpack.c.l.s4 1934713408
        %v4900 = vunpack.c.0.s8 %v4899
        %v4901 = vperm.slane %v4893, %v4900
        %v4902 = vrot.slane %v4885, 4
        %v4903 = vsel %vm881, 0.0, %v4902
        %v4904 = vrot.slane %v4889, 4
        %v4905 = vsel %vm881, 0.0, %v4904
        %v4906 = vrot.slane %v4897, 4
        %v4907 = vsel %vm881, 0.0, %v4906
        %v4908 = vrot.slane %v4901, 4
        %v4909 = vsel %vm881, 0.0, %v4908
        %v4910 = vsel %vm881, %v4736, %v4717
        %v4912 = vunpack.c.l.s4 1983009808
        %v4913 = vunpack.c.0.s8 %v4912
        %v4914 = vperm.slane %v4910, %v4913
        %v4915 = vrot.slane %v4737, 4
        %v4916 = vsel %vm881, %v4915, %v4735
        %v4918 = vunpack.c.l.s4 1983009808
        %v4919 = vunpack.c.0.s8 %v4918
        %v4920 = vperm.slane %v4916, %v4919
        %v4921 = vsel %vm881, %v4740, %v4729
        %v4923 = vunpack.c.l.s4 1983009808
        %v4924 = vunpack.c.0.s8 %v4923
        %v4925 = vperm.slane %v4921, %v4924
        %v4926 = vrot.slane %v4741, 4
        %v4927 = vsel %vm881, %v4926, %v4739
        %v4929 = vunpack.c.l.s4 1983009808
        %v4930 = vunpack.c.0.s8 %v4929
        %v4931 = vperm.slane %v4927, %v4930
        %v4932 = vrot.slane %v4920, 4
        %v4933 = vsel %vm881, %v4932, %v4914
        %v4934 = vrot.slane %v4914, 4
        %v4935 = vsel %vm881, %v4920, %v4934
        %v4937 = vunpack.c.l.s4 1934713408
        %v4938 = vunpack.c.0.s8 %v4937
        %v4939 = vperm.slane %v4933, %v4938
        %v4941 = vunpack.c.l.s4 1934713408
        %v4942 = vunpack.c.0.s8 %v4941
        %v4943 = vperm.slane %v4935, %v4942
        %v4944 = vrot.slane %v4931, 4
        %v4945 = vsel %vm881, %v4944, %v4925
        %v4946 = vrot.slane %v4925, 4
        %v4947 = vsel %vm881, %v4931, %v4946
        %v4949 = vunpack.c.l.s4 1934713408
        %v4950 = vunpack.c.0.s8 %v4949
        %v4951 = vperm.slane %v4945, %v4950
        %v4953 = vunpack.c.l.s4 1934713408
        %v4954 = vunpack.c.0.s8 %v4953
        %v4955 = vperm.slane %v4947, %v4954
        %v4956 = vrot.slane %v4951, 4
        %v4957 = vsel %vm881, %v4956, %v4939
        %v4958 = vrot.slane %v4939, 4
        %v4959 = vsel %vm881, %v4951, %v4958
        %v4960 = vrot.slane %v4955, 4
        %v4961 = vsel %vm881, %v4960, %v4943
        %v4962 = vrot.slane %v4943, 4
        %v4963 = vsel %vm881, %v4955, %v4962
        %v4964 = vsel %vm881, %v4792, %v4773
        %v4966 = vunpack.c.l.s4 1983009808
        %v4967 = vunpack.c.0.s8 %v4966
        %v4968 = vperm.slane %v4964, %v4967
        %v4969 = vrot.slane %v4793, 4
        %v4970 = vsel %vm881, %v4969, %v4791
        %v4972 = vunpack.c.l.s4 1983009808
        %v4973 = vunpack.c.0.s8 %v4972
        %v4974 = vperm.slane %v4970, %v4973
        %v4975 = vsel %vm881, %v4796, %v4785
        %v4977 = vunpack.c.l.s4 1983009808
        %v4978 = vunpack.c.0.s8 %v4977
        %v4979 = vperm.slane %v4975, %v4978
        %v4980 = vrot.slane %v4797, 4
        %v4981 = vsel %vm881, %v4980, %v4795
        %v4983 = vunpack.c.l.s4 1983009808
        %v4984 = vunpack.c.0.s8 %v4983
        %v4985 = vperm.slane %v4981, %v4984
        %v4986 = vrot.slane %v4974, 4
        %v4987 = vsel %vm881, %v4986, %v4968
        %v4988 = vrot.slane %v4968, 4
        %v4989 = vsel %vm881, %v4974, %v4988
        %v4991 = vunpack.c.l.s4 1934713408
        %v4992 = vunpack.c.0.s8 %v4991
        %v4993 = vperm.slane %v4987, %v4992
        %v4995 = vunpack.c.l.s4 1934713408
        %v4996 = vunpack.c.0.s8 %v4995
        %v4997 = vperm.slane %v4989, %v4996
        %v4998 = vrot.slane %v4985, 4
        %v4999 = vsel %vm881, %v4998, %v4979
        %v5000 = vrot.slane %v4979, 4
        %v5001 = vsel %vm881, %v4985, %v5000
        %v5003 = vunpack.c.l.s4 1934713408
        %v5004 = vunpack.c.0.s8 %v5003
        %v5005 = vperm.slane %v4999, %v5004
        %v5007 = vunpack.c.l.s4 1934713408
        %v5008 = vunpack.c.0.s8 %v5007
        %v5009 = vperm.slane %v5001, %v5008
        %v5010 = vrot.slane %v5005, 4
        %v5011 = vsel %vm881, %v5010, %v4993
        %v5012 = vrot.slane %v4993, 4
        %v5013 = vsel %vm881, %v5005, %v5012
        %v5014 = vrot.slane %v5009, 4
        %v5015 = vsel %vm881, %v5014, %v4997
        %v5016 = vrot.slane %v4997, 4
        %v5017 = vsel %vm881, %v5009, %v5016
        %v5018 = vsel %vm881, %v4848, %v4829
        %v5020 = vunpack.c.l.s4 1983009808
        %v5021 = vunpack.c.0.s8 %v5020
        %v5022 = vperm.slane %v5018, %v5021
        %v5023 = vrot.slane %v4849, 4
        %v5024 = vsel %vm881, %v5023, %v4847
        %v5026 = vunpack.c.l.s4 1983009808
        %v5027 = vunpack.c.0.s8 %v5026
        %v5028 = vperm.slane %v5024, %v5027
        %v5029 = vsel %vm881, %v4852, %v4841
        %v5031 = vunpack.c.l.s4 1983009808
        %v5032 = vunpack.c.0.s8 %v5031
        %v5033 = vperm.slane %v5029, %v5032
        %v5034 = vrot.slane %v4853, 4
        %v5035 = vsel %vm881, %v5034, %v4851
        %v5037 = vunpack.c.l.s4 1983009808
        %v5038 = vunpack.c.0.s8 %v5037
        %v5039 = vperm.slane %v5035, %v5038
        %v5040 = vrot.slane %v5028, 4
        %v5041 = vsel %vm881, %v5040, %v5022
        %v5042 = vrot.slane %v5022, 4
        %v5043 = vsel %vm881, %v5028, %v5042
        %v5045 = vunpack.c.l.s4 1934713408
        %v5046 = vunpack.c.0.s8 %v5045
        %v5047 = vperm.slane %v5041, %v5046
        %v5049 = vunpack.c.l.s4 1934713408
        %v5050 = vunpack.c.0.s8 %v5049
        %v5051 = vperm.slane %v5043, %v5050
        %v5052 = vrot.slane %v5039, 4
        %v5053 = vsel %vm881, %v5052, %v5033
        %v5054 = vrot.slane %v5033, 4
        %v5055 = vsel %vm881, %v5039, %v5054
        %v5057 = vunpack.c.l.s4 1934713408
        %v5058 = vunpack.c.0.s8 %v5057
        %v5059 = vperm.slane %v5053, %v5058
        %v5061 = vunpack.c.l.s4 1934713408
        %v5062 = vunpack.c.0.s8 %v5061
        %v5063 = vperm.slane %v5055, %v5062
        %v5064 = vrot.slane %v5059, 4
        %v5065 = vsel %vm881, %v5064, %v5047
        %v5066 = vrot.slane %v5047, 4
        %v5067 = vsel %vm881, %v5059, %v5066
        %v5068 = vrot.slane %v5063, 4
        %v5069 = vsel %vm881, %v5068, %v5051
        %v5070 = vrot.slane %v5051, 4
        %v5071 = vsel %vm881, %v5063, %v5070
        %v5072 = vsel %vm881, %v4904, %v4885
        %v5074 = vunpack.c.l.s4 1983009808
        %v5075 = vunpack.c.0.s8 %v5074
        %v5076 = vperm.slane %v5072, %v5075
        %v5077 = vrot.slane %v4905, 4
        %v5078 = vsel %vm881, %v5077, %v4903
        %v5080 = vunpack.c.l.s4 1983009808
        %v5081 = vunpack.c.0.s8 %v5080
        %v5082 = vperm.slane %v5078, %v5081
        %v5083 = vsel %vm881, %v4908, %v4897
        %v5085 = vunpack.c.l.s4 1983009808
        %v5086 = vunpack.c.0.s8 %v5085
        %v5087 = vperm.slane %v5083, %v5086
        %v5088 = vrot.slane %v4909, 4
        %v5089 = vsel %vm881, %v5088, %v4907
        %v5091 = vunpack.c.l.s4 1983009808
        %v5092 = vunpack.c.0.s8 %v5091
        %v5093 = vperm.slane %v5089, %v5092
        %v5094 = vrot.slane %v5082, 4
        %v5095 = vsel %vm881, %v5094, %v5076
        %v5096 = vrot.slane %v5076, 4
        %v5097 = vsel %vm881, %v5082, %v5096
        %v5099 = vunpack.c.l.s4 1934713408
        %v5100 = vunpack.c.0.s8 %v5099
        %v5101 = vperm.slane %v5095, %v5100
        %v5103 = vunpack.c.l.s4 1934713408
        %v5104 = vunpack.c.0.s8 %v5103
        %v5105 = vperm.slane %v5097, %v5104
        %v5106 = vrot.slane %v5093, 4
        %v5107 = vsel %vm881, %v5106, %v5087
        %v5108 = vrot.slane %v5087, 4
        %v5109 = vsel %vm881, %v5093, %v5108
        %v5111 = vunpack.c.l.s4 1934713408
        %v5112 = vunpack.c.0.s8 %v5111
        %v5113 = vperm.slane %v5107, %v5112
        %v5115 = vunpack.c.l.s4 1934713408
        %v5116 = vunpack.c.0.s8 %v5115
        %v5117 = vperm.slane %v5109, %v5116
        %v5118 = vrot.slane %v5113, 4
        %v5119 = vsel %vm881, %v5118, %v5101
        %v5120 = vrot.slane %v5101, 4
        %v5121 = vsel %vm881, %v5113, %v5120
        %v5122 = vrot.slane %v5117, 4
        %v5123 = vsel %vm881, %v5122, %v5105
        %v5124 = vrot.slane %v5105, 4
        %v5125 = vsel %vm881, %v5117, %v5124
        %v5126 = vpack.c.bf16 %v4957, %v4957
        %v5127 = vpack.c.bf16 %v5011, %v5011
        %v5128 = vpack.c.bf16 %v4959, %v4959
        %v5129 = vpack.c.bf16 %v5013, %v5013
        %v5130 = vpack.c.bf16 %v4961, %v4961
        %v5131 = vpack.c.bf16 %v5015, %v5015
        %v5132 = vpack.c.bf16 %v4963, %v4963
        %v5133 = vpack.c.bf16 %v5017, %v5017
        %v5134 = vpack.c.bf16 %v5065, %v5065
        %v5135 = vpack.c.bf16 %v5119, %v5119
        %v5136 = vpack.c.bf16 %v5067, %v5067
        %v5137 = vpack.c.bf16 %v5121, %v5121
        %v5138 = vpack.c.bf16 %v5069, %v5069
        %v5139 = vpack.c.bf16 %v5123, %v5123
        %v5140 = vpack.c.bf16 %v5071, %v5071
        %v5141 = vpack.c.bf16 %v5125, %v5125
        %5146 = vrot.lane.b32.xlu0 %v4125, 96
        %v5147 = vpop.permute.xlu0 %5146
        %5148 = vrot.lane.b32.xlu0 %v4127, 96
        %v5149 = vpop.permute.xlu0 %5148
        %5150 = vrot.lane.b32.xlu0 %v4130, 96
        %v5151 = vpop.permute.xlu0 %5150
        %5152 = vrot.lane.b32.xlu0 %v4132, 96
        %v5153 = vpop.permute.xlu0 %5152
        %5158 = vrot.lane.b32.xlu0 %v4125, 64
        %v5159 = vpop.permute.xlu0 %5158
        %5160 = vrot.lane.b32.xlu0 %v4127, 64
        %v5161 = vpop.permute.xlu0 %5160
        %5162 = vrot.lane.b32.xlu0 %v4130, 64
        %v5163 = vpop.permute.xlu0 %5162
        %5164 = vrot.lane.b32.xlu0 %v4132, 64
        %v5165 = vpop.permute.xlu0 %5164
        %5170 = vrot.lane.b32.xlu0 %v4125, 32
        %v5171 = vpop.permute.xlu0 %5170
        %5172 = vrot.lane.b32.xlu0 %v4127, 32
        %v5173 = vpop.permute.xlu0 %5172
        %5174 = vrot.lane.b32.xlu0 %v4130, 32
        %v5175 = vpop.permute.xlu0 %5174
        %5176 = vrot.lane.b32.xlu0 %v4132, 32
        %v5177 = vpop.permute.xlu0 %5176
        %v5182 = vrot.slane %v5159, 4
        %v5183 = vsel %vm881, %v5182, %v4125
        %v5184 = vrot.slane %v4125, 4
        %v5185 = vsel %vm881, %v5159, %v5184
        %v5187 = vunpack.c.l.s4 1983009808
        %v5188 = vunpack.c.0.s8 %v5187
        %v5189 = vperm.slane %v5183, %v5188
        %v5191 = vunpack.c.l.s4 1983009808
        %v5192 = vunpack.c.0.s8 %v5191
        %v5193 = vperm.slane %v5185, %v5192
        %v5194 = vrot.slane %v5171, 4
        %v5195 = vsel %vm881, %v5194, %v5147
        %v5196 = vrot.slane %v5147, 4
        %v5197 = vsel %vm881, %v5171, %v5196
        %v5199 = vunpack.c.l.s4 1983009808
        %v5200 = vunpack.c.0.s8 %v5199
        %v5201 = vperm.slane %v5195, %v5200
        %v5203 = vunpack.c.l.s4 1983009808
        %v5204 = vunpack.c.0.s8 %v5203
        %v5205 = vperm.slane %v5197, %v5204
        %v5206 = vrot.slane %v5201, 4
        %v5207 = vsel %vm881, %v5206, %v5189
        %v5208 = vrot.slane %v5189, 4
        %v5209 = vsel %vm881, %v5201, %v5208
        %v5211 = vunpack.c.l.s4 1934713408
        %v5212 = vunpack.c.0.s8 %v5211
        %v5213 = vperm.slane %v5207, %v5212
        %v5215 = vunpack.c.l.s4 1934713408
        %v5216 = vunpack.c.0.s8 %v5215
        %v5217 = vperm.slane %v5209, %v5216
        %v5218 = vrot.slane %v5205, 4
        %v5219 = vsel %vm881, %v5218, %v5193
        %v5220 = vrot.slane %v5193, 4
        %v5221 = vsel %vm881, %v5205, %v5220
        %v5223 = vunpack.c.l.s4 1934713408
        %v5224 = vunpack.c.0.s8 %v5223
        %v5225 = vperm.slane %v5219, %v5224
        %v5227 = vunpack.c.l.s4 1934713408
        %v5228 = vunpack.c.0.s8 %v5227
        %v5229 = vperm.slane %v5221, %v5228
        %v5230 = vrot.slane %v5213, 4
        %v5231 = vsel %vm881, 0.0, %v5230
        %v5232 = vrot.slane %v5217, 4
        %v5233 = vsel %vm881, 0.0, %v5232
        %v5234 = vrot.slane %v5225, 4
        %v5235 = vsel %vm881, 0.0, %v5234
        %v5236 = vrot.slane %v5229, 4
        %v5237 = vsel %vm881, 0.0, %v5236
        %v5238 = vrot.slane %v5161, 4
        %v5239 = vsel %vm881, %v5238, %v4127
        %v5240 = vrot.slane %v4127, 4
        %v5241 = vsel %vm881, %v5161, %v5240
        %v5243 = vunpack.c.l.s4 1983009808
        %v5244 = vunpack.c.0.s8 %v5243
        %v5245 = vperm.slane %v5239, %v5244
        %v5247 = vunpack.c.l.s4 1983009808
        %v5248 = vunpack.c.0.s8 %v5247
        %v5249 = vperm.slane %v5241, %v5248
        %v5250 = vrot.slane %v5173, 4
        %v5251 = vsel %vm881, %v5250, %v5149
        %v5252 = vrot.slane %v5149, 4
        %v5253 = vsel %vm881, %v5173, %v5252
        %v5255 = vunpack.c.l.s4 1983009808
        %v5256 = vunpack.c.0.s8 %v5255
        %v5257 = vperm.slane %v5251, %v5256
        %v5259 = vunpack.c.l.s4 1983009808
        %v5260 = vunpack.c.0.s8 %v5259
        %v5261 = vperm.slane %v5253, %v5260
        %v5262 = vrot.slane %v5257, 4
        %v5263 = vsel %vm881, %v5262, %v5245
        %v5264 = vrot.slane %v5245, 4
        %v5265 = vsel %vm881, %v5257, %v5264
        %v5267 = vunpack.c.l.s4 1934713408
        %v5268 = vunpack.c.0.s8 %v5267
        %v5269 = vperm.slane %v5263, %v5268
        %v5271 = vunpack.c.l.s4 1934713408
        %v5272 = vunpack.c.0.s8 %v5271
        %v5273 = vperm.slane %v5265, %v5272
        %v5274 = vrot.slane %v5261, 4
        %v5275 = vsel %vm881, %v5274, %v5249
        %v5276 = vrot.slane %v5249, 4
        %v5277 = vsel %vm881, %v5261, %v5276
        %v5279 = vunpack.c.l.s4 1934713408
        %v5280 = vunpack.c.0.s8 %v5279
        %v5281 = vperm.slane %v5275, %v5280
        %v5283 = vunpack.c.l.s4 1934713408
        %v5284 = vunpack.c.0.s8 %v5283
        %v5285 = vperm.slane %v5277, %v5284
        %v5286 = vrot.slane %v5269, 4
        %v5287 = vsel %vm881, 0.0, %v5286
        %v5288 = vrot.slane %v5273, 4
        %v5289 = vsel %vm881, 0.0, %v5288
        %v5290 = vrot.slane %v5281, 4
        %v5291 = vsel %vm881, 0.0, %v5290
        %v5292 = vrot.slane %v5285, 4
        %v5293 = vsel %vm881, 0.0, %v5292
        %v5294 = vrot.slane %v5163, 4
        %v5295 = vsel %vm881, %v5294, %v4130
        %v5296 = vrot.slane %v4130, 4
        %v5297 = vsel %vm881, %v5163, %v5296
        %v5299 = vunpack.c.l.s4 1983009808
        %v5300 = vunpack.c.0.s8 %v5299
        %v5301 = vperm.slane %v5295, %v5300
        %v5303 = vunpack.c.l.s4 1983009808
        %v5304 = vunpack.c.0.s8 %v5303
        %v5305 = vperm.slane %v5297, %v5304
        %v5306 = vrot.slane %v5175, 4
        %v5307 = vsel %vm881, %v5306, %v5151
        %v5308 = vrot.slane %v5151, 4
        %v5309 = vsel %vm881, %v5175, %v5308
        %v5311 = vunpack.c.l.s4 1983009808
        %v5312 = vunpack.c.0.s8 %v5311
        %v5313 = vperm.slane %v5307, %v5312
        %v5315 = vunpack.c.l.s4 1983009808
        %v5316 = vunpack.c.0.s8 %v5315
        %v5317 = vperm.slane %v5309, %v5316
        %v5318 = vrot.slane %v5313, 4
        %v5319 = vsel %vm881, %v5318, %v5301
        %v5320 = vrot.slane %v5301, 4
        %v5321 = vsel %vm881, %v5313, %v5320
        %v5323 = vunpack.c.l.s4 1934713408
        %v5324 = vunpack.c.0.s8 %v5323
        %v5325 = vperm.slane %v5319, %v5324
        %v5327 = vunpack.c.l.s4 1934713408
        %v5328 = vunpack.c.0.s8 %v5327
        %v5329 = vperm.slane %v5321, %v5328
        %v5330 = vrot.slane %v5317, 4
        %v5331 = vsel %vm881, %v5330, %v5305
        %v5332 = vrot.slane %v5305, 4
        %v5333 = vsel %vm881, %v5317, %v5332
        %v5335 = vunpack.c.l.s4 1934713408
        %v5336 = vunpack.c.0.s8 %v5335
        %v5337 = vperm.slane %v5331, %v5336
        %v5339 = vunpack.c.l.s4 1934713408
        %v5340 = vunpack.c.0.s8 %v5339
        %v5341 = vperm.slane %v5333, %v5340
        %v5342 = vrot.slane %v5325, 4
        %v5343 = vsel %vm881, 0.0, %v5342
        %v5344 = vrot.slane %v5329, 4
        %v5345 = vsel %vm881, 0.0, %v5344
        %v5346 = vrot.slane %v5337, 4
        %v5347 = vsel %vm881, 0.0, %v5346
        %v5348 = vrot.slane %v5341, 4
        %v5349 = vsel %vm881, 0.0, %v5348
        %v5350 = vrot.slane %v5165, 4
        %v5351 = vsel %vm881, %v5350, %v4132
        %v5352 = vrot.slane %v4132, 4
        %v5353 = vsel %vm881, %v5165, %v5352
        %v5355 = vunpack.c.l.s4 1983009808
        %v5356 = vunpack.c.0.s8 %v5355
        %v5357 = vperm.slane %v5351, %v5356
        %v5359 = vunpack.c.l.s4 1983009808
        %v5360 = vunpack.c.0.s8 %v5359
        %v5361 = vperm.slane %v5353, %v5360
        %v5362 = vrot.slane %v5177, 4
        %v5363 = vsel %vm881, %v5362, %v5153
        %v5364 = vrot.slane %v5153, 4
        %v5365 = vsel %vm881, %v5177, %v5364
        %v5367 = vunpack.c.l.s4 1983009808
        %v5368 = vunpack.c.0.s8 %v5367
        %v5369 = vperm.slane %v5363, %v5368
        %v5371 = vunpack.c.l.s4 1983009808
        %v5372 = vunpack.c.0.s8 %v5371
        %v5373 = vperm.slane %v5365, %v5372
        %v5374 = vrot.slane %v5369, 4
        %v5375 = vsel %vm881, %v5374, %v5357
        %v5376 = vrot.slane %v5357, 4
        %v5377 = vsel %vm881, %v5369, %v5376
        %v5379 = vunpack.c.l.s4 1934713408
        %v5380 = vunpack.c.0.s8 %v5379
        %v5381 = vperm.slane %v5375, %v5380
        %v5383 = vunpack.c.l.s4 1934713408
        %v5384 = vunpack.c.0.s8 %v5383
        %v5385 = vperm.slane %v5377, %v5384
        %v5386 = vrot.slane %v5373, 4
        %v5387 = vsel %vm881, %v5386, %v5361
        %v5388 = vrot.slane %v5361, 4
        %v5389 = vsel %vm881, %v5373, %v5388
        %v5391 = vunpack.c.l.s4 1934713408
        %v5392 = vunpack.c.0.s8 %v5391
        %v5393 = vperm.slane %v5387, %v5392
        %v5395 = vunpack.c.l.s4 1934713408
        %v5396 = vunpack.c.0.s8 %v5395
        %v5397 = vperm.slane %v5389, %v5396
        %v5398 = vrot.slane %v5381, 4
        %v5399 = vsel %vm881, 0.0, %v5398
        %v5400 = vrot.slane %v5385, 4
        %v5401 = vsel %vm881, 0.0, %v5400
        %v5402 = vrot.slane %v5393, 4
        %v5403 = vsel %vm881, 0.0, %v5402
        %v5404 = vrot.slane %v5397, 4
        %v5405 = vsel %vm881, 0.0, %v5404
        %v5406 = vsel %vm881, %v5232, %v5213
        %v5408 = vunpack.c.l.s4 1983009808
        %v5409 = vunpack.c.0.s8 %v5408
        %v5410 = vperm.slane %v5406, %v5409
        %v5411 = vrot.slane %v5233, 4
        %v5412 = vsel %vm881, %v5411, %v5231
        %v5414 = vunpack.c.l.s4 1983009808
        %v5415 = vunpack.c.0.s8 %v5414
        %v5416 = vperm.slane %v5412, %v5415
        %v5417 = vsel %vm881, %v5236, %v5225
        %v5419 = vunpack.c.l.s4 1983009808
        %v5420 = vunpack.c.0.s8 %v5419
        %v5421 = vperm.slane %v5417, %v5420
        %v5422 = vrot.slane %v5237, 4
        %v5423 = vsel %vm881, %v5422, %v5235
        %v5425 = vunpack.c.l.s4 1983009808
        %v5426 = vunpack.c.0.s8 %v5425
        %v5427 = vperm.slane %v5423, %v5426
        %v5428 = vrot.slane %v5416, 4
        %v5429 = vsel %vm881, %v5428, %v5410
        %v5430 = vrot.slane %v5410, 4
        %v5431 = vsel %vm881, %v5416, %v5430
        %v5433 = vunpack.c.l.s4 1934713408
        %v5434 = vunpack.c.0.s8 %v5433
        %v5435 = vperm.slane %v5429, %v5434
        %v5437 = vunpack.c.l.s4 1934713408
        %v5438 = vunpack.c.0.s8 %v5437
        %v5439 = vperm.slane %v5431, %v5438
        %v5440 = vrot.slane %v5427, 4
        %v5441 = vsel %vm881, %v5440, %v5421
        %v5442 = vrot.slane %v5421, 4
        %v5443 = vsel %vm881, %v5427, %v5442
        %v5445 = vunpack.c.l.s4 1934713408
        %v5446 = vunpack.c.0.s8 %v5445
        %v5447 = vperm.slane %v5441, %v5446
        %v5449 = vunpack.c.l.s4 1934713408
        %v5450 = vunpack.c.0.s8 %v5449
        %v5451 = vperm.slane %v5443, %v5450
        %v5452 = vrot.slane %v5447, 4
        %v5453 = vsel %vm881, %v5452, %v5435
        %v5454 = vrot.slane %v5435, 4
        %v5455 = vsel %vm881, %v5447, %v5454
        %v5456 = vrot.slane %v5451, 4
        %v5457 = vsel %vm881, %v5456, %v5439
        %v5458 = vrot.slane %v5439, 4
        %v5459 = vsel %vm881, %v5451, %v5458
        %v5460 = vsel %vm881, %v5288, %v5269
        %v5462 = vunpack.c.l.s4 1983009808
        %v5463 = vunpack.c.0.s8 %v5462
        %v5464 = vperm.slane %v5460, %v5463
        %v5465 = vrot.slane %v5289, 4
        %v5466 = vsel %vm881, %v5465, %v5287
        %v5468 = vunpack.c.l.s4 1983009808
        %v5469 = vunpack.c.0.s8 %v5468
        %v5470 = vperm.slane %v5466, %v5469
        %v5471 = vsel %vm881, %v5292, %v5281
        %v5473 = vunpack.c.l.s4 1983009808
        %v5474 = vunpack.c.0.s8 %v5473
        %v5475 = vperm.slane %v5471, %v5474
        %v5476 = vrot.slane %v5293, 4
        %v5477 = vsel %vm881, %v5476, %v5291
        %v5479 = vunpack.c.l.s4 1983009808
        %v5480 = vunpack.c.0.s8 %v5479
        %v5481 = vperm.slane %v5477, %v5480
        %v5482 = vrot.slane %v5470, 4
        %v5483 = vsel %vm881, %v5482, %v5464
        %v5484 = vrot.slane %v5464, 4
        %v5485 = vsel %vm881, %v5470, %v5484
        %v5487 = vunpack.c.l.s4 1934713408
        %v5488 = vunpack.c.0.s8 %v5487
        %v5489 = vperm.slane %v5483, %v5488
        %v5491 = vunpack.c.l.s4 1934713408
        %v5492 = vunpack.c.0.s8 %v5491
        %v5493 = vperm.slane %v5485, %v5492
        %v5494 = vrot.slane %v5481, 4
        %v5495 = vsel %vm881, %v5494, %v5475
        %v5496 = vrot.slane %v5475, 4
        %v5497 = vsel %vm881, %v5481, %v5496
        %v5499 = vunpack.c.l.s4 1934713408
        %v5500 = vunpack.c.0.s8 %v5499
        %v5501 = vperm.slane %v5495, %v5500
        %v5503 = vunpack.c.l.s4 1934713408
        %v5504 = vunpack.c.0.s8 %v5503
        %v5505 = vperm.slane %v5497, %v5504
        %v5506 = vrot.slane %v5501, 4
        %v5507 = vsel %vm881, %v5506, %v5489
        %v5508 = vrot.slane %v5489, 4
        %v5509 = vsel %vm881, %v5501, %v5508
        %v5510 = vrot.slane %v5505, 4
        %v5511 = vsel %vm881, %v5510, %v5493
        %v5512 = vrot.slane %v5493, 4
        %v5513 = vsel %vm881, %v5505, %v5512
        %v5514 = vsel %vm881, %v5344, %v5325
        %v5516 = vunpack.c.l.s4 1983009808
        %v5517 = vunpack.c.0.s8 %v5516
        %v5518 = vperm.slane %v5514, %v5517
        %v5519 = vrot.slane %v5345, 4
        %v5520 = vsel %vm881, %v5519, %v5343
        %v5522 = vunpack.c.l.s4 1983009808
        %v5523 = vunpack.c.0.s8 %v5522
        %v5524 = vperm.slane %v5520, %v5523
        %v5525 = vsel %vm881, %v5348, %v5337
        %v5527 = vunpack.c.l.s4 1983009808
        %v5528 = vunpack.c.0.s8 %v5527
        %v5529 = vperm.slane %v5525, %v5528
        %v5530 = vrot.slane %v5349, 4
        %v5531 = vsel %vm881, %v5530, %v5347
        %v5533 = vunpack.c.l.s4 1983009808
        %v5534 = vunpack.c.0.s8 %v5533
        %v5535 = vperm.slane %v5531, %v5534
        %v5536 = vrot.slane %v5524, 4
        %v5537 = vsel %vm881, %v5536, %v5518
        %v5538 = vrot.slane %v5518, 4
        %v5539 = vsel %vm881, %v5524, %v5538
        %v5541 = vunpack.c.l.s4 1934713408
        %v5542 = vunpack.c.0.s8 %v5541
        %v5543 = vperm.slane %v5537, %v5542
        %v5545 = vunpack.c.l.s4 1934713408
        %v5546 = vunpack.c.0.s8 %v5545
        %v5547 = vperm.slane %v5539, %v5546
        %v5548 = vrot.slane %v5535, 4
        %v5549 = vsel %vm881, %v5548, %v5529
        %v5550 = vrot.slane %v5529, 4
        %v5551 = vsel %vm881, %v5535, %v5550
        %v5553 = vunpack.c.l.s4 1934713408
        %v5554 = vunpack.c.0.s8 %v5553
        %v5555 = vperm.slane %v5549, %v5554
        %v5557 = vunpack.c.l.s4 1934713408
        %v5558 = vunpack.c.0.s8 %v5557
        %v5559 = vperm.slane %v5551, %v5558
        %v5560 = vrot.slane %v5555, 4
        %v5561 = vsel %vm881, %v5560, %v5543
        %v5562 = vrot.slane %v5543, 4
        %v5563 = vsel %vm881, %v5555, %v5562
        %v5564 = vrot.slane %v5559, 4
        %v5565 = vsel %vm881, %v5564, %v5547
        %v5566 = vrot.slane %v5547, 4
        %v5567 = vsel %vm881, %v5559, %v5566
        %v5568 = vsel %vm881, %v5400, %v5381
        %v5570 = vunpack.c.l.s4 1983009808
        %v5571 = vunpack.c.0.s8 %v5570
        %v5572 = vperm.slane %v5568, %v5571
        %v5573 = vrot.slane %v5401, 4
        %v5574 = vsel %vm881, %v5573, %v5399
        %v5576 = vunpack.c.l.s4 1983009808
        %v5577 = vunpack.c.0.s8 %v5576
        %v5578 = vperm.slane %v5574, %v5577
        %v5579 = vsel %vm881, %v5404, %v5393
        %v5581 = vunpack.c.l.s4 1983009808
        %v5582 = vunpack.c.0.s8 %v5581
        %v5583 = vperm.slane %v5579, %v5582
        %v5584 = vrot.slane %v5405, 4
        %v5585 = vsel %vm881, %v5584, %v5403
        %v5587 = vunpack.c.l.s4 1983009808
        %v5588 = vunpack.c.0.s8 %v5587
        %v5589 = vperm.slane %v5585, %v5588
        %v5590 = vrot.slane %v5578, 4
        %v5591 = vsel %vm881, %v5590, %v5572
        %v5592 = vrot.slane %v5572, 4
        %v5593 = vsel %vm881, %v5578, %v5592
        %v5595 = vunpack.c.l.s4 1934713408
        %v5596 = vunpack.c.0.s8 %v5595
        %v5597 = vperm.slane %v5591, %v5596
        %v5599 = vunpack.c.l.s4 1934713408
        %v5600 = vunpack.c.0.s8 %v5599
        %v5601 = vperm.slane %v5593, %v5600
        %v5602 = vrot.slane %v5589, 4
        %v5603 = vsel %vm881, %v5602, %v5583
        %v5604 = vrot.slane %v5583, 4
        %v5605 = vsel %vm881, %v5589, %v5604
        %v5607 = vunpack.c.l.s4 1934713408
        %v5608 = vunpack.c.0.s8 %v5607
        %v5609 = vperm.slane %v5603, %v5608
        %v5611 = vunpack.c.l.s4 1934713408
        %v5612 = vunpack.c.0.s8 %v5611
        %v5613 = vperm.slane %v5605, %v5612
        %v5614 = vrot.slane %v5609, 4
        %v5615 = vsel %vm881, %v5614, %v5597
        %v5616 = vrot.slane %v5597, 4
        %v5617 = vsel %vm881, %v5609, %v5616
        %v5618 = vrot.slane %v5613, 4
        %v5619 = vsel %vm881, %v5618, %v5601
        %v5620 = vrot.slane %v5601, 4
        %v5621 = vsel %vm881, %v5613, %v5620
        %v5622 = vpack.c.bf16 %v5453, %v5453
        %v5623 = vpack.c.bf16 %v5507, %v5507
        %v5624 = vpack.c.bf16 %v5455, %v5455
        %v5625 = vpack.c.bf16 %v5509, %v5509
        %v5626 = vpack.c.bf16 %v5457, %v5457
        %v5627 = vpack.c.bf16 %v5511, %v5511
        %v5628 = vpack.c.bf16 %v5459, %v5459
        %v5629 = vpack.c.bf16 %v5513, %v5513
        %v5630 = vpack.c.bf16 %v5561, %v5561
        %v5631 = vpack.c.bf16 %v5615, %v5615
        %v5632 = vpack.c.bf16 %v5563, %v5563
        %v5633 = vpack.c.bf16 %v5617, %v5617
        %v5634 = vpack.c.bf16 %v5565, %v5565
        %v5635 = vpack.c.bf16 %v5619, %v5619
        %v5636 = vpack.c.bf16 %v5567, %v5567
        %v5637 = vpack.c.bf16 %v5621, %v5621
        %v5640 = vunpack.c.l.b16 %v4630
        %v5641 = vunpack.c.l.b16 %v4631
        %v5642 = vpack.c.b16 %v5641, %v5640
        %v5645 = vunpack.c.l.b16 %v5126
        %v5646 = vunpack.c.l.b16 %v5127
        %v5647 = vpack.c.b16 %v5646, %v5645
        %v5649 = vsel %vm2339, %v5642, 0
        %v5652 = vsel %vm2339, %v5647, 0
        %5654 = vmatpush.bf16.xpose.msra.mxu0 0
        %5655 = vmatpush.bf16.xpose.msra.mxu0 0
        %5656 = vmatpush.bf16.xpose.msra.mxu0 0
        %5657 = vmatpush.bf16.xpose.msra.mxu0 0
        %5658 = vmatpush.bf16.xpose.msra.mxu0 0
        %5659 = vmatpush.bf16.xpose.msra.mxu0 0
        %5660 = vmatpush.bf16.xpose.msra.mxu0 0
        %5661 = vmatpush.bf16.xpose.msra.mxu0 %v5652
        %5662 = vmatmul.bf16.gmra.mxu0 %v5649
        %v5663 = vpop.f32.mrf.mxu0
        %v5664 = vadd.f32 0.0, %v5663
        %v5665 = vpop.f32.mrf.mxu0
        %v5666 = vadd.f32 0.0, %v5665
        %5667 = vdwg.mxu0
        %v5670 = vunpack.c.l.b16 %v4632
        %v5671 = vunpack.c.l.b16 %v4633
        %v5672 = vpack.c.b16 %v5671, %v5670
        %v5675 = vunpack.c.l.b16 %v5128
        %v5676 = vunpack.c.l.b16 %v5129
        %v5677 = vpack.c.b16 %v5676, %v5675
        %v5679 = vsel %vm2339, %v5672, 0
        %v5682 = vsel %vm2339, %v5677, 0
        %5684 = vmatpush.bf16.xpose.msra.mxu0 0
        %5685 = vmatpush.bf16.xpose.msra.mxu0 0
        %5686 = vmatpush.bf16.xpose.msra.mxu0 0
        %5687 = vmatpush.bf16.xpose.msra.mxu0 0
        %5688 = vmatpush.bf16.xpose.msra.mxu0 0
        %5689 = vmatpush.bf16.xpose.msra.mxu0 0
        %5690 = vmatpush.bf16.xpose.msra.mxu0 0
        %5691 = vmatpush.bf16.xpose.msra.mxu0 %v5682
        %5692 = vmatmul.bf16.gmra.mxu0 %v5679
        %v5693 = vpop.f32.mrf.mxu0
        %v5694 = vadd.f32 0.0, %v5693
        %v5695 = vpop.f32.mrf.mxu0
        %v5696 = vadd.f32 0.0, %v5695
        %5697 = vdwg.mxu0
        %v5700 = vunpack.c.l.b16 %v4634
        %v5701 = vunpack.c.l.b16 %v4635
        %v5702 = vpack.c.b16 %v5701, %v5700
        %v5705 = vunpack.c.l.b16 %v5130
        %v5706 = vunpack.c.l.b16 %v5131
        %v5707 = vpack.c.b16 %v5706, %v5705
        %v5709 = vsel %vm2339, %v5702, 0
        %v5712 = vsel %vm2339, %v5707, 0
        %5714 = vmatpush.bf16.xpose.msra.mxu0 0
        %5715 = vmatpush.bf16.xpose.msra.mxu0 0
        %5716 = vmatpush.bf16.xpose.msra.mxu0 0
        %5717 = vmatpush.bf16.xpose.msra.mxu0 0
        %5718 = vmatpush.bf16.xpose.msra.mxu0 0
        %5719 = vmatpush.bf16.xpose.msra.mxu0 0
        %5720 = vmatpush.bf16.xpose.msra.mxu0 0
        %5721 = vmatpush.bf16.xpose.msra.mxu0 %v5712
        %5722 = vmatmul.bf16.gmra.mxu0 %v5709
        %v5723 = vpop.f32.mrf.mxu0
        %v5724 = vadd.f32 0.0, %v5723
        %v5725 = vpop.f32.mrf.mxu0
        %v5726 = vadd.f32 0.0, %v5725
        %5727 = vdwg.mxu0
        %v5730 = vunpack.c.l.b16 %v4636
        %v5731 = vunpack.c.l.b16 %v4637
        %v5732 = vpack.c.b16 %v5731, %v5730
        %v5735 = vunpack.c.l.b16 %v5132
        %v5736 = vunpack.c.l.b16 %v5133
        %v5737 = vpack.c.b16 %v5736, %v5735
        %v5739 = vsel %vm2339, %v5732, 0
        %v5742 = vsel %vm2339, %v5737, 0
        %5744 = vmatpush.bf16.xpose.msra.mxu0 0
        %5745 = vmatpush.bf16.xpose.msra.mxu0 0
        %5746 = vmatpush.bf16.xpose.msra.mxu0 0
        %5747 = vmatpush.bf16.xpose.msra.mxu0 0
        %5748 = vmatpush.bf16.xpose.msra.mxu0 0
        %5749 = vmatpush.bf16.xpose.msra.mxu0 0
        %5750 = vmatpush.bf16.xpose.msra.mxu0 0
        %5751 = vmatpush.bf16.xpose.msra.mxu0 %v5742
        %5752 = vmatmul.bf16.gmra.mxu0 %v5739
        %v5753 = vpop.f32.mrf.mxu0
        %v5754 = vadd.f32 0.0, %v5753
        %v5755 = vpop.f32.mrf.mxu0
        %v5756 = vadd.f32 0.0, %v5755
        %5757 = vdwg.mxu0
        %v5760 = vunpack.c.l.b16 %v4638
        %v5761 = vunpack.c.l.b16 %v4639
        %v5762 = vpack.c.b16 %v5761, %v5760
        %v5765 = vunpack.c.l.b16 %v5134
        %v5766 = vunpack.c.l.b16 %v5135
        %v5767 = vpack.c.b16 %v5766, %v5765
        %v5769 = vsel %vm2339, %v5762, 0
        %v5772 = vsel %vm2339, %v5767, 0
        %5774 = vmatpush.bf16.xpose.msra.mxu0 0
        %5775 = vmatpush.bf16.xpose.msra.mxu0 0
        %5776 = vmatpush.bf16.xpose.msra.mxu0 0
        %5777 = vmatpush.bf16.xpose.msra.mxu0 0
        %5778 = vmatpush.bf16.xpose.msra.mxu0 0
        %5779 = vmatpush.bf16.xpose.msra.mxu0 0
        %5780 = vmatpush.bf16.xpose.msra.mxu0 0
        %5781 = vmatpush.bf16.xpose.msra.mxu0 %v5772
        %5782 = vmatmul.bf16.gmra.mxu0 %v5769
        %v5783 = vpop.f32.mrf.mxu0
        %v5784 = vadd.f32 0.0, %v5783
        %v5785 = vpop.f32.mrf.mxu0
        %v5786 = vadd.f32 0.0, %v5785
        %5787 = vdwg.mxu0
        %v5790 = vunpack.c.l.b16 %v4640
        %v5791 = vunpack.c.l.b16 %v4641
        %v5792 = vpack.c.b16 %v5791, %v5790
        %v5795 = vunpack.c.l.b16 %v5136
        %v5796 = vunpack.c.l.b16 %v5137
        %v5797 = vpack.c.b16 %v5796, %v5795
        %v5799 = vsel %vm2339, %v5792, 0
        %v5802 = vsel %vm2339, %v5797, 0
        %5804 = vmatpush.bf16.xpose.msra.mxu0 0
        %5805 = vmatpush.bf16.xpose.msra.mxu0 0
        %5806 = vmatpush.bf16.xpose.msra.mxu0 0
        %5807 = vmatpush.bf16.xpose.msra.mxu0 0
        %5808 = vmatpush.bf16.xpose.msra.mxu0 0
        %5809 = vmatpush.bf16.xpose.msra.mxu0 0
        %5810 = vmatpush.bf16.xpose.msra.mxu0 0
        %5811 = vmatpush.bf16.xpose.msra.mxu0 %v5802
        %5812 = vmatmul.bf16.gmra.mxu0 %v5799
        %v5813 = vpop.f32.mrf.mxu0
        %v5814 = vadd.f32 0.0, %v5813
        %v5815 = vpop.f32.mrf.mxu0
        %v5816 = vadd.f32 0.0, %v5815
        %5817 = vdwg.mxu0
        %v5820 = vunpack.c.l.b16 %v4642
        %v5821 = vunpack.c.l.b16 %v4643
        %v5822 = vpack.c.b16 %v5821, %v5820
        %v5825 = vunpack.c.l.b16 %v5138
        %v5826 = vunpack.c.l.b16 %v5139
        %v5827 = vpack.c.b16 %v5826, %v5825
        %v5829 = vsel %vm2339, %v5822, 0
        %v5832 = vsel %vm2339, %v5827, 0
        %5834 = vmatpush.bf16.xpose.msra.mxu0 0
        %5835 = vmatpush.bf16.xpose.msra.mxu0 0
        %5836 = vmatpush.bf16.xpose.msra.mxu0 0
        %5837 = vmatpush.bf16.xpose.msra.mxu0 0
        %5838 = vmatpush.bf16.xpose.msra.mxu0 0
        %5839 = vmatpush.bf16.xpose.msra.mxu0 0
        %5840 = vmatpush.bf16.xpose.msra.mxu0 0
        %5841 = vmatpush.bf16.xpose.msra.mxu0 %v5832
        %5842 = vmatmul.bf16.gmra.mxu0 %v5829
        %v5843 = vpop.f32.mrf.mxu0
        %v5844 = vadd.f32 0.0, %v5843
        %v5845 = vpop.f32.mrf.mxu0
        %v5846 = vadd.f32 0.0, %v5845
        %5847 = vdwg.mxu0
        %v5850 = vunpack.c.l.b16 %v4644
        %v5851 = vunpack.c.l.b16 %v4645
        %v5852 = vpack.c.b16 %v5851, %v5850
        %v5855 = vunpack.c.l.b16 %v5140
        %v5856 = vunpack.c.l.b16 %v5141
        %v5857 = vpack.c.b16 %v5856, %v5855
        %v5859 = vsel %vm2339, %v5852, 0
        %v5862 = vsel %vm2339, %v5857, 0
        %5864 = vmatpush.bf16.xpose.msra.mxu0 0
        %5865 = vmatpush.bf16.xpose.msra.mxu0 0
        %5866 = vmatpush.bf16.xpose.msra.mxu0 0
        %5867 = vmatpush.bf16.xpose.msra.mxu0 0
        %5868 = vmatpush.bf16.xpose.msra.mxu0 0
        %5869 = vmatpush.bf16.xpose.msra.mxu0 0
        %5870 = vmatpush.bf16.xpose.msra.mxu0 0
        %5871 = vmatpush.bf16.xpose.msra.mxu0 %v5862
        %5872 = vmatmul.bf16.gmra.mxu0 %v5859
        %v5873 = vpop.f32.mrf.mxu0
        %v5874 = vadd.f32 0.0, %v5873
        %v5875 = vpop.f32.mrf.mxu0
        %v5876 = vadd.f32 0.0, %v5875
        %5877 = vdwg.mxu0
        %v5878 = vmul.f32 %v5664, 0.17677669
        %v5879 = vmul.f32 %v5666, 0.17677669
        %v5880 = vmul.f32 %v5694, 0.17677669
        %v5881 = vmul.f32 %v5696, 0.17677669
        %v5882 = vmul.f32 %v5724, 0.17677669
        %v5883 = vmul.f32 %v5726, 0.17677669
        %v5884 = vmul.f32 %v5754, 0.17677669
        %v5885 = vmul.f32 %v5756, 0.17677669
        %v5886 = vmul.f32 %v5784, 0.17677669
        %v5887 = vmul.f32 %v5786, 0.17677669
        %v5888 = vmul.f32 %v5814, 0.17677669
        %v5889 = vmul.f32 %v5816, 0.17677669
        %v5890 = vmul.f32 %v5844, 0.17677669
        %v5891 = vmul.f32 %v5846, 0.17677669
        %v5892 = vmul.f32 %v5874, 0.17677669
        %v5893 = vmul.f32 %v5876, 0.17677669
        %v5894 = vadd.f32 %v5878, %v588
        %v5895 = vadd.f32 %v5879, %v589
        %v5896 = vadd.f32 %v5880, %v588
        %v5897 = vadd.f32 %v5881, %v589
        %v5898 = vadd.f32 %v5882, %v588
        %v5899 = vadd.f32 %v5883, %v589
        %v5900 = vadd.f32 %v5884, %v588
        %v5901 = vadd.f32 %v5885, %v589
        %v5902 = vadd.f32 %v5886, %v588
        %v5903 = vadd.f32 %v5887, %v589
        %v5904 = vadd.f32 %v5888, %v588
        %v5905 = vadd.f32 %v5889, %v589
        %v5906 = vadd.f32 %v5890, %v588
        %v5907 = vadd.f32 %v5891, %v589
        %v5908 = vadd.f32 %v5892, %v588
        %v5909 = vadd.f32 %v5893, %v589
        %v5910 = vsel %vm2602, %v5894, -inf
        %5911 = vmax.xlane.f32.xlu0 %v5910
        %v5912 = vpop.xlane.xlu0 %5911
        %v5913 = vsel %vm2602, %v5895, -inf
        %5914 = vmax.xlane.f32.xlu0 %v5913
        %v5915 = vpop.xlane.xlu0 %5914
        %v5916 = vsel %vm2602, %v5896, -inf
        %5917 = vmax.xlane.f32.xlu0 %v5916
        %v5918 = vpop.xlane.xlu0 %5917
        %v5919 = vsel %vm2602, %v5897, -inf
        %5920 = vmax.xlane.f32.xlu0 %v5919
        %v5921 = vpop.xlane.xlu0 %5920
        %v5922 = vsel %vm2602, %v5898, -inf
        %5923 = vmax.xlane.f32.xlu0 %v5922
        %v5924 = vpop.xlane.xlu0 %5923
        %v5925 = vsel %vm2602, %v5899, -inf
        %5926 = vmax.xlane.f32.xlu0 %v5925
        %v5927 = vpop.xlane.xlu0 %5926
        %v5928 = vsel %vm2602, %v5900, -inf
        %5929 = vmax.xlane.f32.xlu0 %v5928
        %v5930 = vpop.xlane.xlu0 %5929
        %v5931 = vsel %vm2602, %v5901, -inf
        %5932 = vmax.xlane.f32.xlu0 %v5931
        %v5933 = vpop.xlane.xlu0 %5932
        %v5934 = vsel %vm2602, %v5902, -inf
        %5935 = vmax.xlane.f32.xlu0 %v5934
        %v5936 = vpop.xlane.xlu0 %5935
        %v5937 = vsel %vm2602, %v5903, -inf
        %5938 = vmax.xlane.f32.xlu0 %v5937
        %v5939 = vpop.xlane.xlu0 %5938
        %v5940 = vsel %vm2602, %v5904, -inf
        %5941 = vmax.xlane.f32.xlu0 %v5940
        %v5942 = vpop.xlane.xlu0 %5941
        %v5943 = vsel %vm2602, %v5905, -inf
        %5944 = vmax.xlane.f32.xlu0 %v5943
        %v5945 = vpop.xlane.xlu0 %5944
        %v5946 = vsel %vm2602, %v5906, -inf
        %5947 = vmax.xlane.f32.xlu0 %v5946
        %v5948 = vpop.xlane.xlu0 %5947
        %v5949 = vsel %vm2602, %v5907, -inf
        %5950 = vmax.xlane.f32.xlu0 %v5949
        %v5951 = vpop.xlane.xlu0 %5950
        %v5952 = vsel %vm2602, %v5908, -inf
        %5953 = vmax.xlane.f32.xlu0 %v5952
        %v5954 = vpop.xlane.xlu0 %5953
        %v5955 = vsel %vm2602, %v5909, -inf
        %5956 = vmax.xlane.f32.xlu0 %v5955
        %v5957 = vpop.xlane.xlu0 %5956
        %v5958 = vsub.f32 %v5894, %v5912
        %v5959 = vsub.f32 %v5895, %v5915
        %v5960 = vsub.f32 %v5896, %v5918
        %v5961 = vsub.f32 %v5897, %v5921
        %v5962 = vsub.f32 %v5898, %v5924
        %v5963 = vsub.f32 %v5899, %v5927
        %v5964 = vsub.f32 %v5900, %v5930
        %v5965 = vsub.f32 %v5901, %v5933
        %v5966 = vsub.f32 %v5902, %v5936
        %v5967 = vsub.f32 %v5903, %v5939
        %v5968 = vsub.f32 %v5904, %v5942
        %v5969 = vsub.f32 %v5905, %v5945
        %v5970 = vsub.f32 %v5906, %v5948
        %v5971 = vsub.f32 %v5907, %v5951
        %v5972 = vsub.f32 %v5908, %v5954
        %v5973 = vsub.f32 %v5909, %v5957
        %v5974 = vmul.f32 %v5958, 1.442695
        %v5975 = vpow.pop %v5974
        %v5976 = vmul.f32 %v5959, 1.442695
        %v5977 = vpow.pop %v5976
        %v5978 = vmul.f32 %v5960, 1.442695
        %v5979 = vpow.pop %v5978
        %v5980 = vmul.f32 %v5961, 1.442695
        %v5981 = vpow.pop %v5980
        %v5982 = vmul.f32 %v5962, 1.442695
        %v5983 = vpow.pop %v5982
        %v5984 = vmul.f32 %v5963, 1.442695
        %v5985 = vpow.pop %v5984
        %v5986 = vmul.f32 %v5964, 1.442695
        %v5987 = vpow.pop %v5986
        %v5988 = vmul.f32 %v5965, 1.442695
        %v5989 = vpow.pop %v5988
        %v5990 = vmul.f32 %v5966, 1.442695
        %v5991 = vpow.pop %v5990
        %v5992 = vmul.f32 %v5967, 1.442695
        %v5993 = vpow.pop %v5992
        %v5994 = vmul.f32 %v5968, 1.442695
        %v5995 = vpow.pop %v5994
        %v5996 = vmul.f32 %v5969, 1.442695
        %v5997 = vpow.pop %v5996
        %v5998 = vmul.f32 %v5970, 1.442695
        %v5999 = vpow.pop %v5998
        %v6000 = vmul.f32 %v5971, 1.442695
        %v6001 = vpow.pop %v6000
        %v6002 = vmul.f32 %v5972, 1.442695
        %v6003 = vpow.pop %v6002
        %v6004 = vmul.f32 %v5973, 1.442695
        %v6005 = vpow.pop %v6004
        %v6006 = vsel %vm2602, %v5975, 0.0
        %6007 = vadd.xlane.f32.xlu0 %v6006
        %v6008 = vpop.xlane.xlu0 %6007
        %v6009 = vsel %vm2602, %v5977, 0.0
        %6010 = vadd.xlane.f32.xlu0 %v6009
        %v6011 = vpop.xlane.xlu0 %6010
        %v6012 = vsel %vm2602, %v5979, 0.0
        %6013 = vadd.xlane.f32.xlu0 %v6012
        %v6014 = vpop.xlane.xlu0 %6013
        %v6015 = vsel %vm2602, %v5981, 0.0
        %6016 = vadd.xlane.f32.xlu0 %v6015
        %v6017 = vpop.xlane.xlu0 %6016
        %v6018 = vsel %vm2602, %v5983, 0.0
        %6019 = vadd.xlane.f32.xlu0 %v6018
        %v6020 = vpop.xlane.xlu0 %6019
        %v6021 = vsel %vm2602, %v5985, 0.0
        %6022 = vadd.xlane.f32.xlu0 %v6021
        %v6023 = vpop.xlane.xlu0 %6022
        %v6024 = vsel %vm2602, %v5987, 0.0
        %6025 = vadd.xlane.f32.xlu0 %v6024
        %v6026 = vpop.xlane.xlu0 %6025
        %v6027 = vsel %vm2602, %v5989, 0.0
        %6028 = vadd.xlane.f32.xlu0 %v6027
        %v6029 = vpop.xlane.xlu0 %6028
        %v6030 = vsel %vm2602, %v5991, 0.0
        %6031 = vadd.xlane.f32.xlu0 %v6030
        %v6032 = vpop.xlane.xlu0 %6031
        %v6033 = vsel %vm2602, %v5993, 0.0
        %6034 = vadd.xlane.f32.xlu0 %v6033
        %v6035 = vpop.xlane.xlu0 %6034
        %v6036 = vsel %vm2602, %v5995, 0.0
        %6037 = vadd.xlane.f32.xlu0 %v6036
        %v6038 = vpop.xlane.xlu0 %6037
        %v6039 = vsel %vm2602, %v5997, 0.0
        %6040 = vadd.xlane.f32.xlu0 %v6039
        %v6041 = vpop.xlane.xlu0 %6040
        %v6042 = vsel %vm2602, %v5999, 0.0
        %6043 = vadd.xlane.f32.xlu0 %v6042
        %v6044 = vpop.xlane.xlu0 %6043
        %v6045 = vsel %vm2602, %v6001, 0.0
        %6046 = vadd.xlane.f32.xlu0 %v6045
        %v6047 = vpop.xlane.xlu0 %6046
        %v6048 = vsel %vm2602, %v6003, 0.0
        %6049 = vadd.xlane.f32.xlu0 %v6048
        %v6050 = vpop.xlane.xlu0 %6049
        %v6051 = vsel %vm2602, %v6005, 0.0
        %6052 = vadd.xlane.f32.xlu0 %v6051
        %v6053 = vpop.xlane.xlu0 %6052
        %v6054 = vrcp.pop %v6008
        %v6055 = vmul.f32 %v6008, %v6054
        %v6056 = vsub.f32 1.0, %v6055
        %v6057 = vmul.f32 %v6054, %v6056
        %v6058 = vadd.f32 %v6054, %v6057
        %vm6059 = vweird.f32 %v6008
        %vm6060 = vweird.f32 %v6054
        %vm6061 = vmor %vm6059, %vm6060
        %v6062 = vsel %vm6061, %v6054, %v6058
        %v6063 = vand.u32 2147483647, %v6008
        %vm6064 = vcmp.eq.f32.partialorder %v6063, 8.507059e+37
        %v6065 = vand.u32 %v6008, 2147483648
        %v6066 = vor.u32 1.1754944e-38, %v6065
        %v6067 = vsel %vm6064, %v6066, %v6062
        %v6068 = vmul.f32 %v5975, %v6067
        %v6069 = vrcp.pop %v6011
        %v6070 = vmul.f32 %v6011, %v6069
        %v6071 = vsub.f32 1.0, %v6070
        %v6072 = vmul.f32 %v6069, %v6071
        %v6073 = vadd.f32 %v6069, %v6072
        %vm6074 = vweird.f32 %v6011
        %vm6075 = vweird.f32 %v6069
        %vm6076 = vmor %vm6074, %vm6075
        %v6077 = vsel %vm6076, %v6069, %v6073
        %v6078 = vand.u32 2147483647, %v6011
        %vm6079 = vcmp.eq.f32.partialorder %v6078, 8.507059e+37
        %v6080 = vand.u32 %v6011, 2147483648
        %v6081 = vor.u32 1.1754944e-38, %v6080
        %v6082 = vsel %vm6079, %v6081, %v6077
        %v6083 = vmul.f32 %v5977, %v6082
        %v6084 = vrcp.pop %v6014
        %v6085 = vmul.f32 %v6014, %v6084
        %v6086 = vsub.f32 1.0, %v6085
        %v6087 = vmul.f32 %v6084, %v6086
        %v6088 = vadd.f32 %v6084, %v6087
        %vm6089 = vweird.f32 %v6014
        %vm6090 = vweird.f32 %v6084
        %vm6091 = vmor %vm6089, %vm6090
        %v6092 = vsel %vm6091, %v6084, %v6088
        %v6093 = vand.u32 2147483647, %v6014
        %vm6094 = vcmp.eq.f32.partialorder %v6093, 8.507059e+37
        %v6095 = vand.u32 %v6014, 2147483648
        %v6096 = vor.u32 1.1754944e-38, %v6095
        %v6097 = vsel %vm6094, %v6096, %v6092
        %v6098 = vmul.f32 %v5979, %v6097
        %v6099 = vrcp.pop %v6017
        %v6100 = vmul.f32 %v6017, %v6099
        %v6101 = vsub.f32 1.0, %v6100
        %v6102 = vmul.f32 %v6099, %v6101
        %v6103 = vadd.f32 %v6099, %v6102
        %vm6104 = vweird.f32 %v6017
        %vm6105 = vweird.f32 %v6099
        %vm6106 = vmor %vm6104, %vm6105
        %v6107 = vsel %vm6106, %v6099, %v6103
        %v6108 = vand.u32 2147483647, %v6017
        %vm6109 = vcmp.eq.f32.partialorder %v6108, 8.507059e+37
        %v6110 = vand.u32 %v6017, 2147483648
        %v6111 = vor.u32 1.1754944e-38, %v6110
        %v6112 = vsel %vm6109, %v6111, %v6107
        %v6113 = vmul.f32 %v5981, %v6112
        %v6114 = vrcp.pop %v6020
        %v6115 = vmul.f32 %v6020, %v6114
        %v6116 = vsub.f32 1.0, %v6115
        %v6117 = vmul.f32 %v6114, %v6116
        %v6118 = vadd.f32 %v6114, %v6117
        %vm6119 = vweird.f32 %v6020
        %vm6120 = vweird.f32 %v6114
        %vm6121 = vmor %vm6119, %vm6120
        %v6122 = vsel %vm6121, %v6114, %v6118
        %v6123 = vand.u32 2147483647, %v6020
        %vm6124 = vcmp.eq.f32.partialorder %v6123, 8.507059e+37
        %v6125 = vand.u32 %v6020, 2147483648
        %v6126 = vor.u32 1.1754944e-38, %v6125
        %v6127 = vsel %vm6124, %v6126, %v6122
        %v6128 = vmul.f32 %v5983, %v6127
        %v6129 = vrcp.pop %v6023
        %v6130 = vmul.f32 %v6023, %v6129
        %v6131 = vsub.f32 1.0, %v6130
        %v6132 = vmul.f32 %v6129, %v6131
        %v6133 = vadd.f32 %v6129, %v6132
        %vm6134 = vweird.f32 %v6023
        %vm6135 = vweird.f32 %v6129
        %vm6136 = vmor %vm6134, %vm6135
        %v6137 = vsel %vm6136, %v6129, %v6133
        %v6138 = vand.u32 2147483647, %v6023
        %vm6139 = vcmp.eq.f32.partialorder %v6138, 8.507059e+37
        %v6140 = vand.u32 %v6023, 2147483648
        %v6141 = vor.u32 1.1754944e-38, %v6140
        %v6142 = vsel %vm6139, %v6141, %v6137
        %v6143 = vmul.f32 %v5985, %v6142
        %v6144 = vrcp.pop %v6026
        %v6145 = vmul.f32 %v6026, %v6144
        %v6146 = vsub.f32 1.0, %v6145
        %v6147 = vmul.f32 %v6144, %v6146
        %v6148 = vadd.f32 %v6144, %v6147
        %vm6149 = vweird.f32 %v6026
        %vm6150 = vweird.f32 %v6144
        %vm6151 = vmor %vm6149, %vm6150
        %v6152 = vsel %vm6151, %v6144, %v6148
        %v6153 = vand.u32 2147483647, %v6026
        %vm6154 = vcmp.eq.f32.partialorder %v6153, 8.507059e+37
        %v6155 = vand.u32 %v6026, 2147483648
        %v6156 = vor.u32 1.1754944e-38, %v6155
        %v6157 = vsel %vm6154, %v6156, %v6152
        %v6158 = vmul.f32 %v5987, %v6157
        %v6159 = vrcp.pop %v6029
        %v6160 = vmul.f32 %v6029, %v6159
        %v6161 = vsub.f32 1.0, %v6160
        %v6162 = vmul.f32 %v6159, %v6161
        %v6163 = vadd.f32 %v6159, %v6162
        %vm6164 = vweird.f32 %v6029
        %vm6165 = vweird.f32 %v6159
        %vm6166 = vmor %vm6164, %vm6165
        %v6167 = vsel %vm6166, %v6159, %v6163
        %v6168 = vand.u32 2147483647, %v6029
        %vm6169 = vcmp.eq.f32.partialorder %v6168, 8.507059e+37
        %v6170 = vand.u32 %v6029, 2147483648
        %v6171 = vor.u32 1.1754944e-38, %v6170
        %v6172 = vsel %vm6169, %v6171, %v6167
        %v6173 = vmul.f32 %v5989, %v6172
        %v6174 = vrcp.pop %v6032
        %v6175 = vmul.f32 %v6032, %v6174
        %v6176 = vsub.f32 1.0, %v6175
        %v6177 = vmul.f32 %v6174, %v6176
        %v6178 = vadd.f32 %v6174, %v6177
        %vm6179 = vweird.f32 %v6032
        %vm6180 = vweird.f32 %v6174
        %vm6181 = vmor %vm6179, %vm6180
        %v6182 = vsel %vm6181, %v6174, %v6178
        %v6183 = vand.u32 2147483647, %v6032
        %vm6184 = vcmp.eq.f32.partialorder %v6183, 8.507059e+37
        %v6185 = vand.u32 %v6032, 2147483648
        %v6186 = vor.u32 1.1754944e-38, %v6185
        %v6187 = vsel %vm6184, %v6186, %v6182
        %v6188 = vmul.f32 %v5991, %v6187
        %v6189 = vrcp.pop %v6035
        %v6190 = vmul.f32 %v6035, %v6189
        %v6191 = vsub.f32 1.0, %v6190
        %v6192 = vmul.f32 %v6189, %v6191
        %v6193 = vadd.f32 %v6189, %v6192
        %vm6194 = vweird.f32 %v6035
        %vm6195 = vweird.f32 %v6189
        %vm6196 = vmor %vm6194, %vm6195
        %v6197 = vsel %vm6196, %v6189, %v6193
        %v6198 = vand.u32 2147483647, %v6035
        %vm6199 = vcmp.eq.f32.partialorder %v6198, 8.507059e+37
        %v6200 = vand.u32 %v6035, 2147483648
        %v6201 = vor.u32 1.1754944e-38, %v6200
        %v6202 = vsel %vm6199, %v6201, %v6197
        %v6203 = vmul.f32 %v5993, %v6202
        %v6204 = vrcp.pop %v6038
        %v6205 = vmul.f32 %v6038, %v6204
        %v6206 = vsub.f32 1.0, %v6205
        %v6207 = vmul.f32 %v6204, %v6206
        %v6208 = vadd.f32 %v6204, %v6207
        %vm6209 = vweird.f32 %v6038
        %vm6210 = vweird.f32 %v6204
        %vm6211 = vmor %vm6209, %vm6210
        %v6212 = vsel %vm6211, %v6204, %v6208
        %v6213 = vand.u32 2147483647, %v6038
        %vm6214 = vcmp.eq.f32.partialorder %v6213, 8.507059e+37
        %v6215 = vand.u32 %v6038, 2147483648
        %v6216 = vor.u32 1.1754944e-38, %v6215
        %v6217 = vsel %vm6214, %v6216, %v6212
        %v6218 = vmul.f32 %v5995, %v6217
        %v6219 = vrcp.pop %v6041
        %v6220 = vmul.f32 %v6041, %v6219
        %v6221 = vsub.f32 1.0, %v6220
        %v6222 = vmul.f32 %v6219, %v6221
        %v6223 = vadd.f32 %v6219, %v6222
        %vm6224 = vweird.f32 %v6041
        %vm6225 = vweird.f32 %v6219
        %vm6226 = vmor %vm6224, %vm6225
        %v6227 = vsel %vm6226, %v6219, %v6223
        %v6228 = vand.u32 2147483647, %v6041
        %vm6229 = vcmp.eq.f32.partialorder %v6228, 8.507059e+37
        %v6230 = vand.u32 %v6041, 2147483648
        %v6231 = vor.u32 1.1754944e-38, %v6230
        %v6232 = vsel %vm6229, %v6231, %v6227
        %v6233 = vmul.f32 %v5997, %v6232
        %v6234 = vrcp.pop %v6044
        %v6235 = vmul.f32 %v6044, %v6234
        %v6236 = vsub.f32 1.0, %v6235
        %v6237 = vmul.f32 %v6234, %v6236
        %v6238 = vadd.f32 %v6234, %v6237
        %vm6239 = vweird.f32 %v6044
        %vm6240 = vweird.f32 %v6234
        %vm6241 = vmor %vm6239, %vm6240
        %v6242 = vsel %vm6241, %v6234, %v6238
        %v6243 = vand.u32 2147483647, %v6044
        %vm6244 = vcmp.eq.f32.partialorder %v6243, 8.507059e+37
        %v6245 = vand.u32 %v6044, 2147483648
        %v6246 = vor.u32 1.1754944e-38, %v6245
        %v6247 = vsel %vm6244, %v6246, %v6242
        %v6248 = vmul.f32 %v5999, %v6247
        %v6249 = vrcp.pop %v6047
        %v6250 = vmul.f32 %v6047, %v6249
        %v6251 = vsub.f32 1.0, %v6250
        %v6252 = vmul.f32 %v6249, %v6251
        %v6253 = vadd.f32 %v6249, %v6252
        %vm6254 = vweird.f32 %v6047
        %vm6255 = vweird.f32 %v6249
        %vm6256 = vmor %vm6254, %vm6255
        %v6257 = vsel %vm6256, %v6249, %v6253
        %v6258 = vand.u32 2147483647, %v6047
        %vm6259 = vcmp.eq.f32.partialorder %v6258, 8.507059e+37
        %v6260 = vand.u32 %v6047, 2147483648
        %v6261 = vor.u32 1.1754944e-38, %v6260
        %v6262 = vsel %vm6259, %v6261, %v6257
        %v6263 = vmul.f32 %v6001, %v6262
        %v6264 = vrcp.pop %v6050
        %v6265 = vmul.f32 %v6050, %v6264
        %v6266 = vsub.f32 1.0, %v6265
        %v6267 = vmul.f32 %v6264, %v6266
        %v6268 = vadd.f32 %v6264, %v6267
        %vm6269 = vweird.f32 %v6050
        %vm6270 = vweird.f32 %v6264
        %vm6271 = vmor %vm6269, %vm6270
        %v6272 = vsel %vm6271, %v6264, %v6268
        %v6273 = vand.u32 2147483647, %v6050
        %vm6274 = vcmp.eq.f32.partialorder %v6273, 8.507059e+37
        %v6275 = vand.u32 %v6050, 2147483648
        %v6276 = vor.u32 1.1754944e-38, %v6275
        %v6277 = vsel %vm6274, %v6276, %v6272
        %v6278 = vmul.f32 %v6003, %v6277
        %v6279 = vrcp.pop %v6053
        %v6280 = vmul.f32 %v6053, %v6279
        %v6281 = vsub.f32 1.0, %v6280
        %v6282 = vmul.f32 %v6279, %v6281
        %v6283 = vadd.f32 %v6279, %v6282
        %vm6284 = vweird.f32 %v6053
        %vm6285 = vweird.f32 %v6279
        %vm6286 = vmor %vm6284, %vm6285
        %v6287 = vsel %vm6286, %v6279, %v6283
        %v6288 = vand.u32 2147483647, %v6053
        %vm6289 = vcmp.eq.f32.partialorder %v6288, 8.507059e+37
        %v6290 = vand.u32 %v6053, 2147483648
        %v6291 = vor.u32 1.1754944e-38, %v6290
        %v6292 = vsel %vm6289, %v6291, %v6287
        %v6293 = vmul.f32 %v6005, %v6292
        %v6294 = vpack.c.bf16 %v6068, %v6068
        %v6295 = vpack.c.bf16 %v6083, %v6083
        %v6296 = vpack.c.bf16 %v6098, %v6098
        %v6297 = vpack.c.bf16 %v6113, %v6113
        %v6298 = vpack.c.bf16 %v6128, %v6128
        %v6299 = vpack.c.bf16 %v6143, %v6143
        %v6300 = vpack.c.bf16 %v6158, %v6158
        %v6301 = vpack.c.bf16 %v6173, %v6173
        %v6302 = vpack.c.bf16 %v6188, %v6188
        %v6303 = vpack.c.bf16 %v6203, %v6203
        %v6304 = vpack.c.bf16 %v6218, %v6218
        %v6305 = vpack.c.bf16 %v6233, %v6233
        %v6306 = vpack.c.bf16 %v6248, %v6248
        %v6307 = vpack.c.bf16 %v6263, %v6263
        %v6308 = vpack.c.bf16 %v6278, %v6278
        %v6309 = vpack.c.bf16 %v6293, %v6293
        %v6312 = vunpack.c.l.b16 %v6294
        %v6313 = vunpack.c.l.b16 %v6295
        %v6314 = vpack.c.b16 %v6313, %v6312
        %v6317 = vunpack.c.l.b16 %v5622
        %v6318 = vunpack.c.l.b16 %v5623
        %v6319 = vpack.c.b16 %v6318, %v6317
        %v6322 = vsel %vm2602, %v6314, 0
        %6324 = vmatpush.bf16.msra.mxu0 0
        %6325 = vmatpush.bf16.msra.mxu0 0
        %6326 = vmatpush.bf16.msra.mxu0 0
        %6327 = vmatpush.bf16.msra.mxu0 0
        %6328 = vmatpush.bf16.msra.mxu0 0
        %6329 = vmatpush.bf16.msra.mxu0 0
        %6330 = vmatpush.bf16.msra.mxu0 0
        %6331 = vmatpush.bf16.msra.mxu0 %v6319
        %6332 = vmatmul.bf16.gmra.mxu0 %v6322
        %v6333 = vpop.f32.mrf.mxu0
        %v6334 = vadd.f32 0.0, %v6333
        %v6335 = vpop.f32.mrf.mxu0
        %v6336 = vadd.f32 0.0, %v6335
        %6337 = vdwg.mxu0
        %v6340 = vunpack.c.l.b16 %v6296
        %v6341 = vunpack.c.l.b16 %v6297
        %v6342 = vpack.c.b16 %v6341, %v6340
        %v6345 = vunpack.c.l.b16 %v5624
        %v6346 = vunpack.c.l.b16 %v5625
        %v6347 = vpack.c.b16 %v6346, %v6345
        %v6350 = vsel %vm2602, %v6342, 0
        %6352 = vmatpush.bf16.msra.mxu0 0
        %6353 = vmatpush.bf16.msra.mxu0 0
        %6354 = vmatpush.bf16.msra.mxu0 0
        %6355 = vmatpush.bf16.msra.mxu0 0
        %6356 = vmatpush.bf16.msra.mxu0 0
        %6357 = vmatpush.bf16.msra.mxu0 0
        %6358 = vmatpush.bf16.msra.mxu0 0
        %6359 = vmatpush.bf16.msra.mxu0 %v6347
        %6360 = vmatmul.bf16.gmra.mxu0 %v6350
        %v6361 = vpop.f32.mrf.mxu0
        %v6362 = vadd.f32 0.0, %v6361
        %v6363 = vpop.f32.mrf.mxu0
        %v6364 = vadd.f32 0.0, %v6363
        %6365 = vdwg.mxu0
        %v6368 = vunpack.c.l.b16 %v6298
        %v6369 = vunpack.c.l.b16 %v6299
        %v6370 = vpack.c.b16 %v6369, %v6368
        %v6373 = vunpack.c.l.b16 %v5626
        %v6374 = vunpack.c.l.b16 %v5627
        %v6375 = vpack.c.b16 %v6374, %v6373
        %v6378 = vsel %vm2602, %v6370, 0
        %6380 = vmatpush.bf16.msra.mxu0 0
        %6381 = vmatpush.bf16.msra.mxu0 0
        %6382 = vmatpush.bf16.msra.mxu0 0
        %6383 = vmatpush.bf16.msra.mxu0 0
        %6384 = vmatpush.bf16.msra.mxu0 0
        %6385 = vmatpush.bf16.msra.mxu0 0
        %6386 = vmatpush.bf16.msra.mxu0 0
        %6387 = vmatpush.bf16.msra.mxu0 %v6375
        %6388 = vmatmul.bf16.gmra.mxu0 %v6378
        %v6389 = vpop.f32.mrf.mxu0
        %v6390 = vadd.f32 0.0, %v6389
        %v6391 = vpop.f32.mrf.mxu0
        %v6392 = vadd.f32 0.0, %v6391
        %6393 = vdwg.mxu0
        %v6396 = vunpack.c.l.b16 %v6300
        %v6397 = vunpack.c.l.b16 %v6301
        %v6398 = vpack.c.b16 %v6397, %v6396
        %v6401 = vunpack.c.l.b16 %v5628
        %v6402 = vunpack.c.l.b16 %v5629
        %v6403 = vpack.c.b16 %v6402, %v6401
        %v6406 = vsel %vm2602, %v6398, 0
        %6408 = vmatpush.bf16.msra.mxu0 0
        %6409 = vmatpush.bf16.msra.mxu0 0
        %6410 = vmatpush.bf16.msra.mxu0 0
        %6411 = vmatpush.bf16.msra.mxu0 0
        %6412 = vmatpush.bf16.msra.mxu0 0
        %6413 = vmatpush.bf16.msra.mxu0 0
        %6414 = vmatpush.bf16.msra.mxu0 0
        %6415 = vmatpush.bf16.msra.mxu0 %v6403
        %6416 = vmatmul.bf16.gmra.mxu0 %v6406
        %v6417 = vpop.f32.mrf.mxu0
        %v6418 = vadd.f32 0.0, %v6417
        %v6419 = vpop.f32.mrf.mxu0
        %v6420 = vadd.f32 0.0, %v6419
        %6421 = vdwg.mxu0
        %v6424 = vunpack.c.l.b16 %v6302
        %v6425 = vunpack.c.l.b16 %v6303
        %v6426 = vpack.c.b16 %v6425, %v6424
        %v6429 = vunpack.c.l.b16 %v5630
        %v6430 = vunpack.c.l.b16 %v5631
        %v6431 = vpack.c.b16 %v6430, %v6429
        %v6434 = vsel %vm2602, %v6426, 0
        %6436 = vmatpush.bf16.msra.mxu0 0
        %6437 = vmatpush.bf16.msra.mxu0 0
        %6438 = vmatpush.bf16.msra.mxu0 0
        %6439 = vmatpush.bf16.msra.mxu0 0
        %6440 = vmatpush.bf16.msra.mxu0 0
        %6441 = vmatpush.bf16.msra.mxu0 0
        %6442 = vmatpush.bf16.msra.mxu0 0
        %6443 = vmatpush.bf16.msra.mxu0 %v6431
        %6444 = vmatmul.bf16.gmra.mxu0 %v6434
        %v6445 = vpop.f32.mrf.mxu0
        %v6446 = vadd.f32 0.0, %v6445
        %v6447 = vpop.f32.mrf.mxu0
        %v6448 = vadd.f32 0.0, %v6447
        %6449 = vdwg.mxu0
        %v6452 = vunpack.c.l.b16 %v6304
        %v6453 = vunpack.c.l.b16 %v6305
        %v6454 = vpack.c.b16 %v6453, %v6452
        %v6457 = vunpack.c.l.b16 %v5632
        %v6458 = vunpack.c.l.b16 %v5633
        %v6459 = vpack.c.b16 %v6458, %v6457
        %v6462 = vsel %vm2602, %v6454, 0
        %6464 = vmatpush.bf16.msra.mxu0 0
        %6465 = vmatpush.bf16.msra.mxu0 0
        %6466 = vmatpush.bf16.msra.mxu0 0
        %6467 = vmatpush.bf16.msra.mxu0 0
        %6468 = vmatpush.bf16.msra.mxu0 0
        %6469 = vmatpush.bf16.msra.mxu0 0
        %6470 = vmatpush.bf16.msra.mxu0 0
        %6471 = vmatpush.bf16.msra.mxu0 %v6459
        %6472 = vmatmul.bf16.gmra.mxu0 %v6462
        %v6473 = vpop.f32.mrf.mxu0
        %v6474 = vadd.f32 0.0, %v6473
        %v6475 = vpop.f32.mrf.mxu0
        %v6476 = vadd.f32 0.0, %v6475
        %6477 = vdwg.mxu0
        %v6480 = vunpack.c.l.b16 %v6306
        %v6481 = vunpack.c.l.b16 %v6307
        %v6482 = vpack.c.b16 %v6481, %v6480
        %v6485 = vunpack.c.l.b16 %v5634
        %v6486 = vunpack.c.l.b16 %v5635
        %v6487 = vpack.c.b16 %v6486, %v6485
        %v6490 = vsel %vm2602, %v6482, 0
        %6492 = vmatpush.bf16.msra.mxu0 0
        %6493 = vmatpush.bf16.msra.mxu0 0
        %6494 = vmatpush.bf16.msra.mxu0 0
        %6495 = vmatpush.bf16.msra.mxu0 0
        %6496 = vmatpush.bf16.msra.mxu0 0
        %6497 = vmatpush.bf16.msra.mxu0 0
        %6498 = vmatpush.bf16.msra.mxu0 0
        %6499 = vmatpush.bf16.msra.mxu0 %v6487
        %6500 = vmatmul.bf16.gmra.mxu0 %v6490
        %v6501 = vpop.f32.mrf.mxu0
        %v6502 = vadd.f32 0.0, %v6501
        %v6503 = vpop.f32.mrf.mxu0
        %v6504 = vadd.f32 0.0, %v6503
        %6505 = vdwg.mxu0
        %v6508 = vunpack.c.l.b16 %v6308
        %v6509 = vunpack.c.l.b16 %v6309
        %v6510 = vpack.c.b16 %v6509, %v6508
        %v6513 = vunpack.c.l.b16 %v5636
        %v6514 = vunpack.c.l.b16 %v5637
        %v6515 = vpack.c.b16 %v6514, %v6513
        %v6518 = vsel %vm2602, %v6510, 0
        %6520 = vmatpush.bf16.msra.mxu0 0
        %6521 = vmatpush.bf16.msra.mxu0 0
        %6522 = vmatpush.bf16.msra.mxu0 0
        %6523 = vmatpush.bf16.msra.mxu0 0
        %6524 = vmatpush.bf16.msra.mxu0 0
        %6525 = vmatpush.bf16.msra.mxu0 0
        %6526 = vmatpush.bf16.msra.mxu0 0
        %6527 = vmatpush.bf16.msra.mxu0 %v6515
        %6528 = vmatmul.bf16.gmra.mxu0 %v6518
        %v6529 = vpop.f32.mrf.mxu0
        %v6530 = vadd.f32 0.0, %v6529
        %v6531 = vpop.f32.mrf.mxu0
        %v6532 = vadd.f32 0.0, %v6531
        %6533 = vdwg.mxu0
        %v6534 = vrot.slane %v6390, 4
        %v6535 = vsel %vm881, %v6534, %v6334
        %v6536 = vrot.slane %v6334, 4
        %v6537 = vsel %vm881, %v6390, %v6536
        %v6539 = vunpack.c.l.s4 1983009808
        %v6540 = vunpack.c.0.s8 %v6539
        %v6541 = vperm.slane %v6535, %v6540
        %v6543 = vunpack.c.l.s4 1983009808
        %v6544 = vunpack.c.0.s8 %v6543
        %v6545 = vperm.slane %v6537, %v6544
        %v6546 = vrot.slane %v6418, 4
        %v6547 = vsel %vm881, %v6546, %v6362
        %v6548 = vrot.slane %v6362, 4
        %v6549 = vsel %vm881, %v6418, %v6548
        %v6551 = vunpack.c.l.s4 1983009808
        %v6552 = vunpack.c.0.s8 %v6551
        %v6553 = vperm.slane %v6547, %v6552
        %v6555 = vunpack.c.l.s4 1983009808
        %v6556 = vunpack.c.0.s8 %v6555
        %v6557 = vperm.slane %v6549, %v6556
        %v6558 = vrot.slane %v6553, 4
        %v6559 = vsel %vm881, %v6558, %v6541
        %v6560 = vrot.slane %v6541, 4
        %v6561 = vsel %vm881, %v6553, %v6560
        %v6563 = vunpack.c.l.s4 1934713408
        %v6564 = vunpack.c.0.s8 %v6563
        %v6565 = vperm.slane %v6559, %v6564
        %v6567 = vunpack.c.l.s4 1934713408
        %v6568 = vunpack.c.0.s8 %v6567
        %v6569 = vperm.slane %v6561, %v6568
        %v6570 = vrot.slane %v6557, 4
        %v6571 = vsel %vm881, %v6570, %v6545
        %v6572 = vrot.slane %v6545, 4
        %v6573 = vsel %vm881, %v6557, %v6572
        %v6575 = vunpack.c.l.s4 1934713408
        %v6576 = vunpack.c.0.s8 %v6575
        %v6577 = vperm.slane %v6571, %v6576
        %v6579 = vunpack.c.l.s4 1934713408
        %v6580 = vunpack.c.0.s8 %v6579
        %v6581 = vperm.slane %v6573, %v6580
        %v6582 = vrot.slane %v6565, 4
        %v6583 = vsel %vm881, 0.0, %v6582
        %v6584 = vrot.slane %v6569, 4
        %v6585 = vsel %vm881, 0.0, %v6584
        %v6586 = vrot.slane %v6577, 4
        %v6587 = vsel %vm881, 0.0, %v6586
        %v6588 = vrot.slane %v6581, 4
        %v6589 = vsel %vm881, 0.0, %v6588
        %v6590 = vrot.slane %v6392, 4
        %v6591 = vsel %vm881, %v6590, %v6336
        %v6592 = vrot.slane %v6336, 4
        %v6593 = vsel %vm881, %v6392, %v6592
        %v6595 = vunpack.c.l.s4 1983009808
        %v6596 = vunpack.c.0.s8 %v6595
        %v6597 = vperm.slane %v6591, %v6596
        %v6599 = vunpack.c.l.s4 1983009808
        %v6600 = vunpack.c.0.s8 %v6599
        %v6601 = vperm.slane %v6593, %v6600
        %v6602 = vrot.slane %v6420, 4
        %v6603 = vsel %vm881, %v6602, %v6364
        %v6604 = vrot.slane %v6364, 4
        %v6605 = vsel %vm881, %v6420, %v6604
        %v6607 = vunpack.c.l.s4 1983009808
        %v6608 = vunpack.c.0.s8 %v6607
        %v6609 = vperm.slane %v6603, %v6608
        %v6611 = vunpack.c.l.s4 1983009808
        %v6612 = vunpack.c.0.s8 %v6611
        %v6613 = vperm.slane %v6605, %v6612
        %v6614 = vrot.slane %v6609, 4
        %v6615 = vsel %vm881, %v6614, %v6597
        %v6616 = vrot.slane %v6597, 4
        %v6617 = vsel %vm881, %v6609, %v6616
        %v6619 = vunpack.c.l.s4 1934713408
        %v6620 = vunpack.c.0.s8 %v6619
        %v6621 = vperm.slane %v6615, %v6620
        %v6623 = vunpack.c.l.s4 1934713408
        %v6624 = vunpack.c.0.s8 %v6623
        %v6625 = vperm.slane %v6617, %v6624
        %v6626 = vrot.slane %v6613, 4
        %v6627 = vsel %vm881, %v6626, %v6601
        %v6628 = vrot.slane %v6601, 4
        %v6629 = vsel %vm881, %v6613, %v6628
        %v6631 = vunpack.c.l.s4 1934713408
        %v6632 = vunpack.c.0.s8 %v6631
        %v6633 = vperm.slane %v6627, %v6632
        %v6635 = vunpack.c.l.s4 1934713408
        %v6636 = vunpack.c.0.s8 %v6635
        %v6637 = vperm.slane %v6629, %v6636
        %v6638 = vrot.slane %v6621, 4
        %v6639 = vsel %vm881, 0.0, %v6638
        %v6640 = vrot.slane %v6625, 4
        %v6641 = vsel %vm881, 0.0, %v6640
        %v6642 = vrot.slane %v6633, 4
        %v6643 = vsel %vm881, 0.0, %v6642
        %v6644 = vrot.slane %v6637, 4
        %v6645 = vsel %vm881, 0.0, %v6644
        %v6646 = vrot.slane %v6502, 4
        %v6647 = vsel %vm881, %v6646, %v6446
        %v6648 = vrot.slane %v6446, 4
        %v6649 = vsel %vm881, %v6502, %v6648
        %v6651 = vunpack.c.l.s4 1983009808
        %v6652 = vunpack.c.0.s8 %v6651
        %v6653 = vperm.slane %v6647, %v6652
        %v6655 = vunpack.c.l.s4 1983009808
        %v6656 = vunpack.c.0.s8 %v6655
        %v6657 = vperm.slane %v6649, %v6656
        %v6658 = vrot.slane %v6530, 4
        %v6659 = vsel %vm881, %v6658, %v6474
        %v6660 = vrot.slane %v6474, 4
        %v6661 = vsel %vm881, %v6530, %v6660
        %v6663 = vunpack.c.l.s4 1983009808
        %v6664 = vunpack.c.0.s8 %v6663
        %v6665 = vperm.slane %v6659, %v6664
        %v6667 = vunpack.c.l.s4 1983009808
        %v6668 = vunpack.c.0.s8 %v6667
        %v6669 = vperm.slane %v6661, %v6668
        %v6670 = vrot.slane %v6665, 4
        %v6671 = vsel %vm881, %v6670, %v6653
        %v6672 = vrot.slane %v6653, 4
        %v6673 = vsel %vm881, %v6665, %v6672
        %v6675 = vunpack.c.l.s4 1934713408
        %v6676 = vunpack.c.0.s8 %v6675
        %v6677 = vperm.slane %v6671, %v6676
        %v6679 = vunpack.c.l.s4 1934713408
        %v6680 = vunpack.c.0.s8 %v6679
        %v6681 = vperm.slane %v6673, %v6680
        %v6682 = vrot.slane %v6669, 4
        %v6683 = vsel %vm881, %v6682, %v6657
        %v6684 = vrot.slane %v6657, 4
        %v6685 = vsel %vm881, %v6669, %v6684
        %v6687 = vunpack.c.l.s4 1934713408
        %v6688 = vunpack.c.0.s8 %v6687
        %v6689 = vperm.slane %v6683, %v6688
        %v6691 = vunpack.c.l.s4 1934713408
        %v6692 = vunpack.c.0.s8 %v6691
        %v6693 = vperm.slane %v6685, %v6692
        %v6694 = vrot.slane %v6677, 4
        %v6695 = vsel %vm881, 0.0, %v6694
        %v6696 = vrot.slane %v6681, 4
        %v6697 = vsel %vm881, 0.0, %v6696
        %v6698 = vrot.slane %v6689, 4
        %v6699 = vsel %vm881, 0.0, %v6698
        %v6700 = vrot.slane %v6693, 4
        %v6701 = vsel %vm881, 0.0, %v6700
        %v6702 = vrot.slane %v6504, 4
        %v6703 = vsel %vm881, %v6702, %v6448
        %v6704 = vrot.slane %v6448, 4
        %v6705 = vsel %vm881, %v6504, %v6704
        %v6707 = vunpack.c.l.s4 1983009808
        %v6708 = vunpack.c.0.s8 %v6707
        %v6709 = vperm.slane %v6703, %v6708
        %v6711 = vunpack.c.l.s4 1983009808
        %v6712 = vunpack.c.0.s8 %v6711
        %v6713 = vperm.slane %v6705, %v6712
        %v6714 = vrot.slane %v6532, 4
        %v6715 = vsel %vm881, %v6714, %v6476
        %v6716 = vrot.slane %v6476, 4
        %v6717 = vsel %vm881, %v6532, %v6716
        %v6719 = vunpack.c.l.s4 1983009808
        %v6720 = vunpack.c.0.s8 %v6719
        %v6721 = vperm.slane %v6715, %v6720
        %v6723 = vunpack.c.l.s4 1983009808
        %v6724 = vunpack.c.0.s8 %v6723
        %v6725 = vperm.slane %v6717, %v6724
        %v6726 = vrot.slane %v6721, 4
        %v6727 = vsel %vm881, %v6726, %v6709
        %v6728 = vrot.slane %v6709, 4
        %v6729 = vsel %vm881, %v6721, %v6728
        %v6731 = vunpack.c.l.s4 1934713408
        %v6732 = vunpack.c.0.s8 %v6731
        %v6733 = vperm.slane %v6727, %v6732
        %v6735 = vunpack.c.l.s4 1934713408
        %v6736 = vunpack.c.0.s8 %v6735
        %v6737 = vperm.slane %v6729, %v6736
        %v6738 = vrot.slane %v6725, 4
        %v6739 = vsel %vm881, %v6738, %v6713
        %v6740 = vrot.slane %v6713, 4
        %v6741 = vsel %vm881, %v6725, %v6740
        %v6743 = vunpack.c.l.s4 1934713408
        %v6744 = vunpack.c.0.s8 %v6743
        %v6745 = vperm.slane %v6739, %v6744
        %v6747 = vunpack.c.l.s4 1934713408
        %v6748 = vunpack.c.0.s8 %v6747
        %v6749 = vperm.slane %v6741, %v6748
        %v6750 = vrot.slane %v6733, 4
        %v6751 = vsel %vm881, 0.0, %v6750
        %v6752 = vrot.slane %v6737, 4
        %v6753 = vsel %vm881, 0.0, %v6752
        %v6754 = vrot.slane %v6745, 4
        %v6755 = vsel %vm881, 0.0, %v6754
        %v6756 = vrot.slane %v6749, 4
        %v6757 = vsel %vm881, 0.0, %v6756
        %v6758 = vsel %vm881, %v6584, %v6565
        %v6760 = vunpack.c.l.s4 1983009808
        %v6761 = vunpack.c.0.s8 %v6760
        %v6762 = vperm.slane %v6758, %v6761
        %v6763 = vrot.slane %v6585, 4
        %v6764 = vsel %vm881, %v6763, %v6583
        %v6766 = vunpack.c.l.s4 1983009808
        %v6767 = vunpack.c.0.s8 %v6766
        %v6768 = vperm.slane %v6764, %v6767
        %v6769 = vsel %vm881, %v6588, %v6577
        %v6771 = vunpack.c.l.s4 1983009808
        %v6772 = vunpack.c.0.s8 %v6771
        %v6773 = vperm.slane %v6769, %v6772
        %v6774 = vrot.slane %v6589, 4
        %v6775 = vsel %vm881, %v6774, %v6587
        %v6777 = vunpack.c.l.s4 1983009808
        %v6778 = vunpack.c.0.s8 %v6777
        %v6779 = vperm.slane %v6775, %v6778
        %v6780 = vrot.slane %v6768, 4
        %v6781 = vsel %vm881, %v6780, %v6762
        %v6782 = vrot.slane %v6762, 4
        %v6783 = vsel %vm881, %v6768, %v6782
        %v6785 = vunpack.c.l.s4 1934713408
        %v6786 = vunpack.c.0.s8 %v6785
        %v6787 = vperm.slane %v6781, %v6786
        %v6789 = vunpack.c.l.s4 1934713408
        %v6790 = vunpack.c.0.s8 %v6789
        %v6791 = vperm.slane %v6783, %v6790
        %v6792 = vrot.slane %v6779, 4
        %v6793 = vsel %vm881, %v6792, %v6773
        %v6794 = vrot.slane %v6773, 4
        %v6795 = vsel %vm881, %v6779, %v6794
        %v6797 = vunpack.c.l.s4 1934713408
        %v6798 = vunpack.c.0.s8 %v6797
        %v6799 = vperm.slane %v6793, %v6798
        %v6801 = vunpack.c.l.s4 1934713408
        %v6802 = vunpack.c.0.s8 %v6801
        %v6803 = vperm.slane %v6795, %v6802
        %v6804 = vrot.slane %v6799, 4
        %v6805 = vsel %vm881, %v6804, %v6787
        %v6806 = vrot.slane %v6787, 4
        %v6807 = vsel %vm881, %v6799, %v6806
        %v6808 = vrot.slane %v6803, 4
        %v6809 = vsel %vm881, %v6808, %v6791
        %v6810 = vrot.slane %v6791, 4
        %v6811 = vsel %vm881, %v6803, %v6810
        %v6812 = vsel %vm881, %v6640, %v6621
        %v6814 = vunpack.c.l.s4 1983009808
        %v6815 = vunpack.c.0.s8 %v6814
        %v6816 = vperm.slane %v6812, %v6815
        %v6817 = vrot.slane %v6641, 4
        %v6818 = vsel %vm881, %v6817, %v6639
        %v6820 = vunpack.c.l.s4 1983009808
        %v6821 = vunpack.c.0.s8 %v6820
        %v6822 = vperm.slane %v6818, %v6821
        %v6823 = vsel %vm881, %v6644, %v6633
        %v6825 = vunpack.c.l.s4 1983009808
        %v6826 = vunpack.c.0.s8 %v6825
        %v6827 = vperm.slane %v6823, %v6826
        %v6828 = vrot.slane %v6645, 4
        %v6829 = vsel %vm881, %v6828, %v6643
        %v6831 = vunpack.c.l.s4 1983009808
        %v6832 = vunpack.c.0.s8 %v6831
        %v6833 = vperm.slane %v6829, %v6832
        %v6834 = vrot.slane %v6822, 4
        %v6835 = vsel %vm881, %v6834, %v6816
        %v6836 = vrot.slane %v6816, 4
        %v6837 = vsel %vm881, %v6822, %v6836
        %v6839 = vunpack.c.l.s4 1934713408
        %v6840 = vunpack.c.0.s8 %v6839
        %v6841 = vperm.slane %v6835, %v6840
        %v6843 = vunpack.c.l.s4 1934713408
        %v6844 = vunpack.c.0.s8 %v6843
        %v6845 = vperm.slane %v6837, %v6844
        %v6846 = vrot.slane %v6833, 4
        %v6847 = vsel %vm881, %v6846, %v6827
        %v6848 = vrot.slane %v6827, 4
        %v6849 = vsel %vm881, %v6833, %v6848
        %v6851 = vunpack.c.l.s4 1934713408
        %v6852 = vunpack.c.0.s8 %v6851
        %v6853 = vperm.slane %v6847, %v6852
        %v6855 = vunpack.c.l.s4 1934713408
        %v6856 = vunpack.c.0.s8 %v6855
        %v6857 = vperm.slane %v6849, %v6856
        %v6858 = vrot.slane %v6853, 4
        %v6859 = vsel %vm881, %v6858, %v6841
        %v6860 = vrot.slane %v6841, 4
        %v6861 = vsel %vm881, %v6853, %v6860
        %v6862 = vrot.slane %v6857, 4
        %v6863 = vsel %vm881, %v6862, %v6845
        %v6864 = vrot.slane %v6845, 4
        %v6865 = vsel %vm881, %v6857, %v6864
        %v6866 = vsel %vm881, %v6696, %v6677
        %v6868 = vunpack.c.l.s4 1983009808
        %v6869 = vunpack.c.0.s8 %v6868
        %v6870 = vperm.slane %v6866, %v6869
        %v6871 = vrot.slane %v6697, 4
        %v6872 = vsel %vm881, %v6871, %v6695
        %v6874 = vunpack.c.l.s4 1983009808
        %v6875 = vunpack.c.0.s8 %v6874
        %v6876 = vperm.slane %v6872, %v6875
        %v6877 = vsel %vm881, %v6700, %v6689
        %v6879 = vunpack.c.l.s4 1983009808
        %v6880 = vunpack.c.0.s8 %v6879
        %v6881 = vperm.slane %v6877, %v6880
        %v6882 = vrot.slane %v6701, 4
        %v6883 = vsel %vm881, %v6882, %v6699
        %v6885 = vunpack.c.l.s4 1983009808
        %v6886 = vunpack.c.0.s8 %v6885
        %v6887 = vperm.slane %v6883, %v6886
        %v6888 = vrot.slane %v6876, 4
        %v6889 = vsel %vm881, %v6888, %v6870
        %v6890 = vrot.slane %v6870, 4
        %v6891 = vsel %vm881, %v6876, %v6890
        %v6893 = vunpack.c.l.s4 1934713408
        %v6894 = vunpack.c.0.s8 %v6893
        %v6895 = vperm.slane %v6889, %v6894
        %v6897 = vunpack.c.l.s4 1934713408
        %v6898 = vunpack.c.0.s8 %v6897
        %v6899 = vperm.slane %v6891, %v6898
        %v6900 = vrot.slane %v6887, 4
        %v6901 = vsel %vm881, %v6900, %v6881
        %v6902 = vrot.slane %v6881, 4
        %v6903 = vsel %vm881, %v6887, %v6902
        %v6905 = vunpack.c.l.s4 1934713408
        %v6906 = vunpack.c.0.s8 %v6905
        %v6907 = vperm.slane %v6901, %v6906
        %v6909 = vunpack.c.l.s4 1934713408
        %v6910 = vunpack.c.0.s8 %v6909
        %v6911 = vperm.slane %v6903, %v6910
        %v6912 = vrot.slane %v6907, 4
        %v6913 = vsel %vm881, %v6912, %v6895
        %v6914 = vrot.slane %v6895, 4
        %v6915 = vsel %vm881, %v6907, %v6914
        %v6916 = vrot.slane %v6911, 4
        %v6917 = vsel %vm881, %v6916, %v6899
        %v6918 = vrot.slane %v6899, 4
        %v6919 = vsel %vm881, %v6911, %v6918
        %v6920 = vsel %vm881, %v6752, %v6733
        %v6922 = vunpack.c.l.s4 1983009808
        %v6923 = vunpack.c.0.s8 %v6922
        %v6924 = vperm.slane %v6920, %v6923
        %v6925 = vrot.slane %v6753, 4
        %v6926 = vsel %vm881, %v6925, %v6751
        %v6928 = vunpack.c.l.s4 1983009808
        %v6929 = vunpack.c.0.s8 %v6928
        %v6930 = vperm.slane %v6926, %v6929
        %v6931 = vsel %vm881, %v6756, %v6745
        %v6933 = vunpack.c.l.s4 1983009808
        %v6934 = vunpack.c.0.s8 %v6933
        %v6935 = vperm.slane %v6931, %v6934
        %v6936 = vrot.slane %v6757, 4
        %v6937 = vsel %vm881, %v6936, %v6755
        %v6939 = vunpack.c.l.s4 1983009808
        %v6940 = vunpack.c.0.s8 %v6939
        %v6941 = vperm.slane %v6937, %v6940
        %v6942 = vrot.slane %v6930, 4
        %v6943 = vsel %vm881, %v6942, %v6924
        %v6944 = vrot.slane %v6924, 4
        %v6945 = vsel %vm881, %v6930, %v6944
        %v6947 = vunpack.c.l.s4 1934713408
        %v6948 = vunpack.c.0.s8 %v6947
        %v6949 = vperm.slane %v6943, %v6948
        %v6951 = vunpack.c.l.s4 1934713408
        %v6952 = vunpack.c.0.s8 %v6951
        %v6953 = vperm.slane %v6945, %v6952
        %v6954 = vrot.slane %v6941, 4
        %v6955 = vsel %vm881, %v6954, %v6935
        %v6956 = vrot.slane %v6935, 4
        %v6957 = vsel %vm881, %v6941, %v6956
        %v6959 = vunpack.c.l.s4 1934713408
        %v6960 = vunpack.c.0.s8 %v6959
        %v6961 = vperm.slane %v6955, %v6960
        %v6963 = vunpack.c.l.s4 1934713408
        %v6964 = vunpack.c.0.s8 %v6963
        %v6965 = vperm.slane %v6957, %v6964
        %v6966 = vrot.slane %v6961, 4
        %v6967 = vsel %vm881, %v6966, %v6949
        %v6968 = vrot.slane %v6949, 4
        %v6969 = vsel %vm881, %v6961, %v6968
        %v6970 = vrot.slane %v6965, 4
        %v6971 = vsel %vm881, %v6970, %v6953
        %v6972 = vrot.slane %v6953, 4
        %v6973 = vsel %vm881, %v6965, %v6972
        %6978 = vrot.lane.b32.xlu0 %v6807, 32
        %v6979 = vpop.permute.xlu0 %6978
        %6980 = vrot.lane.b32.xlu0 %v6861, 32
        %v6981 = vpop.permute.xlu0 %6980
        %6982 = vrot.lane.b32.xlu0 %v6915, 32
        %v6983 = vpop.permute.xlu0 %6982
        %6984 = vrot.lane.b32.xlu0 %v6969, 32
        %v6985 = vpop.permute.xlu0 %6984
        %6994 = vrot.lane.b32.xlu0 %v6809, 64
        %v6995 = vpop.permute.xlu0 %6994
        %6996 = vrot.lane.b32.xlu0 %v6863, 64
        %v6997 = vpop.permute.xlu0 %6996
        %6998 = vrot.lane.b32.xlu0 %v6917, 64
        %v6999 = vpop.permute.xlu0 %6998
        %7000 = vrot.lane.b32.xlu0 %v6971, 64
        %v7001 = vpop.permute.xlu0 %7000
        %7010 = vrot.lane.b32.xlu0 %v6811, 96
        %v7011 = vpop.permute.xlu0 %7010
        %7012 = vrot.lane.b32.xlu0 %v6865, 96
        %v7013 = vpop.permute.xlu0 %7012
        %7014 = vrot.lane.b32.xlu0 %v6919, 96
        %v7015 = vpop.permute.xlu0 %7014
        %7016 = vrot.lane.b32.xlu0 %v6973, 96
        %v7017 = vpop.permute.xlu0 %7016
        %v7022 = vsel %vm2339, %v6805, %v6979
        %v7023 = vsel %vm2339, %v6859, %v6981
        %v7024 = vsel %vm2339, %v6913, %v6983
        %v7025 = vsel %vm2339, %v6967, %v6985
        %v7026 = vsel %vm3719, %v7022, %v6995
        %v7027 = vsel %vm3719, %v7023, %v6997
        %v7028 = vsel %vm3719, %v7024, %v6999
        %v7029 = vsel %vm3719, %v7025, %v7001
        %v7030 = vsel %vm3724, %v7026, %v7011
        %v7031 = vsel %vm3724, %v7027, %v7013
        %v7032 = vsel %vm3724, %v7028, %v7015
        %v7033 = vsel %vm3724, %v7029, %v7017
        %v7034 = vpack.c.bf16 %v7031, %v7030
        %v7035 = vpack.c.bf16 %v7033, %v7032
        %v7036 = vperm.slane %v570, 5
        %v7053 = vunpack.c.l.b16 %v4134
        %v7054 = vunpack.c.l.b16 %v4135
        %v7055 = vunpack.c.l.b16 %v4136
        %v7056 = vunpack.c.l.b16 %v4137
        %v7057 = vunpack.c.l.b16 %v4138
        %v7058 = vunpack.c.l.b16 %v4139
        %v7059 = vunpack.c.l.b16 %v4140
        %v7060 = vunpack.c.l.b16 %v4141
        %v7061 = vunpack.c.l.b16 %v4142
        %v7062 = vunpack.c.l.b16 %v4143
        %v7063 = vunpack.c.l.b16 %v4144
        %v7064 = vunpack.c.l.b16 %v4145
        %v7065 = vunpack.c.l.b16 %v4146
        %v7066 = vunpack.c.l.b16 %v4147
        %v7067 = vunpack.c.l.b16 %v4148
        %v7068 = vunpack.c.l.b16 %v4149
        %v7069 = vpack.c.b16 %v7054, %v7053
        %v7070 = vpack.c.b16 %v7056, %v7055
        %v7071 = vpack.c.b16 %v7058, %v7057
        %v7072 = vpack.c.b16 %v7060, %v7059
        %v7073 = vpack.c.b16 %v7062, %v7061
        %v7074 = vpack.c.b16 %v7064, %v7063
        %v7075 = vpack.c.b16 %v7066, %v7065
        %v7076 = vpack.c.b16 %v7068, %v7067
        %7085 = vmatpush.bf16.msra.mxu0 %v7076
        %7086 = vmatpush.bf16.msra.mxu0 %v7075
        %7087 = vmatpush.bf16.msra.mxu0 %v7074
        %7088 = vmatpush.bf16.msra.mxu0 %v7073
        %7089 = vmatpush.bf16.msra.mxu0 %v7072
        %7090 = vmatpush.bf16.msra.mxu0 %v7071
        %7091 = vmatpush.bf16.msra.mxu0 %v7070
        %7092 = vmatpush.bf16.msra.mxu0 %v7069
        %7093 = vmatmul.bf16.gmra.mxu0 %v7034
        %v7094 = vpop.f32.mrf.mxu0
        %v7095 = vadd.f32 %v7036, %v7094
        %v7096 = vpop.f32.mrf.mxu0
        %v7097 = vadd.f32 %v7036, %v7096
        %7098 = vmatmul.bf16.gmra.mxu0 %v7035
        %v7099 = vpop.f32.mrf.mxu0
        %v7100 = vadd.f32 %v7036, %v7099
        %v7101 = vpop.f32.mrf.mxu0
        %v7102 = vadd.f32 %v7036, %v7101
        %7103 = vdwg.mxu0
        %v7104 = vadd.f32 %v3896, %v7095
        %v7105 = vadd.f32 %v3897, %v7097
        %v7106 = vadd.f32 %v3898, %v7100
        %v7107 = vadd.f32 %v3899, %v7102
        %7108 = vadd.xlane.f32.xlu0 %v7104
        %v7109 = vpop.xlane.xlu0 %7108
        %7110 = vadd.xlane.f32.xlu0 %v7105
        %v7111 = vpop.xlane.xlu0 %7110
        %7112 = vadd.xlane.f32.xlu0 %v7106
        %v7113 = vpop.xlane.xlu0 %7112
        %7114 = vadd.xlane.f32.xlu0 %v7107
        %v7115 = vpop.xlane.xlu0 %7114
        %v7116 = vmul.f32 %v7109, %v3817
        %v7117 = vmul.f32 %v7111, %v3817
        %v7118 = vmul.f32 %v7113, %v3817
        %v7119 = vmul.f32 %v7115, %v3817
        %v7120 = vsub.f32 %v7104, %v7116
        %v7121 = vsub.f32 %v7105, %v7117
        %v7122 = vsub.f32 %v7106, %v7118
        %v7123 = vsub.f32 %v7107, %v7119
        %v7124 = vmul.f32 %v7120, %v7120
        %v7125 = vmul.f32 %v7121, %v7121
        %v7126 = vmul.f32 %v7122, %v7122
        %v7127 = vmul.f32 %v7123, %v7123
        %7128 = vadd.xlane.f32.xlu0 %v7124
        %v7129 = vpop.xlane.xlu0 %7128
        %7130 = vadd.xlane.f32.xlu0 %v7125
        %v7131 = vpop.xlane.xlu0 %7130
        %7132 = vadd.xlane.f32.xlu0 %v7126
        %v7133 = vpop.xlane.xlu0 %7132
        %7134 = vadd.xlane.f32.xlu0 %v7127
        %v7135 = vpop.xlane.xlu0 %7134
        %v7136 = vmul.f32 %v7129, %v3817
        %v7137 = vmul.f32 %v7131, %v3817
        %v7138 = vmul.f32 %v7133, %v3817
        %v7139 = vmul.f32 %v7135, %v3817
        %v7140 = vadd.f32 %v7136, 1e-05
        %v7141 = vadd.f32 %v7137, 1e-05
        %v7142 = vadd.f32 %v7138, 1e-05
        %v7143 = vadd.f32 %v7139, 1e-05
        %v7144 = vrsqrt.pop %v7140
        %v7145 = vmul.f32 %v7144, %v7140
        %v7146 = vmul.f32 %v7145, %v7144
        %v7147 = vmul.f32 0.5, %v7146
        %v7148 = vsub.f32 1.5, %v7147
        %v7149 = vmul.f32 %v7144, %v7148
        %vm7150 = vweird.f32 %v7140
        %vm7151 = vweird.f32 %v7144
        %vm7152 = vmor %vm7150, %vm7151
        %v7153 = vsel %vm7152, %v7144, %v7149
        %v7154 = vrsqrt.pop %v7141
        %v7155 = vmul.f32 %v7154, %v7141
        %v7156 = vmul.f32 %v7155, %v7154
        %v7157 = vmul.f32 0.5, %v7156
        %v7158 = vsub.f32 1.5, %v7157
        %v7159 = vmul.f32 %v7154, %v7158
        %vm7160 = vweird.f32 %v7141
        %vm7161 = vweird.f32 %v7154
        %vm7162 = vmor %vm7160, %vm7161
        %v7163 = vsel %vm7162, %v7154, %v7159
        %v7164 = vrsqrt.pop %v7142
        %v7165 = vmul.f32 %v7164, %v7142
        %v7166 = vmul.f32 %v7165, %v7164
        %v7167 = vmul.f32 0.5, %v7166
        %v7168 = vsub.f32 1.5, %v7167
        %v7169 = vmul.f32 %v7164, %v7168
        %vm7170 = vweird.f32 %v7142
        %vm7171 = vweird.f32 %v7164
        %vm7172 = vmor %vm7170, %vm7171
        %v7173 = vsel %vm7172, %v7164, %v7169
        %v7174 = vrsqrt.pop %v7143
        %v7175 = vmul.f32 %v7174, %v7143
        %v7176 = vmul.f32 %v7175, %v7174
        %v7177 = vmul.f32 0.5, %v7176
        %v7178 = vsub.f32 1.5, %v7177
        %v7179 = vmul.f32 %v7174, %v7178
        %vm7180 = vweird.f32 %v7143
        %vm7181 = vweird.f32 %v7174
        %vm7182 = vmor %vm7180, %vm7181
        %v7183 = vsel %vm7182, %v7174, %v7179
        %v7184 = vmul.f32 %v7120, %v7153
        %v7185 = vmul.f32 %v7121, %v7163
        %v7186 = vmul.f32 %v7122, %v7173
        %v7187 = vmul.f32 %v7123, %v7183
        %v7188 = vperm.slane %v573, 1
        %v7189 = vmul.f32 %v7184, %v7188
        %v7190 = vmul.f32 %v7185, %v7188
        %v7191 = vmul.f32 %v7186, %v7188
        %v7192 = vmul.f32 %v7187, %v7188
        %v7193 = vperm.slane %v573, 2
        %v7194 = vadd.f32 %v7189, %v7193
        %v7195 = vadd.f32 %v7190, %v7193
        %v7196 = vadd.f32 %v7191, %v7193
        %v7197 = vadd.f32 %v7192, %v7193
        %v7198 = vpack.c.bf16 %v7195, %v7194
        %v7199 = vpack.c.bf16 %v7197, %v7196
        %v7200 = vld [vmem:[%s546] sm:$0xff]
        %v7201 = vld [vmem:[%s546 + $0x8] sm:$0xff]
        %v7202 = vld [vmem:[%s546 + $0x10] sm:$0xff]
        %v7203 = vld [vmem:[%s546 + $0x18] sm:$0xff]
        %v7204 = vld [vmem:[%s546 + $0x20] sm:$0xff]
        %v7205 = vld [vmem:[%s546 + $0x28] sm:$0xff]
        %v7206 = vld [vmem:[%s546 + $0x30] sm:$0xff]
        %v7207 = vld [vmem:[%s546 + $0x38] sm:$0xff]
        %v7208 = vld [vmem:[%s546 + $0x40] sm:$0xff]
        %v7209 = vld [vmem:[%s546 + $0x48] sm:$0xff]
        %v7210 = vld [vmem:[%s546 + $0x50] sm:$0xff]
        %v7211 = vld [vmem:[%s546 + $0x58] sm:$0xff]
        %v7212 = vld [vmem:[%s546 + $0x60] sm:$0xff]
        %v7213 = vld [vmem:[%s546 + $0x68] sm:$0xff]
        %v7214 = vld [vmem:[%s546 + $0x70] sm:$0xff]
        %v7215 = vld [vmem:[%s546 + $0x78] sm:$0xff]
        %v7216 = vperm.slane %v570, 2
        %v7217 = vperm.slane %v571, 2
        %v7234 = vunpack.c.l.b16 %v7200
        %v7235 = vunpack.c.h.b16 %v7200
        %v7236 = vunpack.c.l.b16 %v7201
        %v7237 = vunpack.c.h.b16 %v7201
        %v7238 = vunpack.c.l.b16 %v7202
        %v7239 = vunpack.c.h.b16 %v7202
        %v7240 = vunpack.c.l.b16 %v7203
        %v7241 = vunpack.c.h.b16 %v7203
        %v7242 = vunpack.c.l.b16 %v7204
        %v7243 = vunpack.c.h.b16 %v7204
        %v7244 = vunpack.c.l.b16 %v7205
        %v7245 = vunpack.c.h.b16 %v7205
        %v7246 = vunpack.c.l.b16 %v7206
        %v7247 = vunpack.c.h.b16 %v7206
        %v7248 = vunpack.c.l.b16 %v7207
        %v7249 = vunpack.c.h.b16 %v7207
        %v7250 = vunpack.c.l.b16 %v7208
        %v7251 = vunpack.c.h.b16 %v7208
        %v7252 = vunpack.c.l.b16 %v7209
        %v7253 = vunpack.c.h.b16 %v7209
        %v7254 = vunpack.c.l.b16 %v7210
        %v7255 = vunpack.c.h.b16 %v7210
        %v7256 = vunpack.c.l.b16 %v7211
        %v7257 = vunpack.c.h.b16 %v7211
        %v7258 = vunpack.c.l.b16 %v7212
        %v7259 = vunpack.c.h.b16 %v7212
        %v7260 = vunpack.c.l.b16 %v7213
        %v7261 = vunpack.c.h.b16 %v7213
        %v7262 = vunpack.c.l.b16 %v7214
        %v7263 = vunpack.c.h.b16 %v7214
        %v7264 = vunpack.c.l.b16 %v7215
        %v7265 = vunpack.c.h.b16 %v7215
        %v7266 = vpack.c.b16 %v7236, %v7234
        %v7267 = vpack.c.b16 %v7237, %v7235
        %v7268 = vpack.c.b16 %v7240, %v7238
        %v7269 = vpack.c.b16 %v7241, %v7239
        %v7270 = vpack.c.b16 %v7244, %v7242
        %v7271 = vpack.c.b16 %v7245, %v7243
        %v7272 = vpack.c.b16 %v7248, %v7246
        %v7273 = vpack.c.b16 %v7249, %v7247
        %v7274 = vpack.c.b16 %v7252, %v7250
        %v7275 = vpack.c.b16 %v7253, %v7251
        %v7276 = vpack.c.b16 %v7256, %v7254
        %v7277 = vpack.c.b16 %v7257, %v7255
        %v7278 = vpack.c.b16 %v7260, %v7258
        %v7279 = vpack.c.b16 %v7261, %v7259
        %v7280 = vpack.c.b16 %v7264, %v7262
        %v7281 = vpack.c.b16 %v7265, %v7263
        %7298 = vmatpush.bf16.msra.mxu0 %v7280
        %7299 = vmatpush.bf16.msra.mxu0 %v7278
        %7300 = vmatpush.bf16.msra.mxu0 %v7276
        %7301 = vmatpush.bf16.msra.mxu0 %v7274
        %7302 = vmatpush.bf16.msra.mxu0 %v7272
        %7303 = vmatpush.bf16.msra.mxu0 %v7270
        %7304 = vmatpush.bf16.msra.mxu0 %v7268
        %7305 = vmatpush.bf16.msra.mxu0 %v7266
        %7306 = vmatmul.bf16.gmra.mxu0 %v7198
        %v7307 = vpop.f32.mrf.mxu0
        %v7308 = vadd.f32 %v7216, %v7307
        %v7309 = vpop.f32.mrf.mxu0
        %v7310 = vadd.f32 %v7216, %v7309
        %7311 = vmatmul.bf16.gmra.mxu0 %v7199
        %v7312 = vpop.f32.mrf.mxu0
        %v7313 = vadd.f32 %v7216, %v7312
        %v7314 = vpop.f32.mrf.mxu0
        %v7315 = vadd.f32 %v7216, %v7314
        %7316 = vdwg.mxu0
        %7317 = vmatpush.bf16.msra.mxu0 %v7281
        %7318 = vmatpush.bf16.msra.mxu0 %v7279
        %7319 = vmatpush.bf16.msra.mxu0 %v7277
        %7320 = vmatpush.bf16.msra.mxu0 %v7275
        %7321 = vmatpush.bf16.msra.mxu0 %v7273
        %7322 = vmatpush.bf16.msra.mxu0 %v7271
        %7323 = vmatpush.bf16.msra.mxu0 %v7269
        %7324 = vmatpush.bf16.msra.mxu0 %v7267
        %7325 = vmatmul.bf16.gmra.mxu0 %v7198
        %v7326 = vpop.f32.mrf.mxu0
        %v7327 = vadd.f32 %v7217, %v7326
        %v7328 = vpop.f32.mrf.mxu0
        %v7329 = vadd.f32 %v7217, %v7328
        %7330 = vmatmul.bf16.gmra.mxu0 %v7199
        %v7331 = vpop.f32.mrf.mxu0
        %v7332 = vadd.f32 %v7217, %v7331
        %v7333 = vpop.f32.mrf.mxu0
        %v7334 = vadd.f32 %v7217, %v7333
        %7335 = vdwg.mxu0
        %v7336 = vmax.f32 %v7308, 0.0
        %v7337 = vmax.f32 %v7327, 0.0
        %v7338 = vmax.f32 %v7310, 0.0
        %v7339 = vmax.f32 %v7329, 0.0
        %v7340 = vmax.f32 %v7313, 0.0
        %v7341 = vmax.f32 %v7332, 0.0
        %v7342 = vmax.f32 %v7315, 0.0
        %v7343 = vmax.f32 %v7334, 0.0
        %v7344 = vpack.c.bf16 %v7338, %v7336
        %v7345 = vpack.c.bf16 %v7339, %v7337
        %v7346 = vpack.c.bf16 %v7342, %v7340
        %v7347 = vpack.c.bf16 %v7343, %v7341
        %v7348 = vld [vmem:[%s551] sm:$0xf]
        %v7349 = vld [vmem:[%s551 + $0x4] sm:$0xf]
        %v7350 = vld [vmem:[%s551 + $0x8] sm:$0xf]
        %v7351 = vld [vmem:[%s551 + $0xc] sm:$0xf]
        %v7352 = vld [vmem:[%s551 + $0x10] sm:$0xf]
        %v7353 = vld [vmem:[%s551 + $0x14] sm:$0xf]
        %v7354 = vld [vmem:[%s551 + $0x18] sm:$0xf]
        %v7355 = vld [vmem:[%s551 + $0x1c] sm:$0xf]
        %v7356 = vld [vmem:[%s551 + $0x20] sm:$0xf]
        %v7357 = vld [vmem:[%s551 + $0x24] sm:$0xf]
        %v7358 = vld [vmem:[%s551 + $0x28] sm:$0xf]
        %v7359 = vld [vmem:[%s551 + $0x2c] sm:$0xf]
        %v7360 = vld [vmem:[%s551 + $0x30] sm:$0xf]
        %v7361 = vld [vmem:[%s551 + $0x34] sm:$0xf]
        %v7362 = vld [vmem:[%s551 + $0x38] sm:$0xf]
        %v7363 = vld [vmem:[%s551 + $0x3c] sm:$0xf]
        %v7364 = vld [vmem:[%s551 + $0x40] sm:$0xf]
        %v7365 = vld [vmem:[%s551 + $0x44] sm:$0xf]
        %v7366 = vld [vmem:[%s551 + $0x48] sm:$0xf]
        %v7367 = vld [vmem:[%s551 + $0x4c] sm:$0xf]
        %v7368 = vld [vmem:[%s551 + $0x50] sm:$0xf]
        %v7369 = vld [vmem:[%s551 + $0x54] sm:$0xf]
        %v7370 = vld [vmem:[%s551 + $0x58] sm:$0xf]
        %v7371 = vld [vmem:[%s551 + $0x5c] sm:$0xf]
        %v7372 = vld [vmem:[%s551 + $0x60] sm:$0xf]
        %v7373 = vld [vmem:[%s551 + $0x64] sm:$0xf]
        %v7374 = vld [vmem:[%s551 + $0x68] sm:$0xf]
        %v7375 = vld [vmem:[%s551 + $0x6c] sm:$0xf]
        %v7376 = vld [vmem:[%s551 + $0x70] sm:$0xf]
        %v7377 = vld [vmem:[%s551 + $0x74] sm:$0xf]
        %v7378 = vld [vmem:[%s551 + $0x78] sm:$0xf]
        %v7379 = vld [vmem:[%s551 + $0x7c] sm:$0xf]
        %v7380 = vperm.slane %v570, 6
        %v7413 = vunpack.c.l.b16 %v7348
        %v7414 = vunpack.c.l.b16 %v7349
        %v7415 = vunpack.c.l.b16 %v7350
        %v7416 = vunpack.c.l.b16 %v7351
        %v7417 = vunpack.c.l.b16 %v7352
        %v7418 = vunpack.c.l.b16 %v7353
        %v7419 = vunpack.c.l.b16 %v7354
        %v7420 = vunpack.c.l.b16 %v7355
        %v7421 = vunpack.c.l.b16 %v7356
        %v7422 = vunpack.c.l.b16 %v7357
        %v7423 = vunpack.c.l.b16 %v7358
        %v7424 = vunpack.c.l.b16 %v7359
        %v7425 = vunpack.c.l.b16 %v7360
        %v7426 = vunpack.c.l.b16 %v7361
        %v7427 = vunpack.c.l.b16 %v7362
        %v7428 = vunpack.c.l.b16 %v7363
        %v7429 = vunpack.c.l.b16 %v7364
        %v7430 = vunpack.c.l.b16 %v7365
        %v7431 = vunpack.c.l.b16 %v7366
        %v7432 = vunpack.c.l.b16 %v7367
        %v7433 = vunpack.c.l.b16 %v7368
        %v7434 = vunpack.c.l.b16 %v7369
        %v7435 = vunpack.c.l.b16 %v7370
        %v7436 = vunpack.c.l.b16 %v7371
        %v7437 = vunpack.c.l.b16 %v7372
        %v7438 = vunpack.c.l.b16 %v7373
        %v7439 = vunpack.c.l.b16 %v7374
        %v7440 = vunpack.c.l.b16 %v7375
        %v7441 = vunpack.c.l.b16 %v7376
        %v7442 = vunpack.c.l.b16 %v7377
        %v7443 = vunpack.c.l.b16 %v7378
        %v7444 = vunpack.c.l.b16 %v7379
        %v7445 = vpack.c.b16 %v7414, %v7413
        %v7446 = vpack.c.b16 %v7416, %v7415
        %v7447 = vpack.c.b16 %v7418, %v7417
        %v7448 = vpack.c.b16 %v7420, %v7419
        %v7449 = vpack.c.b16 %v7422, %v7421
        %v7450 = vpack.c.b16 %v7424, %v7423
        %v7451 = vpack.c.b16 %v7426, %v7425
        %v7452 = vpack.c.b16 %v7428, %v7427
        %v7453 = vpack.c.b16 %v7430, %v7429
        %v7454 = vpack.c.b16 %v7432, %v7431
        %v7455 = vpack.c.b16 %v7434, %v7433
        %v7456 = vpack.c.b16 %v7436, %v7435
        %v7457 = vpack.c.b16 %v7438, %v7437
        %v7458 = vpack.c.b16 %v7440, %v7439
        %v7459 = vpack.c.b16 %v7442, %v7441
        %v7460 = vpack.c.b16 %v7444, %v7443
        %7477 = vmatpush.bf16.msra.mxu0 %v7452
        %7478 = vmatpush.bf16.msra.mxu0 %v7451
        %7479 = vmatpush.bf16.msra.mxu0 %v7450
        %7480 = vmatpush.bf16.msra.mxu0 %v7449
        %7481 = vmatpush.bf16.msra.mxu0 %v7448
        %7482 = vmatpush.bf16.msra.mxu0 %v7447
        %7483 = vmatpush.bf16.msra.mxu0 %v7446
        %7484 = vmatpush.bf16.msra.mxu0 %v7445
        %7485 = vmatmul.bf16.gmra.mxu0 %v7344
        %v7486 = vpop.f32.mrf.mxu0
        %v7487 = vadd.f32 %v7380, %v7486
        %v7488 = vpop.f32.mrf.mxu0
        %v7489 = vadd.f32 %v7380, %v7488
        %7490 = vmatmul.bf16.gmra.mxu0 %v7346
        %v7491 = vpop.f32.mrf.mxu0
        %v7492 = vadd.f32 %v7380, %v7491
        %v7493 = vpop.f32.mrf.mxu0
        %v7494 = vadd.f32 %v7380, %v7493
        %7495 = vdwg.mxu0
        %7496 = vmatpush.bf16.msra.mxu0 %v7460
        %7497 = vmatpush.bf16.msra.mxu0 %v7459
        %7498 = vmatpush.bf16.msra.mxu0 %v7458
        %7499 = vmatpush.bf16.msra.mxu0 %v7457
        %7500 = vmatpush.bf16.msra.mxu0 %v7456
        %7501 = vmatpush.bf16.msra.mxu0 %v7455
        %7502 = vmatpush.bf16.msra.mxu0 %v7454
        %7503 = vmatpush.bf16.msra.mxu0 %v7453
        %7504 = vmatmul.bf16.gmra.mxu0 %v7345
        %v7505 = vpop.f32.mrf.mxu0
        %v7506 = vadd.f32 %v7487, %v7505
        %v7507 = vpop.f32.mrf.mxu0
        %v7508 = vadd.f32 %v7489, %v7507
        %7509 = vmatmul.bf16.gmra.mxu0 %v7347
        %v7510 = vpop.f32.mrf.mxu0
        %v7511 = vadd.f32 %v7492, %v7510
        %v7512 = vpop.f32.mrf.mxu0
        %v7513 = vadd.f32 %v7494, %v7512
        %7514 = vdwg.mxu0
        %v7515 = vadd.f32 %v7194, %v7506
        %v7516 = vadd.f32 %v7195, %v7508
        %v7517 = vadd.f32 %v7196, %v7511
        %v7518 = vadd.f32 %v7197, %v7513
        %7519 = vadd.xlane.f32.xlu0 %v7515
        %v7520 = vpop.xlane.xlu0 %7519
        %7521 = vadd.xlane.f32.xlu0 %v7516
        %v7522 = vpop.xlane.xlu0 %7521
        %7523 = vadd.xlane.f32.xlu0 %v7517
        %v7524 = vpop.xlane.xlu0 %7523
        %7525 = vadd.xlane.f32.xlu0 %v7518
        %v7526 = vpop.xlane.xlu0 %7525
        %v7527 = vmul.f32 %v7520, %v3817
        %v7528 = vmul.f32 %v7522, %v3817
        %v7529 = vmul.f32 %v7524, %v3817
        %v7530 = vmul.f32 %v7526, %v3817
        %v7531 = vsub.f32 %v7515, %v7527
        %v7532 = vsub.f32 %v7516, %v7528
        %v7533 = vsub.f32 %v7517, %v7529
        %v7534 = vsub.f32 %v7518, %v7530
        %v7535 = vmul.f32 %v7531, %v7531
        %v7536 = vmul.f32 %v7532, %v7532
        %v7537 = vmul.f32 %v7533, %v7533
        %v7538 = vmul.f32 %v7534, %v7534
        %7539 = vadd.xlane.f32.xlu0 %v7535
        %v7540 = vpop.xlane.xlu0 %7539
        %7541 = vadd.xlane.f32.xlu0 %v7536
        %v7542 = vpop.xlane.xlu0 %7541
        %7543 = vadd.xlane.f32.xlu0 %v7537
        %v7544 = vpop.xlane.xlu0 %7543
        %7545 = vadd.xlane.f32.xlu0 %v7538
        %v7546 = vpop.xlane.xlu0 %7545
        %v7547 = vmul.f32 %v7540, %v3817
        %v7548 = vmul.f32 %v7542, %v3817
        %v7549 = vmul.f32 %v7544, %v3817
        %v7550 = vmul.f32 %v7546, %v3817
        %v7551 = vadd.f32 %v7547, 1e-05
        %v7552 = vadd.f32 %v7548, 1e-05
        %v7553 = vadd.f32 %v7549, 1e-05
        %v7554 = vadd.f32 %v7550, 1e-05
        %v7555 = vrsqrt.pop %v7551
        %v7556 = vmul.f32 %v7555, %v7551
        %v7557 = vmul.f32 %v7556, %v7555
        %v7558 = vmul.f32 0.5, %v7557
        %v7559 = vsub.f32 1.5, %v7558
        %v7560 = vmul.f32 %v7555, %v7559
        %vm7561 = vweird.f32 %v7551
        %vm7562 = vweird.f32 %v7555
        %vm7563 = vmor %vm7561, %vm7562
        %v7564 = vsel %vm7563, %v7555, %v7560
        %v7565 = vrsqrt.pop %v7552
        %v7566 = vmul.f32 %v7565, %v7552
        %v7567 = vmul.f32 %v7566, %v7565
        %v7568 = vmul.f32 0.5, %v7567
        %v7569 = vsub.f32 1.5, %v7568
        %v7570 = vmul.f32 %v7565, %v7569
        %vm7571 = vweird.f32 %v7552
        %vm7572 = vweird.f32 %v7565
        %vm7573 = vmor %vm7571, %vm7572
        %v7574 = vsel %vm7573, %v7565, %v7570
        %v7575 = vrsqrt.pop %v7553
        %v7576 = vmul.f32 %v7575, %v7553
        %v7577 = vmul.f32 %v7576, %v7575
        %v7578 = vmul.f32 0.5, %v7577
        %v7579 = vsub.f32 1.5, %v7578
        %v7580 = vmul.f32 %v7575, %v7579
        %vm7581 = vweird.f32 %v7553
        %vm7582 = vweird.f32 %v7575
        %vm7583 = vmor %vm7581, %vm7582
        %v7584 = vsel %vm7583, %v7575, %v7580
        %v7585 = vrsqrt.pop %v7554
        %v7586 = vmul.f32 %v7585, %v7554
        %v7587 = vmul.f32 %v7586, %v7585
        %v7588 = vmul.f32 0.5, %v7587
        %v7589 = vsub.f32 1.5, %v7588
        %v7590 = vmul.f32 %v7585, %v7589
        %vm7591 = vweird.f32 %v7554
        %vm7592 = vweird.f32 %v7585
        %vm7593 = vmor %vm7591, %vm7592
        %v7594 = vsel %vm7593, %v7585, %v7590
        %v7595 = vmul.f32 %v7531, %v7564
        %v7596 = vmul.f32 %v7532, %v7574
        %v7597 = vmul.f32 %v7533, %v7584
        %v7598 = vmul.f32 %v7534, %v7594
        %v7599 = vperm.slane %v573, 3
        %v7600 = vmul.f32 %v7595, %v7599
        %v7601 = vmul.f32 %v7596, %v7599
        %v7602 = vmul.f32 %v7597, %v7599
        %v7603 = vmul.f32 %v7598, %v7599
        %v7604 = vperm.slane %v573, 4
        %v7605 = vadd.f32 %v7600, %v7604
        %v7606 = vadd.f32 %v7601, %v7604
        %v7607 = vadd.f32 %v7602, %v7604
        %v7608 = vadd.f32 %v7603, %v7604
        %7609 = vst [vmem:[#allocation5] sm:$0xff] %v7605
        %7610 = vst [vmem:[#allocation5 + $0x8] sm:$0xff] %v7606
        %7611 = vst [vmem:[#allocation5 + $0x10] sm:$0xff] %v7607
        %7612 = vst [vmem:[#allocation5 + $0x18] sm:$0xff] %v7608
        // Predicated region
        $region77: #{decoder_pallas.1} parent=67 // pred_check
          %p7613 = pneg %p330
        $region78: #{decoder_pallas.1} parent=67 // pred_check_branch
          %7615 = sbr.rel (%p7613) target = $region80
        $region79: #{decoder_pallas.1} parent=67 // pred_region
          %7617 = vsyncadd [#allocation4], 0
          %s7618 = sshll.u32 [#allocation5], 4
          %s7619 = int_to_ptr.vmem [resolvable:$true] %s7618
          %s7620 = sshll.u32 %s12, 4
          %s7621 = int_to_ptr.hbm [resolvable:$true] %s7620
          %7626 = dma.vmem_to_hbm [thread:$0]  %s7619, 512, %s7621, [#allocation4], 128, 128, 8
        $region80: #{decoder_pallas.1} parent=67 // pred_fallthru
          _
        // Predicated region
        $region81: #{decoder_pallas.1} parent=67 // pred_check
          %p7627 = pneg %p330
        $region82: #{decoder_pallas.1} parent=67 // pred_check_branch
          %7629 = sbr.rel (%p7627) target = $region84
        $region83: #{decoder_pallas.1} parent=67 // pred_region
          %7631 = dma.done [#allocation4], 512
        $region84: #{decoder_pallas.1} parent=67 // pred_fallthru
          _
      $region68: #{decoder_pallas.1} parent=5 // pred_fallthru
        _
      %p7632 = scmp.le.s32.totalorder 2, %s20
      // Predicated region
      $region85: #{decoder_pallas.1} parent=5 // pred_check
        %p7633 = pneg %p7632
      $region86: #{decoder_pallas.1} parent=5 // pred_check_branch
        %7635 = sbr.rel (%p7633) target = $region88
      $region87: #{decoder_pallas.1} parent=5 // pred_region
        %s7636 = ssub.s32 %s20, 2
      $region88: #{decoder_pallas.1} parent=5 // pred_fallthru
        _
    $region6: #{decoder_pallas.1} parent=1 // loop_footer
      %s24 = sadd.s32 1, %s20
    $region7: #{decoder_pallas.1} parent=1 // loop_footer_branch
      %19 = sbr.rel target = $region3
    $region8: #{decoder_pallas.1} parent=1 // loop_exit
      _
    %7637 = vsyncpa [#allocation3], 1
    %s7638 = scalar_lea.sflag [#allocation3], 1
    %7639 = vsyncpa %s7638, 1
    %7640 = vsyncpa [#allocation4], 1
    %s7641 = scalar_lea.sflag [#allocation4], 1
    %7642 = vsyncpa %s7641, 1

</llo_original>
